<compile_context>
chip_gen: v6e
topology: v6e:2x2x1
jax: 0.10.0
libtpu: 0.0.40
codegen_flags: <defaults>
</compile_context>

<pallas_src>
import functools

import jax
import jax.numpy as jnp
from jax.experimental import pallas as pl
from jax.experimental.pallas import tpu as pltpu

LAT_DIM = 2
CAPACITY2 = 64 * 2 ** 4   # 1024
CAPACITY1 = 128 * 2 ** 4  # 2048
OBS_DIM = 128


def _round_up(x, m):
    return ((x + m - 1) // m) * m


def _decoder_kernel(x_ref, w1_ref, b1_ref, w2_ref, b2_ref, w3_ref, b3_ref, o_ref):
    x = x_ref[...]                       # (TB, 2)  f32
    w1 = w1_ref[...]                     # (2, 1024) f32

    # hidden1 + ReLU.  K=2 -> do it as two rank-1 broadcast FMAs on the VPU
    # instead of wasting an MXU pass padded to full contraction depth.
    h1 = x[:, 0:1] * w1[0:1, :] + x[:, 1:2] * w1[1:2, :]
    h1 = jnp.maximum(h1 + b1_ref[...], 0.0)

    # hidden2 + ReLU (bf16 MXU inputs, f32 accumulate).
    h2 = jnp.dot(h1.astype(jnp.bfloat16), w2_ref[...],
                 preferred_element_type=jnp.float32)
    h2 = jnp.maximum(h2 + b2_ref[...], 0.0)

    # output layer (no activation). view(B, OBS_DIM) is a no-op: shape already (TB, 128).
    out = jnp.dot(h2.astype(jnp.bfloat16), w3_ref[...],
                  preferred_element_type=jnp.float32)
    o_ref[...] = (out + b3_ref[...]).astype(o_ref.dtype)


@functools.partial(jax.jit, static_argnames=("batch_tile",))
def decoder_forward(x, params, *, batch_tile=256):
    """x: (B, LAT_DIM) float32 -> (B, OBS_DIM) float32."""
    w1, b1, w2, b2, w3, b3 = params
    B = x.shape[0]

    # Batch tiling: tile is a multiple of 8 (sublane), capped at 256 (MXU rows
    # on v6e/v7x). Pad batch up to a multiple of the tile; extra rows are
    # computed on garbage-free zero padding and sliced off at the end.
    Bp = _round_up(B, 8)
    TB = min(batch_tile, Bp)
    Bp = _round_up(Bp, TB)
    xp = x if Bp == B else jnp.pad(x, ((0, Bp - B), (0, 0)))

    n_tiles = Bp // TB

    const2d = lambda a: pl.BlockSpec(a.shape, lambda i: (0, 0))  # VMEM-resident params

    flops = 2 * Bp * (LAT_DIM * CAPACITY2 + CAPACITY2 * CAPACITY1
                      + CAPACITY1 * OBS_DIM)
    bytes_accessed = (
        xp.size * 4 + Bp * OBS_DIM * 4          # activations in / out (f32)
        + w1.size * 4 + w2.size * 2 + w3.size * 2   # weights (w2/w3 bf16)
        + (b1.size + b2.size + b3.size) * 4)        # biases (f32)

    out = pl.pallas_call(
        _decoder_kernel,
        out_shape=jax.ShapeDtypeStruct((Bp, OBS_DIM), jnp.float32),
        grid=(n_tiles,),
        in_specs=[
            pl.BlockSpec((TB, LAT_DIM), lambda i: (i, 0)),
            const2d(w1), const2d(b1),
            const2d(w2), const2d(b2),
            const2d(w3), const2d(b3),
        ],
        out_specs=pl.BlockSpec((TB, OBS_DIM), lambda i: (i, 0)),
        compiler_params=pltpu.CompilerParams(
            dimension_semantics=("parallel",),
            vmem_limit_bytes=32 << 20,
        ),
        cost_estimate=pl.CostEstimate(
            flops=flops, transcendentals=0, bytes_accessed=bytes_accessed),
    )(xp, w1, b1, w2, b2, w3, b3)

    return out[:B] if Bp != B else out


def init_params(key):
    """Deterministic synthetic parameters.

    Weights stored (in, out); biases (1, out). Large weights (w2, w3) are
    bfloat16 to halve the HBM weight stream; w1 and biases stay f32.
    """
    ks = jax.random.split(key, 6)

    def lin(kw, kb, fan_in, fan_out, w_dtype):
        bound = 1.0 / jnp.sqrt(fan_in)
        w = jax.random.uniform(kw, (fan_in, fan_out), jnp.float32, -bound, bound)
        b = jax.random.uniform(kb, (1, fan_out), jnp.float32, -bound, bound)
        return w.astype(w_dtype), b

    w1, b1 = lin(ks[0], ks[1], LAT_DIM, CAPACITY2, jnp.float32)
    w2, b2 = lin(ks[2], ks[3], CAPACITY2, CAPACITY1, jnp.bfloat16)
    w3, b3 = lin(ks[4], ks[5], CAPACITY1, OBS_DIM, jnp.bfloat16)
    return (w1, b1, w2, b2, w3, b3)


def decoder_ref(x, params):
    """Plain-JAX reference (f32 math on the same bf16-stored weights)."""
    w1, b1, w2, b2, w3, b3 = params
    h1 = jnp.maximum(x @ w1.astype(jnp.float32) + b1, 0.0)
    h2 = jnp.maximum(h1 @ w2.astype(jnp.float32) + b2, 0.0)
    return (h2 @ w3.astype(jnp.float32) + b3).reshape(x.shape[0], OBS_DIM)


if __name__ == "__main__":
    key = jax.random.PRNGKey(0)
    k_params, k_x = jax.random.split(key)

    params = init_params(k_params)
    batch = 8
    x = jax.random.normal(k_x, (batch, LAT_DIM), jnp.float32)

    out = decoder_forward(x, params)
    out = jax.block_until_ready(out)

    ref = decoder_ref(x, params)
    assert out.shape == (batch, OBS_DIM), out.shape
    # Kernel casts activations to bf16 before the MXU dots -> small rounding
    # difference vs the f32-activation reference; 5e-2 comfortably covers it
    # while still catching real layout/indexing bugs (errors would be O(0.3+)).
    assert jnp.allclose(out, ref, atol=5e-2, rtol=5e-2), \
        float(jnp.max(jnp.abs(out - ref)))

    print("KERNEL_OK")
</pallas_src>

<mosaic_0001>
module attributes {stable_mosaic.version = 11 : i64} {
  func.func @_decoder_kernel(%arg0: i32, %arg1: memref<8x2xf32, #tpu.memory_space<vmem>>, %arg2: memref<2x1024xf32, #tpu.memory_space<vmem>>, %arg3: memref<1x1024xf32, #tpu.memory_space<vmem>>, %arg4: memref<1024x2048xbf16, #tpu.memory_space<vmem>>, %arg5: memref<1x2048xf32, #tpu.memory_space<vmem>>, %arg6: memref<2048x128xbf16, #tpu.memory_space<vmem>>, %arg7: memref<1x128xf32, #tpu.memory_space<vmem>>, %arg8: memref<8x128xf32, #tpu.memory_space<vmem>>) attributes {dimension_semantics = [#tpu.dimension_semantics<parallel>], iteration_bounds = array<i64: 1>, scalar_prefetch = 0 : i64, scratch_operands = 0 : i64, tpu.core_type = #tpu.core_type<tc>, window_params = [{transform_indices = @transform_0, window_bounds = array<i64: 8, 2>}, {pipeline_mode = #tpu.pipeline_mode<synchronous>, transform_indices = @transform_1, window_bounds = array<i64: 2, 1024>}, {pipeline_mode = #tpu.pipeline_mode<synchronous>, transform_indices = @transform_2, window_bounds = array<i64: 1, 1024>}, {pipeline_mode = #tpu.pipeline_mode<synchronous>, transform_indices = @transform_3, window_bounds = array<i64: 1024, 2048>}, {pipeline_mode = #tpu.pipeline_mode<synchronous>, transform_indices = @transform_4, window_bounds = array<i64: 1, 2048>}, {pipeline_mode = #tpu.pipeline_mode<synchronous>, transform_indices = @transform_5, window_bounds = array<i64: 2048, 128>}, {pipeline_mode = #tpu.pipeline_mode<synchronous>, transform_indices = @transform_6, window_bounds = array<i64: 1, 128>}, {transform_indices = @transform_7, window_bounds = array<i64: 8, 128>}]} {
    %c0 = arith.constant 0 : index
    %c0_0 = arith.constant 0 : index
    %0 = vector.load %arg1[%c0, %c0_0] : memref<8x2xf32, #tpu.memory_space<vmem>>, vector<8x2xf32>
    %c0_1 = arith.constant 0 : index
    %c0_2 = arith.constant 0 : index
    %1 = vector.load %arg2[%c0_1, %c0_2] : memref<2x1024xf32, #tpu.memory_space<vmem>>, vector<2x1024xf32>
    %2 = vector.extract_strided_slice %0 {offsets = [0, 0], sizes = [8, 1], strides = [1, 1]} : vector<8x2xf32> to vector<8x1xf32>
    %3 = vector.extract_strided_slice %1 {offsets = [0, 0], sizes = [1, 1024], strides = [1, 1]} : vector<2x1024xf32> to vector<1x1024xf32>
    %4 = vector.broadcast %2 : vector<8x1xf32> to vector<8x1024xf32>
    %5 = vector.broadcast %3 : vector<1x1024xf32> to vector<8x1024xf32>
    %6 = arith.mulf %4, %5 : vector<8x1024xf32>
    %7 = vector.extract_strided_slice %0 {offsets = [0, 1], sizes = [8, 1], strides = [1, 1]} : vector<8x2xf32> to vector<8x1xf32>
    %8 = vector.extract_strided_slice %1 {offsets = [1, 0], sizes = [1, 1024], strides = [1, 1]} : vector<2x1024xf32> to vector<1x1024xf32>
    %9 = vector.broadcast %7 : vector<8x1xf32> to vector<8x1024xf32>
    %10 = vector.broadcast %8 : vector<1x1024xf32> to vector<8x1024xf32>
    %11 = arith.mulf %9, %10 : vector<8x1024xf32>
    %12 = arith.addf %6, %11 : vector<8x1024xf32>
    %c0_3 = arith.constant 0 : index
    %c0_4 = arith.constant 0 : index
    %13 = vector.load %arg3[%c0_3, %c0_4] : memref<1x1024xf32, #tpu.memory_space<vmem>>, vector<1x1024xf32>
    %14 = vector.broadcast %13 : vector<1x1024xf32> to vector<8x1024xf32>
    %15 = arith.addf %12, %14 : vector<8x1024xf32>
    %cst = arith.constant 0.000000e+00 : f32
    %16 = vector.broadcast %cst : f32 to vector<8x1024xf32>
    %17 = arith.maximumf %15, %16 : vector<8x1024xf32>
    %18 = arith.truncf %17 : vector<8x1024xf32> to vector<8x1024xbf16>
    %c0_5 = arith.constant 0 : index
    %c0_6 = arith.constant 0 : index
    %19 = vector.load %arg4[%c0_5, %c0_6] : memref<1024x2048xbf16, #tpu.memory_space<vmem>>, vector<1024x2048xbf16>
    %cst_7 = arith.constant dense<0.000000e+00> : vector<8x2048xf32>
    %20 = tpu.matmul %18, %19, %cst_7 {dimension_numbers = #tpu.dot_dimension_numbers<[1], [0], [0], [1], [0, 0, 1, 1], [], []>} : vector<8x1024xbf16>, vector<1024x2048xbf16>, vector<8x2048xf32> -> vector<8x2048xf32>
    %c0_8 = arith.constant 0 : index
    %c0_9 = arith.constant 0 : index
    %21 = vector.load %arg5[%c0_8, %c0_9] : memref<1x2048xf32, #tpu.memory_space<vmem>>, vector<1x2048xf32>
    %22 = vector.broadcast %21 : vector<1x2048xf32> to vector<8x2048xf32>
    %23 = arith.addf %20, %22 : vector<8x2048xf32>
    %cst_10 = arith.constant 0.000000e+00 : f32
    %24 = vector.broadcast %cst_10 : f32 to vector<8x2048xf32>
    %25 = arith.maximumf %23, %24 : vector<8x2048xf32>
    %26 = arith.truncf %25 : vector<8x2048xf32> to vector<8x2048xbf16>
    %c0_11 = arith.constant 0 : index
    %c0_12 = arith.constant 0 : index
    %27 = vector.load %arg6[%c0_11, %c0_12] : memref<2048x128xbf16, #tpu.memory_space<vmem>>, vector<2048x128xbf16>
    %cst_13 = arith.constant dense<0.000000e+00> : vector<8x128xf32>
    %28 = tpu.matmul %26, %27, %cst_13 {dimension_numbers = #tpu.dot_dimension_numbers<[1], [0], [0], [1], [0, 0, 1, 1], [], []>} : vector<8x2048xbf16>, vector<2048x128xbf16>, vector<8x128xf32> -> vector<8x128xf32>
    %c0_14 = arith.constant 0 : index
    %c0_15 = arith.constant 0 : index
    %29 = vector.load %arg7[%c0_14, %c0_15] : memref<1x128xf32, #tpu.memory_space<vmem>>, vector<1x128xf32>
    %30 = vector.broadcast %29 : vector<1x128xf32> to vector<8x128xf32>
    %31 = arith.addf %28, %30 : vector<8x128xf32>
    %c0_16 = arith.constant 0 : index
    %c0_17 = arith.constant 0 : index
    %32 = vector.load %arg8[%c0_16, %c0_17] : memref<8x128xf32, #tpu.memory_space<vmem>>, vector<8x128xf32>
    tpu.vector_store %arg8[%c0_16, %c0_17], %31 {strides = array<i32>} : memref<8x128xf32, #tpu.memory_space<vmem>>, vector<8x128xf32>,
    return
  }
  func.func @transform_0(%arg0: i32) -> (i32, i32) {
    %c0_i32 = arith.constant 0 : i32
    %c0_i32_0 = arith.constant 0 : i32
    return %arg0, %c0_i32 : i32, i32
  }
  func.func @transform_1(%arg0: i32) -> (i32, i32) {
    %c0_i32 = arith.constant 0 : i32
    %c0_i32_0 = arith.constant 0 : i32
    %c0_i32_1 = arith.constant 0 : i32
    return %c0_i32, %c0_i32_0 : i32, i32
  }
  func.func @transform_2(%arg0: i32) -> (i32, i32) {
    %c0_i32 = arith.constant 0 : i32
    %c0_i32_0 = arith.constant 0 : i32
    %c0_i32_1 = arith.constant 0 : i32
    return %c0_i32, %c0_i32_0 : i32, i32
  }
  func.func @transform_3(%arg0: i32) -> (i32, i32) {
    %c0_i32 = arith.constant 0 : i32
    %c0_i32_0 = arith.constant 0 : i32
    %c0_i32_1 = arith.constant 0 : i32
    return %c0_i32, %c0_i32_0 : i32, i32
  }
  func.func @transform_4(%arg0: i32) -> (i32, i32) {
    %c0_i32 = arith.constant 0 : i32
    %c0_i32_0 = arith.constant 0 : i32
    %c0_i32_1 = arith.constant 0 : i32
    return %c0_i32, %c0_i32_0 : i32, i32
  }
  func.func @transform_5(%arg0: i32) -> (i32, i32) {
    %c0_i32 = arith.constant 0 : i32
    %c0_i32_0 = arith.constant 0 : i32
    %c0_i32_1 = arith.constant 0 : i32
    return %c0_i32, %c0_i32_0 : i32, i32
  }
  func.func @transform_6(%arg0: i32) -> (i32, i32) {
    %c0_i32 = arith.constant 0 : i32
    %c0_i32_0 = arith.constant 0 : i32
    %c0_i32_1 = arith.constant 0 : i32
    return %c0_i32, %c0_i32_0 : i32, i32
  }
  func.func @transform_7(%arg0: i32) -> (i32, i32) {
    %c0_i32 = arith.constant 0 : i32
    %c0_i32_0 = arith.constant 0 : i32
    return %arg0, %c0_i32 : i32, i32
  }
}

</mosaic_0001>

<llo_original>
// kernel: decoder_forward.1
$region0: #{decoder_forward.1}
  #allocation0 [shape = 'u32[]', space=smem, size = 0x4, offset = 0x4, fixed_abs, tag = 'smem constant byte address 0x4 - core index']
  #allocation1 [shape = 'u32[144,128]{1,0:T(1,128)}', space=vmem, size = 0x12000, scoped, tag = 'internal scratch']
  %s0 = inlined_call_operand.vmem [shape: f32[8,2], index: 0, kind: input, shape index: {}]
  %s1 = inlined_call_operand.hbm [shape: f32[2,1024], index: 1, kind: input, shape index: {}]
  %s2 = inlined_call_operand.hbm [shape: f32[1,1024], index: 2, kind: input, shape index: {}]
  %s3 = inlined_call_operand.hbm [shape: bf16[1024,2048], index: 3, kind: input, shape index: {}]
  %s4 = inlined_call_operand.hbm [shape: f32[1,2048], index: 4, kind: input, shape index: {}]
  %s5 = inlined_call_operand.hbm [shape: bf16[2048,128], index: 5, kind: input, shape index: {}]
  %s6 = inlined_call_operand.hbm [shape: f32[1,128], index: 6, kind: input, shape index: {}]
  %s7 = inlined_call_operand.hbm [shape: f32[8,128], index: 7, kind: output, shape index: {}]
  %s8 = sld [smem:[#allocation0]]
  $region62: #{decoder_forward.1} parent=0
    _
  %s10 = ssub.s32 1, %s8
  %s11 = scalar_select 0, %s10, %s8
  $region1: #{decoder_forward.1} parent=0
    #allocation2 [shape = 'u8[8192]{0}', space=vmem, size = 0x2000, scoped, tag = 'input window, operand 1, single buffered']
    #allocation3 [shape = 's32[1]{0}', space=sflag, size = 0x4, scoped, tag = 'scoped memory for decoder_forward.1']
    #allocation4 [shape = 's32[1]{0}', space=sflag, size = 0x4, scoped, tag = 'scoped memory for decoder_forward.1']
    #allocation5 [shape = 'u8[4096]{0}', space=vmem, size = 0x1000, scoped, tag = 'input window, operand 2, single buffered']
    #allocation6 [shape = 's32[1]{0}', space=sflag, size = 0x4, scoped, tag = 'scoped memory for decoder_forward.1']
    #allocation7 [shape = 'u8[4194304]{0}', space=vmem, size = 0x400000, scoped, tag = 'input window, operand 3, single buffered']
    #allocation8 [shape = 'u8[8192]{0}', space=vmem, size = 0x2000, scoped, tag = 'input window, operand 4, single buffered']
    #allocation9 [shape = 's32[1]{0}', space=sflag, size = 0x4, scoped, tag = 'scoped memory for decoder_forward.1']
    #allocation10 [shape = 'u8[524288]{0}', space=vmem, size = 0x80000, scoped, tag = 'input window, operand 5, single buffered']
    #allocation11 [shape = 'u8[512]{0}', space=vmem, size = 0x400, scoped, tag = 'input window, operand 6, single buffered']
    #allocation12 [shape = 's32[1]{0}', space=sflag, size = 0x4, scoped, tag = 'scoped memory for decoder_forward.1']
    #allocation13 [shape = 'u8[4096]{0}', space=vmem, size = 0x1000, scoped, tag = 'output window, operand 0, single buffered']
    %12 = vsyncpa [#allocation3], 0
    %13 = vsyncpa [#allocation6], 0
    %14 = vsyncpa [#allocation9], 0
    %15 = vsyncpa [#allocation12], 0
    %16 = vsyncpa [#allocation4], 0
    // Predicated region
    $region2: #{decoder_forward.1} parent=1 // pred_check
      _
    $region3: #{decoder_forward.1} parent=1 // pred_check_branch
      %18 = sbr.rel (0) target = $region5
    $region4: #{decoder_forward.1} parent=1 // pred_region
      _
    $region5: #{decoder_forward.1} parent=1 // pred_fallthru
      _
    // Predicated region
    $region6: #{decoder_forward.1} parent=1 // pred_check
      _
    $region7: #{decoder_forward.1} parent=1 // pred_check_branch
      %20 = sbr.rel (0) target = $region9
    $region8: #{decoder_forward.1} parent=1 // pred_region
      %s22 = ssub.s32 256, 256
      %23 = vsyncadd [#allocation3], %s22
      %s25 = sshll.u32 [#allocation2], 4
      %s26 = int_to_ptr.vmem [resolvable:$true] %s25
      %28 = dma.hbm_to_vmem [thread:$0]  %s1, 256, %s26, [#allocation3]
    $region9: #{decoder_forward.1} parent=1 // pred_fallthru
      _
    // Predicated region
    $region10: #{decoder_forward.1} parent=1 // pred_check
      _
    $region11: #{decoder_forward.1} parent=1 // pred_check_branch
      %30 = sbr.rel (0) target = $region13
    $region12: #{decoder_forward.1} parent=1 // pred_region
      %s32 = ssub.s32 128, 128
      %33 = vsyncadd [#allocation6], %s32
      %s35 = sshll.u32 [#allocation5], 4
      %s36 = int_to_ptr.vmem [resolvable:$true] %s35
      %38 = dma.hbm_to_vmem [thread:$0]  %s2, 128, %s36, [#allocation6]
    $region13: #{decoder_forward.1} parent=1 // pred_fallthru
      _
    // Predicated region
    $region14: #{decoder_forward.1} parent=1 // pred_check
      _
    $region15: #{decoder_forward.1} parent=1 // pred_check_branch
      %40 = sbr.rel (0) target = $region17
    $region16: #{decoder_forward.1} parent=1 // pred_region
      %s42 = ssub.s32 131072, 131072
      %43 = vsyncadd [#allocation6], %s42
      %s44 = sshll.u32 [#allocation7], 4
      %s45 = int_to_ptr.vmem [resolvable:$true] %s44
      %50 = dma.hbm_to_vmem [thread:$0]  %s3, 131072, %s45, [#allocation6], 1024, 1024, 64
    $region17: #{decoder_forward.1} parent=1 // pred_fallthru
      _
    // Predicated region
    $region18: #{decoder_forward.1} parent=1 // pred_check
      _
    $region19: #{decoder_forward.1} parent=1 // pred_check_branch
      %52 = sbr.rel (0) target = $region21
    $region20: #{decoder_forward.1} parent=1 // pred_region
      %s54 = ssub.s32 256, 256
      %55 = vsyncadd [#allocation9], %s54
      %s57 = sshll.u32 [#allocation8], 4
      %s58 = int_to_ptr.vmem [resolvable:$true] %s57
      %60 = dma.hbm_to_vmem [thread:$0]  %s4, 256, %s58, [#allocation9]
    $region21: #{decoder_forward.1} parent=1 // pred_fallthru
      _
    // Predicated region
    $region22: #{decoder_forward.1} parent=1 // pred_check
      _
    $region23: #{decoder_forward.1} parent=1 // pred_check_branch
      %62 = sbr.rel (0) target = $region25
    $region24: #{decoder_forward.1} parent=1 // pred_region
      %s64 = ssub.s32 16384, 16384
      %65 = vsyncadd [#allocation9], %s64
      %s66 = sshll.u32 [#allocation10], 4
      %s67 = int_to_ptr.vmem [resolvable:$true] %s66
      %72 = dma.hbm_to_vmem [thread:$0]  %s5, 16384, %s67, [#allocation9], 64, 64, 4
    $region25: #{decoder_forward.1} parent=1 // pred_fallthru
      _
    // Predicated region
    $region26: #{decoder_forward.1} parent=1 // pred_check
      _
    $region27: #{decoder_forward.1} parent=1 // pred_check_branch
      %74 = sbr.rel (0) target = $region29
    $region28: #{decoder_forward.1} parent=1 // pred_region
      %s76 = ssub.s32 16, 16
      %77 = vsyncadd [#allocation12], %s76
      %s79 = sshll.u32 [#allocation11], 4
      %s80 = int_to_ptr.vmem [resolvable:$true] %s79
      %82 = dma.hbm_to_vmem [thread:$0]  %s6, 16, %s80, [#allocation12]
    $region29: #{decoder_forward.1} parent=1 // pred_fallthru
      _
    // Predicated region
    $region30: #{decoder_forward.1} parent=1 // pred_check
      _
    $region31: #{decoder_forward.1} parent=1 // pred_check_branch
      %84 = sbr.rel (0) target = $region33
    $region32: #{decoder_forward.1} parent=1 // pred_region
      %85 = dma.done [#allocation3], 256
    $region33: #{decoder_forward.1} parent=1 // pred_fallthru
      _
    // Predicated region
    $region34: #{decoder_forward.1} parent=1 // pred_check
      _
    $region35: #{decoder_forward.1} parent=1 // pred_check_branch
      %87 = sbr.rel (0) target = $region37
    $region36: #{decoder_forward.1} parent=1 // pred_region
      %88 = dma.done [#allocation6], 128
    $region37: #{decoder_forward.1} parent=1 // pred_fallthru
      _
    // Predicated region
    $region38: #{decoder_forward.1} parent=1 // pred_check
      _
    $region39: #{decoder_forward.1} parent=1 // pred_check_branch
      %90 = sbr.rel (0) target = $region41
    $region40: #{decoder_forward.1} parent=1 // pred_region
      %91 = dma.done [#allocation6], 131072
    $region41: #{decoder_forward.1} parent=1 // pred_fallthru
      _
    // Predicated region
    $region42: #{decoder_forward.1} parent=1 // pred_check
      _
    $region43: #{decoder_forward.1} parent=1 // pred_check_branch
      %93 = sbr.rel (0) target = $region45
    $region44: #{decoder_forward.1} parent=1 // pred_region
      %94 = dma.done [#allocation9], 256
    $region45: #{decoder_forward.1} parent=1 // pred_fallthru
      _
    // Predicated region
    $region46: #{decoder_forward.1} parent=1 // pred_check
      _
    $region47: #{decoder_forward.1} parent=1 // pred_check_branch
      %96 = sbr.rel (0) target = $region49
    $region48: #{decoder_forward.1} parent=1 // pred_region
      %97 = dma.done [#allocation9], 16384
    $region49: #{decoder_forward.1} parent=1 // pred_fallthru
      _
    // Predicated region
    $region50: #{decoder_forward.1} parent=1 // pred_check
      _
    $region51: #{decoder_forward.1} parent=1 // pred_check_branch
      %99 = sbr.rel (0) target = $region53
    $region52: #{decoder_forward.1} parent=1 // pred_region
      %100 = dma.done [#allocation12], 16
    $region53: #{decoder_forward.1} parent=1 // pred_fallthru
      _
    %v102 = vld [vmem:[%s0] sm:$0xff]
    %v103 = vld [vmem:[#allocation2] sm:$0xff]
    %v104 = vld [vmem:[#allocation2 + $0x8] sm:$0xff]
    %106 = vset.pattern.permute.xlu0 0
    %107 = vperm.xlu0 %106, %v102
    %v108 = vpop.permute.xlu0 %107
    %v112 = vlaneseq
    %v113 = vshrl.u32 %v112, 7
    %v114 = vsub.s32 0, %v113
    %v115 = vrot.slane %v103, %v114
    %v116 = vlaneseq
    %v117 = vshrl.u32 %v116, 7
    %v118 = vsub.s32 2, %v117
    %v119 = vrot.slane %v103, %v118
    %v120 = vlaneseq
    %v121 = vshrl.u32 %v120, 7
    %v122 = vsub.s32 4, %v121
    %v123 = vrot.slane %v103, %v122
    %v124 = vlaneseq
    %v125 = vshrl.u32 %v124, 7
    %v126 = vsub.s32 6, %v125
    %v127 = vrot.slane %v103, %v126
    %v128 = vlaneseq
    %v129 = vshrl.u32 %v128, 7
    %v130 = vsub.s32 0, %v129
    %v131 = vrot.slane %v104, %v130
    %v132 = vlaneseq
    %v133 = vshrl.u32 %v132, 7
    %v134 = vsub.s32 2, %v133
    %v135 = vrot.slane %v104, %v134
    %v136 = vlaneseq
    %v137 = vshrl.u32 %v136, 7
    %v138 = vsub.s32 4, %v137
    %v139 = vrot.slane %v104, %v138
    %v140 = vlaneseq
    %v141 = vshrl.u32 %v140, 7
    %v142 = vsub.s32 6, %v141
    %v143 = vrot.slane %v104, %v142
    %v152 = vlaneseq
    %v153 = vshrl.u32 %v152, 7
    %v154 = vsub.s32 0, %v153
    %v155 = vrot.slane %v115, %v154
    %v156 = vlaneseq
    %v157 = vshrl.u32 %v156, 7
    %v158 = vsub.s32 0, %v157
    %v159 = vrot.slane %v119, %v158
    %v160 = vlaneseq
    %v161 = vshrl.u32 %v160, 7
    %v162 = vsub.s32 0, %v161
    %v163 = vrot.slane %v123, %v162
    %v164 = vlaneseq
    %v165 = vshrl.u32 %v164, 7
    %v166 = vsub.s32 0, %v165
    %v167 = vrot.slane %v127, %v166
    %v168 = vlaneseq
    %v169 = vshrl.u32 %v168, 7
    %v170 = vsub.s32 0, %v169
    %v171 = vrot.slane %v131, %v170
    %v172 = vlaneseq
    %v173 = vshrl.u32 %v172, 7
    %v174 = vsub.s32 0, %v173
    %v175 = vrot.slane %v135, %v174
    %v176 = vlaneseq
    %v177 = vshrl.u32 %v176, 7
    %v178 = vsub.s32 0, %v177
    %v179 = vrot.slane %v139, %v178
    %v180 = vlaneseq
    %v181 = vshrl.u32 %v180, 7
    %v182 = vsub.s32 0, %v181
    %v183 = vrot.slane %v143, %v182
    %v184 = vmul.f32 %v108, %v155
    %v185 = vmul.f32 %v108, %v159
    %v186 = vmul.f32 %v108, %v163
    %v187 = vmul.f32 %v108, %v167
    %v188 = vmul.f32 %v108, %v171
    %v189 = vmul.f32 %v108, %v175
    %v190 = vmul.f32 %v108, %v179
    %v191 = vmul.f32 %v108, %v183
    %192 = vset.pattern.permute.xlu0 1
    %193 = vperm.xlu0 %192, %v102
    %v194 = vpop.permute.xlu0 %193
    %v196 = vlaneseq
    %v197 = vshrl.u32 %v196, 7
    %v198 = vsub.s32 1, %v197
    %v199 = vrot.slane %v103, %v198
    %v200 = vlaneseq
    %v201 = vshrl.u32 %v200, 7
    %v202 = vsub.s32 3, %v201
    %v203 = vrot.slane %v103, %v202
    %v204 = vlaneseq
    %v205 = vshrl.u32 %v204, 7
    %v206 = vsub.s32 5, %v205
    %v207 = vrot.slane %v103, %v206
    %v208 = vlaneseq
    %v209 = vshrl.u32 %v208, 7
    %v210 = vsub.s32 7, %v209
    %v211 = vrot.slane %v103, %v210
    %v212 = vlaneseq
    %v213 = vshrl.u32 %v212, 7
    %v214 = vsub.s32 1, %v213
    %v215 = vrot.slane %v104, %v214
    %v216 = vlaneseq
    %v217 = vshrl.u32 %v216, 7
    %v218 = vsub.s32 3, %v217
    %v219 = vrot.slane %v104, %v218
    %v220 = vlaneseq
    %v221 = vshrl.u32 %v220, 7
    %v222 = vsub.s32 5, %v221
    %v223 = vrot.slane %v104, %v222
    %v224 = vlaneseq
    %v225 = vshrl.u32 %v224, 7
    %v226 = vsub.s32 7, %v225
    %v227 = vrot.slane %v104, %v226
    %v236 = vlaneseq
    %v237 = vshrl.u32 %v236, 7
    %v238 = vsub.s32 1, %v237
    %v239 = vrot.slane %v199, %v238
    %v240 = vlaneseq
    %v241 = vshrl.u32 %v240, 7
    %v242 = vsub.s32 1, %v241
    %v243 = vrot.slane %v203, %v242
    %v244 = vlaneseq
    %v245 = vshrl.u32 %v244, 7
    %v246 = vsub.s32 1, %v245
    %v247 = vrot.slane %v207, %v246
    %v248 = vlaneseq
    %v249 = vshrl.u32 %v248, 7
    %v250 = vsub.s32 1, %v249
    %v251 = vrot.slane %v211, %v250
    %v252 = vlaneseq
    %v253 = vshrl.u32 %v252, 7
    %v254 = vsub.s32 1, %v253
    %v255 = vrot.slane %v215, %v254
    %v256 = vlaneseq
    %v257 = vshrl.u32 %v256, 7
    %v258 = vsub.s32 1, %v257
    %v259 = vrot.slane %v219, %v258
    %v260 = vlaneseq
    %v261 = vshrl.u32 %v260, 7
    %v262 = vsub.s32 1, %v261
    %v263 = vrot.slane %v223, %v262
    %v264 = vlaneseq
    %v265 = vshrl.u32 %v264, 7
    %v266 = vsub.s32 1, %v265
    %v267 = vrot.slane %v227, %v266
    %v268 = vmul.f32 %v194, %v239
    %v269 = vmul.f32 %v194, %v243
    %v270 = vmul.f32 %v194, %v247
    %v271 = vmul.f32 %v194, %v251
    %v272 = vmul.f32 %v194, %v255
    %v273 = vmul.f32 %v194, %v259
    %v274 = vmul.f32 %v194, %v263
    %v275 = vmul.f32 %v194, %v267
    %v276 = vadd.f32 %v184, %v268
    %v277 = vadd.f32 %v185, %v269
    %v278 = vadd.f32 %v186, %v270
    %v279 = vadd.f32 %v187, %v271
    %v280 = vadd.f32 %v188, %v272
    %v281 = vadd.f32 %v189, %v273
    %v282 = vadd.f32 %v190, %v274
    %v283 = vadd.f32 %v191, %v275
    %v284 = vld [vmem:[#allocation5] sm:$0xff]
    %v286 = vlaneseq
    %v287 = vshrl.u32 %v286, 7
    %v288 = vsub.s32 0, %v287
    %v289 = vrot.slane %v284, %v288
    %v290 = vlaneseq
    %v291 = vshrl.u32 %v290, 7
    %v292 = vsub.s32 1, %v291
    %v293 = vrot.slane %v284, %v292
    %v294 = vlaneseq
    %v295 = vshrl.u32 %v294, 7
    %v296 = vsub.s32 2, %v295
    %v297 = vrot.slane %v284, %v296
    %v298 = vlaneseq
    %v299 = vshrl.u32 %v298, 7
    %v300 = vsub.s32 3, %v299
    %v301 = vrot.slane %v284, %v300
    %v302 = vlaneseq
    %v303 = vshrl.u32 %v302, 7
    %v304 = vsub.s32 4, %v303
    %v305 = vrot.slane %v284, %v304
    %v306 = vlaneseq
    %v307 = vshrl.u32 %v306, 7
    %v308 = vsub.s32 5, %v307
    %v309 = vrot.slane %v284, %v308
    %v310 = vlaneseq
    %v311 = vshrl.u32 %v310, 7
    %v312 = vsub.s32 6, %v311
    %v313 = vrot.slane %v284, %v312
    %v314 = vlaneseq
    %v315 = vshrl.u32 %v314, 7
    %v316 = vsub.s32 7, %v315
    %v317 = vrot.slane %v284, %v316
    %v326 = vadd.f32 %v276, %v289
    %v327 = vadd.f32 %v277, %v293
    %v328 = vadd.f32 %v278, %v297
    %v329 = vadd.f32 %v279, %v301
    %v330 = vadd.f32 %v280, %v305
    %v331 = vadd.f32 %v281, %v309
    %v332 = vadd.f32 %v282, %v313
    %v333 = vadd.f32 %v283, %v317
    %v334 = vmax.f32 %v326, 0.0
    %v335 = vmax.f32 %v327, 0.0
    %v336 = vmax.f32 %v328, 0.0
    %v337 = vmax.f32 %v329, 0.0
    %v338 = vmax.f32 %v330, 0.0
    %v339 = vmax.f32 %v331, 0.0
    %v340 = vmax.f32 %v332, 0.0
    %v341 = vmax.f32 %v333, 0.0
    %v342 = vpack.c.bf16 %v334, %v334
    %v343 = vpack.c.bf16 %v335, %v335
    %v344 = vpack.c.bf16 %v336, %v336
    %v345 = vpack.c.bf16 %v337, %v337
    %v346 = vpack.c.bf16 %v338, %v338
    %v347 = vpack.c.bf16 %v339, %v339
    %v348 = vpack.c.bf16 %v340, %v340
    %v349 = vpack.c.bf16 %v341, %v341
    %v350 = vld [vmem:[#allocation7] sm:$0xff]
    %v351 = vld [vmem:[#allocation7 + $0x8] sm:$0xff]
    %v352 = vld [vmem:[#allocation7 + $0x10] sm:$0xff]
    %v353 = vld [vmem:[#allocation7 + $0x18] sm:$0xff]
    %v354 = vld [vmem:[#allocation7 + $0x20] sm:$0xff]
    %v355 = vld [vmem:[#allocation7 + $0x28] sm:$0xff]
    %v356 = vld [vmem:[#allocation7 + $0x30] sm:$0xff]
    %v357 = vld [vmem:[#allocation7 + $0x38] sm:$0xff]
    %v358 = vld [vmem:[#allocation7 + $0x40] sm:$0xff]
    %v359 = vld [vmem:[#allocation7 + $0x48] sm:$0xff]
    %v360 = vld [vmem:[#allocation7 + $0x50] sm:$0xff]
    %v361 = vld [vmem:[#allocation7 + $0x58] sm:$0xff]
    %v362 = vld [vmem:[#allocation7 + $0x60] sm:$0xff]
    %v363 = vld [vmem:[#allocation7 + $0x68] sm:$0xff]
    %v364 = vld [vmem:[#allocation7 + $0x70] sm:$0xff]
    %v365 = vld [vmem:[#allocation7 + $0x78] sm:$0xff]
    %v366 = vld [vmem:[#allocation7 + $0x80] sm:$0xff]
    %v367 = vld [vmem:[#allocation7 + $0x88] sm:$0xff]
    %v368 = vld [vmem:[#allocation7 + $0x90] sm:$0xff]
    %v369 = vld [vmem:[#allocation7 + $0x98] sm:$0xff]
    %v370 = vld [vmem:[#allocation7 + $0xa0] sm:$0xff]
    %v371 = vld [vmem:[#allocation7 + $0xa8] sm:$0xff]
    %v372 = vld [vmem:[#allocation7 + $0xb0] sm:$0xff]
    %v373 = vld [vmem:[#allocation7 + $0xb8] sm:$0xff]
    %v374 = vld [vmem:[#allocation7 + $0xc0] sm:$0xff]
    %v375 = vld [vmem:[#allocation7 + $0xc8] sm:$0xff]
    %v376 = vld [vmem:[#allocation7 + $0xd0] sm:$0xff]
    %v377 = vld [vmem:[#allocation7 + $0xd8] sm:$0xff]
    %v378 = vld [vmem:[#allocation7 + $0xe0] sm:$0xff]
    %v379 = vld [vmem:[#allocation7 + $0xe8] sm:$0xff]
    %v380 = vld [vmem:[#allocation7 + $0xf0] sm:$0xff]
    %v381 = vld [vmem:[#allocation7 + $0xf8] sm:$0xff]
    %v382 = vld [vmem:[#allocation7 + $0x100] sm:$0xff]
    %v383 = vld [vmem:[#allocation7 + $0x108] sm:$0xff]
    %v384 = vld [vmem:[#allocation7 + $0x110] sm:$0xff]
    %v385 = vld [vmem:[#allocation7 + $0x118] sm:$0xff]
    %v386 = vld [vmem:[#allocation7 + $0x120] sm:$0xff]
    %v387 = vld [vmem:[#allocation7 + $0x128] sm:$0xff]
    %v388 = vld [vmem:[#allocation7 + $0x130] sm:$0xff]
    %v389 = vld [vmem:[#allocation7 + $0x138] sm:$0xff]
    %v390 = vld [vmem:[#allocation7 + $0x140] sm:$0xff]
    %v391 = vld [vmem:[#allocation7 + $0x148] sm:$0xff]
    %v392 = vld [vmem:[#allocation7 + $0x150] sm:$0xff]
    %v393 = vld [vmem:[#allocation7 + $0x158] sm:$0xff]
    %v394 = vld [vmem:[#allocation7 + $0x160] sm:$0xff]
    %v395 = vld [vmem:[#allocation7 + $0x168] sm:$0xff]
    %v396 = vld [vmem:[#allocation7 + $0x170] sm:$0xff]
    %v397 = vld [vmem:[#allocation7 + $0x178] sm:$0xff]
    %v398 = vld [vmem:[#allocation7 + $0x180] sm:$0xff]
    %v399 = vld [vmem:[#allocation7 + $0x188] sm:$0xff]
    %v400 = vld [vmem:[#allocation7 + $0x190] sm:$0xff]
    %v401 = vld [vmem:[#allocation7 + $0x198] sm:$0xff]
    %v402 = vld [vmem:[#allocation7 + $0x1a0] sm:$0xff]
    %v403 = vld [vmem:[#allocation7 + $0x1a8] sm:$0xff]
    %v404 = vld [vmem:[#allocation7 + $0x1b0] sm:$0xff]
    %v405 = vld [vmem:[#allocation7 + $0x1b8] sm:$0xff]
    %v406 = vld [vmem:[#allocation7 + $0x1c0] sm:$0xff]
    %v407 = vld [vmem:[#allocation7 + $0x1c8] sm:$0xff]
    %v408 = vld [vmem:[#allocation7 + $0x1d0] sm:$0xff]
    %v409 = vld [vmem:[#allocation7 + $0x1d8] sm:$0xff]
    %v410 = vld [vmem:[#allocation7 + $0x1e0] sm:$0xff]
    %v411 = vld [vmem:[#allocation7 + $0x1e8] sm:$0xff]
    %v412 = vld [vmem:[#allocation7 + $0x1f0] sm:$0xff]
    %v413 = vld [vmem:[#allocation7 + $0x1f8] sm:$0xff]
    %v414 = vld [vmem:[#allocation7 + $0x200] sm:$0xff]
    %v415 = vld [vmem:[#allocation7 + $0x208] sm:$0xff]
    %v416 = vld [vmem:[#allocation7 + $0x210] sm:$0xff]
    %v417 = vld [vmem:[#allocation7 + $0x218] sm:$0xff]
    %v418 = vld [vmem:[#allocation7 + $0x220] sm:$0xff]
    %v419 = vld [vmem:[#allocation7 + $0x228] sm:$0xff]
    %v420 = vld [vmem:[#allocation7 + $0x230] sm:$0xff]
    %v421 = vld [vmem:[#allocation7 + $0x238] sm:$0xff]
    %v422 = vld [vmem:[#allocation7 + $0x240] sm:$0xff]
    %v423 = vld [vmem:[#allocation7 + $0x248] sm:$0xff]
    %v424 = vld [vmem:[#allocation7 + $0x250] sm:$0xff]
    %v425 = vld [vmem:[#allocation7 + $0x258] sm:$0xff]
    %v426 = vld [vmem:[#allocation7 + $0x260] sm:$0xff]
    %v427 = vld [vmem:[#allocation7 + $0x268] sm:$0xff]
    %v428 = vld [vmem:[#allocation7 + $0x270] sm:$0xff]
    %v429 = vld [vmem:[#allocation7 + $0x278] sm:$0xff]
    %v430 = vld [vmem:[#allocation7 + $0x280] sm:$0xff]
    %v431 = vld [vmem:[#allocation7 + $0x288] sm:$0xff]
    %v432 = vld [vmem:[#allocation7 + $0x290] sm:$0xff]
    %v433 = vld [vmem:[#allocation7 + $0x298] sm:$0xff]
    %v434 = vld [vmem:[#allocation7 + $0x2a0] sm:$0xff]
    %v435 = vld [vmem:[#allocation7 + $0x2a8] sm:$0xff]
    %v436 = vld [vmem:[#allocation7 + $0x2b0] sm:$0xff]
    %v437 = vld [vmem:[#allocation7 + $0x2b8] sm:$0xff]
    %v438 = vld [vmem:[#allocation7 + $0x2c0] sm:$0xff]
    %v439 = vld [vmem:[#allocation7 + $0x2c8] sm:$0xff]
    %v440 = vld [vmem:[#allocation7 + $0x2d0] sm:$0xff]
    %v441 = vld [vmem:[#allocation7 + $0x2d8] sm:$0xff]
    %v442 = vld [vmem:[#allocation7 + $0x2e0] sm:$0xff]
    %v443 = vld [vmem:[#allocation7 + $0x2e8] sm:$0xff]
    %v444 = vld [vmem:[#allocation7 + $0x2f0] sm:$0xff]
    %v445 = vld [vmem:[#allocation7 + $0x2f8] sm:$0xff]
    %v446 = vld [vmem:[#allocation7 + $0x300] sm:$0xff]
    %v447 = vld [vmem:[#allocation7 + $0x308] sm:$0xff]
    %v448 = vld [vmem:[#allocation7 + $0x310] sm:$0xff]
    %v449 = vld [vmem:[#allocation7 + $0x318] sm:$0xff]
    %v450 = vld [vmem:[#allocation7 + $0x320] sm:$0xff]
    %v451 = vld [vmem:[#allocation7 + $0x328] sm:$0xff]
    %v452 = vld [vmem:[#allocation7 + $0x330] sm:$0xff]
    %v453 = vld [vmem:[#allocation7 + $0x338] sm:$0xff]
    %v454 = vld [vmem:[#allocation7 + $0x340] sm:$0xff]
    %v455 = vld [vmem:[#allocation7 + $0x348] sm:$0xff]
    %v456 = vld [vmem:[#allocation7 + $0x350] sm:$0xff]
    %v457 = vld [vmem:[#allocation7 + $0x358] sm:$0xff]
    %v458 = vld [vmem:[#allocation7 + $0x360] sm:$0xff]
    %v459 = vld [vmem:[#allocation7 + $0x368] sm:$0xff]
    %v460 = vld [vmem:[#allocation7 + $0x370] sm:$0xff]
    %v461 = vld [vmem:[#allocation7 + $0x378] sm:$0xff]
    %v462 = vld [vmem:[#allocation7 + $0x380] sm:$0xff]
    %v463 = vld [vmem:[#allocation7 + $0x388] sm:$0xff]
    %v464 = vld [vmem:[#allocation7 + $0x390] sm:$0xff]
    %v465 = vld [vmem:[#allocation7 + $0x398] sm:$0xff]
    %v466 = vld [vmem:[#allocation7 + $0x3a0] sm:$0xff]
    %v467 = vld [vmem:[#allocation7 + $0x3a8] sm:$0xff]
    %v468 = vld [vmem:[#allocation7 + $0x3b0] sm:$0xff]
    %v469 = vld [vmem:[#allocation7 + $0x3b8] sm:$0xff]
    %v470 = vld [vmem:[#allocation7 + $0x3c0] sm:$0xff]
    %v471 = vld [vmem:[#allocation7 + $0x3c8] sm:$0xff]
    %v472 = vld [vmem:[#allocation7 + $0x3d0] sm:$0xff]
    %v473 = vld [vmem:[#allocation7 + $0x3d8] sm:$0xff]
    %v474 = vld [vmem:[#allocation7 + $0x3e0] sm:$0xff]
    %v475 = vld [vmem:[#allocation7 + $0x3e8] sm:$0xff]
    %v476 = vld [vmem:[#allocation7 + $0x3f0] sm:$0xff]
    %v477 = vld [vmem:[#allocation7 + $0x3f8] sm:$0xff]
    %v478 = vld [vmem:[#allocation7 + $0x400] sm:$0xff]
    %v479 = vld [vmem:[#allocation7 + $0x408] sm:$0xff]
    %v480 = vld [vmem:[#allocation7 + $0x410] sm:$0xff]
    %v481 = vld [vmem:[#allocation7 + $0x418] sm:$0xff]
    %v482 = vld [vmem:[#allocation7 + $0x420] sm:$0xff]
    %v483 = vld [vmem:[#allocation7 + $0x428] sm:$0xff]
    %v484 = vld [vmem:[#allocation7 + $0x430] sm:$0xff]
    %v485 = vld [vmem:[#allocation7 + $0x438] sm:$0xff]
    %v486 = vld [vmem:[#allocation7 + $0x440] sm:$0xff]
    %v487 = vld [vmem:[#allocation7 + $0x448] sm:$0xff]
    %v488 = vld [vmem:[#allocation7 + $0x450] sm:$0xff]
    %v489 = vld [vmem:[#allocation7 + $0x458] sm:$0xff]
    %v490 = vld [vmem:[#allocation7 + $0x460] sm:$0xff]
    %v491 = vld [vmem:[#allocation7 + $0x468] sm:$0xff]
    %v492 = vld [vmem:[#allocation7 + $0x470] sm:$0xff]
    %v493 = vld [vmem:[#allocation7 + $0x478] sm:$0xff]
    %v494 = vld [vmem:[#allocation7 + $0x480] sm:$0xff]
    %v495 = vld [vmem:[#allocation7 + $0x488] sm:$0xff]
    %v496 = vld [vmem:[#allocation7 + $0x490] sm:$0xff]
    %v497 = vld [vmem:[#allocation7 + $0x498] sm:$0xff]
    %v498 = vld [vmem:[#allocation7 + $0x4a0] sm:$0xff]
    %v499 = vld [vmem:[#allocation7 + $0x4a8] sm:$0xff]
    %v500 = vld [vmem:[#allocation7 + $0x4b0] sm:$0xff]
    %v501 = vld [vmem:[#allocation7 + $0x4b8] sm:$0xff]
    %v502 = vld [vmem:[#allocation7 + $0x4c0] sm:$0xff]
    %v503 = vld [vmem:[#allocation7 + $0x4c8] sm:$0xff]
    %v504 = vld [vmem:[#allocation7 + $0x4d0] sm:$0xff]
    %v505 = vld [vmem:[#allocation7 + $0x4d8] sm:$0xff]
    %v506 = vld [vmem:[#allocation7 + $0x4e0] sm:$0xff]
    %v507 = vld [vmem:[#allocation7 + $0x4e8] sm:$0xff]
    %v508 = vld [vmem:[#allocation7 + $0x4f0] sm:$0xff]
    %v509 = vld [vmem:[#allocation7 + $0x4f8] sm:$0xff]
    %v510 = vld [vmem:[#allocation7 + $0x500] sm:$0xff]
    %v511 = vld [vmem:[#allocation7 + $0x508] sm:$0xff]
    %v512 = vld [vmem:[#allocation7 + $0x510] sm:$0xff]
    %v513 = vld [vmem:[#allocation7 + $0x518] sm:$0xff]
    %v514 = vld [vmem:[#allocation7 + $0x520] sm:$0xff]
    %v515 = vld [vmem:[#allocation7 + $0x528] sm:$0xff]
    %v516 = vld [vmem:[#allocation7 + $0x530] sm:$0xff]
    %v517 = vld [vmem:[#allocation7 + $0x538] sm:$0xff]
    %v518 = vld [vmem:[#allocation7 + $0x540] sm:$0xff]
    %v519 = vld [vmem:[#allocation7 + $0x548] sm:$0xff]
    %v520 = vld [vmem:[#allocation7 + $0x550] sm:$0xff]
    %v521 = vld [vmem:[#allocation7 + $0x558] sm:$0xff]
    %v522 = vld [vmem:[#allocation7 + $0x560] sm:$0xff]
    %v523 = vld [vmem:[#allocation7 + $0x568] sm:$0xff]
    %v524 = vld [vmem:[#allocation7 + $0x570] sm:$0xff]
    %v525 = vld [vmem:[#allocation7 + $0x578] sm:$0xff]
    %v526 = vld [vmem:[#allocation7 + $0x580] sm:$0xff]
    %v527 = vld [vmem:[#allocation7 + $0x588] sm:$0xff]
    %v528 = vld [vmem:[#allocation7 + $0x590] sm:$0xff]
    %v529 = vld [vmem:[#allocation7 + $0x598] sm:$0xff]
    %v530 = vld [vmem:[#allocation7 + $0x5a0] sm:$0xff]
    %v531 = vld [vmem:[#allocation7 + $0x5a8] sm:$0xff]
    %v532 = vld [vmem:[#allocation7 + $0x5b0] sm:$0xff]
    %v533 = vld [vmem:[#allocation7 + $0x5b8] sm:$0xff]
    %v534 = vld [vmem:[#allocation7 + $0x5c0] sm:$0xff]
    %v535 = vld [vmem:[#allocation7 + $0x5c8] sm:$0xff]
    %v536 = vld [vmem:[#allocation7 + $0x5d0] sm:$0xff]
    %v537 = vld [vmem:[#allocation7 + $0x5d8] sm:$0xff]
    %v538 = vld [vmem:[#allocation7 + $0x5e0] sm:$0xff]
    %v539 = vld [vmem:[#allocation7 + $0x5e8] sm:$0xff]
    %v540 = vld [vmem:[#allocation7 + $0x5f0] sm:$0xff]
    %v541 = vld [vmem:[#allocation7 + $0x5f8] sm:$0xff]
    %v542 = vld [vmem:[#allocation7 + $0x600] sm:$0xff]
    %v543 = vld [vmem:[#allocation7 + $0x608] sm:$0xff]
    %v544 = vld [vmem:[#allocation7 + $0x610] sm:$0xff]
    %v545 = vld [vmem:[#allocation7 + $0x618] sm:$0xff]
    %v546 = vld [vmem:[#allocation7 + $0x620] sm:$0xff]
    %v547 = vld [vmem:[#allocation7 + $0x628] sm:$0xff]
    %v548 = vld [vmem:[#allocation7 + $0x630] sm:$0xff]
    %v549 = vld [vmem:[#allocation7 + $0x638] sm:$0xff]
    %v550 = vld [vmem:[#allocation7 + $0x640] sm:$0xff]
    %v551 = vld [vmem:[#allocation7 + $0x648] sm:$0xff]
    %v552 = vld [vmem:[#allocation7 + $0x650] sm:$0xff]
    %v553 = vld [vmem:[#allocation7 + $0x658] sm:$0xff]
    %v554 = vld [vmem:[#allocation7 + $0x660] sm:$0xff]
    %v555 = vld [vmem:[#allocation7 + $0x668] sm:$0xff]
    %v556 = vld [vmem:[#allocation7 + $0x670] sm:$0xff]
    %v557 = vld [vmem:[#allocation7 + $0x678] sm:$0xff]
    %v558 = vld [vmem:[#allocation7 + $0x680] sm:$0xff]
    %v559 = vld [vmem:[#allocation7 + $0x688] sm:$0xff]
    %v560 = vld [vmem:[#allocation7 + $0x690] sm:$0xff]
    %v561 = vld [vmem:[#allocation7 + $0x698] sm:$0xff]
    %v562 = vld [vmem:[#allocation7 + $0x6a0] sm:$0xff]
    %v563 = vld [vmem:[#allocation7 + $0x6a8] sm:$0xff]
    %v564 = vld [vmem:[#allocation7 + $0x6b0] sm:$0xff]
    %v565 = vld [vmem:[#allocation7 + $0x6b8] sm:$0xff]
    %v566 = vld [vmem:[#allocation7 + $0x6c0] sm:$0xff]
    %v567 = vld [vmem:[#allocation7 + $0x6c8] sm:$0xff]
    %v568 = vld [vmem:[#allocation7 + $0x6d0] sm:$0xff]
    %v569 = vld [vmem:[#allocation7 + $0x6d8] sm:$0xff]
    %v570 = vld [vmem:[#allocation7 + $0x6e0] sm:$0xff]
    %v571 = vld [vmem:[#allocation7 + $0x6e8] sm:$0xff]
    %v572 = vld [vmem:[#allocation7 + $0x6f0] sm:$0xff]
    %v573 = vld [vmem:[#allocation7 + $0x6f8] sm:$0xff]
    %v574 = vld [vmem:[#allocation7 + $0x700] sm:$0xff]
    %v575 = vld [vmem:[#allocation7 + $0x708] sm:$0xff]
    %v576 = vld [vmem:[#allocation7 + $0x710] sm:$0xff]
    %v577 = vld [vmem:[#allocation7 + $0x718] sm:$0xff]
    %v578 = vld [vmem:[#allocation7 + $0x720] sm:$0xff]
    %v579 = vld [vmem:[#allocation7 + $0x728] sm:$0xff]
    %v580 = vld [vmem:[#allocation7 + $0x730] sm:$0xff]
    %v581 = vld [vmem:[#allocation7 + $0x738] sm:$0xff]
    %v582 = vld [vmem:[#allocation7 + $0x740] sm:$0xff]
    %v583 = vld [vmem:[#allocation7 + $0x748] sm:$0xff]
    %v584 = vld [vmem:[#allocation7 + $0x750] sm:$0xff]
    %v585 = vld [vmem:[#allocation7 + $0x758] sm:$0xff]
    %v586 = vld [vmem:[#allocation7 + $0x760] sm:$0xff]
    %v587 = vld [vmem:[#allocation7 + $0x768] sm:$0xff]
    %v588 = vld [vmem:[#allocation7 + $0x770] sm:$0xff]
    %v589 = vld [vmem:[#allocation7 + $0x778] sm:$0xff]
    %v590 = vld [vmem:[#allocation7 + $0x780] sm:$0xff]
    %v591 = vld [vmem:[#allocation7 + $0x788] sm:$0xff]
    %v592 = vld [vmem:[#allocation7 + $0x790] sm:$0xff]
    %v593 = vld [vmem:[#allocation7 + $0x798] sm:$0xff]
    %v594 = vld [vmem:[#allocation7 + $0x7a0] sm:$0xff]
    %v595 = vld [vmem:[#allocation7 + $0x7a8] sm:$0xff]
    %v596 = vld [vmem:[#allocation7 + $0x7b0] sm:$0xff]
    %v597 = vld [vmem:[#allocation7 + $0x7b8] sm:$0xff]
    %v598 = vld [vmem:[#allocation7 + $0x7c0] sm:$0xff]
    %v599 = vld [vmem:[#allocation7 + $0x7c8] sm:$0xff]
    %v600 = vld [vmem:[#allocation7 + $0x7d0] sm:$0xff]
    %v601 = vld [vmem:[#allocation7 + $0x7d8] sm:$0xff]
    %v602 = vld [vmem:[#allocation7 + $0x7e0] sm:$0xff]
    %v603 = vld [vmem:[#allocation7 + $0x7e8] sm:$0xff]
    %v604 = vld [vmem:[#allocation7 + $0x7f0] sm:$0xff]
    %v605 = vld [vmem:[#allocation7 + $0x7f8] sm:$0xff]
    %v606 = vld [vmem:[#allocation7 + $0x800] sm:$0xff]
    %v607 = vld [vmem:[#allocation7 + $0x808] sm:$0xff]
    %v608 = vld [vmem:[#allocation7 + $0x810] sm:$0xff]
    %v609 = vld [vmem:[#allocation7 + $0x818] sm:$0xff]
    %v610 = vld [vmem:[#allocation7 + $0x820] sm:$0xff]
    %v611 = vld [vmem:[#allocation7 + $0x828] sm:$0xff]
    %v612 = vld [vmem:[#allocation7 + $0x830] sm:$0xff]
    %v613 = vld [vmem:[#allocation7 + $0x838] sm:$0xff]
    %v614 = vld [vmem:[#allocation7 + $0x840] sm:$0xff]
    %v615 = vld [vmem:[#allocation7 + $0x848] sm:$0xff]
    %v616 = vld [vmem:[#allocation7 + $0x850] sm:$0xff]
    %v617 = vld [vmem:[#allocation7 + $0x858] sm:$0xff]
    %v618 = vld [vmem:[#allocation7 + $0x860] sm:$0xff]
    %v619 = vld [vmem:[#allocation7 + $0x868] sm:$0xff]
    %v620 = vld [vmem:[#allocation7 + $0x870] sm:$0xff]
    %v621 = vld [vmem:[#allocation7 + $0x878] sm:$0xff]
    %v622 = vld [vmem:[#allocation7 + $0x880] sm:$0xff]
    %v623 = vld [vmem:[#allocation7 + $0x888] sm:$0xff]
    %v624 = vld [vmem:[#allocation7 + $0x890] sm:$0xff]
    %v625 = vld [vmem:[#allocation7 + $0x898] sm:$0xff]
    %v626 = vld [vmem:[#allocation7 + $0x8a0] sm:$0xff]
    %v627 = vld [vmem:[#allocation7 + $0x8a8] sm:$0xff]
    %v628 = vld [vmem:[#allocation7 + $0x8b0] sm:$0xff]
    %v629 = vld [vmem:[#allocation7 + $0x8b8] sm:$0xff]
    %v630 = vld [vmem:[#allocation7 + $0x8c0] sm:$0xff]
    %v631 = vld [vmem:[#allocation7 + $0x8c8] sm:$0xff]
    %v632 = vld [vmem:[#allocation7 + $0x8d0] sm:$0xff]
    %v633 = vld [vmem:[#allocation7 + $0x8d8] sm:$0xff]
    %v634 = vld [vmem:[#allocation7 + $0x8e0] sm:$0xff]
    %v635 = vld [vmem:[#allocation7 + $0x8e8] sm:$0xff]
    %v636 = vld [vmem:[#allocation7 + $0x8f0] sm:$0xff]
    %v637 = vld [vmem:[#allocation7 + $0x8f8] sm:$0xff]
    %v638 = vld [vmem:[#allocation7 + $0x900] sm:$0xff]
    %v639 = vld [vmem:[#allocation7 + $0x908] sm:$0xff]
    %v640 = vld [vmem:[#allocation7 + $0x910] sm:$0xff]
    %v641 = vld [vmem:[#allocation7 + $0x918] sm:$0xff]
    %v642 = vld [vmem:[#allocation7 + $0x920] sm:$0xff]
    %v643 = vld [vmem:[#allocation7 + $0x928] sm:$0xff]
    %v644 = vld [vmem:[#allocation7 + $0x930] sm:$0xff]
    %v645 = vld [vmem:[#allocation7 + $0x938] sm:$0xff]
    %v646 = vld [vmem:[#allocation7 + $0x940] sm:$0xff]
    %v647 = vld [vmem:[#allocation7 + $0x948] sm:$0xff]
    %v648 = vld [vmem:[#allocation7 + $0x950] sm:$0xff]
    %v649 = vld [vmem:[#allocation7 + $0x958] sm:$0xff]
    %v650 = vld [vmem:[#allocation7 + $0x960] sm:$0xff]
    %v651 = vld [vmem:[#allocation7 + $0x968] sm:$0xff]
    %v652 = vld [vmem:[#allocation7 + $0x970] sm:$0xff]
    %v653 = vld [vmem:[#allocation7 + $0x978] sm:$0xff]
    %v654 = vld [vmem:[#allocation7 + $0x980] sm:$0xff]
    %v655 = vld [vmem:[#allocation7 + $0x988] sm:$0xff]
    %v656 = vld [vmem:[#allocation7 + $0x990] sm:$0xff]
    %v657 = vld [vmem:[#allocation7 + $0x998] sm:$0xff]
    %v658 = vld [vmem:[#allocation7 + $0x9a0] sm:$0xff]
    %v659 = vld [vmem:[#allocation7 + $0x9a8] sm:$0xff]
    %v660 = vld [vmem:[#allocation7 + $0x9b0] sm:$0xff]
    %v661 = vld [vmem:[#allocation7 + $0x9b8] sm:$0xff]
    %v662 = vld [vmem:[#allocation7 + $0x9c0] sm:$0xff]
    %v663 = vld [vmem:[#allocation7 + $0x9c8] sm:$0xff]
    %v664 = vld [vmem:[#allocation7 + $0x9d0] sm:$0xff]
    %v665 = vld [vmem:[#allocation7 + $0x9d8] sm:$0xff]
    %v666 = vld [vmem:[#allocation7 + $0x9e0] sm:$0xff]
    %v667 = vld [vmem:[#allocation7 + $0x9e8] sm:$0xff]
    %v668 = vld [vmem:[#allocation7 + $0x9f0] sm:$0xff]
    %v669 = vld [vmem:[#allocation7 + $0x9f8] sm:$0xff]
    %v670 = vld [vmem:[#allocation7 + $0xa00] sm:$0xff]
    %v671 = vld [vmem:[#allocation7 + $0xa08] sm:$0xff]
    %v672 = vld [vmem:[#allocation7 + $0xa10] sm:$0xff]
    %v673 = vld [vmem:[#allocation7 + $0xa18] sm:$0xff]
    %v674 = vld [vmem:[#allocation7 + $0xa20] sm:$0xff]
    %v675 = vld [vmem:[#allocation7 + $0xa28] sm:$0xff]
    %v676 = vld [vmem:[#allocation7 + $0xa30] sm:$0xff]
    %v677 = vld [vmem:[#allocation7 + $0xa38] sm:$0xff]
    %v678 = vld [vmem:[#allocation7 + $0xa40] sm:$0xff]
    %v679 = vld [vmem:[#allocation7 + $0xa48] sm:$0xff]
    %v680 = vld [vmem:[#allocation7 + $0xa50] sm:$0xff]
    %v681 = vld [vmem:[#allocation7 + $0xa58] sm:$0xff]
    %v682 = vld [vmem:[#allocation7 + $0xa60] sm:$0xff]
    %v683 = vld [vmem:[#allocation7 + $0xa68] sm:$0xff]
    %v684 = vld [vmem:[#allocation7 + $0xa70] sm:$0xff]
    %v685 = vld [vmem:[#allocation7 + $0xa78] sm:$0xff]
    %v686 = vld [vmem:[#allocation7 + $0xa80] sm:$0xff]
    %v687 = vld [vmem:[#allocation7 + $0xa88] sm:$0xff]
    %v688 = vld [vmem:[#allocation7 + $0xa90] sm:$0xff]
    %v689 = vld [vmem:[#allocation7 + $0xa98] sm:$0xff]
    %v690 = vld [vmem:[#allocation7 + $0xaa0] sm:$0xff]
    %v691 = vld [vmem:[#allocation7 + $0xaa8] sm:$0xff]
    %v692 = vld [vmem:[#allocation7 + $0xab0] sm:$0xff]
    %v693 = vld [vmem:[#allocation7 + $0xab8] sm:$0xff]
    %v694 = vld [vmem:[#allocation7 + $0xac0] sm:$0xff]
    %v695 = vld [vmem:[#allocation7 + $0xac8] sm:$0xff]
    %v696 = vld [vmem:[#allocation7 + $0xad0] sm:$0xff]
    %v697 = vld [vmem:[#allocation7 + $0xad8] sm:$0xff]
    %v698 = vld [vmem:[#allocation7 + $0xae0] sm:$0xff]
    %v699 = vld [vmem:[#allocation7 + $0xae8] sm:$0xff]
    %v700 = vld [vmem:[#allocation7 + $0xaf0] sm:$0xff]
    %v701 = vld [vmem:[#allocation7 + $0xaf8] sm:$0xff]
    %v702 = vld [vmem:[#allocation7 + $0xb00] sm:$0xff]
    %v703 = vld [vmem:[#allocation7 + $0xb08] sm:$0xff]
    %v704 = vld [vmem:[#allocation7 + $0xb10] sm:$0xff]
    %v705 = vld [vmem:[#allocation7 + $0xb18] sm:$0xff]
    %v706 = vld [vmem:[#allocation7 + $0xb20] sm:$0xff]
    %v707 = vld [vmem:[#allocation7 + $0xb28] sm:$0xff]
    %v708 = vld [vmem:[#allocation7 + $0xb30] sm:$0xff]
    %v709 = vld [vmem:[#allocation7 + $0xb38] sm:$0xff]
    %v710 = vld [vmem:[#allocation7 + $0xb40] sm:$0xff]
    %v711 = vld [vmem:[#allocation7 + $0xb48] sm:$0xff]
    %v712 = vld [vmem:[#allocation7 + $0xb50] sm:$0xff]
    %v713 = vld [vmem:[#allocation7 + $0xb58] sm:$0xff]
    %v714 = vld [vmem:[#allocation7 + $0xb60] sm:$0xff]
    %v715 = vld [vmem:[#allocation7 + $0xb68] sm:$0xff]
    %v716 = vld [vmem:[#allocation7 + $0xb70] sm:$0xff]
    %v717 = vld [vmem:[#allocation7 + $0xb78] sm:$0xff]
    %v718 = vld [vmem:[#allocation7 + $0xb80] sm:$0xff]
    %v719 = vld [vmem:[#allocation7 + $0xb88] sm:$0xff]
    %v720 = vld [vmem:[#allocation7 + $0xb90] sm:$0xff]
    %v721 = vld [vmem:[#allocation7 + $0xb98] sm:$0xff]
    %v722 = vld [vmem:[#allocation7 + $0xba0] sm:$0xff]
    %v723 = vld [vmem:[#allocation7 + $0xba8] sm:$0xff]
    %v724 = vld [vmem:[#allocation7 + $0xbb0] sm:$0xff]
    %v725 = vld [vmem:[#allocation7 + $0xbb8] sm:$0xff]
    %v726 = vld [vmem:[#allocation7 + $0xbc0] sm:$0xff]
    %v727 = vld [vmem:[#allocation7 + $0xbc8] sm:$0xff]
    %v728 = vld [vmem:[#allocation7 + $0xbd0] sm:$0xff]
    %v729 = vld [vmem:[#allocation7 + $0xbd8] sm:$0xff]
    %v730 = vld [vmem:[#allocation7 + $0xbe0] sm:$0xff]
    %v731 = vld [vmem:[#allocation7 + $0xbe8] sm:$0xff]
    %v732 = vld [vmem:[#allocation7 + $0xbf0] sm:$0xff]
    %v733 = vld [vmem:[#allocation7 + $0xbf8] sm:$0xff]
    %v734 = vld [vmem:[#allocation7 + $0xc00] sm:$0xff]
    %v735 = vld [vmem:[#allocation7 + $0xc08] sm:$0xff]
    %v736 = vld [vmem:[#allocation7 + $0xc10] sm:$0xff]
    %v737 = vld [vmem:[#allocation7 + $0xc18] sm:$0xff]
    %v738 = vld [vmem:[#allocation7 + $0xc20] sm:$0xff]
    %v739 = vld [vmem:[#allocation7 + $0xc28] sm:$0xff]
    %v740 = vld [vmem:[#allocation7 + $0xc30] sm:$0xff]
    %v741 = vld [vmem:[#allocation7 + $0xc38] sm:$0xff]
    %v742 = vld [vmem:[#allocation7 + $0xc40] sm:$0xff]
    %v743 = vld [vmem:[#allocation7 + $0xc48] sm:$0xff]
    %v744 = vld [vmem:[#allocation7 + $0xc50] sm:$0xff]
    %v745 = vld [vmem:[#allocation7 + $0xc58] sm:$0xff]
    %v746 = vld [vmem:[#allocation7 + $0xc60] sm:$0xff]
    %v747 = vld [vmem:[#allocation7 + $0xc68] sm:$0xff]
    %v748 = vld [vmem:[#allocation7 + $0xc70] sm:$0xff]
    %v749 = vld [vmem:[#allocation7 + $0xc78] sm:$0xff]
    %v750 = vld [vmem:[#allocation7 + $0xc80] sm:$0xff]
    %v751 = vld [vmem:[#allocation7 + $0xc88] sm:$0xff]
    %v752 = vld [vmem:[#allocation7 + $0xc90] sm:$0xff]
    %v753 = vld [vmem:[#allocation7 + $0xc98] sm:$0xff]
    %v754 = vld [vmem:[#allocation7 + $0xca0] sm:$0xff]
    %v755 = vld [vmem:[#allocation7 + $0xca8] sm:$0xff]
    %v756 = vld [vmem:[#allocation7 + $0xcb0] sm:$0xff]
    %v757 = vld [vmem:[#allocation7 + $0xcb8] sm:$0xff]
    %v758 = vld [vmem:[#allocation7 + $0xcc0] sm:$0xff]
    %v759 = vld [vmem:[#allocation7 + $0xcc8] sm:$0xff]
    %v760 = vld [vmem:[#allocation7 + $0xcd0] sm:$0xff]
    %v761 = vld [vmem:[#allocation7 + $0xcd8] sm:$0xff]
    %v762 = vld [vmem:[#allocation7 + $0xce0] sm:$0xff]
    %v763 = vld [vmem:[#allocation7 + $0xce8] sm:$0xff]
    %v764 = vld [vmem:[#allocation7 + $0xcf0] sm:$0xff]
    %v765 = vld [vmem:[#allocation7 + $0xcf8] sm:$0xff]
    %v766 = vld [vmem:[#allocation7 + $0xd00] sm:$0xff]
    %v767 = vld [vmem:[#allocation7 + $0xd08] sm:$0xff]
    %v768 = vld [vmem:[#allocation7 + $0xd10] sm:$0xff]
    %v769 = vld [vmem:[#allocation7 + $0xd18] sm:$0xff]
    %v770 = vld [vmem:[#allocation7 + $0xd20] sm:$0xff]
    %v771 = vld [vmem:[#allocation7 + $0xd28] sm:$0xff]
    %v772 = vld [vmem:[#allocation7 + $0xd30] sm:$0xff]
    %v773 = vld [vmem:[#allocation7 + $0xd38] sm:$0xff]
    %v774 = vld [vmem:[#allocation7 + $0xd40] sm:$0xff]
    %v775 = vld [vmem:[#allocation7 + $0xd48] sm:$0xff]
    %v776 = vld [vmem:[#allocation7 + $0xd50] sm:$0xff]
    %v777 = vld [vmem:[#allocation7 + $0xd58] sm:$0xff]
    %v778 = vld [vmem:[#allocation7 + $0xd60] sm:$0xff]
    %v779 = vld [vmem:[#allocation7 + $0xd68] sm:$0xff]
    %v780 = vld [vmem:[#allocation7 + $0xd70] sm:$0xff]
    %v781 = vld [vmem:[#allocation7 + $0xd78] sm:$0xff]
    %v782 = vld [vmem:[#allocation7 + $0xd80] sm:$0xff]
    %v783 = vld [vmem:[#allocation7 + $0xd88] sm:$0xff]
    %v784 = vld [vmem:[#allocation7 + $0xd90] sm:$0xff]
    %v785 = vld [vmem:[#allocation7 + $0xd98] sm:$0xff]
    %v786 = vld [vmem:[#allocation7 + $0xda0] sm:$0xff]
    %v787 = vld [vmem:[#allocation7 + $0xda8] sm:$0xff]
    %v788 = vld [vmem:[#allocation7 + $0xdb0] sm:$0xff]
    %v789 = vld [vmem:[#allocation7 + $0xdb8] sm:$0xff]
    %v790 = vld [vmem:[#allocation7 + $0xdc0] sm:$0xff]
    %v791 = vld [vmem:[#allocation7 + $0xdc8] sm:$0xff]
    %v792 = vld [vmem:[#allocation7 + $0xdd0] sm:$0xff]
    %v793 = vld [vmem:[#allocation7 + $0xdd8] sm:$0xff]
    %v794 = vld [vmem:[#allocation7 + $0xde0] sm:$0xff]
    %v795 = vld [vmem:[#allocation7 + $0xde8] sm:$0xff]
    %v796 = vld [vmem:[#allocation7 + $0xdf0] sm:$0xff]
    %v797 = vld [vmem:[#allocation7 + $0xdf8] sm:$0xff]
    %v798 = vld [vmem:[#allocation7 + $0xe00] sm:$0xff]
    %v799 = vld [vmem:[#allocation7 + $0xe08] sm:$0xff]
    %v800 = vld [vmem:[#allocation7 + $0xe10] sm:$0xff]
    %v801 = vld [vmem:[#allocation7 + $0xe18] sm:$0xff]
    %v802 = vld [vmem:[#allocation7 + $0xe20] sm:$0xff]
    %v803 = vld [vmem:[#allocation7 + $0xe28] sm:$0xff]
    %v804 = vld [vmem:[#allocation7 + $0xe30] sm:$0xff]
    %v805 = vld [vmem:[#allocation7 + $0xe38] sm:$0xff]
    %v806 = vld [vmem:[#allocation7 + $0xe40] sm:$0xff]
    %v807 = vld [vmem:[#allocation7 + $0xe48] sm:$0xff]
    %v808 = vld [vmem:[#allocation7 + $0xe50] sm:$0xff]
    %v809 = vld [vmem:[#allocation7 + $0xe58] sm:$0xff]
    %v810 = vld [vmem:[#allocation7 + $0xe60] sm:$0xff]
    %v811 = vld [vmem:[#allocation7 + $0xe68] sm:$0xff]
    %v812 = vld [vmem:[#allocation7 + $0xe70] sm:$0xff]
    %v813 = vld [vmem:[#allocation7 + $0xe78] sm:$0xff]
    %v814 = vld [vmem:[#allocation7 + $0xe80] sm:$0xff]
    %v815 = vld [vmem:[#allocation7 + $0xe88] sm:$0xff]
    %v816 = vld [vmem:[#allocation7 + $0xe90] sm:$0xff]
    %v817 = vld [vmem:[#allocation7 + $0xe98] sm:$0xff]
    %v818 = vld [vmem:[#allocation7 + $0xea0] sm:$0xff]
    %v819 = vld [vmem:[#allocation7 + $0xea8] sm:$0xff]
    %v820 = vld [vmem:[#allocation7 + $0xeb0] sm:$0xff]
    %v821 = vld [vmem:[#allocation7 + $0xeb8] sm:$0xff]
    %v822 = vld [vmem:[#allocation7 + $0xec0] sm:$0xff]
    %v823 = vld [vmem:[#allocation7 + $0xec8] sm:$0xff]
    %v824 = vld [vmem:[#allocation7 + $0xed0] sm:$0xff]
    %v825 = vld [vmem:[#allocation7 + $0xed8] sm:$0xff]
    %v826 = vld [vmem:[#allocation7 + $0xee0] sm:$0xff]
    %v827 = vld [vmem:[#allocation7 + $0xee8] sm:$0xff]
    %v828 = vld [vmem:[#allocation7 + $0xef0] sm:$0xff]
    %v829 = vld [vmem:[#allocation7 + $0xef8] sm:$0xff]
    %v830 = vld [vmem:[#allocation7 + $0xf00] sm:$0xff]
    %v831 = vld [vmem:[#allocation7 + $0xf08] sm:$0xff]
    %v832 = vld [vmem:[#allocation7 + $0xf10] sm:$0xff]
    %v833 = vld [vmem:[#allocation7 + $0xf18] sm:$0xff]
    %v834 = vld [vmem:[#allocation7 + $0xf20] sm:$0xff]
    %v835 = vld [vmem:[#allocation7 + $0xf28] sm:$0xff]
    %v836 = vld [vmem:[#allocation7 + $0xf30] sm:$0xff]
    %v837 = vld [vmem:[#allocation7 + $0xf38] sm:$0xff]
    %v838 = vld [vmem:[#allocation7 + $0xf40] sm:$0xff]
    %v839 = vld [vmem:[#allocation7 + $0xf48] sm:$0xff]
    %v840 = vld [vmem:[#allocation7 + $0xf50] sm:$0xff]
    %v841 = vld [vmem:[#allocation7 + $0xf58] sm:$0xff]
    %v842 = vld [vmem:[#allocation7 + $0xf60] sm:$0xff]
    %v843 = vld [vmem:[#allocation7 + $0xf68] sm:$0xff]
    %v844 = vld [vmem:[#allocation7 + $0xf70] sm:$0xff]
    %v845 = vld [vmem:[#allocation7 + $0xf78] sm:$0xff]
    %v846 = vld [vmem:[#allocation7 + $0xf80] sm:$0xff]
    %v847 = vld [vmem:[#allocation7 + $0xf88] sm:$0xff]
    %v848 = vld [vmem:[#allocation7 + $0xf90] sm:$0xff]
    %v849 = vld [vmem:[#allocation7 + $0xf98] sm:$0xff]
    %v850 = vld [vmem:[#allocation7 + $0xfa0] sm:$0xff]
    %v851 = vld [vmem:[#allocation7 + $0xfa8] sm:$0xff]
    %v852 = vld [vmem:[#allocation7 + $0xfb0] sm:$0xff]
    %v853 = vld [vmem:[#allocation7 + $0xfb8] sm:$0xff]
    %v854 = vld [vmem:[#allocation7 + $0xfc0] sm:$0xff]
    %v855 = vld [vmem:[#allocation7 + $0xfc8] sm:$0xff]
    %v856 = vld [vmem:[#allocation7 + $0xfd0] sm:$0xff]
    %v857 = vld [vmem:[#allocation7 + $0xfd8] sm:$0xff]
    %v858 = vld [vmem:[#allocation7 + $0xfe0] sm:$0xff]
    %v859 = vld [vmem:[#allocation7 + $0xfe8] sm:$0xff]
    %v860 = vld [vmem:[#allocation7 + $0xff0] sm:$0xff]
    %v861 = vld [vmem:[#allocation7 + $0xff8] sm:$0xff]
    %v862 = vld [vmem:[#allocation7 + $0x1000] sm:$0xff]
    %v863 = vld [vmem:[#allocation7 + $0x1008] sm:$0xff]
    %v864 = vld [vmem:[#allocation7 + $0x1010] sm:$0xff]
    %v865 = vld [vmem:[#allocation7 + $0x1018] sm:$0xff]
    %v866 = vld [vmem:[#allocation7 + $0x1020] sm:$0xff]
    %v867 = vld [vmem:[#allocation7 + $0x1028] sm:$0xff]
    %v868 = vld [vmem:[#allocation7 + $0x1030] sm:$0xff]
    %v869 = vld [vmem:[#allocation7 + $0x1038] sm:$0xff]
    %v870 = vld [vmem:[#allocation7 + $0x1040] sm:$0xff]
    %v871 = vld [vmem:[#allocation7 + $0x1048] sm:$0xff]
    %v872 = vld [vmem:[#allocation7 + $0x1050] sm:$0xff]
    %v873 = vld [vmem:[#allocation7 + $0x1058] sm:$0xff]
    %v874 = vld [vmem:[#allocation7 + $0x1060] sm:$0xff]
    %v875 = vld [vmem:[#allocation7 + $0x1068] sm:$0xff]
    %v876 = vld [vmem:[#allocation7 + $0x1070] sm:$0xff]
    %v877 = vld [vmem:[#allocation7 + $0x1078] sm:$0xff]
    %v878 = vld [vmem:[#allocation7 + $0x1080] sm:$0xff]
    %v879 = vld [vmem:[#allocation7 + $0x1088] sm:$0xff]
    %v880 = vld [vmem:[#allocation7 + $0x1090] sm:$0xff]
    %v881 = vld [vmem:[#allocation7 + $0x1098] sm:$0xff]
    %v882 = vld [vmem:[#allocation7 + $0x10a0] sm:$0xff]
    %v883 = vld [vmem:[#allocation7 + $0x10a8] sm:$0xff]
    %v884 = vld [vmem:[#allocation7 + $0x10b0] sm:$0xff]
    %v885 = vld [vmem:[#allocation7 + $0x10b8] sm:$0xff]
    %v886 = vld [vmem:[#allocation7 + $0x10c0] sm:$0xff]
    %v887 = vld [vmem:[#allocation7 + $0x10c8] sm:$0xff]
    %v888 = vld [vmem:[#allocation7 + $0x10d0] sm:$0xff]
    %v889 = vld [vmem:[#allocation7 + $0x10d8] sm:$0xff]
    %v890 = vld [vmem:[#allocation7 + $0x10e0] sm:$0xff]
    %v891 = vld [vmem:[#allocation7 + $0x10e8] sm:$0xff]
    %v892 = vld [vmem:[#allocation7 + $0x10f0] sm:$0xff]
    %v893 = vld [vmem:[#allocation7 + $0x10f8] sm:$0xff]
    %v894 = vld [vmem:[#allocation7 + $0x1100] sm:$0xff]
    %v895 = vld [vmem:[#allocation7 + $0x1108] sm:$0xff]
    %v896 = vld [vmem:[#allocation7 + $0x1110] sm:$0xff]
    %v897 = vld [vmem:[#allocation7 + $0x1118] sm:$0xff]
    %v898 = vld [vmem:[#allocation7 + $0x1120] sm:$0xff]
    %v899 = vld [vmem:[#allocation7 + $0x1128] sm:$0xff]
    %v900 = vld [vmem:[#allocation7 + $0x1130] sm:$0xff]
    %v901 = vld [vmem:[#allocation7 + $0x1138] sm:$0xff]
    %v902 = vld [vmem:[#allocation7 + $0x1140] sm:$0xff]
    %v903 = vld [vmem:[#allocation7 + $0x1148] sm:$0xff]
    %v904 = vld [vmem:[#allocation7 + $0x1150] sm:$0xff]
    %v905 = vld [vmem:[#allocation7 + $0x1158] sm:$0xff]
    %v906 = vld [vmem:[#allocation7 + $0x1160] sm:$0xff]
    %v907 = vld [vmem:[#allocation7 + $0x1168] sm:$0xff]
    %v908 = vld [vmem:[#allocation7 + $0x1170] sm:$0xff]
    %v909 = vld [vmem:[#allocation7 + $0x1178] sm:$0xff]
    %v910 = vld [vmem:[#allocation7 + $0x1180] sm:$0xff]
    %v911 = vld [vmem:[#allocation7 + $0x1188] sm:$0xff]
    %v912 = vld [vmem:[#allocation7 + $0x1190] sm:$0xff]
    %v913 = vld [vmem:[#allocation7 + $0x1198] sm:$0xff]
    %v914 = vld [vmem:[#allocation7 + $0x11a0] sm:$0xff]
    %v915 = vld [vmem:[#allocation7 + $0x11a8] sm:$0xff]
    %v916 = vld [vmem:[#allocation7 + $0x11b0] sm:$0xff]
    %v917 = vld [vmem:[#allocation7 + $0x11b8] sm:$0xff]
    %v918 = vld [vmem:[#allocation7 + $0x11c0] sm:$0xff]
    %v919 = vld [vmem:[#allocation7 + $0x11c8] sm:$0xff]
    %v920 = vld [vmem:[#allocation7 + $0x11d0] sm:$0xff]
    %v921 = vld [vmem:[#allocation7 + $0x11d8] sm:$0xff]
    %v922 = vld [vmem:[#allocation7 + $0x11e0] sm:$0xff]
    %v923 = vld [vmem:[#allocation7 + $0x11e8] sm:$0xff]
    %v924 = vld [vmem:[#allocation7 + $0x11f0] sm:$0xff]
    %v925 = vld [vmem:[#allocation7 + $0x11f8] sm:$0xff]
    %v926 = vld [vmem:[#allocation7 + $0x1200] sm:$0xff]
    %v927 = vld [vmem:[#allocation7 + $0x1208] sm:$0xff]
    %v928 = vld [vmem:[#allocation7 + $0x1210] sm:$0xff]
    %v929 = vld [vmem:[#allocation7 + $0x1218] sm:$0xff]
    %v930 = vld [vmem:[#allocation7 + $0x1220] sm:$0xff]
    %v931 = vld [vmem:[#allocation7 + $0x1228] sm:$0xff]
    %v932 = vld [vmem:[#allocation7 + $0x1230] sm:$0xff]
    %v933 = vld [vmem:[#allocation7 + $0x1238] sm:$0xff]
    %v934 = vld [vmem:[#allocation7 + $0x1240] sm:$0xff]
    %v935 = vld [vmem:[#allocation7 + $0x1248] sm:$0xff]
    %v936 = vld [vmem:[#allocation7 + $0x1250] sm:$0xff]
    %v937 = vld [vmem:[#allocation7 + $0x1258] sm:$0xff]
    %v938 = vld [vmem:[#allocation7 + $0x1260] sm:$0xff]
    %v939 = vld [vmem:[#allocation7 + $0x1268] sm:$0xff]
    %v940 = vld [vmem:[#allocation7 + $0x1270] sm:$0xff]
    %v941 = vld [vmem:[#allocation7 + $0x1278] sm:$0xff]
    %v942 = vld [vmem:[#allocation7 + $0x1280] sm:$0xff]
    %v943 = vld [vmem:[#allocation7 + $0x1288] sm:$0xff]
    %v944 = vld [vmem:[#allocation7 + $0x1290] sm:$0xff]
    %v945 = vld [vmem:[#allocation7 + $0x1298] sm:$0xff]
    %v946 = vld [vmem:[#allocation7 + $0x12a0] sm:$0xff]
    %v947 = vld [vmem:[#allocation7 + $0x12a8] sm:$0xff]
    %v948 = vld [vmem:[#allocation7 + $0x12b0] sm:$0xff]
    %v949 = vld [vmem:[#allocation7 + $0x12b8] sm:$0xff]
    %v950 = vld [vmem:[#allocation7 + $0x12c0] sm:$0xff]
    %v951 = vld [vmem:[#allocation7 + $0x12c8] sm:$0xff]
    %v952 = vld [vmem:[#allocation7 + $0x12d0] sm:$0xff]
    %v953 = vld [vmem:[#allocation7 + $0x12d8] sm:$0xff]
    %v954 = vld [vmem:[#allocation7 + $0x12e0] sm:$0xff]
    %v955 = vld [vmem:[#allocation7 + $0x12e8] sm:$0xff]
    %v956 = vld [vmem:[#allocation7 + $0x12f0] sm:$0xff]
    %v957 = vld [vmem:[#allocation7 + $0x12f8] sm:$0xff]
    %v958 = vld [vmem:[#allocation7 + $0x1300] sm:$0xff]
    %v959 = vld [vmem:[#allocation7 + $0x1308] sm:$0xff]
    %v960 = vld [vmem:[#allocation7 + $0x1310] sm:$0xff]
    %v961 = vld [vmem:[#allocation7 + $0x1318] sm:$0xff]
    %v962 = vld [vmem:[#allocation7 + $0x1320] sm:$0xff]
    %v963 = vld [vmem:[#allocation7 + $0x1328] sm:$0xff]
    %v964 = vld [vmem:[#allocation7 + $0x1330] sm:$0xff]
    %v965 = vld [vmem:[#allocation7 + $0x1338] sm:$0xff]
    %v966 = vld [vmem:[#allocation7 + $0x1340] sm:$0xff]
    %v967 = vld [vmem:[#allocation7 + $0x1348] sm:$0xff]
    %v968 = vld [vmem:[#allocation7 + $0x1350] sm:$0xff]
    %v969 = vld [vmem:[#allocation7 + $0x1358] sm:$0xff]
    %v970 = vld [vmem:[#allocation7 + $0x1360] sm:$0xff]
    %v971 = vld [vmem:[#allocation7 + $0x1368] sm:$0xff]
    %v972 = vld [vmem:[#allocation7 + $0x1370] sm:$0xff]
    %v973 = vld [vmem:[#allocation7 + $0x1378] sm:$0xff]
    %v974 = vld [vmem:[#allocation7 + $0x1380] sm:$0xff]
    %v975 = vld [vmem:[#allocation7 + $0x1388] sm:$0xff]
    %v976 = vld [vmem:[#allocation7 + $0x1390] sm:$0xff]
    %v977 = vld [vmem:[#allocation7 + $0x1398] sm:$0xff]
    %v978 = vld [vmem:[#allocation7 + $0x13a0] sm:$0xff]
    %v979 = vld [vmem:[#allocation7 + $0x13a8] sm:$0xff]
    %v980 = vld [vmem:[#allocation7 + $0x13b0] sm:$0xff]
    %v981 = vld [vmem:[#allocation7 + $0x13b8] sm:$0xff]
    %v982 = vld [vmem:[#allocation7 + $0x13c0] sm:$0xff]
    %v983 = vld [vmem:[#allocation7 + $0x13c8] sm:$0xff]
    %v984 = vld [vmem:[#allocation7 + $0x13d0] sm:$0xff]
    %v985 = vld [vmem:[#allocation7 + $0x13d8] sm:$0xff]
    %v986 = vld [vmem:[#allocation7 + $0x13e0] sm:$0xff]
    %v987 = vld [vmem:[#allocation7 + $0x13e8] sm:$0xff]
    %v988 = vld [vmem:[#allocation7 + $0x13f0] sm:$0xff]
    %v989 = vld [vmem:[#allocation7 + $0x13f8] sm:$0xff]
    %v990 = vld [vmem:[#allocation7 + $0x1400] sm:$0xff]
    %v991 = vld [vmem:[#allocation7 + $0x1408] sm:$0xff]
    %v992 = vld [vmem:[#allocation7 + $0x1410] sm:$0xff]
    %v993 = vld [vmem:[#allocation7 + $0x1418] sm:$0xff]
    %v994 = vld [vmem:[#allocation7 + $0x1420] sm:$0xff]
    %v995 = vld [vmem:[#allocation7 + $0x1428] sm:$0xff]
    %v996 = vld [vmem:[#allocation7 + $0x1430] sm:$0xff]
    %v997 = vld [vmem:[#allocation7 + $0x1438] sm:$0xff]
    %v998 = vld [vmem:[#allocation7 + $0x1440] sm:$0xff]
    %v999 = vld [vmem:[#allocation7 + $0x1448] sm:$0xff]
    %v1000 = vld [vmem:[#allocation7 + $0x1450] sm:$0xff]
    %v1001 = vld [vmem:[#allocation7 + $0x1458] sm:$0xff]
    %v1002 = vld [vmem:[#allocation7 + $0x1460] sm:$0xff]
    %v1003 = vld [vmem:[#allocation7 + $0x1468] sm:$0xff]
    %v1004 = vld [vmem:[#allocation7 + $0x1470] sm:$0xff]
    %v1005 = vld [vmem:[#allocation7 + $0x1478] sm:$0xff]
    %v1006 = vld [vmem:[#allocation7 + $0x1480] sm:$0xff]
    %v1007 = vld [vmem:[#allocation7 + $0x1488] sm:$0xff]
    %v1008 = vld [vmem:[#allocation7 + $0x1490] sm:$0xff]
    %v1009 = vld [vmem:[#allocation7 + $0x1498] sm:$0xff]
    %v1010 = vld [vmem:[#allocation7 + $0x14a0] sm:$0xff]
    %v1011 = vld [vmem:[#allocation7 + $0x14a8] sm:$0xff]
    %v1012 = vld [vmem:[#allocation7 + $0x14b0] sm:$0xff]
    %v1013 = vld [vmem:[#allocation7 + $0x14b8] sm:$0xff]
    %v1014 = vld [vmem:[#allocation7 + $0x14c0] sm:$0xff]
    %v1015 = vld [vmem:[#allocation7 + $0x14c8] sm:$0xff]
    %v1016 = vld [vmem:[#allocation7 + $0x14d0] sm:$0xff]
    %v1017 = vld [vmem:[#allocation7 + $0x14d8] sm:$0xff]
    %v1018 = vld [vmem:[#allocation7 + $0x14e0] sm:$0xff]
    %v1019 = vld [vmem:[#allocation7 + $0x14e8] sm:$0xff]
    %v1020 = vld [vmem:[#allocation7 + $0x14f0] sm:$0xff]
    %v1021 = vld [vmem:[#allocation7 + $0x14f8] sm:$0xff]
    %v1022 = vld [vmem:[#allocation7 + $0x1500] sm:$0xff]
    %v1023 = vld [vmem:[#allocation7 + $0x1508] sm:$0xff]
    %v1024 = vld [vmem:[#allocation7 + $0x1510] sm:$0xff]
    %v1025 = vld [vmem:[#allocation7 + $0x1518] sm:$0xff]
    %v1026 = vld [vmem:[#allocation7 + $0x1520] sm:$0xff]
    %v1027 = vld [vmem:[#allocation7 + $0x1528] sm:$0xff]
    %v1028 = vld [vmem:[#allocation7 + $0x1530] sm:$0xff]
    %v1029 = vld [vmem:[#allocation7 + $0x1538] sm:$0xff]
    %v1030 = vld [vmem:[#allocation7 + $0x1540] sm:$0xff]
    %v1031 = vld [vmem:[#allocation7 + $0x1548] sm:$0xff]
    %v1032 = vld [vmem:[#allocation7 + $0x1550] sm:$0xff]
    %v1033 = vld [vmem:[#allocation7 + $0x1558] sm:$0xff]
    %v1034 = vld [vmem:[#allocation7 + $0x1560] sm:$0xff]
    %v1035 = vld [vmem:[#allocation7 + $0x1568] sm:$0xff]
    %v1036 = vld [vmem:[#allocation7 + $0x1570] sm:$0xff]
    %v1037 = vld [vmem:[#allocation7 + $0x1578] sm:$0xff]
    %v1038 = vld [vmem:[#allocation7 + $0x1580] sm:$0xff]
    %v1039 = vld [vmem:[#allocation7 + $0x1588] sm:$0xff]
    %v1040 = vld [vmem:[#allocation7 + $0x1590] sm:$0xff]
    %v1041 = vld [vmem:[#allocation7 + $0x1598] sm:$0xff]
    %v1042 = vld [vmem:[#allocation7 + $0x15a0] sm:$0xff]
    %v1043 = vld [vmem:[#allocation7 + $0x15a8] sm:$0xff]
    %v1044 = vld [vmem:[#allocation7 + $0x15b0] sm:$0xff]
    %v1045 = vld [vmem:[#allocation7 + $0x15b8] sm:$0xff]
    %v1046 = vld [vmem:[#allocation7 + $0x15c0] sm:$0xff]
    %v1047 = vld [vmem:[#allocation7 + $0x15c8] sm:$0xff]
    %v1048 = vld [vmem:[#allocation7 + $0x15d0] sm:$0xff]
    %v1049 = vld [vmem:[#allocation7 + $0x15d8] sm:$0xff]
    %v1050 = vld [vmem:[#allocation7 + $0x15e0] sm:$0xff]
    %v1051 = vld [vmem:[#allocation7 + $0x15e8] sm:$0xff]
    %v1052 = vld [vmem:[#allocation7 + $0x15f0] sm:$0xff]
    %v1053 = vld [vmem:[#allocation7 + $0x15f8] sm:$0xff]
    %v1054 = vld [vmem:[#allocation7 + $0x1600] sm:$0xff]
    %v1055 = vld [vmem:[#allocation7 + $0x1608] sm:$0xff]
    %v1056 = vld [vmem:[#allocation7 + $0x1610] sm:$0xff]
    %v1057 = vld [vmem:[#allocation7 + $0x1618] sm:$0xff]
    %v1058 = vld [vmem:[#allocation7 + $0x1620] sm:$0xff]
    %v1059 = vld [vmem:[#allocation7 + $0x1628] sm:$0xff]
    %v1060 = vld [vmem:[#allocation7 + $0x1630] sm:$0xff]
    %v1061 = vld [vmem:[#allocation7 + $0x1638] sm:$0xff]
    %v1062 = vld [vmem:[#allocation7 + $0x1640] sm:$0xff]
    %v1063 = vld [vmem:[#allocation7 + $0x1648] sm:$0xff]
    %v1064 = vld [vmem:[#allocation7 + $0x1650] sm:$0xff]
    %v1065 = vld [vmem:[#allocation7 + $0x1658] sm:$0xff]
    %v1066 = vld [vmem:[#allocation7 + $0x1660] sm:$0xff]
    %v1067 = vld [vmem:[#allocation7 + $0x1668] sm:$0xff]
    %v1068 = vld [vmem:[#allocation7 + $0x1670] sm:$0xff]
    %v1069 = vld [vmem:[#allocation7 + $0x1678] sm:$0xff]
    %v1070 = vld [vmem:[#allocation7 + $0x1680] sm:$0xff]
    %v1071 = vld [vmem:[#allocation7 + $0x1688] sm:$0xff]
    %v1072 = vld [vmem:[#allocation7 + $0x1690] sm:$0xff]
    %v1073 = vld [vmem:[#allocation7 + $0x1698] sm:$0xff]
    %v1074 = vld [vmem:[#allocation7 + $0x16a0] sm:$0xff]
    %v1075 = vld [vmem:[#allocation7 + $0x16a8] sm:$0xff]
    %v1076 = vld [vmem:[#allocation7 + $0x16b0] sm:$0xff]
    %v1077 = vld [vmem:[#allocation7 + $0x16b8] sm:$0xff]
    %v1078 = vld [vmem:[#allocation7 + $0x16c0] sm:$0xff]
    %v1079 = vld [vmem:[#allocation7 + $0x16c8] sm:$0xff]
    %v1080 = vld [vmem:[#allocation7 + $0x16d0] sm:$0xff]
    %v1081 = vld [vmem:[#allocation7 + $0x16d8] sm:$0xff]
    %v1082 = vld [vmem:[#allocation7 + $0x16e0] sm:$0xff]
    %v1083 = vld [vmem:[#allocation7 + $0x16e8] sm:$0xff]
    %v1084 = vld [vmem:[#allocation7 + $0x16f0] sm:$0xff]
    %v1085 = vld [vmem:[#allocation7 + $0x16f8] sm:$0xff]
    %v1086 = vld [vmem:[#allocation7 + $0x1700] sm:$0xff]
    %v1087 = vld [vmem:[#allocation7 + $0x1708] sm:$0xff]
    %v1088 = vld [vmem:[#allocation7 + $0x1710] sm:$0xff]
    %v1089 = vld [vmem:[#allocation7 + $0x1718] sm:$0xff]
    %v1090 = vld [vmem:[#allocation7 + $0x1720] sm:$0xff]
    %v1091 = vld [vmem:[#allocation7 + $0x1728] sm:$0xff]
    %v1092 = vld [vmem:[#allocation7 + $0x1730] sm:$0xff]
    %v1093 = vld [vmem:[#allocation7 + $0x1738] sm:$0xff]
    %v1094 = vld [vmem:[#allocation7 + $0x1740] sm:$0xff]
    %v1095 = vld [vmem:[#allocation7 + $0x1748] sm:$0xff]
    %v1096 = vld [vmem:[#allocation7 + $0x1750] sm:$0xff]
    %v1097 = vld [vmem:[#allocation7 + $0x1758] sm:$0xff]
    %v1098 = vld [vmem:[#allocation7 + $0x1760] sm:$0xff]
    %v1099 = vld [vmem:[#allocation7 + $0x1768] sm:$0xff]
    %v1100 = vld [vmem:[#allocation7 + $0x1770] sm:$0xff]
    %v1101 = vld [vmem:[#allocation7 + $0x1778] sm:$0xff]
    %v1102 = vld [vmem:[#allocation7 + $0x1780] sm:$0xff]
    %v1103 = vld [vmem:[#allocation7 + $0x1788] sm:$0xff]
    %v1104 = vld [vmem:[#allocation7 + $0x1790] sm:$0xff]
    %v1105 = vld [vmem:[#allocation7 + $0x1798] sm:$0xff]
    %v1106 = vld [vmem:[#allocation7 + $0x17a0] sm:$0xff]
    %v1107 = vld [vmem:[#allocation7 + $0x17a8] sm:$0xff]
    %v1108 = vld [vmem:[#allocation7 + $0x17b0] sm:$0xff]
    %v1109 = vld [vmem:[#allocation7 + $0x17b8] sm:$0xff]
    %v1110 = vld [vmem:[#allocation7 + $0x17c0] sm:$0xff]
    %v1111 = vld [vmem:[#allocation7 + $0x17c8] sm:$0xff]
    %v1112 = vld [vmem:[#allocation7 + $0x17d0] sm:$0xff]
    %v1113 = vld [vmem:[#allocation7 + $0x17d8] sm:$0xff]
    %v1114 = vld [vmem:[#allocation7 + $0x17e0] sm:$0xff]
    %v1115 = vld [vmem:[#allocation7 + $0x17e8] sm:$0xff]
    %v1116 = vld [vmem:[#allocation7 + $0x17f0] sm:$0xff]
    %v1117 = vld [vmem:[#allocation7 + $0x17f8] sm:$0xff]
    %v1118 = vld [vmem:[#allocation7 + $0x1800] sm:$0xff]
    %v1119 = vld [vmem:[#allocation7 + $0x1808] sm:$0xff]
    %v1120 = vld [vmem:[#allocation7 + $0x1810] sm:$0xff]
    %v1121 = vld [vmem:[#allocation7 + $0x1818] sm:$0xff]
    %v1122 = vld [vmem:[#allocation7 + $0x1820] sm:$0xff]
    %v1123 = vld [vmem:[#allocation7 + $0x1828] sm:$0xff]
    %v1124 = vld [vmem:[#allocation7 + $0x1830] sm:$0xff]
    %v1125 = vld [vmem:[#allocation7 + $0x1838] sm:$0xff]
    %v1126 = vld [vmem:[#allocation7 + $0x1840] sm:$0xff]
    %v1127 = vld [vmem:[#allocation7 + $0x1848] sm:$0xff]
    %v1128 = vld [vmem:[#allocation7 + $0x1850] sm:$0xff]
    %v1129 = vld [vmem:[#allocation7 + $0x1858] sm:$0xff]
    %v1130 = vld [vmem:[#allocation7 + $0x1860] sm:$0xff]
    %v1131 = vld [vmem:[#allocation7 + $0x1868] sm:$0xff]
    %v1132 = vld [vmem:[#allocation7 + $0x1870] sm:$0xff]
    %v1133 = vld [vmem:[#allocation7 + $0x1878] sm:$0xff]
    %v1134 = vld [vmem:[#allocation7 + $0x1880] sm:$0xff]
    %v1135 = vld [vmem:[#allocation7 + $0x1888] sm:$0xff]
    %v1136 = vld [vmem:[#allocation7 + $0x1890] sm:$0xff]
    %v1137 = vld [vmem:[#allocation7 + $0x1898] sm:$0xff]
    %v1138 = vld [vmem:[#allocation7 + $0x18a0] sm:$0xff]
    %v1139 = vld [vmem:[#allocation7 + $0x18a8] sm:$0xff]
    %v1140 = vld [vmem:[#allocation7 + $0x18b0] sm:$0xff]
    %v1141 = vld [vmem:[#allocation7 + $0x18b8] sm:$0xff]
    %v1142 = vld [vmem:[#allocation7 + $0x18c0] sm:$0xff]
    %v1143 = vld [vmem:[#allocation7 + $0x18c8] sm:$0xff]
    %v1144 = vld [vmem:[#allocation7 + $0x18d0] sm:$0xff]
    %v1145 = vld [vmem:[#allocation7 + $0x18d8] sm:$0xff]
    %v1146 = vld [vmem:[#allocation7 + $0x18e0] sm:$0xff]
    %v1147 = vld [vmem:[#allocation7 + $0x18e8] sm:$0xff]
    %v1148 = vld [vmem:[#allocation7 + $0x18f0] sm:$0xff]
    %v1149 = vld [vmem:[#allocation7 + $0x18f8] sm:$0xff]
    %v1150 = vld [vmem:[#allocation7 + $0x1900] sm:$0xff]
    %v1151 = vld [vmem:[#allocation7 + $0x1908] sm:$0xff]
    %v1152 = vld [vmem:[#allocation7 + $0x1910] sm:$0xff]
    %v1153 = vld [vmem:[#allocation7 + $0x1918] sm:$0xff]
    %v1154 = vld [vmem:[#allocation7 + $0x1920] sm:$0xff]
    %v1155 = vld [vmem:[#allocation7 + $0x1928] sm:$0xff]
    %v1156 = vld [vmem:[#allocation7 + $0x1930] sm:$0xff]
    %v1157 = vld [vmem:[#allocation7 + $0x1938] sm:$0xff]
    %v1158 = vld [vmem:[#allocation7 + $0x1940] sm:$0xff]
    %v1159 = vld [vmem:[#allocation7 + $0x1948] sm:$0xff]
    %v1160 = vld [vmem:[#allocation7 + $0x1950] sm:$0xff]
    %v1161 = vld [vmem:[#allocation7 + $0x1958] sm:$0xff]
    %v1162 = vld [vmem:[#allocation7 + $0x1960] sm:$0xff]
    %v1163 = vld [vmem:[#allocation7 + $0x1968] sm:$0xff]
    %v1164 = vld [vmem:[#allocation7 + $0x1970] sm:$0xff]
    %v1165 = vld [vmem:[#allocation7 + $0x1978] sm:$0xff]
    %v1166 = vld [vmem:[#allocation7 + $0x1980] sm:$0xff]
    %v1167 = vld [vmem:[#allocation7 + $0x1988] sm:$0xff]
    %v1168 = vld [vmem:[#allocation7 + $0x1990] sm:$0xff]
    %v1169 = vld [vmem:[#allocation7 + $0x1998] sm:$0xff]
    %v1170 = vld [vmem:[#allocation7 + $0x19a0] sm:$0xff]
    %v1171 = vld [vmem:[#allocation7 + $0x19a8] sm:$0xff]
    %v1172 = vld [vmem:[#allocation7 + $0x19b0] sm:$0xff]
    %v1173 = vld [vmem:[#allocation7 + $0x19b8] sm:$0xff]
    %v1174 = vld [vmem:[#allocation7 + $0x19c0] sm:$0xff]
    %v1175 = vld [vmem:[#allocation7 + $0x19c8] sm:$0xff]
    %v1176 = vld [vmem:[#allocation7 + $0x19d0] sm:$0xff]
    %v1177 = vld [vmem:[#allocation7 + $0x19d8] sm:$0xff]
    %v1178 = vld [vmem:[#allocation7 + $0x19e0] sm:$0xff]
    %v1179 = vld [vmem:[#allocation7 + $0x19e8] sm:$0xff]
    %v1180 = vld [vmem:[#allocation7 + $0x19f0] sm:$0xff]
    %v1181 = vld [vmem:[#allocation7 + $0x19f8] sm:$0xff]
    %v1182 = vld [vmem:[#allocation7 + $0x1a00] sm:$0xff]
    %v1183 = vld [vmem:[#allocation7 + $0x1a08] sm:$0xff]
    %v1184 = vld [vmem:[#allocation7 + $0x1a10] sm:$0xff]
    %v1185 = vld [vmem:[#allocation7 + $0x1a18] sm:$0xff]
    %v1186 = vld [vmem:[#allocation7 + $0x1a20] sm:$0xff]
    %v1187 = vld [vmem:[#allocation7 + $0x1a28] sm:$0xff]
    %v1188 = vld [vmem:[#allocation7 + $0x1a30] sm:$0xff]
    %v1189 = vld [vmem:[#allocation7 + $0x1a38] sm:$0xff]
    %v1190 = vld [vmem:[#allocation7 + $0x1a40] sm:$0xff]
    %v1191 = vld [vmem:[#allocation7 + $0x1a48] sm:$0xff]
    %v1192 = vld [vmem:[#allocation7 + $0x1a50] sm:$0xff]
    %v1193 = vld [vmem:[#allocation7 + $0x1a58] sm:$0xff]
    %v1194 = vld [vmem:[#allocation7 + $0x1a60] sm:$0xff]
    %v1195 = vld [vmem:[#allocation7 + $0x1a68] sm:$0xff]
    %v1196 = vld [vmem:[#allocation7 + $0x1a70] sm:$0xff]
    %v1197 = vld [vmem:[#allocation7 + $0x1a78] sm:$0xff]
    %v1198 = vld [vmem:[#allocation7 + $0x1a80] sm:$0xff]
    %v1199 = vld [vmem:[#allocation7 + $0x1a88] sm:$0xff]
    %v1200 = vld [vmem:[#allocation7 + $0x1a90] sm:$0xff]
    %v1201 = vld [vmem:[#allocation7 + $0x1a98] sm:$0xff]
    %v1202 = vld [vmem:[#allocation7 + $0x1aa0] sm:$0xff]
    %v1203 = vld [vmem:[#allocation7 + $0x1aa8] sm:$0xff]
    %v1204 = vld [vmem:[#allocation7 + $0x1ab0] sm:$0xff]
    %v1205 = vld [vmem:[#allocation7 + $0x1ab8] sm:$0xff]
    %v1206 = vld [vmem:[#allocation7 + $0x1ac0] sm:$0xff]
    %v1207 = vld [vmem:[#allocation7 + $0x1ac8] sm:$0xff]
    %v1208 = vld [vmem:[#allocation7 + $0x1ad0] sm:$0xff]
    %v1209 = vld [vmem:[#allocation7 + $0x1ad8] sm:$0xff]
    %v1210 = vld [vmem:[#allocation7 + $0x1ae0] sm:$0xff]
    %v1211 = vld [vmem:[#allocation7 + $0x1ae8] sm:$0xff]
    %v1212 = vld [vmem:[#allocation7 + $0x1af0] sm:$0xff]
    %v1213 = vld [vmem:[#allocation7 + $0x1af8] sm:$0xff]
    %v1214 = vld [vmem:[#allocation7 + $0x1b00] sm:$0xff]
    %v1215 = vld [vmem:[#allocation7 + $0x1b08] sm:$0xff]
    %v1216 = vld [vmem:[#allocation7 + $0x1b10] sm:$0xff]
    %v1217 = vld [vmem:[#allocation7 + $0x1b18] sm:$0xff]
    %v1218 = vld [vmem:[#allocation7 + $0x1b20] sm:$0xff]
    %v1219 = vld [vmem:[#allocation7 + $0x1b28] sm:$0xff]
    %v1220 = vld [vmem:[#allocation7 + $0x1b30] sm:$0xff]
    %v1221 = vld [vmem:[#allocation7 + $0x1b38] sm:$0xff]
    %v1222 = vld [vmem:[#allocation7 + $0x1b40] sm:$0xff]
    %v1223 = vld [vmem:[#allocation7 + $0x1b48] sm:$0xff]
    %v1224 = vld [vmem:[#allocation7 + $0x1b50] sm:$0xff]
    %v1225 = vld [vmem:[#allocation7 + $0x1b58] sm:$0xff]
    %v1226 = vld [vmem:[#allocation7 + $0x1b60] sm:$0xff]
    %v1227 = vld [vmem:[#allocation7 + $0x1b68] sm:$0xff]
    %v1228 = vld [vmem:[#allocation7 + $0x1b70] sm:$0xff]
    %v1229 = vld [vmem:[#allocation7 + $0x1b78] sm:$0xff]
    %v1230 = vld [vmem:[#allocation7 + $0x1b80] sm:$0xff]
    %v1231 = vld [vmem:[#allocation7 + $0x1b88] sm:$0xff]
    %v1232 = vld [vmem:[#allocation7 + $0x1b90] sm:$0xff]
    %v1233 = vld [vmem:[#allocation7 + $0x1b98] sm:$0xff]
    %v1234 = vld [vmem:[#allocation7 + $0x1ba0] sm:$0xff]
    %v1235 = vld [vmem:[#allocation7 + $0x1ba8] sm:$0xff]
    %v1236 = vld [vmem:[#allocation7 + $0x1bb0] sm:$0xff]
    %v1237 = vld [vmem:[#allocation7 + $0x1bb8] sm:$0xff]
    %v1238 = vld [vmem:[#allocation7 + $0x1bc0] sm:$0xff]
    %v1239 = vld [vmem:[#allocation7 + $0x1bc8] sm:$0xff]
    %v1240 = vld [vmem:[#allocation7 + $0x1bd0] sm:$0xff]
    %v1241 = vld [vmem:[#allocation7 + $0x1bd8] sm:$0xff]
    %v1242 = vld [vmem:[#allocation7 + $0x1be0] sm:$0xff]
    %v1243 = vld [vmem:[#allocation7 + $0x1be8] sm:$0xff]
    %v1244 = vld [vmem:[#allocation7 + $0x1bf0] sm:$0xff]
    %v1245 = vld [vmem:[#allocation7 + $0x1bf8] sm:$0xff]
    %v1246 = vld [vmem:[#allocation7 + $0x1c00] sm:$0xff]
    %v1247 = vld [vmem:[#allocation7 + $0x1c08] sm:$0xff]
    %v1248 = vld [vmem:[#allocation7 + $0x1c10] sm:$0xff]
    %v1249 = vld [vmem:[#allocation7 + $0x1c18] sm:$0xff]
    %v1250 = vld [vmem:[#allocation7 + $0x1c20] sm:$0xff]
    %v1251 = vld [vmem:[#allocation7 + $0x1c28] sm:$0xff]
    %v1252 = vld [vmem:[#allocation7 + $0x1c30] sm:$0xff]
    %v1253 = vld [vmem:[#allocation7 + $0x1c38] sm:$0xff]
    %v1254 = vld [vmem:[#allocation7 + $0x1c40] sm:$0xff]
    %v1255 = vld [vmem:[#allocation7 + $0x1c48] sm:$0xff]
    %v1256 = vld [vmem:[#allocation7 + $0x1c50] sm:$0xff]
    %v1257 = vld [vmem:[#allocation7 + $0x1c58] sm:$0xff]
    %v1258 = vld [vmem:[#allocation7 + $0x1c60] sm:$0xff]
    %v1259 = vld [vmem:[#allocation7 + $0x1c68] sm:$0xff]
    %v1260 = vld [vmem:[#allocation7 + $0x1c70] sm:$0xff]
    %v1261 = vld [vmem:[#allocation7 + $0x1c78] sm:$0xff]
    %v1262 = vld [vmem:[#allocation7 + $0x1c80] sm:$0xff]
    %v1263 = vld [vmem:[#allocation7 + $0x1c88] sm:$0xff]
    %v1264 = vld [vmem:[#allocation7 + $0x1c90] sm:$0xff]
    %v1265 = vld [vmem:[#allocation7 + $0x1c98] sm:$0xff]
    %v1266 = vld [vmem:[#allocation7 + $0x1ca0] sm:$0xff]
    %v1267 = vld [vmem:[#allocation7 + $0x1ca8] sm:$0xff]
    %v1268 = vld [vmem:[#allocation7 + $0x1cb0] sm:$0xff]
    %v1269 = vld [vmem:[#allocation7 + $0x1cb8] sm:$0xff]
    %v1270 = vld [vmem:[#allocation7 + $0x1cc0] sm:$0xff]
    %v1271 = vld [vmem:[#allocation7 + $0x1cc8] sm:$0xff]
    %v1272 = vld [vmem:[#allocation7 + $0x1cd0] sm:$0xff]
    %v1273 = vld [vmem:[#allocation7 + $0x1cd8] sm:$0xff]
    %v1274 = vld [vmem:[#allocation7 + $0x1ce0] sm:$0xff]
    %v1275 = vld [vmem:[#allocation7 + $0x1ce8] sm:$0xff]
    %v1276 = vld [vmem:[#allocation7 + $0x1cf0] sm:$0xff]
    %v1277 = vld [vmem:[#allocation7 + $0x1cf8] sm:$0xff]
    %v1278 = vld [vmem:[#allocation7 + $0x1d00] sm:$0xff]
    %v1279 = vld [vmem:[#allocation7 + $0x1d08] sm:$0xff]
    %v1280 = vld [vmem:[#allocation7 + $0x1d10] sm:$0xff]
    %v1281 = vld [vmem:[#allocation7 + $0x1d18] sm:$0xff]
    %v1282 = vld [vmem:[#allocation7 + $0x1d20] sm:$0xff]
    %v1283 = vld [vmem:[#allocation7 + $0x1d28] sm:$0xff]
    %v1284 = vld [vmem:[#allocation7 + $0x1d30] sm:$0xff]
    %v1285 = vld [vmem:[#allocation7 + $0x1d38] sm:$0xff]
    %v1286 = vld [vmem:[#allocation7 + $0x1d40] sm:$0xff]
    %v1287 = vld [vmem:[#allocation7 + $0x1d48] sm:$0xff]
    %v1288 = vld [vmem:[#allocation7 + $0x1d50] sm:$0xff]
    %v1289 = vld [vmem:[#allocation7 + $0x1d58] sm:$0xff]
    %v1290 = vld [vmem:[#allocation7 + $0x1d60] sm:$0xff]
    %v1291 = vld [vmem:[#allocation7 + $0x1d68] sm:$0xff]
    %v1292 = vld [vmem:[#allocation7 + $0x1d70] sm:$0xff]
    %v1293 = vld [vmem:[#allocation7 + $0x1d78] sm:$0xff]
    %v1294 = vld [vmem:[#allocation7 + $0x1d80] sm:$0xff]
    %v1295 = vld [vmem:[#allocation7 + $0x1d88] sm:$0xff]
    %v1296 = vld [vmem:[#allocation7 + $0x1d90] sm:$0xff]
    %v1297 = vld [vmem:[#allocation7 + $0x1d98] sm:$0xff]
    %v1298 = vld [vmem:[#allocation7 + $0x1da0] sm:$0xff]
    %v1299 = vld [vmem:[#allocation7 + $0x1da8] sm:$0xff]
    %v1300 = vld [vmem:[#allocation7 + $0x1db0] sm:$0xff]
    %v1301 = vld [vmem:[#allocation7 + $0x1db8] sm:$0xff]
    %v1302 = vld [vmem:[#allocation7 + $0x1dc0] sm:$0xff]
    %v1303 = vld [vmem:[#allocation7 + $0x1dc8] sm:$0xff]
    %v1304 = vld [vmem:[#allocation7 + $0x1dd0] sm:$0xff]
    %v1305 = vld [vmem:[#allocation7 + $0x1dd8] sm:$0xff]
    %v1306 = vld [vmem:[#allocation7 + $0x1de0] sm:$0xff]
    %v1307 = vld [vmem:[#allocation7 + $0x1de8] sm:$0xff]
    %v1308 = vld [vmem:[#allocation7 + $0x1df0] sm:$0xff]
    %v1309 = vld [vmem:[#allocation7 + $0x1df8] sm:$0xff]
    %v1310 = vld [vmem:[#allocation7 + $0x1e00] sm:$0xff]
    %v1311 = vld [vmem:[#allocation7 + $0x1e08] sm:$0xff]
    %v1312 = vld [vmem:[#allocation7 + $0x1e10] sm:$0xff]
    %v1313 = vld [vmem:[#allocation7 + $0x1e18] sm:$0xff]
    %v1314 = vld [vmem:[#allocation7 + $0x1e20] sm:$0xff]
    %v1315 = vld [vmem:[#allocation7 + $0x1e28] sm:$0xff]
    %v1316 = vld [vmem:[#allocation7 + $0x1e30] sm:$0xff]
    %v1317 = vld [vmem:[#allocation7 + $0x1e38] sm:$0xff]
    %v1318 = vld [vmem:[#allocation7 + $0x1e40] sm:$0xff]
    %v1319 = vld [vmem:[#allocation7 + $0x1e48] sm:$0xff]
    %v1320 = vld [vmem:[#allocation7 + $0x1e50] sm:$0xff]
    %v1321 = vld [vmem:[#allocation7 + $0x1e58] sm:$0xff]
    %v1322 = vld [vmem:[#allocation7 + $0x1e60] sm:$0xff]
    %v1323 = vld [vmem:[#allocation7 + $0x1e68] sm:$0xff]
    %v1324 = vld [vmem:[#allocation7 + $0x1e70] sm:$0xff]
    %v1325 = vld [vmem:[#allocation7 + $0x1e78] sm:$0xff]
    %v1326 = vld [vmem:[#allocation7 + $0x1e80] sm:$0xff]
    %v1327 = vld [vmem:[#allocation7 + $0x1e88] sm:$0xff]
    %v1328 = vld [vmem:[#allocation7 + $0x1e90] sm:$0xff]
    %v1329 = vld [vmem:[#allocation7 + $0x1e98] sm:$0xff]
    %v1330 = vld [vmem:[#allocation7 + $0x1ea0] sm:$0xff]
    %v1331 = vld [vmem:[#allocation7 + $0x1ea8] sm:$0xff]
    %v1332 = vld [vmem:[#allocation7 + $0x1eb0] sm:$0xff]
    %v1333 = vld [vmem:[#allocation7 + $0x1eb8] sm:$0xff]
    %v1334 = vld [vmem:[#allocation7 + $0x1ec0] sm:$0xff]
    %v1335 = vld [vmem:[#allocation7 + $0x1ec8] sm:$0xff]
    %v1336 = vld [vmem:[#allocation7 + $0x1ed0] sm:$0xff]
    %v1337 = vld [vmem:[#allocation7 + $0x1ed8] sm:$0xff]
    %v1338 = vld [vmem:[#allocation7 + $0x1ee0] sm:$0xff]
    %v1339 = vld [vmem:[#allocation7 + $0x1ee8] sm:$0xff]
    %v1340 = vld [vmem:[#allocation7 + $0x1ef0] sm:$0xff]
    %v1341 = vld [vmem:[#allocation7 + $0x1ef8] sm:$0xff]
    %v1342 = vld [vmem:[#allocation7 + $0x1f00] sm:$0xff]
    %v1343 = vld [vmem:[#allocation7 + $0x1f08] sm:$0xff]
    %v1344 = vld [vmem:[#allocation7 + $0x1f10] sm:$0xff]
    %v1345 = vld [vmem:[#allocation7 + $0x1f18] sm:$0xff]
    %v1346 = vld [vmem:[#allocation7 + $0x1f20] sm:$0xff]
    %v1347 = vld [vmem:[#allocation7 + $0x1f28] sm:$0xff]
    %v1348 = vld [vmem:[#allocation7 + $0x1f30] sm:$0xff]
    %v1349 = vld [vmem:[#allocation7 + $0x1f38] sm:$0xff]
    %v1350 = vld [vmem:[#allocation7 + $0x1f40] sm:$0xff]
    %v1351 = vld [vmem:[#allocation7 + $0x1f48] sm:$0xff]
    %v1352 = vld [vmem:[#allocation7 + $0x1f50] sm:$0xff]
    %v1353 = vld [vmem:[#allocation7 + $0x1f58] sm:$0xff]
    %v1354 = vld [vmem:[#allocation7 + $0x1f60] sm:$0xff]
    %v1355 = vld [vmem:[#allocation7 + $0x1f68] sm:$0xff]
    %v1356 = vld [vmem:[#allocation7 + $0x1f70] sm:$0xff]
    %v1357 = vld [vmem:[#allocation7 + $0x1f78] sm:$0xff]
    %v1358 = vld [vmem:[#allocation7 + $0x1f80] sm:$0xff]
    %v1359 = vld [vmem:[#allocation7 + $0x1f88] sm:$0xff]
    %v1360 = vld [vmem:[#allocation7 + $0x1f90] sm:$0xff]
    %v1361 = vld [vmem:[#allocation7 + $0x1f98] sm:$0xff]
    %v1362 = vld [vmem:[#allocation7 + $0x1fa0] sm:$0xff]
    %v1363 = vld [vmem:[#allocation7 + $0x1fa8] sm:$0xff]
    %v1364 = vld [vmem:[#allocation7 + $0x1fb0] sm:$0xff]
    %v1365 = vld [vmem:[#allocation7 + $0x1fb8] sm:$0xff]
    %v1366 = vld [vmem:[#allocation7 + $0x1fc0] sm:$0xff]
    %v1367 = vld [vmem:[#allocation7 + $0x1fc8] sm:$0xff]
    %v1368 = vld [vmem:[#allocation7 + $0x1fd0] sm:$0xff]
    %v1369 = vld [vmem:[#allocation7 + $0x1fd8] sm:$0xff]
    %v1370 = vld [vmem:[#allocation7 + $0x1fe0] sm:$0xff]
    %v1371 = vld [vmem:[#allocation7 + $0x1fe8] sm:$0xff]
    %v1372 = vld [vmem:[#allocation7 + $0x1ff0] sm:$0xff]
    %v1373 = vld [vmem:[#allocation7 + $0x1ff8] sm:$0xff]
    %v1374 = vld [vmem:[#allocation8] sm:$0xff]
    %v1375 = vld [vmem:[#allocation8 + $0x8] sm:$0xff]
    %v1378 = vlaneseq
    %v1379 = vshrl.u32 %v1378, 7
    %v1380 = vsub.s32 0, %v1379
    %v1381 = vrot.slane %v1374, %v1380
    %v1382 = vlaneseq
    %v1383 = vshrl.u32 %v1382, 7
    %v1384 = vsub.s32 1, %v1383
    %v1385 = vrot.slane %v1374, %v1384
    %v1386 = vlaneseq
    %v1387 = vshrl.u32 %v1386, 7
    %v1388 = vsub.s32 2, %v1387
    %v1389 = vrot.slane %v1374, %v1388
    %v1390 = vlaneseq
    %v1391 = vshrl.u32 %v1390, 7
    %v1392 = vsub.s32 3, %v1391
    %v1393 = vrot.slane %v1374, %v1392
    %v1394 = vlaneseq
    %v1395 = vshrl.u32 %v1394, 7
    %v1396 = vsub.s32 4, %v1395
    %v1397 = vrot.slane %v1374, %v1396
    %v1398 = vlaneseq
    %v1399 = vshrl.u32 %v1398, 7
    %v1400 = vsub.s32 5, %v1399
    %v1401 = vrot.slane %v1374, %v1400
    %v1402 = vlaneseq
    %v1403 = vshrl.u32 %v1402, 7
    %v1404 = vsub.s32 6, %v1403
    %v1405 = vrot.slane %v1374, %v1404
    %v1406 = vlaneseq
    %v1407 = vshrl.u32 %v1406, 7
    %v1408 = vsub.s32 7, %v1407
    %v1409 = vrot.slane %v1374, %v1408
    %v1410 = vlaneseq
    %v1411 = vshrl.u32 %v1410, 7
    %v1412 = vsub.s32 0, %v1411
    %v1413 = vrot.slane %v1375, %v1412
    %v1414 = vlaneseq
    %v1415 = vshrl.u32 %v1414, 7
    %v1416 = vsub.s32 1, %v1415
    %v1417 = vrot.slane %v1375, %v1416
    %v1418 = vlaneseq
    %v1419 = vshrl.u32 %v1418, 7
    %v1420 = vsub.s32 2, %v1419
    %v1421 = vrot.slane %v1375, %v1420
    %v1422 = vlaneseq
    %v1423 = vshrl.u32 %v1422, 7
    %v1424 = vsub.s32 3, %v1423
    %v1425 = vrot.slane %v1375, %v1424
    %v1426 = vlaneseq
    %v1427 = vshrl.u32 %v1426, 7
    %v1428 = vsub.s32 4, %v1427
    %v1429 = vrot.slane %v1375, %v1428
    %v1430 = vlaneseq
    %v1431 = vshrl.u32 %v1430, 7
    %v1432 = vsub.s32 5, %v1431
    %v1433 = vrot.slane %v1375, %v1432
    %v1434 = vlaneseq
    %v1435 = vshrl.u32 %v1434, 7
    %v1436 = vsub.s32 6, %v1435
    %v1437 = vrot.slane %v1375, %v1436
    %v1438 = vlaneseq
    %v1439 = vshrl.u32 %v1438, 7
    %v1440 = vsub.s32 7, %v1439
    %v1441 = vrot.slane %v1375, %v1440
    %v2482 = vunpack.c.l.b16 %v350
    %v2483 = vunpack.c.h.b16 %v350
    %v2484 = vunpack.c.l.b16 %v351
    %v2485 = vunpack.c.h.b16 %v351
    %v2486 = vunpack.c.l.b16 %v352
    %v2487 = vunpack.c.h.b16 %v352
    %v2488 = vunpack.c.l.b16 %v353
    %v2489 = vunpack.c.h.b16 %v353
    %v2490 = vunpack.c.l.b16 %v354
    %v2491 = vunpack.c.h.b16 %v354
    %v2492 = vunpack.c.l.b16 %v355
    %v2493 = vunpack.c.h.b16 %v355
    %v2494 = vunpack.c.l.b16 %v356
    %v2495 = vunpack.c.h.b16 %v356
    %v2496 = vunpack.c.l.b16 %v357
    %v2497 = vunpack.c.h.b16 %v357
    %v2498 = vunpack.c.l.b16 %v358
    %v2499 = vunpack.c.h.b16 %v358
    %v2500 = vunpack.c.l.b16 %v359
    %v2501 = vunpack.c.h.b16 %v359
    %v2502 = vunpack.c.l.b16 %v360
    %v2503 = vunpack.c.h.b16 %v360
    %v2504 = vunpack.c.l.b16 %v361
    %v2505 = vunpack.c.h.b16 %v361
    %v2506 = vunpack.c.l.b16 %v362
    %v2507 = vunpack.c.h.b16 %v362
    %v2508 = vunpack.c.l.b16 %v363
    %v2509 = vunpack.c.h.b16 %v363
    %v2510 = vunpack.c.l.b16 %v364
    %v2511 = vunpack.c.h.b16 %v364
    %v2512 = vunpack.c.l.b16 %v365
    %v2513 = vunpack.c.h.b16 %v365
    %v2514 = vunpack.c.l.b16 %v366
    %v2515 = vunpack.c.h.b16 %v366
    %v2516 = vunpack.c.l.b16 %v367
    %v2517 = vunpack.c.h.b16 %v367
    %v2518 = vunpack.c.l.b16 %v368
    %v2519 = vunpack.c.h.b16 %v368
    %v2520 = vunpack.c.l.b16 %v369
    %v2521 = vunpack.c.h.b16 %v369
    %v2522 = vunpack.c.l.b16 %v370
    %v2523 = vunpack.c.h.b16 %v370
    %v2524 = vunpack.c.l.b16 %v371
    %v2525 = vunpack.c.h.b16 %v371
    %v2526 = vunpack.c.l.b16 %v372
    %v2527 = vunpack.c.h.b16 %v372
    %v2528 = vunpack.c.l.b16 %v373
    %v2529 = vunpack.c.h.b16 %v373
    %v2530 = vunpack.c.l.b16 %v374
    %v2531 = vunpack.c.h.b16 %v374
    %v2532 = vunpack.c.l.b16 %v375
    %v2533 = vunpack.c.h.b16 %v375
    %v2534 = vunpack.c.l.b16 %v376
    %v2535 = vunpack.c.h.b16 %v376
    %v2536 = vunpack.c.l.b16 %v377
    %v2537 = vunpack.c.h.b16 %v377
    %v2538 = vunpack.c.l.b16 %v378
    %v2539 = vunpack.c.h.b16 %v378
    %v2540 = vunpack.c.l.b16 %v379
    %v2541 = vunpack.c.h.b16 %v379
    %v2542 = vunpack.c.l.b16 %v380
    %v2543 = vunpack.c.h.b16 %v380
    %v2544 = vunpack.c.l.b16 %v381
    %v2545 = vunpack.c.h.b16 %v381
    %v2546 = vunpack.c.l.b16 %v382
    %v2547 = vunpack.c.h.b16 %v382
    %v2548 = vunpack.c.l.b16 %v383
    %v2549 = vunpack.c.h.b16 %v383
    %v2550 = vunpack.c.l.b16 %v384
    %v2551 = vunpack.c.h.b16 %v384
    %v2552 = vunpack.c.l.b16 %v385
    %v2553 = vunpack.c.h.b16 %v385
    %v2554 = vunpack.c.l.b16 %v386
    %v2555 = vunpack.c.h.b16 %v386
    %v2556 = vunpack.c.l.b16 %v387
    %v2557 = vunpack.c.h.b16 %v387
    %v2558 = vunpack.c.l.b16 %v388
    %v2559 = vunpack.c.h.b16 %v388
    %v2560 = vunpack.c.l.b16 %v389
    %v2561 = vunpack.c.h.b16 %v389
    %v2562 = vunpack.c.l.b16 %v390
    %v2563 = vunpack.c.h.b16 %v390
    %v2564 = vunpack.c.l.b16 %v391
    %v2565 = vunpack.c.h.b16 %v391
    %v2566 = vunpack.c.l.b16 %v392
    %v2567 = vunpack.c.h.b16 %v392
    %v2568 = vunpack.c.l.b16 %v393
    %v2569 = vunpack.c.h.b16 %v393
    %v2570 = vunpack.c.l.b16 %v394
    %v2571 = vunpack.c.h.b16 %v394
    %v2572 = vunpack.c.l.b16 %v395
    %v2573 = vunpack.c.h.b16 %v395
    %v2574 = vunpack.c.l.b16 %v396
    %v2575 = vunpack.c.h.b16 %v396
    %v2576 = vunpack.c.l.b16 %v397
    %v2577 = vunpack.c.h.b16 %v397
    %v2578 = vunpack.c.l.b16 %v398
    %v2579 = vunpack.c.h.b16 %v398
    %v2580 = vunpack.c.l.b16 %v399
    %v2581 = vunpack.c.h.b16 %v399
    %v2582 = vunpack.c.l.b16 %v400
    %v2583 = vunpack.c.h.b16 %v400
    %v2584 = vunpack.c.l.b16 %v401
    %v2585 = vunpack.c.h.b16 %v401
    %v2586 = vunpack.c.l.b16 %v402
    %v2587 = vunpack.c.h.b16 %v402
    %v2588 = vunpack.c.l.b16 %v403
    %v2589 = vunpack.c.h.b16 %v403
    %v2590 = vunpack.c.l.b16 %v404
    %v2591 = vunpack.c.h.b16 %v404
    %v2592 = vunpack.c.l.b16 %v405
    %v2593 = vunpack.c.h.b16 %v405
    %v2594 = vunpack.c.l.b16 %v406
    %v2595 = vunpack.c.h.b16 %v406
    %v2596 = vunpack.c.l.b16 %v407
    %v2597 = vunpack.c.h.b16 %v407
    %v2598 = vunpack.c.l.b16 %v408
    %v2599 = vunpack.c.h.b16 %v408
    %v2600 = vunpack.c.l.b16 %v409
    %v2601 = vunpack.c.h.b16 %v409
    %v2602 = vunpack.c.l.b16 %v410
    %v2603 = vunpack.c.h.b16 %v410
    %v2604 = vunpack.c.l.b16 %v411
    %v2605 = vunpack.c.h.b16 %v411
    %v2606 = vunpack.c.l.b16 %v412
    %v2607 = vunpack.c.h.b16 %v412
    %v2608 = vunpack.c.l.b16 %v413
    %v2609 = vunpack.c.h.b16 %v413
    %v2610 = vunpack.c.l.b16 %v414
    %v2611 = vunpack.c.h.b16 %v414
    %v2612 = vunpack.c.l.b16 %v415
    %v2613 = vunpack.c.h.b16 %v415
    %v2614 = vunpack.c.l.b16 %v416
    %v2615 = vunpack.c.h.b16 %v416
    %v2616 = vunpack.c.l.b16 %v417
    %v2617 = vunpack.c.h.b16 %v417
    %v2618 = vunpack.c.l.b16 %v418
    %v2619 = vunpack.c.h.b16 %v418
    %v2620 = vunpack.c.l.b16 %v419
    %v2621 = vunpack.c.h.b16 %v419
    %v2622 = vunpack.c.l.b16 %v420
    %v2623 = vunpack.c.h.b16 %v420
    %v2624 = vunpack.c.l.b16 %v421
    %v2625 = vunpack.c.h.b16 %v421
    %v2626 = vunpack.c.l.b16 %v422
    %v2627 = vunpack.c.h.b16 %v422
    %v2628 = vunpack.c.l.b16 %v423
    %v2629 = vunpack.c.h.b16 %v423
    %v2630 = vunpack.c.l.b16 %v424
    %v2631 = vunpack.c.h.b16 %v424
    %v2632 = vunpack.c.l.b16 %v425
    %v2633 = vunpack.c.h.b16 %v425
    %v2634 = vunpack.c.l.b16 %v426
    %v2635 = vunpack.c.h.b16 %v426
    %v2636 = vunpack.c.l.b16 %v427
    %v2637 = vunpack.c.h.b16 %v427
    %v2638 = vunpack.c.l.b16 %v428
    %v2639 = vunpack.c.h.b16 %v428
    %v2640 = vunpack.c.l.b16 %v429
    %v2641 = vunpack.c.h.b16 %v429
    %v2642 = vunpack.c.l.b16 %v430
    %v2643 = vunpack.c.h.b16 %v430
    %v2644 = vunpack.c.l.b16 %v431
    %v2645 = vunpack.c.h.b16 %v431
    %v2646 = vunpack.c.l.b16 %v432
    %v2647 = vunpack.c.h.b16 %v432
    %v2648 = vunpack.c.l.b16 %v433
    %v2649 = vunpack.c.h.b16 %v433
    %v2650 = vunpack.c.l.b16 %v434
    %v2651 = vunpack.c.h.b16 %v434
    %v2652 = vunpack.c.l.b16 %v435
    %v2653 = vunpack.c.h.b16 %v435
    %v2654 = vunpack.c.l.b16 %v436
    %v2655 = vunpack.c.h.b16 %v436
    %v2656 = vunpack.c.l.b16 %v437
    %v2657 = vunpack.c.h.b16 %v437
    %v2658 = vunpack.c.l.b16 %v438
    %v2659 = vunpack.c.h.b16 %v438
    %v2660 = vunpack.c.l.b16 %v439
    %v2661 = vunpack.c.h.b16 %v439
    %v2662 = vunpack.c.l.b16 %v440
    %v2663 = vunpack.c.h.b16 %v440
    %v2664 = vunpack.c.l.b16 %v441
    %v2665 = vunpack.c.h.b16 %v441
    %v2666 = vunpack.c.l.b16 %v442
    %v2667 = vunpack.c.h.b16 %v442
    %v2668 = vunpack.c.l.b16 %v443
    %v2669 = vunpack.c.h.b16 %v443
    %v2670 = vunpack.c.l.b16 %v444
    %v2671 = vunpack.c.h.b16 %v444
    %v2672 = vunpack.c.l.b16 %v445
    %v2673 = vunpack.c.h.b16 %v445
    %v2674 = vunpack.c.l.b16 %v446
    %v2675 = vunpack.c.h.b16 %v446
    %v2676 = vunpack.c.l.b16 %v447
    %v2677 = vunpack.c.h.b16 %v447
    %v2678 = vunpack.c.l.b16 %v448
    %v2679 = vunpack.c.h.b16 %v448
    %v2680 = vunpack.c.l.b16 %v449
    %v2681 = vunpack.c.h.b16 %v449
    %v2682 = vunpack.c.l.b16 %v450
    %v2683 = vunpack.c.h.b16 %v450
    %v2684 = vunpack.c.l.b16 %v451
    %v2685 = vunpack.c.h.b16 %v451
    %v2686 = vunpack.c.l.b16 %v452
    %v2687 = vunpack.c.h.b16 %v452
    %v2688 = vunpack.c.l.b16 %v453
    %v2689 = vunpack.c.h.b16 %v453
    %v2690 = vunpack.c.l.b16 %v454
    %v2691 = vunpack.c.h.b16 %v454
    %v2692 = vunpack.c.l.b16 %v455
    %v2693 = vunpack.c.h.b16 %v455
    %v2694 = vunpack.c.l.b16 %v456
    %v2695 = vunpack.c.h.b16 %v456
    %v2696 = vunpack.c.l.b16 %v457
    %v2697 = vunpack.c.h.b16 %v457
    %v2698 = vunpack.c.l.b16 %v458
    %v2699 = vunpack.c.h.b16 %v458
    %v2700 = vunpack.c.l.b16 %v459
    %v2701 = vunpack.c.h.b16 %v459
    %v2702 = vunpack.c.l.b16 %v460
    %v2703 = vunpack.c.h.b16 %v460
    %v2704 = vunpack.c.l.b16 %v461
    %v2705 = vunpack.c.h.b16 %v461
    %v2706 = vunpack.c.l.b16 %v462
    %v2707 = vunpack.c.h.b16 %v462
    %v2708 = vunpack.c.l.b16 %v463
    %v2709 = vunpack.c.h.b16 %v463
    %v2710 = vunpack.c.l.b16 %v464
    %v2711 = vunpack.c.h.b16 %v464
    %v2712 = vunpack.c.l.b16 %v465
    %v2713 = vunpack.c.h.b16 %v465
    %v2714 = vunpack.c.l.b16 %v466
    %v2715 = vunpack.c.h.b16 %v466
    %v2716 = vunpack.c.l.b16 %v467
    %v2717 = vunpack.c.h.b16 %v467
    %v2718 = vunpack.c.l.b16 %v468
    %v2719 = vunpack.c.h.b16 %v468
    %v2720 = vunpack.c.l.b16 %v469
    %v2721 = vunpack.c.h.b16 %v469
    %v2722 = vunpack.c.l.b16 %v470
    %v2723 = vunpack.c.h.b16 %v470
    %v2724 = vunpack.c.l.b16 %v471
    %v2725 = vunpack.c.h.b16 %v471
    %v2726 = vunpack.c.l.b16 %v472
    %v2727 = vunpack.c.h.b16 %v472
    %v2728 = vunpack.c.l.b16 %v473
    %v2729 = vunpack.c.h.b16 %v473
    %v2730 = vunpack.c.l.b16 %v474
    %v2731 = vunpack.c.h.b16 %v474
    %v2732 = vunpack.c.l.b16 %v475
    %v2733 = vunpack.c.h.b16 %v475
    %v2734 = vunpack.c.l.b16 %v476
    %v2735 = vunpack.c.h.b16 %v476
    %v2736 = vunpack.c.l.b16 %v477
    %v2737 = vunpack.c.h.b16 %v477
    %v2738 = vunpack.c.l.b16 %v478
    %v2739 = vunpack.c.h.b16 %v478
    %v2740 = vunpack.c.l.b16 %v479
    %v2741 = vunpack.c.h.b16 %v479
    %v2742 = vunpack.c.l.b16 %v480
    %v2743 = vunpack.c.h.b16 %v480
    %v2744 = vunpack.c.l.b16 %v481
    %v2745 = vunpack.c.h.b16 %v481
    %v2746 = vunpack.c.l.b16 %v482
    %v2747 = vunpack.c.h.b16 %v482
    %v2748 = vunpack.c.l.b16 %v483
    %v2749 = vunpack.c.h.b16 %v483
    %v2750 = vunpack.c.l.b16 %v484
    %v2751 = vunpack.c.h.b16 %v484
    %v2752 = vunpack.c.l.b16 %v485
    %v2753 = vunpack.c.h.b16 %v485
    %v2754 = vunpack.c.l.b16 %v486
    %v2755 = vunpack.c.h.b16 %v486
    %v2756 = vunpack.c.l.b16 %v487
    %v2757 = vunpack.c.h.b16 %v487
    %v2758 = vunpack.c.l.b16 %v488
    %v2759 = vunpack.c.h.b16 %v488
    %v2760 = vunpack.c.l.b16 %v489
    %v2761 = vunpack.c.h.b16 %v489
    %v2762 = vunpack.c.l.b16 %v490
    %v2763 = vunpack.c.h.b16 %v490
    %v2764 = vunpack.c.l.b16 %v491
    %v2765 = vunpack.c.h.b16 %v491
    %v2766 = vunpack.c.l.b16 %v492
    %v2767 = vunpack.c.h.b16 %v492
    %v2768 = vunpack.c.l.b16 %v493
    %v2769 = vunpack.c.h.b16 %v493
    %v2770 = vunpack.c.l.b16 %v494
    %v2771 = vunpack.c.h.b16 %v494
    %v2772 = vunpack.c.l.b16 %v495
    %v2773 = vunpack.c.h.b16 %v495
    %v2774 = vunpack.c.l.b16 %v496
    %v2775 = vunpack.c.h.b16 %v496
    %v2776 = vunpack.c.l.b16 %v497
    %v2777 = vunpack.c.h.b16 %v497
    %v2778 = vunpack.c.l.b16 %v498
    %v2779 = vunpack.c.h.b16 %v498
    %v2780 = vunpack.c.l.b16 %v499
    %v2781 = vunpack.c.h.b16 %v499
    %v2782 = vunpack.c.l.b16 %v500
    %v2783 = vunpack.c.h.b16 %v500
    %v2784 = vunpack.c.l.b16 %v501
    %v2785 = vunpack.c.h.b16 %v501
    %v2786 = vunpack.c.l.b16 %v502
    %v2787 = vunpack.c.h.b16 %v502
    %v2788 = vunpack.c.l.b16 %v503
    %v2789 = vunpack.c.h.b16 %v503
    %v2790 = vunpack.c.l.b16 %v504
    %v2791 = vunpack.c.h.b16 %v504
    %v2792 = vunpack.c.l.b16 %v505
    %v2793 = vunpack.c.h.b16 %v505
    %v2794 = vunpack.c.l.b16 %v506
    %v2795 = vunpack.c.h.b16 %v506
    %v2796 = vunpack.c.l.b16 %v507
    %v2797 = vunpack.c.h.b16 %v507
    %v2798 = vunpack.c.l.b16 %v508
    %v2799 = vunpack.c.h.b16 %v508
    %v2800 = vunpack.c.l.b16 %v509
    %v2801 = vunpack.c.h.b16 %v509
    %v2802 = vunpack.c.l.b16 %v510
    %v2803 = vunpack.c.h.b16 %v510
    %v2804 = vunpack.c.l.b16 %v511
    %v2805 = vunpack.c.h.b16 %v511
    %v2806 = vunpack.c.l.b16 %v512
    %v2807 = vunpack.c.h.b16 %v512
    %v2808 = vunpack.c.l.b16 %v513
    %v2809 = vunpack.c.h.b16 %v513
    %v2810 = vunpack.c.l.b16 %v514
    %v2811 = vunpack.c.h.b16 %v514
    %v2812 = vunpack.c.l.b16 %v515
    %v2813 = vunpack.c.h.b16 %v515
    %v2814 = vunpack.c.l.b16 %v516
    %v2815 = vunpack.c.h.b16 %v516
    %v2816 = vunpack.c.l.b16 %v517
    %v2817 = vunpack.c.h.b16 %v517
    %v2818 = vunpack.c.l.b16 %v518
    %v2819 = vunpack.c.h.b16 %v518
    %v2820 = vunpack.c.l.b16 %v519
    %v2821 = vunpack.c.h.b16 %v519
    %v2822 = vunpack.c.l.b16 %v520
    %v2823 = vunpack.c.h.b16 %v520
    %v2824 = vunpack.c.l.b16 %v521
    %v2825 = vunpack.c.h.b16 %v521
    %v2826 = vunpack.c.l.b16 %v522
    %v2827 = vunpack.c.h.b16 %v522
    %v2828 = vunpack.c.l.b16 %v523
    %v2829 = vunpack.c.h.b16 %v523
    %v2830 = vunpack.c.l.b16 %v524
    %v2831 = vunpack.c.h.b16 %v524
    %v2832 = vunpack.c.l.b16 %v525
    %v2833 = vunpack.c.h.b16 %v525
    %v2834 = vunpack.c.l.b16 %v526
    %v2835 = vunpack.c.h.b16 %v526
    %v2836 = vunpack.c.l.b16 %v527
    %v2837 = vunpack.c.h.b16 %v527
    %v2838 = vunpack.c.l.b16 %v528
    %v2839 = vunpack.c.h.b16 %v528
    %v2840 = vunpack.c.l.b16 %v529
    %v2841 = vunpack.c.h.b16 %v529
    %v2842 = vunpack.c.l.b16 %v530
    %v2843 = vunpack.c.h.b16 %v530
    %v2844 = vunpack.c.l.b16 %v531
    %v2845 = vunpack.c.h.b16 %v531
    %v2846 = vunpack.c.l.b16 %v532
    %v2847 = vunpack.c.h.b16 %v532
    %v2848 = vunpack.c.l.b16 %v533
    %v2849 = vunpack.c.h.b16 %v533
    %v2850 = vunpack.c.l.b16 %v534
    %v2851 = vunpack.c.h.b16 %v534
    %v2852 = vunpack.c.l.b16 %v535
    %v2853 = vunpack.c.h.b16 %v535
    %v2854 = vunpack.c.l.b16 %v536
    %v2855 = vunpack.c.h.b16 %v536
    %v2856 = vunpack.c.l.b16 %v537
    %v2857 = vunpack.c.h.b16 %v537
    %v2858 = vunpack.c.l.b16 %v538
    %v2859 = vunpack.c.h.b16 %v538
    %v2860 = vunpack.c.l.b16 %v539
    %v2861 = vunpack.c.h.b16 %v539
    %v2862 = vunpack.c.l.b16 %v540
    %v2863 = vunpack.c.h.b16 %v540
    %v2864 = vunpack.c.l.b16 %v541
    %v2865 = vunpack.c.h.b16 %v541
    %v2866 = vunpack.c.l.b16 %v542
    %v2867 = vunpack.c.h.b16 %v542
    %v2868 = vunpack.c.l.b16 %v543
    %v2869 = vunpack.c.h.b16 %v543
    %v2870 = vunpack.c.l.b16 %v544
    %v2871 = vunpack.c.h.b16 %v544
    %v2872 = vunpack.c.l.b16 %v545
    %v2873 = vunpack.c.h.b16 %v545
    %v2874 = vunpack.c.l.b16 %v546
    %v2875 = vunpack.c.h.b16 %v546
    %v2876 = vunpack.c.l.b16 %v547
    %v2877 = vunpack.c.h.b16 %v547
    %v2878 = vunpack.c.l.b16 %v548
    %v2879 = vunpack.c.h.b16 %v548
    %v2880 = vunpack.c.l.b16 %v549
    %v2881 = vunpack.c.h.b16 %v549
    %v2882 = vunpack.c.l.b16 %v550
    %v2883 = vunpack.c.h.b16 %v550
    %v2884 = vunpack.c.l.b16 %v551
    %v2885 = vunpack.c.h.b16 %v551
    %v2886 = vunpack.c.l.b16 %v552
    %v2887 = vunpack.c.h.b16 %v552
    %v2888 = vunpack.c.l.b16 %v553
    %v2889 = vunpack.c.h.b16 %v553
    %v2890 = vunpack.c.l.b16 %v554
    %v2891 = vunpack.c.h.b16 %v554
    %v2892 = vunpack.c.l.b16 %v555
    %v2893 = vunpack.c.h.b16 %v555
    %v2894 = vunpack.c.l.b16 %v556
    %v2895 = vunpack.c.h.b16 %v556
    %v2896 = vunpack.c.l.b16 %v557
    %v2897 = vunpack.c.h.b16 %v557
    %v2898 = vunpack.c.l.b16 %v558
    %v2899 = vunpack.c.h.b16 %v558
    %v2900 = vunpack.c.l.b16 %v559
    %v2901 = vunpack.c.h.b16 %v559
    %v2902 = vunpack.c.l.b16 %v560
    %v2903 = vunpack.c.h.b16 %v560
    %v2904 = vunpack.c.l.b16 %v561
    %v2905 = vunpack.c.h.b16 %v561
    %v2906 = vunpack.c.l.b16 %v562
    %v2907 = vunpack.c.h.b16 %v562
    %v2908 = vunpack.c.l.b16 %v563
    %v2909 = vunpack.c.h.b16 %v563
    %v2910 = vunpack.c.l.b16 %v564
    %v2911 = vunpack.c.h.b16 %v564
    %v2912 = vunpack.c.l.b16 %v565
    %v2913 = vunpack.c.h.b16 %v565
    %v2914 = vunpack.c.l.b16 %v566
    %v2915 = vunpack.c.h.b16 %v566
    %v2916 = vunpack.c.l.b16 %v567
    %v2917 = vunpack.c.h.b16 %v567
    %v2918 = vunpack.c.l.b16 %v568
    %v2919 = vunpack.c.h.b16 %v568
    %v2920 = vunpack.c.l.b16 %v569
    %v2921 = vunpack.c.h.b16 %v569
    %v2922 = vunpack.c.l.b16 %v570
    %v2923 = vunpack.c.h.b16 %v570
    %v2924 = vunpack.c.l.b16 %v571
    %v2925 = vunpack.c.h.b16 %v571
    %v2926 = vunpack.c.l.b16 %v572
    %v2927 = vunpack.c.h.b16 %v572
    %v2928 = vunpack.c.l.b16 %v573
    %v2929 = vunpack.c.h.b16 %v573
    %v2930 = vunpack.c.l.b16 %v574
    %v2931 = vunpack.c.h.b16 %v574
    %v2932 = vunpack.c.l.b16 %v575
    %v2933 = vunpack.c.h.b16 %v575
    %v2934 = vunpack.c.l.b16 %v576
    %v2935 = vunpack.c.h.b16 %v576
    %v2936 = vunpack.c.l.b16 %v577
    %v2937 = vunpack.c.h.b16 %v577
    %v2938 = vunpack.c.l.b16 %v578
    %v2939 = vunpack.c.h.b16 %v578
    %v2940 = vunpack.c.l.b16 %v579
    %v2941 = vunpack.c.h.b16 %v579
    %v2942 = vunpack.c.l.b16 %v580
    %v2943 = vunpack.c.h.b16 %v580
    %v2944 = vunpack.c.l.b16 %v581
    %v2945 = vunpack.c.h.b16 %v581
    %v2946 = vunpack.c.l.b16 %v582
    %v2947 = vunpack.c.h.b16 %v582
    %v2948 = vunpack.c.l.b16 %v583
    %v2949 = vunpack.c.h.b16 %v583
    %v2950 = vunpack.c.l.b16 %v584
    %v2951 = vunpack.c.h.b16 %v584
    %v2952 = vunpack.c.l.b16 %v585
    %v2953 = vunpack.c.h.b16 %v585
    %v2954 = vunpack.c.l.b16 %v586
    %v2955 = vunpack.c.h.b16 %v586
    %v2956 = vunpack.c.l.b16 %v587
    %v2957 = vunpack.c.h.b16 %v587
    %v2958 = vunpack.c.l.b16 %v588
    %v2959 = vunpack.c.h.b16 %v588
    %v2960 = vunpack.c.l.b16 %v589
    %v2961 = vunpack.c.h.b16 %v589
    %v2962 = vunpack.c.l.b16 %v590
    %v2963 = vunpack.c.h.b16 %v590
    %v2964 = vunpack.c.l.b16 %v591
    %v2965 = vunpack.c.h.b16 %v591
    %v2966 = vunpack.c.l.b16 %v592
    %v2967 = vunpack.c.h.b16 %v592
    %v2968 = vunpack.c.l.b16 %v593
    %v2969 = vunpack.c.h.b16 %v593
    %v2970 = vunpack.c.l.b16 %v594
    %v2971 = vunpack.c.h.b16 %v594
    %v2972 = vunpack.c.l.b16 %v595
    %v2973 = vunpack.c.h.b16 %v595
    %v2974 = vunpack.c.l.b16 %v596
    %v2975 = vunpack.c.h.b16 %v596
    %v2976 = vunpack.c.l.b16 %v597
    %v2977 = vunpack.c.h.b16 %v597
    %v2978 = vunpack.c.l.b16 %v598
    %v2979 = vunpack.c.h.b16 %v598
    %v2980 = vunpack.c.l.b16 %v599
    %v2981 = vunpack.c.h.b16 %v599
    %v2982 = vunpack.c.l.b16 %v600
    %v2983 = vunpack.c.h.b16 %v600
    %v2984 = vunpack.c.l.b16 %v601
    %v2985 = vunpack.c.h.b16 %v601
    %v2986 = vunpack.c.l.b16 %v602
    %v2987 = vunpack.c.h.b16 %v602
    %v2988 = vunpack.c.l.b16 %v603
    %v2989 = vunpack.c.h.b16 %v603
    %v2990 = vunpack.c.l.b16 %v604
    %v2991 = vunpack.c.h.b16 %v604
    %v2992 = vunpack.c.l.b16 %v605
    %v2993 = vunpack.c.h.b16 %v605
    %v2994 = vunpack.c.l.b16 %v606
    %v2995 = vunpack.c.h.b16 %v606
    %v2996 = vunpack.c.l.b16 %v607
    %v2997 = vunpack.c.h.b16 %v607
    %v2998 = vunpack.c.l.b16 %v608
    %v2999 = vunpack.c.h.b16 %v608
    %v3000 = vunpack.c.l.b16 %v609
    %v3001 = vunpack.c.h.b16 %v609
    %v3002 = vunpack.c.l.b16 %v610
    %v3003 = vunpack.c.h.b16 %v610
    %v3004 = vunpack.c.l.b16 %v611
    %v3005 = vunpack.c.h.b16 %v611
    %v3006 = vunpack.c.l.b16 %v612
    %v3007 = vunpack.c.h.b16 %v612
    %v3008 = vunpack.c.l.b16 %v613
    %v3009 = vunpack.c.h.b16 %v613
    %v3010 = vunpack.c.l.b16 %v614
    %v3011 = vunpack.c.h.b16 %v614
    %v3012 = vunpack.c.l.b16 %v615
    %v3013 = vunpack.c.h.b16 %v615
    %v3014 = vunpack.c.l.b16 %v616
    %v3015 = vunpack.c.h.b16 %v616
    %v3016 = vunpack.c.l.b16 %v617
    %v3017 = vunpack.c.h.b16 %v617
    %v3018 = vunpack.c.l.b16 %v618
    %v3019 = vunpack.c.h.b16 %v618
    %v3020 = vunpack.c.l.b16 %v619
    %v3021 = vunpack.c.h.b16 %v619
    %v3022 = vunpack.c.l.b16 %v620
    %v3023 = vunpack.c.h.b16 %v620
    %v3024 = vunpack.c.l.b16 %v621
    %v3025 = vunpack.c.h.b16 %v621
    %v3026 = vunpack.c.l.b16 %v622
    %v3027 = vunpack.c.h.b16 %v622
    %v3028 = vunpack.c.l.b16 %v623
    %v3029 = vunpack.c.h.b16 %v623
    %v3030 = vunpack.c.l.b16 %v624
    %v3031 = vunpack.c.h.b16 %v624
    %v3032 = vunpack.c.l.b16 %v625
    %v3033 = vunpack.c.h.b16 %v625
    %v3034 = vunpack.c.l.b16 %v626
    %v3035 = vunpack.c.h.b16 %v626
    %v3036 = vunpack.c.l.b16 %v627
    %v3037 = vunpack.c.h.b16 %v627
    %v3038 = vunpack.c.l.b16 %v628
    %v3039 = vunpack.c.h.b16 %v628
    %v3040 = vunpack.c.l.b16 %v629
    %v3041 = vunpack.c.h.b16 %v629
    %v3042 = vunpack.c.l.b16 %v630
    %v3043 = vunpack.c.h.b16 %v630
    %v3044 = vunpack.c.l.b16 %v631
    %v3045 = vunpack.c.h.b16 %v631
    %v3046 = vunpack.c.l.b16 %v632
    %v3047 = vunpack.c.h.b16 %v632
    %v3048 = vunpack.c.l.b16 %v633
    %v3049 = vunpack.c.h.b16 %v633
    %v3050 = vunpack.c.l.b16 %v634
    %v3051 = vunpack.c.h.b16 %v634
    %v3052 = vunpack.c.l.b16 %v635
    %v3053 = vunpack.c.h.b16 %v635
    %v3054 = vunpack.c.l.b16 %v636
    %v3055 = vunpack.c.h.b16 %v636
    %v3056 = vunpack.c.l.b16 %v637
    %v3057 = vunpack.c.h.b16 %v637
    %v3058 = vunpack.c.l.b16 %v638
    %v3059 = vunpack.c.h.b16 %v638
    %v3060 = vunpack.c.l.b16 %v639
    %v3061 = vunpack.c.h.b16 %v639
    %v3062 = vunpack.c.l.b16 %v640
    %v3063 = vunpack.c.h.b16 %v640
    %v3064 = vunpack.c.l.b16 %v641
    %v3065 = vunpack.c.h.b16 %v641
    %v3066 = vunpack.c.l.b16 %v642
    %v3067 = vunpack.c.h.b16 %v642
    %v3068 = vunpack.c.l.b16 %v643
    %v3069 = vunpack.c.h.b16 %v643
    %v3070 = vunpack.c.l.b16 %v644
    %v3071 = vunpack.c.h.b16 %v644
    %v3072 = vunpack.c.l.b16 %v645
    %v3073 = vunpack.c.h.b16 %v645
    %v3074 = vunpack.c.l.b16 %v646
    %v3075 = vunpack.c.h.b16 %v646
    %v3076 = vunpack.c.l.b16 %v647
    %v3077 = vunpack.c.h.b16 %v647
    %v3078 = vunpack.c.l.b16 %v648
    %v3079 = vunpack.c.h.b16 %v648
    %v3080 = vunpack.c.l.b16 %v649
    %v3081 = vunpack.c.h.b16 %v649
    %v3082 = vunpack.c.l.b16 %v650
    %v3083 = vunpack.c.h.b16 %v650
    %v3084 = vunpack.c.l.b16 %v651
    %v3085 = vunpack.c.h.b16 %v651
    %v3086 = vunpack.c.l.b16 %v652
    %v3087 = vunpack.c.h.b16 %v652
    %v3088 = vunpack.c.l.b16 %v653
    %v3089 = vunpack.c.h.b16 %v653
    %v3090 = vunpack.c.l.b16 %v654
    %v3091 = vunpack.c.h.b16 %v654
    %v3092 = vunpack.c.l.b16 %v655
    %v3093 = vunpack.c.h.b16 %v655
    %v3094 = vunpack.c.l.b16 %v656
    %v3095 = vunpack.c.h.b16 %v656
    %v3096 = vunpack.c.l.b16 %v657
    %v3097 = vunpack.c.h.b16 %v657
    %v3098 = vunpack.c.l.b16 %v658
    %v3099 = vunpack.c.h.b16 %v658
    %v3100 = vunpack.c.l.b16 %v659
    %v3101 = vunpack.c.h.b16 %v659
    %v3102 = vunpack.c.l.b16 %v660
    %v3103 = vunpack.c.h.b16 %v660
    %v3104 = vunpack.c.l.b16 %v661
    %v3105 = vunpack.c.h.b16 %v661
    %v3106 = vunpack.c.l.b16 %v662
    %v3107 = vunpack.c.h.b16 %v662
    %v3108 = vunpack.c.l.b16 %v663
    %v3109 = vunpack.c.h.b16 %v663
    %v3110 = vunpack.c.l.b16 %v664
    %v3111 = vunpack.c.h.b16 %v664
    %v3112 = vunpack.c.l.b16 %v665
    %v3113 = vunpack.c.h.b16 %v665
    %v3114 = vunpack.c.l.b16 %v666
    %v3115 = vunpack.c.h.b16 %v666
    %v3116 = vunpack.c.l.b16 %v667
    %v3117 = vunpack.c.h.b16 %v667
    %v3118 = vunpack.c.l.b16 %v668
    %v3119 = vunpack.c.h.b16 %v668
    %v3120 = vunpack.c.l.b16 %v669
    %v3121 = vunpack.c.h.b16 %v669
    %v3122 = vunpack.c.l.b16 %v670
    %v3123 = vunpack.c.h.b16 %v670
    %v3124 = vunpack.c.l.b16 %v671
    %v3125 = vunpack.c.h.b16 %v671
    %v3126 = vunpack.c.l.b16 %v672
    %v3127 = vunpack.c.h.b16 %v672
    %v3128 = vunpack.c.l.b16 %v673
    %v3129 = vunpack.c.h.b16 %v673
    %v3130 = vunpack.c.l.b16 %v674
    %v3131 = vunpack.c.h.b16 %v674
    %v3132 = vunpack.c.l.b16 %v675
    %v3133 = vunpack.c.h.b16 %v675
    %v3134 = vunpack.c.l.b16 %v676
    %v3135 = vunpack.c.h.b16 %v676
    %v3136 = vunpack.c.l.b16 %v677
    %v3137 = vunpack.c.h.b16 %v677
    %v3138 = vunpack.c.l.b16 %v678
    %v3139 = vunpack.c.h.b16 %v678
    %v3140 = vunpack.c.l.b16 %v679
    %v3141 = vunpack.c.h.b16 %v679
    %v3142 = vunpack.c.l.b16 %v680
    %v3143 = vunpack.c.h.b16 %v680
    %v3144 = vunpack.c.l.b16 %v681
    %v3145 = vunpack.c.h.b16 %v681
    %v3146 = vunpack.c.l.b16 %v682
    %v3147 = vunpack.c.h.b16 %v682
    %v3148 = vunpack.c.l.b16 %v683
    %v3149 = vunpack.c.h.b16 %v683
    %v3150 = vunpack.c.l.b16 %v684
    %v3151 = vunpack.c.h.b16 %v684
    %v3152 = vunpack.c.l.b16 %v685
    %v3153 = vunpack.c.h.b16 %v685
    %v3154 = vunpack.c.l.b16 %v686
    %v3155 = vunpack.c.h.b16 %v686
    %v3156 = vunpack.c.l.b16 %v687
    %v3157 = vunpack.c.h.b16 %v687
    %v3158 = vunpack.c.l.b16 %v688
    %v3159 = vunpack.c.h.b16 %v688
    %v3160 = vunpack.c.l.b16 %v689
    %v3161 = vunpack.c.h.b16 %v689
    %v3162 = vunpack.c.l.b16 %v690
    %v3163 = vunpack.c.h.b16 %v690
    %v3164 = vunpack.c.l.b16 %v691
    %v3165 = vunpack.c.h.b16 %v691
    %v3166 = vunpack.c.l.b16 %v692
    %v3167 = vunpack.c.h.b16 %v692
    %v3168 = vunpack.c.l.b16 %v693
    %v3169 = vunpack.c.h.b16 %v693
    %v3170 = vunpack.c.l.b16 %v694
    %v3171 = vunpack.c.h.b16 %v694
    %v3172 = vunpack.c.l.b16 %v695
    %v3173 = vunpack.c.h.b16 %v695
    %v3174 = vunpack.c.l.b16 %v696
    %v3175 = vunpack.c.h.b16 %v696
    %v3176 = vunpack.c.l.b16 %v697
    %v3177 = vunpack.c.h.b16 %v697
    %v3178 = vunpack.c.l.b16 %v698
    %v3179 = vunpack.c.h.b16 %v698
    %v3180 = vunpack.c.l.b16 %v699
    %v3181 = vunpack.c.h.b16 %v699
    %v3182 = vunpack.c.l.b16 %v700
    %v3183 = vunpack.c.h.b16 %v700
    %v3184 = vunpack.c.l.b16 %v701
    %v3185 = vunpack.c.h.b16 %v701
    %v3186 = vunpack.c.l.b16 %v702
    %v3187 = vunpack.c.h.b16 %v702
    %v3188 = vunpack.c.l.b16 %v703
    %v3189 = vunpack.c.h.b16 %v703
    %v3190 = vunpack.c.l.b16 %v704
    %v3191 = vunpack.c.h.b16 %v704
    %v3192 = vunpack.c.l.b16 %v705
    %v3193 = vunpack.c.h.b16 %v705
    %v3194 = vunpack.c.l.b16 %v706
    %v3195 = vunpack.c.h.b16 %v706
    %v3196 = vunpack.c.l.b16 %v707
    %v3197 = vunpack.c.h.b16 %v707
    %v3198 = vunpack.c.l.b16 %v708
    %v3199 = vunpack.c.h.b16 %v708
    %v3200 = vunpack.c.l.b16 %v709
    %v3201 = vunpack.c.h.b16 %v709
    %v3202 = vunpack.c.l.b16 %v710
    %v3203 = vunpack.c.h.b16 %v710
    %v3204 = vunpack.c.l.b16 %v711
    %v3205 = vunpack.c.h.b16 %v711
    %v3206 = vunpack.c.l.b16 %v712
    %v3207 = vunpack.c.h.b16 %v712
    %v3208 = vunpack.c.l.b16 %v713
    %v3209 = vunpack.c.h.b16 %v713
    %v3210 = vunpack.c.l.b16 %v714
    %v3211 = vunpack.c.h.b16 %v714
    %v3212 = vunpack.c.l.b16 %v715
    %v3213 = vunpack.c.h.b16 %v715
    %v3214 = vunpack.c.l.b16 %v716
    %v3215 = vunpack.c.h.b16 %v716
    %v3216 = vunpack.c.l.b16 %v717
    %v3217 = vunpack.c.h.b16 %v717
    %v3218 = vunpack.c.l.b16 %v718
    %v3219 = vunpack.c.h.b16 %v718
    %v3220 = vunpack.c.l.b16 %v719
    %v3221 = vunpack.c.h.b16 %v719
    %v3222 = vunpack.c.l.b16 %v720
    %v3223 = vunpack.c.h.b16 %v720
    %v3224 = vunpack.c.l.b16 %v721
    %v3225 = vunpack.c.h.b16 %v721
    %v3226 = vunpack.c.l.b16 %v722
    %v3227 = vunpack.c.h.b16 %v722
    %v3228 = vunpack.c.l.b16 %v723
    %v3229 = vunpack.c.h.b16 %v723
    %v3230 = vunpack.c.l.b16 %v724
    %v3231 = vunpack.c.h.b16 %v724
    %v3232 = vunpack.c.l.b16 %v725
    %v3233 = vunpack.c.h.b16 %v725
    %v3234 = vunpack.c.l.b16 %v726
    %v3235 = vunpack.c.h.b16 %v726
    %v3236 = vunpack.c.l.b16 %v727
    %v3237 = vunpack.c.h.b16 %v727
    %v3238 = vunpack.c.l.b16 %v728
    %v3239 = vunpack.c.h.b16 %v728
    %v3240 = vunpack.c.l.b16 %v729
    %v3241 = vunpack.c.h.b16 %v729
    %v3242 = vunpack.c.l.b16 %v730
    %v3243 = vunpack.c.h.b16 %v730
    %v3244 = vunpack.c.l.b16 %v731
    %v3245 = vunpack.c.h.b16 %v731
    %v3246 = vunpack.c.l.b16 %v732
    %v3247 = vunpack.c.h.b16 %v732
    %v3248 = vunpack.c.l.b16 %v733
    %v3249 = vunpack.c.h.b16 %v733
    %v3250 = vunpack.c.l.b16 %v734
    %v3251 = vunpack.c.h.b16 %v734
    %v3252 = vunpack.c.l.b16 %v735
    %v3253 = vunpack.c.h.b16 %v735
    %v3254 = vunpack.c.l.b16 %v736
    %v3255 = vunpack.c.h.b16 %v736
    %v3256 = vunpack.c.l.b16 %v737
    %v3257 = vunpack.c.h.b16 %v737
    %v3258 = vunpack.c.l.b16 %v738
    %v3259 = vunpack.c.h.b16 %v738
    %v3260 = vunpack.c.l.b16 %v739
    %v3261 = vunpack.c.h.b16 %v739
    %v3262 = vunpack.c.l.b16 %v740
    %v3263 = vunpack.c.h.b16 %v740
    %v3264 = vunpack.c.l.b16 %v741
    %v3265 = vunpack.c.h.b16 %v741
    %v3266 = vunpack.c.l.b16 %v742
    %v3267 = vunpack.c.h.b16 %v742
    %v3268 = vunpack.c.l.b16 %v743
    %v3269 = vunpack.c.h.b16 %v743
    %v3270 = vunpack.c.l.b16 %v744
    %v3271 = vunpack.c.h.b16 %v744
    %v3272 = vunpack.c.l.b16 %v745
    %v3273 = vunpack.c.h.b16 %v745
    %v3274 = vunpack.c.l.b16 %v746
    %v3275 = vunpack.c.h.b16 %v746
    %v3276 = vunpack.c.l.b16 %v747
    %v3277 = vunpack.c.h.b16 %v747
    %v3278 = vunpack.c.l.b16 %v748
    %v3279 = vunpack.c.h.b16 %v748
    %v3280 = vunpack.c.l.b16 %v749
    %v3281 = vunpack.c.h.b16 %v749
    %v3282 = vunpack.c.l.b16 %v750
    %v3283 = vunpack.c.h.b16 %v750
    %v3284 = vunpack.c.l.b16 %v751
    %v3285 = vunpack.c.h.b16 %v751
    %v3286 = vunpack.c.l.b16 %v752
    %v3287 = vunpack.c.h.b16 %v752
    %v3288 = vunpack.c.l.b16 %v753
    %v3289 = vunpack.c.h.b16 %v753
    %v3290 = vunpack.c.l.b16 %v754
    %v3291 = vunpack.c.h.b16 %v754
    %v3292 = vunpack.c.l.b16 %v755
    %v3293 = vunpack.c.h.b16 %v755
    %v3294 = vunpack.c.l.b16 %v756
    %v3295 = vunpack.c.h.b16 %v756
    %v3296 = vunpack.c.l.b16 %v757
    %v3297 = vunpack.c.h.b16 %v757
    %v3298 = vunpack.c.l.b16 %v758
    %v3299 = vunpack.c.h.b16 %v758
    %v3300 = vunpack.c.l.b16 %v759
    %v3301 = vunpack.c.h.b16 %v759
    %v3302 = vunpack.c.l.b16 %v760
    %v3303 = vunpack.c.h.b16 %v760
    %v3304 = vunpack.c.l.b16 %v761
    %v3305 = vunpack.c.h.b16 %v761
    %v3306 = vunpack.c.l.b16 %v762
    %v3307 = vunpack.c.h.b16 %v762
    %v3308 = vunpack.c.l.b16 %v763
    %v3309 = vunpack.c.h.b16 %v763
    %v3310 = vunpack.c.l.b16 %v764
    %v3311 = vunpack.c.h.b16 %v764
    %v3312 = vunpack.c.l.b16 %v765
    %v3313 = vunpack.c.h.b16 %v765
    %v3314 = vunpack.c.l.b16 %v766
    %v3315 = vunpack.c.h.b16 %v766
    %v3316 = vunpack.c.l.b16 %v767
    %v3317 = vunpack.c.h.b16 %v767
    %v3318 = vunpack.c.l.b16 %v768
    %v3319 = vunpack.c.h.b16 %v768
    %v3320 = vunpack.c.l.b16 %v769
    %v3321 = vunpack.c.h.b16 %v769
    %v3322 = vunpack.c.l.b16 %v770
    %v3323 = vunpack.c.h.b16 %v770
    %v3324 = vunpack.c.l.b16 %v771
    %v3325 = vunpack.c.h.b16 %v771
    %v3326 = vunpack.c.l.b16 %v772
    %v3327 = vunpack.c.h.b16 %v772
    %v3328 = vunpack.c.l.b16 %v773
    %v3329 = vunpack.c.h.b16 %v773
    %v3330 = vunpack.c.l.b16 %v774
    %v3331 = vunpack.c.h.b16 %v774
    %v3332 = vunpack.c.l.b16 %v775
    %v3333 = vunpack.c.h.b16 %v775
    %v3334 = vunpack.c.l.b16 %v776
    %v3335 = vunpack.c.h.b16 %v776
    %v3336 = vunpack.c.l.b16 %v777
    %v3337 = vunpack.c.h.b16 %v777
    %v3338 = vunpack.c.l.b16 %v778
    %v3339 = vunpack.c.h.b16 %v778
    %v3340 = vunpack.c.l.b16 %v779
    %v3341 = vunpack.c.h.b16 %v779
    %v3342 = vunpack.c.l.b16 %v780
    %v3343 = vunpack.c.h.b16 %v780
    %v3344 = vunpack.c.l.b16 %v781
    %v3345 = vunpack.c.h.b16 %v781
    %v3346 = vunpack.c.l.b16 %v782
    %v3347 = vunpack.c.h.b16 %v782
    %v3348 = vunpack.c.l.b16 %v783
    %v3349 = vunpack.c.h.b16 %v783
    %v3350 = vunpack.c.l.b16 %v784
    %v3351 = vunpack.c.h.b16 %v784
    %v3352 = vunpack.c.l.b16 %v785
    %v3353 = vunpack.c.h.b16 %v785
    %v3354 = vunpack.c.l.b16 %v786
    %v3355 = vunpack.c.h.b16 %v786
    %v3356 = vunpack.c.l.b16 %v787
    %v3357 = vunpack.c.h.b16 %v787
    %v3358 = vunpack.c.l.b16 %v788
    %v3359 = vunpack.c.h.b16 %v788
    %v3360 = vunpack.c.l.b16 %v789
    %v3361 = vunpack.c.h.b16 %v789
    %v3362 = vunpack.c.l.b16 %v790
    %v3363 = vunpack.c.h.b16 %v790
    %v3364 = vunpack.c.l.b16 %v791
    %v3365 = vunpack.c.h.b16 %v791
    %v3366 = vunpack.c.l.b16 %v792
    %v3367 = vunpack.c.h.b16 %v792
    %v3368 = vunpack.c.l.b16 %v793
    %v3369 = vunpack.c.h.b16 %v793
    %v3370 = vunpack.c.l.b16 %v794
    %v3371 = vunpack.c.h.b16 %v794
    %v3372 = vunpack.c.l.b16 %v795
    %v3373 = vunpack.c.h.b16 %v795
    %v3374 = vunpack.c.l.b16 %v796
    %v3375 = vunpack.c.h.b16 %v796
    %v3376 = vunpack.c.l.b16 %v797
    %v3377 = vunpack.c.h.b16 %v797
    %v3378 = vunpack.c.l.b16 %v798
    %v3379 = vunpack.c.h.b16 %v798
    %v3380 = vunpack.c.l.b16 %v799
    %v3381 = vunpack.c.h.b16 %v799
    %v3382 = vunpack.c.l.b16 %v800
    %v3383 = vunpack.c.h.b16 %v800
    %v3384 = vunpack.c.l.b16 %v801
    %v3385 = vunpack.c.h.b16 %v801
    %v3386 = vunpack.c.l.b16 %v802
    %v3387 = vunpack.c.h.b16 %v802
    %v3388 = vunpack.c.l.b16 %v803
    %v3389 = vunpack.c.h.b16 %v803
    %v3390 = vunpack.c.l.b16 %v804
    %v3391 = vunpack.c.h.b16 %v804
    %v3392 = vunpack.c.l.b16 %v805
    %v3393 = vunpack.c.h.b16 %v805
    %v3394 = vunpack.c.l.b16 %v806
    %v3395 = vunpack.c.h.b16 %v806
    %v3396 = vunpack.c.l.b16 %v807
    %v3397 = vunpack.c.h.b16 %v807
    %v3398 = vunpack.c.l.b16 %v808
    %v3399 = vunpack.c.h.b16 %v808
    %v3400 = vunpack.c.l.b16 %v809
    %v3401 = vunpack.c.h.b16 %v809
    %v3402 = vunpack.c.l.b16 %v810
    %v3403 = vunpack.c.h.b16 %v810
    %v3404 = vunpack.c.l.b16 %v811
    %v3405 = vunpack.c.h.b16 %v811
    %v3406 = vunpack.c.l.b16 %v812
    %v3407 = vunpack.c.h.b16 %v812
    %v3408 = vunpack.c.l.b16 %v813
    %v3409 = vunpack.c.h.b16 %v813
    %v3410 = vunpack.c.l.b16 %v814
    %v3411 = vunpack.c.h.b16 %v814
    %v3412 = vunpack.c.l.b16 %v815
    %v3413 = vunpack.c.h.b16 %v815
    %v3414 = vunpack.c.l.b16 %v816
    %v3415 = vunpack.c.h.b16 %v816
    %v3416 = vunpack.c.l.b16 %v817
    %v3417 = vunpack.c.h.b16 %v817
    %v3418 = vunpack.c.l.b16 %v818
    %v3419 = vunpack.c.h.b16 %v818
    %v3420 = vunpack.c.l.b16 %v819
    %v3421 = vunpack.c.h.b16 %v819
    %v3422 = vunpack.c.l.b16 %v820
    %v3423 = vunpack.c.h.b16 %v820
    %v3424 = vunpack.c.l.b16 %v821
    %v3425 = vunpack.c.h.b16 %v821
    %v3426 = vunpack.c.l.b16 %v822
    %v3427 = vunpack.c.h.b16 %v822
    %v3428 = vunpack.c.l.b16 %v823
    %v3429 = vunpack.c.h.b16 %v823
    %v3430 = vunpack.c.l.b16 %v824
    %v3431 = vunpack.c.h.b16 %v824
    %v3432 = vunpack.c.l.b16 %v825
    %v3433 = vunpack.c.h.b16 %v825
    %v3434 = vunpack.c.l.b16 %v826
    %v3435 = vunpack.c.h.b16 %v826
    %v3436 = vunpack.c.l.b16 %v827
    %v3437 = vunpack.c.h.b16 %v827
    %v3438 = vunpack.c.l.b16 %v828
    %v3439 = vunpack.c.h.b16 %v828
    %v3440 = vunpack.c.l.b16 %v829
    %v3441 = vunpack.c.h.b16 %v829
    %v3442 = vunpack.c.l.b16 %v830
    %v3443 = vunpack.c.h.b16 %v830
    %v3444 = vunpack.c.l.b16 %v831
    %v3445 = vunpack.c.h.b16 %v831
    %v3446 = vunpack.c.l.b16 %v832
    %v3447 = vunpack.c.h.b16 %v832
    %v3448 = vunpack.c.l.b16 %v833
    %v3449 = vunpack.c.h.b16 %v833
    %v3450 = vunpack.c.l.b16 %v834
    %v3451 = vunpack.c.h.b16 %v834
    %v3452 = vunpack.c.l.b16 %v835
    %v3453 = vunpack.c.h.b16 %v835
    %v3454 = vunpack.c.l.b16 %v836
    %v3455 = vunpack.c.h.b16 %v836
    %v3456 = vunpack.c.l.b16 %v837
    %v3457 = vunpack.c.h.b16 %v837
    %v3458 = vunpack.c.l.b16 %v838
    %v3459 = vunpack.c.h.b16 %v838
    %v3460 = vunpack.c.l.b16 %v839
    %v3461 = vunpack.c.h.b16 %v839
    %v3462 = vunpack.c.l.b16 %v840
    %v3463 = vunpack.c.h.b16 %v840
    %v3464 = vunpack.c.l.b16 %v841
    %v3465 = vunpack.c.h.b16 %v841
    %v3466 = vunpack.c.l.b16 %v842
    %v3467 = vunpack.c.h.b16 %v842
    %v3468 = vunpack.c.l.b16 %v843
    %v3469 = vunpack.c.h.b16 %v843
    %v3470 = vunpack.c.l.b16 %v844
    %v3471 = vunpack.c.h.b16 %v844
    %v3472 = vunpack.c.l.b16 %v845
    %v3473 = vunpack.c.h.b16 %v845
    %v3474 = vunpack.c.l.b16 %v846
    %v3475 = vunpack.c.h.b16 %v846
    %v3476 = vunpack.c.l.b16 %v847
    %v3477 = vunpack.c.h.b16 %v847
    %v3478 = vunpack.c.l.b16 %v848
    %v3479 = vunpack.c.h.b16 %v848
    %v3480 = vunpack.c.l.b16 %v849
    %v3481 = vunpack.c.h.b16 %v849
    %v3482 = vunpack.c.l.b16 %v850
    %v3483 = vunpack.c.h.b16 %v850
    %v3484 = vunpack.c.l.b16 %v851
    %v3485 = vunpack.c.h.b16 %v851
    %v3486 = vunpack.c.l.b16 %v852
    %v3487 = vunpack.c.h.b16 %v852
    %v3488 = vunpack.c.l.b16 %v853
    %v3489 = vunpack.c.h.b16 %v853
    %v3490 = vunpack.c.l.b16 %v854
    %v3491 = vunpack.c.h.b16 %v854
    %v3492 = vunpack.c.l.b16 %v855
    %v3493 = vunpack.c.h.b16 %v855
    %v3494 = vunpack.c.l.b16 %v856
    %v3495 = vunpack.c.h.b16 %v856
    %v3496 = vunpack.c.l.b16 %v857
    %v3497 = vunpack.c.h.b16 %v857
    %v3498 = vunpack.c.l.b16 %v858
    %v3499 = vunpack.c.h.b16 %v858
    %v3500 = vunpack.c.l.b16 %v859
    %v3501 = vunpack.c.h.b16 %v859
    %v3502 = vunpack.c.l.b16 %v860
    %v3503 = vunpack.c.h.b16 %v860
    %v3504 = vunpack.c.l.b16 %v861
    %v3505 = vunpack.c.h.b16 %v861
    %v3506 = vunpack.c.l.b16 %v862
    %v3507 = vunpack.c.h.b16 %v862
    %v3508 = vunpack.c.l.b16 %v863
    %v3509 = vunpack.c.h.b16 %v863
    %v3510 = vunpack.c.l.b16 %v864
    %v3511 = vunpack.c.h.b16 %v864
    %v3512 = vunpack.c.l.b16 %v865
    %v3513 = vunpack.c.h.b16 %v865
    %v3514 = vunpack.c.l.b16 %v866
    %v3515 = vunpack.c.h.b16 %v866
    %v3516 = vunpack.c.l.b16 %v867
    %v3517 = vunpack.c.h.b16 %v867
    %v3518 = vunpack.c.l.b16 %v868
    %v3519 = vunpack.c.h.b16 %v868
    %v3520 = vunpack.c.l.b16 %v869
    %v3521 = vunpack.c.h.b16 %v869
    %v3522 = vunpack.c.l.b16 %v870
    %v3523 = vunpack.c.h.b16 %v870
    %v3524 = vunpack.c.l.b16 %v871
    %v3525 = vunpack.c.h.b16 %v871
    %v3526 = vunpack.c.l.b16 %v872
    %v3527 = vunpack.c.h.b16 %v872
    %v3528 = vunpack.c.l.b16 %v873
    %v3529 = vunpack.c.h.b16 %v873
    %v3530 = vunpack.c.l.b16 %v874
    %v3531 = vunpack.c.h.b16 %v874
    %v3532 = vunpack.c.l.b16 %v875
    %v3533 = vunpack.c.h.b16 %v875
    %v3534 = vunpack.c.l.b16 %v876
    %v3535 = vunpack.c.h.b16 %v876
    %v3536 = vunpack.c.l.b16 %v877
    %v3537 = vunpack.c.h.b16 %v877
    %v3538 = vunpack.c.l.b16 %v878
    %v3539 = vunpack.c.h.b16 %v878
    %v3540 = vunpack.c.l.b16 %v879
    %v3541 = vunpack.c.h.b16 %v879
    %v3542 = vunpack.c.l.b16 %v880
    %v3543 = vunpack.c.h.b16 %v880
    %v3544 = vunpack.c.l.b16 %v881
    %v3545 = vunpack.c.h.b16 %v881
    %v3546 = vunpack.c.l.b16 %v882
    %v3547 = vunpack.c.h.b16 %v882
    %v3548 = vunpack.c.l.b16 %v883
    %v3549 = vunpack.c.h.b16 %v883
    %v3550 = vunpack.c.l.b16 %v884
    %v3551 = vunpack.c.h.b16 %v884
    %v3552 = vunpack.c.l.b16 %v885
    %v3553 = vunpack.c.h.b16 %v885
    %v3554 = vunpack.c.l.b16 %v886
    %v3555 = vunpack.c.h.b16 %v886
    %v3556 = vunpack.c.l.b16 %v887
    %v3557 = vunpack.c.h.b16 %v887
    %v3558 = vunpack.c.l.b16 %v888
    %v3559 = vunpack.c.h.b16 %v888
    %v3560 = vunpack.c.l.b16 %v889
    %v3561 = vunpack.c.h.b16 %v889
    %v3562 = vunpack.c.l.b16 %v890
    %v3563 = vunpack.c.h.b16 %v890
    %v3564 = vunpack.c.l.b16 %v891
    %v3565 = vunpack.c.h.b16 %v891
    %v3566 = vunpack.c.l.b16 %v892
    %v3567 = vunpack.c.h.b16 %v892
    %v3568 = vunpack.c.l.b16 %v893
    %v3569 = vunpack.c.h.b16 %v893
    %v3570 = vunpack.c.l.b16 %v894
    %v3571 = vunpack.c.h.b16 %v894
    %v3572 = vunpack.c.l.b16 %v895
    %v3573 = vunpack.c.h.b16 %v895
    %v3574 = vunpack.c.l.b16 %v896
    %v3575 = vunpack.c.h.b16 %v896
    %v3576 = vunpack.c.l.b16 %v897
    %v3577 = vunpack.c.h.b16 %v897
    %v3578 = vunpack.c.l.b16 %v898
    %v3579 = vunpack.c.h.b16 %v898
    %v3580 = vunpack.c.l.b16 %v899
    %v3581 = vunpack.c.h.b16 %v899
    %v3582 = vunpack.c.l.b16 %v900
    %v3583 = vunpack.c.h.b16 %v900
    %v3584 = vunpack.c.l.b16 %v901
    %v3585 = vunpack.c.h.b16 %v901
    %v3586 = vunpack.c.l.b16 %v902
    %v3587 = vunpack.c.h.b16 %v902
    %v3588 = vunpack.c.l.b16 %v903
    %v3589 = vunpack.c.h.b16 %v903
    %v3590 = vunpack.c.l.b16 %v904
    %v3591 = vunpack.c.h.b16 %v904
    %v3592 = vunpack.c.l.b16 %v905
    %v3593 = vunpack.c.h.b16 %v905
    %v3594 = vunpack.c.l.b16 %v906
    %v3595 = vunpack.c.h.b16 %v906
    %v3596 = vunpack.c.l.b16 %v907
    %v3597 = vunpack.c.h.b16 %v907
    %v3598 = vunpack.c.l.b16 %v908
    %v3599 = vunpack.c.h.b16 %v908
    %v3600 = vunpack.c.l.b16 %v909
    %v3601 = vunpack.c.h.b16 %v909
    %v3602 = vunpack.c.l.b16 %v910
    %v3603 = vunpack.c.h.b16 %v910
    %v3604 = vunpack.c.l.b16 %v911
    %v3605 = vunpack.c.h.b16 %v911
    %v3606 = vunpack.c.l.b16 %v912
    %v3607 = vunpack.c.h.b16 %v912
    %v3608 = vunpack.c.l.b16 %v913
    %v3609 = vunpack.c.h.b16 %v913
    %v3610 = vunpack.c.l.b16 %v914
    %v3611 = vunpack.c.h.b16 %v914
    %v3612 = vunpack.c.l.b16 %v915
    %v3613 = vunpack.c.h.b16 %v915
    %v3614 = vunpack.c.l.b16 %v916
    %v3615 = vunpack.c.h.b16 %v916
    %v3616 = vunpack.c.l.b16 %v917
    %v3617 = vunpack.c.h.b16 %v917
    %v3618 = vunpack.c.l.b16 %v918
    %v3619 = vunpack.c.h.b16 %v918
    %v3620 = vunpack.c.l.b16 %v919
    %v3621 = vunpack.c.h.b16 %v919
    %v3622 = vunpack.c.l.b16 %v920
    %v3623 = vunpack.c.h.b16 %v920
    %v3624 = vunpack.c.l.b16 %v921
    %v3625 = vunpack.c.h.b16 %v921
    %v3626 = vunpack.c.l.b16 %v922
    %v3627 = vunpack.c.h.b16 %v922
    %v3628 = vunpack.c.l.b16 %v923
    %v3629 = vunpack.c.h.b16 %v923
    %v3630 = vunpack.c.l.b16 %v924
    %v3631 = vunpack.c.h.b16 %v924
    %v3632 = vunpack.c.l.b16 %v925
    %v3633 = vunpack.c.h.b16 %v925
    %v3634 = vunpack.c.l.b16 %v926
    %v3635 = vunpack.c.h.b16 %v926
    %v3636 = vunpack.c.l.b16 %v927
    %v3637 = vunpack.c.h.b16 %v927
    %v3638 = vunpack.c.l.b16 %v928
    %v3639 = vunpack.c.h.b16 %v928
    %v3640 = vunpack.c.l.b16 %v929
    %v3641 = vunpack.c.h.b16 %v929
    %v3642 = vunpack.c.l.b16 %v930
    %v3643 = vunpack.c.h.b16 %v930
    %v3644 = vunpack.c.l.b16 %v931
    %v3645 = vunpack.c.h.b16 %v931
    %v3646 = vunpack.c.l.b16 %v932
    %v3647 = vunpack.c.h.b16 %v932
    %v3648 = vunpack.c.l.b16 %v933
    %v3649 = vunpack.c.h.b16 %v933
    %v3650 = vunpack.c.l.b16 %v934
    %v3651 = vunpack.c.h.b16 %v934
    %v3652 = vunpack.c.l.b16 %v935
    %v3653 = vunpack.c.h.b16 %v935
    %v3654 = vunpack.c.l.b16 %v936
    %v3655 = vunpack.c.h.b16 %v936
    %v3656 = vunpack.c.l.b16 %v937
    %v3657 = vunpack.c.h.b16 %v937
    %v3658 = vunpack.c.l.b16 %v938
    %v3659 = vunpack.c.h.b16 %v938
    %v3660 = vunpack.c.l.b16 %v939
    %v3661 = vunpack.c.h.b16 %v939
    %v3662 = vunpack.c.l.b16 %v940
    %v3663 = vunpack.c.h.b16 %v940
    %v3664 = vunpack.c.l.b16 %v941
    %v3665 = vunpack.c.h.b16 %v941
    %v3666 = vunpack.c.l.b16 %v942
    %v3667 = vunpack.c.h.b16 %v942
    %v3668 = vunpack.c.l.b16 %v943
    %v3669 = vunpack.c.h.b16 %v943
    %v3670 = vunpack.c.l.b16 %v944
    %v3671 = vunpack.c.h.b16 %v944
    %v3672 = vunpack.c.l.b16 %v945
    %v3673 = vunpack.c.h.b16 %v945
    %v3674 = vunpack.c.l.b16 %v946
    %v3675 = vunpack.c.h.b16 %v946
    %v3676 = vunpack.c.l.b16 %v947
    %v3677 = vunpack.c.h.b16 %v947
    %v3678 = vunpack.c.l.b16 %v948
    %v3679 = vunpack.c.h.b16 %v948
    %v3680 = vunpack.c.l.b16 %v949
    %v3681 = vunpack.c.h.b16 %v949
    %v3682 = vunpack.c.l.b16 %v950
    %v3683 = vunpack.c.h.b16 %v950
    %v3684 = vunpack.c.l.b16 %v951
    %v3685 = vunpack.c.h.b16 %v951
    %v3686 = vunpack.c.l.b16 %v952
    %v3687 = vunpack.c.h.b16 %v952
    %v3688 = vunpack.c.l.b16 %v953
    %v3689 = vunpack.c.h.b16 %v953
    %v3690 = vunpack.c.l.b16 %v954
    %v3691 = vunpack.c.h.b16 %v954
    %v3692 = vunpack.c.l.b16 %v955
    %v3693 = vunpack.c.h.b16 %v955
    %v3694 = vunpack.c.l.b16 %v956
    %v3695 = vunpack.c.h.b16 %v956
    %v3696 = vunpack.c.l.b16 %v957
    %v3697 = vunpack.c.h.b16 %v957
    %v3698 = vunpack.c.l.b16 %v958
    %v3699 = vunpack.c.h.b16 %v958
    %v3700 = vunpack.c.l.b16 %v959
    %v3701 = vunpack.c.h.b16 %v959
    %v3702 = vunpack.c.l.b16 %v960
    %v3703 = vunpack.c.h.b16 %v960
    %v3704 = vunpack.c.l.b16 %v961
    %v3705 = vunpack.c.h.b16 %v961
    %v3706 = vunpack.c.l.b16 %v962
    %v3707 = vunpack.c.h.b16 %v962
    %v3708 = vunpack.c.l.b16 %v963
    %v3709 = vunpack.c.h.b16 %v963
    %v3710 = vunpack.c.l.b16 %v964
    %v3711 = vunpack.c.h.b16 %v964
    %v3712 = vunpack.c.l.b16 %v965
    %v3713 = vunpack.c.h.b16 %v965
    %v3714 = vunpack.c.l.b16 %v966
    %v3715 = vunpack.c.h.b16 %v966
    %v3716 = vunpack.c.l.b16 %v967
    %v3717 = vunpack.c.h.b16 %v967
    %v3718 = vunpack.c.l.b16 %v968
    %v3719 = vunpack.c.h.b16 %v968
    %v3720 = vunpack.c.l.b16 %v969
    %v3721 = vunpack.c.h.b16 %v969
    %v3722 = vunpack.c.l.b16 %v970
    %v3723 = vunpack.c.h.b16 %v970
    %v3724 = vunpack.c.l.b16 %v971
    %v3725 = vunpack.c.h.b16 %v971
    %v3726 = vunpack.c.l.b16 %v972
    %v3727 = vunpack.c.h.b16 %v972
    %v3728 = vunpack.c.l.b16 %v973
    %v3729 = vunpack.c.h.b16 %v973
    %v3730 = vunpack.c.l.b16 %v974
    %v3731 = vunpack.c.h.b16 %v974
    %v3732 = vunpack.c.l.b16 %v975
    %v3733 = vunpack.c.h.b16 %v975
    %v3734 = vunpack.c.l.b16 %v976
    %v3735 = vunpack.c.h.b16 %v976
    %v3736 = vunpack.c.l.b16 %v977
    %v3737 = vunpack.c.h.b16 %v977
    %v3738 = vunpack.c.l.b16 %v978
    %v3739 = vunpack.c.h.b16 %v978
    %v3740 = vunpack.c.l.b16 %v979
    %v3741 = vunpack.c.h.b16 %v979
    %v3742 = vunpack.c.l.b16 %v980
    %v3743 = vunpack.c.h.b16 %v980
    %v3744 = vunpack.c.l.b16 %v981
    %v3745 = vunpack.c.h.b16 %v981
    %v3746 = vunpack.c.l.b16 %v982
    %v3747 = vunpack.c.h.b16 %v982
    %v3748 = vunpack.c.l.b16 %v983
    %v3749 = vunpack.c.h.b16 %v983
    %v3750 = vunpack.c.l.b16 %v984
    %v3751 = vunpack.c.h.b16 %v984
    %v3752 = vunpack.c.l.b16 %v985
    %v3753 = vunpack.c.h.b16 %v985
    %v3754 = vunpack.c.l.b16 %v986
    %v3755 = vunpack.c.h.b16 %v986
    %v3756 = vunpack.c.l.b16 %v987
    %v3757 = vunpack.c.h.b16 %v987
    %v3758 = vunpack.c.l.b16 %v988
    %v3759 = vunpack.c.h.b16 %v988
    %v3760 = vunpack.c.l.b16 %v989
    %v3761 = vunpack.c.h.b16 %v989
    %v3762 = vunpack.c.l.b16 %v990
    %v3763 = vunpack.c.h.b16 %v990
    %v3764 = vunpack.c.l.b16 %v991
    %v3765 = vunpack.c.h.b16 %v991
    %v3766 = vunpack.c.l.b16 %v992
    %v3767 = vunpack.c.h.b16 %v992
    %v3768 = vunpack.c.l.b16 %v993
    %v3769 = vunpack.c.h.b16 %v993
    %v3770 = vunpack.c.l.b16 %v994
    %v3771 = vunpack.c.h.b16 %v994
    %v3772 = vunpack.c.l.b16 %v995
    %v3773 = vunpack.c.h.b16 %v995
    %v3774 = vunpack.c.l.b16 %v996
    %v3775 = vunpack.c.h.b16 %v996
    %v3776 = vunpack.c.l.b16 %v997
    %v3777 = vunpack.c.h.b16 %v997
    %v3778 = vunpack.c.l.b16 %v998
    %v3779 = vunpack.c.h.b16 %v998
    %v3780 = vunpack.c.l.b16 %v999
    %v3781 = vunpack.c.h.b16 %v999
    %v3782 = vunpack.c.l.b16 %v1000
    %v3783 = vunpack.c.h.b16 %v1000
    %v3784 = vunpack.c.l.b16 %v1001
    %v3785 = vunpack.c.h.b16 %v1001
    %v3786 = vunpack.c.l.b16 %v1002
    %v3787 = vunpack.c.h.b16 %v1002
    %v3788 = vunpack.c.l.b16 %v1003
    %v3789 = vunpack.c.h.b16 %v1003
    %v3790 = vunpack.c.l.b16 %v1004
    %v3791 = vunpack.c.h.b16 %v1004
    %v3792 = vunpack.c.l.b16 %v1005
    %v3793 = vunpack.c.h.b16 %v1005
    %v3794 = vunpack.c.l.b16 %v1006
    %v3795 = vunpack.c.h.b16 %v1006
    %v3796 = vunpack.c.l.b16 %v1007
    %v3797 = vunpack.c.h.b16 %v1007
    %v3798 = vunpack.c.l.b16 %v1008
    %v3799 = vunpack.c.h.b16 %v1008
    %v3800 = vunpack.c.l.b16 %v1009
    %v3801 = vunpack.c.h.b16 %v1009
    %v3802 = vunpack.c.l.b16 %v1010
    %v3803 = vunpack.c.h.b16 %v1010
    %v3804 = vunpack.c.l.b16 %v1011
    %v3805 = vunpack.c.h.b16 %v1011
    %v3806 = vunpack.c.l.b16 %v1012
    %v3807 = vunpack.c.h.b16 %v1012
    %v3808 = vunpack.c.l.b16 %v1013
    %v3809 = vunpack.c.h.b16 %v1013
    %v3810 = vunpack.c.l.b16 %v1014
    %v3811 = vunpack.c.h.b16 %v1014
    %v3812 = vunpack.c.l.b16 %v1015
    %v3813 = vunpack.c.h.b16 %v1015
    %v3814 = vunpack.c.l.b16 %v1016
    %v3815 = vunpack.c.h.b16 %v1016
    %v3816 = vunpack.c.l.b16 %v1017
    %v3817 = vunpack.c.h.b16 %v1017
    %v3818 = vunpack.c.l.b16 %v1018
    %v3819 = vunpack.c.h.b16 %v1018
    %v3820 = vunpack.c.l.b16 %v1019
    %v3821 = vunpack.c.h.b16 %v1019
    %v3822 = vunpack.c.l.b16 %v1020
    %v3823 = vunpack.c.h.b16 %v1020
    %v3824 = vunpack.c.l.b16 %v1021
    %v3825 = vunpack.c.h.b16 %v1021
    %v3826 = vunpack.c.l.b16 %v1022
    %v3827 = vunpack.c.h.b16 %v1022
    %v3828 = vunpack.c.l.b16 %v1023
    %v3829 = vunpack.c.h.b16 %v1023
    %v3830 = vunpack.c.l.b16 %v1024
    %v3831 = vunpack.c.h.b16 %v1024
    %v3832 = vunpack.c.l.b16 %v1025
    %v3833 = vunpack.c.h.b16 %v1025
    %v3834 = vunpack.c.l.b16 %v1026
    %v3835 = vunpack.c.h.b16 %v1026
    %v3836 = vunpack.c.l.b16 %v1027
    %v3837 = vunpack.c.h.b16 %v1027
    %v3838 = vunpack.c.l.b16 %v1028
    %v3839 = vunpack.c.h.b16 %v1028
    %v3840 = vunpack.c.l.b16 %v1029
    %v3841 = vunpack.c.h.b16 %v1029
    %v3842 = vunpack.c.l.b16 %v1030
    %v3843 = vunpack.c.h.b16 %v1030
    %v3844 = vunpack.c.l.b16 %v1031
    %v3845 = vunpack.c.h.b16 %v1031
    %v3846 = vunpack.c.l.b16 %v1032
    %v3847 = vunpack.c.h.b16 %v1032
    %v3848 = vunpack.c.l.b16 %v1033
    %v3849 = vunpack.c.h.b16 %v1033
    %v3850 = vunpack.c.l.b16 %v1034
    %v3851 = vunpack.c.h.b16 %v1034
    %v3852 = vunpack.c.l.b16 %v1035
    %v3853 = vunpack.c.h.b16 %v1035
    %v3854 = vunpack.c.l.b16 %v1036
    %v3855 = vunpack.c.h.b16 %v1036
    %v3856 = vunpack.c.l.b16 %v1037
    %v3857 = vunpack.c.h.b16 %v1037
    %v3858 = vunpack.c.l.b16 %v1038
    %v3859 = vunpack.c.h.b16 %v1038
    %v3860 = vunpack.c.l.b16 %v1039
    %v3861 = vunpack.c.h.b16 %v1039
    %v3862 = vunpack.c.l.b16 %v1040
    %v3863 = vunpack.c.h.b16 %v1040
    %v3864 = vunpack.c.l.b16 %v1041
    %v3865 = vunpack.c.h.b16 %v1041
    %v3866 = vunpack.c.l.b16 %v1042
    %v3867 = vunpack.c.h.b16 %v1042
    %v3868 = vunpack.c.l.b16 %v1043
    %v3869 = vunpack.c.h.b16 %v1043
    %v3870 = vunpack.c.l.b16 %v1044
    %v3871 = vunpack.c.h.b16 %v1044
    %v3872 = vunpack.c.l.b16 %v1045
    %v3873 = vunpack.c.h.b16 %v1045
    %v3874 = vunpack.c.l.b16 %v1046
    %v3875 = vunpack.c.h.b16 %v1046
    %v3876 = vunpack.c.l.b16 %v1047
    %v3877 = vunpack.c.h.b16 %v1047
    %v3878 = vunpack.c.l.b16 %v1048
    %v3879 = vunpack.c.h.b16 %v1048
    %v3880 = vunpack.c.l.b16 %v1049
    %v3881 = vunpack.c.h.b16 %v1049
    %v3882 = vunpack.c.l.b16 %v1050
    %v3883 = vunpack.c.h.b16 %v1050
    %v3884 = vunpack.c.l.b16 %v1051
    %v3885 = vunpack.c.h.b16 %v1051
    %v3886 = vunpack.c.l.b16 %v1052
    %v3887 = vunpack.c.h.b16 %v1052
    %v3888 = vunpack.c.l.b16 %v1053
    %v3889 = vunpack.c.h.b16 %v1053
    %v3890 = vunpack.c.l.b16 %v1054
    %v3891 = vunpack.c.h.b16 %v1054
    %v3892 = vunpack.c.l.b16 %v1055
    %v3893 = vunpack.c.h.b16 %v1055
    %v3894 = vunpack.c.l.b16 %v1056
    %v3895 = vunpack.c.h.b16 %v1056
    %v3896 = vunpack.c.l.b16 %v1057
    %v3897 = vunpack.c.h.b16 %v1057
    %v3898 = vunpack.c.l.b16 %v1058
    %v3899 = vunpack.c.h.b16 %v1058
    %v3900 = vunpack.c.l.b16 %v1059
    %v3901 = vunpack.c.h.b16 %v1059
    %v3902 = vunpack.c.l.b16 %v1060
    %v3903 = vunpack.c.h.b16 %v1060
    %v3904 = vunpack.c.l.b16 %v1061
    %v3905 = vunpack.c.h.b16 %v1061
    %v3906 = vunpack.c.l.b16 %v1062
    %v3907 = vunpack.c.h.b16 %v1062
    %v3908 = vunpack.c.l.b16 %v1063
    %v3909 = vunpack.c.h.b16 %v1063
    %v3910 = vunpack.c.l.b16 %v1064
    %v3911 = vunpack.c.h.b16 %v1064
    %v3912 = vunpack.c.l.b16 %v1065
    %v3913 = vunpack.c.h.b16 %v1065
    %v3914 = vunpack.c.l.b16 %v1066
    %v3915 = vunpack.c.h.b16 %v1066
    %v3916 = vunpack.c.l.b16 %v1067
    %v3917 = vunpack.c.h.b16 %v1067
    %v3918 = vunpack.c.l.b16 %v1068
    %v3919 = vunpack.c.h.b16 %v1068
    %v3920 = vunpack.c.l.b16 %v1069
    %v3921 = vunpack.c.h.b16 %v1069
    %v3922 = vunpack.c.l.b16 %v1070
    %v3923 = vunpack.c.h.b16 %v1070
    %v3924 = vunpack.c.l.b16 %v1071
    %v3925 = vunpack.c.h.b16 %v1071
    %v3926 = vunpack.c.l.b16 %v1072
    %v3927 = vunpack.c.h.b16 %v1072
    %v3928 = vunpack.c.l.b16 %v1073
    %v3929 = vunpack.c.h.b16 %v1073
    %v3930 = vunpack.c.l.b16 %v1074
    %v3931 = vunpack.c.h.b16 %v1074
    %v3932 = vunpack.c.l.b16 %v1075
    %v3933 = vunpack.c.h.b16 %v1075
    %v3934 = vunpack.c.l.b16 %v1076
    %v3935 = vunpack.c.h.b16 %v1076
    %v3936 = vunpack.c.l.b16 %v1077
    %v3937 = vunpack.c.h.b16 %v1077
    %v3938 = vunpack.c.l.b16 %v1078
    %v3939 = vunpack.c.h.b16 %v1078
    %v3940 = vunpack.c.l.b16 %v1079
    %v3941 = vunpack.c.h.b16 %v1079
    %v3942 = vunpack.c.l.b16 %v1080
    %v3943 = vunpack.c.h.b16 %v1080
    %v3944 = vunpack.c.l.b16 %v1081
    %v3945 = vunpack.c.h.b16 %v1081
    %v3946 = vunpack.c.l.b16 %v1082
    %v3947 = vunpack.c.h.b16 %v1082
    %v3948 = vunpack.c.l.b16 %v1083
    %v3949 = vunpack.c.h.b16 %v1083
    %v3950 = vunpack.c.l.b16 %v1084
    %v3951 = vunpack.c.h.b16 %v1084
    %v3952 = vunpack.c.l.b16 %v1085
    %v3953 = vunpack.c.h.b16 %v1085
    %v3954 = vunpack.c.l.b16 %v1086
    %v3955 = vunpack.c.h.b16 %v1086
    %v3956 = vunpack.c.l.b16 %v1087
    %v3957 = vunpack.c.h.b16 %v1087
    %v3958 = vunpack.c.l.b16 %v1088
    %v3959 = vunpack.c.h.b16 %v1088
    %v3960 = vunpack.c.l.b16 %v1089
    %v3961 = vunpack.c.h.b16 %v1089
    %v3962 = vunpack.c.l.b16 %v1090
    %v3963 = vunpack.c.h.b16 %v1090
    %v3964 = vunpack.c.l.b16 %v1091
    %v3965 = vunpack.c.h.b16 %v1091
    %v3966 = vunpack.c.l.b16 %v1092
    %v3967 = vunpack.c.h.b16 %v1092
    %v3968 = vunpack.c.l.b16 %v1093
    %v3969 = vunpack.c.h.b16 %v1093
    %v3970 = vunpack.c.l.b16 %v1094
    %v3971 = vunpack.c.h.b16 %v1094
    %v3972 = vunpack.c.l.b16 %v1095
    %v3973 = vunpack.c.h.b16 %v1095
    %v3974 = vunpack.c.l.b16 %v1096
    %v3975 = vunpack.c.h.b16 %v1096
    %v3976 = vunpack.c.l.b16 %v1097
    %v3977 = vunpack.c.h.b16 %v1097
    %v3978 = vunpack.c.l.b16 %v1098
    %v3979 = vunpack.c.h.b16 %v1098
    %v3980 = vunpack.c.l.b16 %v1099
    %v3981 = vunpack.c.h.b16 %v1099
    %v3982 = vunpack.c.l.b16 %v1100
    %v3983 = vunpack.c.h.b16 %v1100
    %v3984 = vunpack.c.l.b16 %v1101
    %v3985 = vunpack.c.h.b16 %v1101
    %v3986 = vunpack.c.l.b16 %v1102
    %v3987 = vunpack.c.h.b16 %v1102
    %v3988 = vunpack.c.l.b16 %v1103
    %v3989 = vunpack.c.h.b16 %v1103
    %v3990 = vunpack.c.l.b16 %v1104
    %v3991 = vunpack.c.h.b16 %v1104
    %v3992 = vunpack.c.l.b16 %v1105
    %v3993 = vunpack.c.h.b16 %v1105
    %v3994 = vunpack.c.l.b16 %v1106
    %v3995 = vunpack.c.h.b16 %v1106
    %v3996 = vunpack.c.l.b16 %v1107
    %v3997 = vunpack.c.h.b16 %v1107
    %v3998 = vunpack.c.l.b16 %v1108
    %v3999 = vunpack.c.h.b16 %v1108
    %v4000 = vunpack.c.l.b16 %v1109
    %v4001 = vunpack.c.h.b16 %v1109
    %v4002 = vunpack.c.l.b16 %v1110
    %v4003 = vunpack.c.h.b16 %v1110
    %v4004 = vunpack.c.l.b16 %v1111
    %v4005 = vunpack.c.h.b16 %v1111
    %v4006 = vunpack.c.l.b16 %v1112
    %v4007 = vunpack.c.h.b16 %v1112
    %v4008 = vunpack.c.l.b16 %v1113
    %v4009 = vunpack.c.h.b16 %v1113
    %v4010 = vunpack.c.l.b16 %v1114
    %v4011 = vunpack.c.h.b16 %v1114
    %v4012 = vunpack.c.l.b16 %v1115
    %v4013 = vunpack.c.h.b16 %v1115
    %v4014 = vunpack.c.l.b16 %v1116
    %v4015 = vunpack.c.h.b16 %v1116
    %v4016 = vunpack.c.l.b16 %v1117
    %v4017 = vunpack.c.h.b16 %v1117
    %v4018 = vunpack.c.l.b16 %v1118
    %v4019 = vunpack.c.h.b16 %v1118
    %v4020 = vunpack.c.l.b16 %v1119
    %v4021 = vunpack.c.h.b16 %v1119
    %v4022 = vunpack.c.l.b16 %v1120
    %v4023 = vunpack.c.h.b16 %v1120
    %v4024 = vunpack.c.l.b16 %v1121
    %v4025 = vunpack.c.h.b16 %v1121
    %v4026 = vunpack.c.l.b16 %v1122
    %v4027 = vunpack.c.h.b16 %v1122
    %v4028 = vunpack.c.l.b16 %v1123
    %v4029 = vunpack.c.h.b16 %v1123
    %v4030 = vunpack.c.l.b16 %v1124
    %v4031 = vunpack.c.h.b16 %v1124
    %v4032 = vunpack.c.l.b16 %v1125
    %v4033 = vunpack.c.h.b16 %v1125
    %v4034 = vunpack.c.l.b16 %v1126
    %v4035 = vunpack.c.h.b16 %v1126
    %v4036 = vunpack.c.l.b16 %v1127
    %v4037 = vunpack.c.h.b16 %v1127
    %v4038 = vunpack.c.l.b16 %v1128
    %v4039 = vunpack.c.h.b16 %v1128
    %v4040 = vunpack.c.l.b16 %v1129
    %v4041 = vunpack.c.h.b16 %v1129
    %v4042 = vunpack.c.l.b16 %v1130
    %v4043 = vunpack.c.h.b16 %v1130
    %v4044 = vunpack.c.l.b16 %v1131
    %v4045 = vunpack.c.h.b16 %v1131
    %v4046 = vunpack.c.l.b16 %v1132
    %v4047 = vunpack.c.h.b16 %v1132
    %v4048 = vunpack.c.l.b16 %v1133
    %v4049 = vunpack.c.h.b16 %v1133
    %v4050 = vunpack.c.l.b16 %v1134
    %v4051 = vunpack.c.h.b16 %v1134
    %v4052 = vunpack.c.l.b16 %v1135
    %v4053 = vunpack.c.h.b16 %v1135
    %v4054 = vunpack.c.l.b16 %v1136
    %v4055 = vunpack.c.h.b16 %v1136
    %v4056 = vunpack.c.l.b16 %v1137
    %v4057 = vunpack.c.h.b16 %v1137
    %v4058 = vunpack.c.l.b16 %v1138
    %v4059 = vunpack.c.h.b16 %v1138
    %v4060 = vunpack.c.l.b16 %v1139
    %v4061 = vunpack.c.h.b16 %v1139
    %v4062 = vunpack.c.l.b16 %v1140
    %v4063 = vunpack.c.h.b16 %v1140
    %v4064 = vunpack.c.l.b16 %v1141
    %v4065 = vunpack.c.h.b16 %v1141
    %v4066 = vunpack.c.l.b16 %v1142
    %v4067 = vunpack.c.h.b16 %v1142
    %v4068 = vunpack.c.l.b16 %v1143
    %v4069 = vunpack.c.h.b16 %v1143
    %v4070 = vunpack.c.l.b16 %v1144
    %v4071 = vunpack.c.h.b16 %v1144
    %v4072 = vunpack.c.l.b16 %v1145
    %v4073 = vunpack.c.h.b16 %v1145
    %v4074 = vunpack.c.l.b16 %v1146
    %v4075 = vunpack.c.h.b16 %v1146
    %v4076 = vunpack.c.l.b16 %v1147
    %v4077 = vunpack.c.h.b16 %v1147
    %v4078 = vunpack.c.l.b16 %v1148
    %v4079 = vunpack.c.h.b16 %v1148
    %v4080 = vunpack.c.l.b16 %v1149
    %v4081 = vunpack.c.h.b16 %v1149
    %v4082 = vunpack.c.l.b16 %v1150
    %v4083 = vunpack.c.h.b16 %v1150
    %v4084 = vunpack.c.l.b16 %v1151
    %v4085 = vunpack.c.h.b16 %v1151
    %v4086 = vunpack.c.l.b16 %v1152
    %v4087 = vunpack.c.h.b16 %v1152
    %v4088 = vunpack.c.l.b16 %v1153
    %v4089 = vunpack.c.h.b16 %v1153
    %v4090 = vunpack.c.l.b16 %v1154
    %v4091 = vunpack.c.h.b16 %v1154
    %v4092 = vunpack.c.l.b16 %v1155
    %v4093 = vunpack.c.h.b16 %v1155
    %v4094 = vunpack.c.l.b16 %v1156
    %v4095 = vunpack.c.h.b16 %v1156
    %v4096 = vunpack.c.l.b16 %v1157
    %v4097 = vunpack.c.h.b16 %v1157
    %v4098 = vunpack.c.l.b16 %v1158
    %v4099 = vunpack.c.h.b16 %v1158
    %v4100 = vunpack.c.l.b16 %v1159
    %v4101 = vunpack.c.h.b16 %v1159
    %v4102 = vunpack.c.l.b16 %v1160
    %v4103 = vunpack.c.h.b16 %v1160
    %v4104 = vunpack.c.l.b16 %v1161
    %v4105 = vunpack.c.h.b16 %v1161
    %v4106 = vunpack.c.l.b16 %v1162
    %v4107 = vunpack.c.h.b16 %v1162
    %v4108 = vunpack.c.l.b16 %v1163
    %v4109 = vunpack.c.h.b16 %v1163
    %v4110 = vunpack.c.l.b16 %v1164
    %v4111 = vunpack.c.h.b16 %v1164
    %v4112 = vunpack.c.l.b16 %v1165
    %v4113 = vunpack.c.h.b16 %v1165
    %v4114 = vunpack.c.l.b16 %v1166
    %v4115 = vunpack.c.h.b16 %v1166
    %v4116 = vunpack.c.l.b16 %v1167
    %v4117 = vunpack.c.h.b16 %v1167
    %v4118 = vunpack.c.l.b16 %v1168
    %v4119 = vunpack.c.h.b16 %v1168
    %v4120 = vunpack.c.l.b16 %v1169
    %v4121 = vunpack.c.h.b16 %v1169
    %v4122 = vunpack.c.l.b16 %v1170
    %v4123 = vunpack.c.h.b16 %v1170
    %v4124 = vunpack.c.l.b16 %v1171
    %v4125 = vunpack.c.h.b16 %v1171
    %v4126 = vunpack.c.l.b16 %v1172
    %v4127 = vunpack.c.h.b16 %v1172
    %v4128 = vunpack.c.l.b16 %v1173
    %v4129 = vunpack.c.h.b16 %v1173
    %v4130 = vunpack.c.l.b16 %v1174
    %v4131 = vunpack.c.h.b16 %v1174
    %v4132 = vunpack.c.l.b16 %v1175
    %v4133 = vunpack.c.h.b16 %v1175
    %v4134 = vunpack.c.l.b16 %v1176
    %v4135 = vunpack.c.h.b16 %v1176
    %v4136 = vunpack.c.l.b16 %v1177
    %v4137 = vunpack.c.h.b16 %v1177
    %v4138 = vunpack.c.l.b16 %v1178
    %v4139 = vunpack.c.h.b16 %v1178
    %v4140 = vunpack.c.l.b16 %v1179
    %v4141 = vunpack.c.h.b16 %v1179
    %v4142 = vunpack.c.l.b16 %v1180
    %v4143 = vunpack.c.h.b16 %v1180
    %v4144 = vunpack.c.l.b16 %v1181
    %v4145 = vunpack.c.h.b16 %v1181
    %v4146 = vunpack.c.l.b16 %v1182
    %v4147 = vunpack.c.h.b16 %v1182
    %v4148 = vunpack.c.l.b16 %v1183
    %v4149 = vunpack.c.h.b16 %v1183
    %v4150 = vunpack.c.l.b16 %v1184
    %v4151 = vunpack.c.h.b16 %v1184
    %v4152 = vunpack.c.l.b16 %v1185
    %v4153 = vunpack.c.h.b16 %v1185
    %v4154 = vunpack.c.l.b16 %v1186
    %v4155 = vunpack.c.h.b16 %v1186
    %v4156 = vunpack.c.l.b16 %v1187
    %v4157 = vunpack.c.h.b16 %v1187
    %v4158 = vunpack.c.l.b16 %v1188
    %v4159 = vunpack.c.h.b16 %v1188
    %v4160 = vunpack.c.l.b16 %v1189
    %v4161 = vunpack.c.h.b16 %v1189
    %v4162 = vunpack.c.l.b16 %v1190
    %v4163 = vunpack.c.h.b16 %v1190
    %v4164 = vunpack.c.l.b16 %v1191
    %v4165 = vunpack.c.h.b16 %v1191
    %v4166 = vunpack.c.l.b16 %v1192
    %v4167 = vunpack.c.h.b16 %v1192
    %v4168 = vunpack.c.l.b16 %v1193
    %v4169 = vunpack.c.h.b16 %v1193
    %v4170 = vunpack.c.l.b16 %v1194
    %v4171 = vunpack.c.h.b16 %v1194
    %v4172 = vunpack.c.l.b16 %v1195
    %v4173 = vunpack.c.h.b16 %v1195
    %v4174 = vunpack.c.l.b16 %v1196
    %v4175 = vunpack.c.h.b16 %v1196
    %v4176 = vunpack.c.l.b16 %v1197
    %v4177 = vunpack.c.h.b16 %v1197
    %v4178 = vunpack.c.l.b16 %v1198
    %v4179 = vunpack.c.h.b16 %v1198
    %v4180 = vunpack.c.l.b16 %v1199
    %v4181 = vunpack.c.h.b16 %v1199
    %v4182 = vunpack.c.l.b16 %v1200
    %v4183 = vunpack.c.h.b16 %v1200
    %v4184 = vunpack.c.l.b16 %v1201
    %v4185 = vunpack.c.h.b16 %v1201
    %v4186 = vunpack.c.l.b16 %v1202
    %v4187 = vunpack.c.h.b16 %v1202
    %v4188 = vunpack.c.l.b16 %v1203
    %v4189 = vunpack.c.h.b16 %v1203
    %v4190 = vunpack.c.l.b16 %v1204
    %v4191 = vunpack.c.h.b16 %v1204
    %v4192 = vunpack.c.l.b16 %v1205
    %v4193 = vunpack.c.h.b16 %v1205
    %v4194 = vunpack.c.l.b16 %v1206
    %v4195 = vunpack.c.h.b16 %v1206
    %v4196 = vunpack.c.l.b16 %v1207
    %v4197 = vunpack.c.h.b16 %v1207
    %v4198 = vunpack.c.l.b16 %v1208
    %v4199 = vunpack.c.h.b16 %v1208
    %v4200 = vunpack.c.l.b16 %v1209
    %v4201 = vunpack.c.h.b16 %v1209
    %v4202 = vunpack.c.l.b16 %v1210
    %v4203 = vunpack.c.h.b16 %v1210
    %v4204 = vunpack.c.l.b16 %v1211
    %v4205 = vunpack.c.h.b16 %v1211
    %v4206 = vunpack.c.l.b16 %v1212
    %v4207 = vunpack.c.h.b16 %v1212
    %v4208 = vunpack.c.l.b16 %v1213
    %v4209 = vunpack.c.h.b16 %v1213
    %v4210 = vunpack.c.l.b16 %v1214
    %v4211 = vunpack.c.h.b16 %v1214
    %v4212 = vunpack.c.l.b16 %v1215
    %v4213 = vunpack.c.h.b16 %v1215
    %v4214 = vunpack.c.l.b16 %v1216
    %v4215 = vunpack.c.h.b16 %v1216
    %v4216 = vunpack.c.l.b16 %v1217
    %v4217 = vunpack.c.h.b16 %v1217
    %v4218 = vunpack.c.l.b16 %v1218
    %v4219 = vunpack.c.h.b16 %v1218
    %v4220 = vunpack.c.l.b16 %v1219
    %v4221 = vunpack.c.h.b16 %v1219
    %v4222 = vunpack.c.l.b16 %v1220
    %v4223 = vunpack.c.h.b16 %v1220
    %v4224 = vunpack.c.l.b16 %v1221
    %v4225 = vunpack.c.h.b16 %v1221
    %v4226 = vunpack.c.l.b16 %v1222
    %v4227 = vunpack.c.h.b16 %v1222
    %v4228 = vunpack.c.l.b16 %v1223
    %v4229 = vunpack.c.h.b16 %v1223
    %v4230 = vunpack.c.l.b16 %v1224
    %v4231 = vunpack.c.h.b16 %v1224
    %v4232 = vunpack.c.l.b16 %v1225
    %v4233 = vunpack.c.h.b16 %v1225
    %v4234 = vunpack.c.l.b16 %v1226
    %v4235 = vunpack.c.h.b16 %v1226
    %v4236 = vunpack.c.l.b16 %v1227
    %v4237 = vunpack.c.h.b16 %v1227
    %v4238 = vunpack.c.l.b16 %v1228
    %v4239 = vunpack.c.h.b16 %v1228
    %v4240 = vunpack.c.l.b16 %v1229
    %v4241 = vunpack.c.h.b16 %v1229
    %v4242 = vunpack.c.l.b16 %v1230
    %v4243 = vunpack.c.h.b16 %v1230
    %v4244 = vunpack.c.l.b16 %v1231
    %v4245 = vunpack.c.h.b16 %v1231
    %v4246 = vunpack.c.l.b16 %v1232
    %v4247 = vunpack.c.h.b16 %v1232
    %v4248 = vunpack.c.l.b16 %v1233
    %v4249 = vunpack.c.h.b16 %v1233
    %v4250 = vunpack.c.l.b16 %v1234
    %v4251 = vunpack.c.h.b16 %v1234
    %v4252 = vunpack.c.l.b16 %v1235
    %v4253 = vunpack.c.h.b16 %v1235
    %v4254 = vunpack.c.l.b16 %v1236
    %v4255 = vunpack.c.h.b16 %v1236
    %v4256 = vunpack.c.l.b16 %v1237
    %v4257 = vunpack.c.h.b16 %v1237
    %v4258 = vunpack.c.l.b16 %v1238
    %v4259 = vunpack.c.h.b16 %v1238
    %v4260 = vunpack.c.l.b16 %v1239
    %v4261 = vunpack.c.h.b16 %v1239
    %v4262 = vunpack.c.l.b16 %v1240
    %v4263 = vunpack.c.h.b16 %v1240
    %v4264 = vunpack.c.l.b16 %v1241
    %v4265 = vunpack.c.h.b16 %v1241
    %v4266 = vunpack.c.l.b16 %v1242
    %v4267 = vunpack.c.h.b16 %v1242
    %v4268 = vunpack.c.l.b16 %v1243
    %v4269 = vunpack.c.h.b16 %v1243
    %v4270 = vunpack.c.l.b16 %v1244
    %v4271 = vunpack.c.h.b16 %v1244
    %v4272 = vunpack.c.l.b16 %v1245
    %v4273 = vunpack.c.h.b16 %v1245
    %v4274 = vunpack.c.l.b16 %v1246
    %v4275 = vunpack.c.h.b16 %v1246
    %v4276 = vunpack.c.l.b16 %v1247
    %v4277 = vunpack.c.h.b16 %v1247
    %v4278 = vunpack.c.l.b16 %v1248
    %v4279 = vunpack.c.h.b16 %v1248
    %v4280 = vunpack.c.l.b16 %v1249
    %v4281 = vunpack.c.h.b16 %v1249
    %v4282 = vunpack.c.l.b16 %v1250
    %v4283 = vunpack.c.h.b16 %v1250
    %v4284 = vunpack.c.l.b16 %v1251
    %v4285 = vunpack.c.h.b16 %v1251
    %v4286 = vunpack.c.l.b16 %v1252
    %v4287 = vunpack.c.h.b16 %v1252
    %v4288 = vunpack.c.l.b16 %v1253
    %v4289 = vunpack.c.h.b16 %v1253
    %v4290 = vunpack.c.l.b16 %v1254
    %v4291 = vunpack.c.h.b16 %v1254
    %v4292 = vunpack.c.l.b16 %v1255
    %v4293 = vunpack.c.h.b16 %v1255
    %v4294 = vunpack.c.l.b16 %v1256
    %v4295 = vunpack.c.h.b16 %v1256
    %v4296 = vunpack.c.l.b16 %v1257
    %v4297 = vunpack.c.h.b16 %v1257
    %v4298 = vunpack.c.l.b16 %v1258
    %v4299 = vunpack.c.h.b16 %v1258
    %v4300 = vunpack.c.l.b16 %v1259
    %v4301 = vunpack.c.h.b16 %v1259
    %v4302 = vunpack.c.l.b16 %v1260
    %v4303 = vunpack.c.h.b16 %v1260
    %v4304 = vunpack.c.l.b16 %v1261
    %v4305 = vunpack.c.h.b16 %v1261
    %v4306 = vunpack.c.l.b16 %v1262
    %v4307 = vunpack.c.h.b16 %v1262
    %v4308 = vunpack.c.l.b16 %v1263
    %v4309 = vunpack.c.h.b16 %v1263
    %v4310 = vunpack.c.l.b16 %v1264
    %v4311 = vunpack.c.h.b16 %v1264
    %v4312 = vunpack.c.l.b16 %v1265
    %v4313 = vunpack.c.h.b16 %v1265
    %v4314 = vunpack.c.l.b16 %v1266
    %v4315 = vunpack.c.h.b16 %v1266
    %v4316 = vunpack.c.l.b16 %v1267
    %v4317 = vunpack.c.h.b16 %v1267
    %v4318 = vunpack.c.l.b16 %v1268
    %v4319 = vunpack.c.h.b16 %v1268
    %v4320 = vunpack.c.l.b16 %v1269
    %v4321 = vunpack.c.h.b16 %v1269
    %v4322 = vunpack.c.l.b16 %v1270
    %v4323 = vunpack.c.h.b16 %v1270
    %v4324 = vunpack.c.l.b16 %v1271
    %v4325 = vunpack.c.h.b16 %v1271
    %v4326 = vunpack.c.l.b16 %v1272
    %v4327 = vunpack.c.h.b16 %v1272
    %v4328 = vunpack.c.l.b16 %v1273
    %v4329 = vunpack.c.h.b16 %v1273
    %v4330 = vunpack.c.l.b16 %v1274
    %v4331 = vunpack.c.h.b16 %v1274
    %v4332 = vunpack.c.l.b16 %v1275
    %v4333 = vunpack.c.h.b16 %v1275
    %v4334 = vunpack.c.l.b16 %v1276
    %v4335 = vunpack.c.h.b16 %v1276
    %v4336 = vunpack.c.l.b16 %v1277
    %v4337 = vunpack.c.h.b16 %v1277
    %v4338 = vunpack.c.l.b16 %v1278
    %v4339 = vunpack.c.h.b16 %v1278
    %v4340 = vunpack.c.l.b16 %v1279
    %v4341 = vunpack.c.h.b16 %v1279
    %v4342 = vunpack.c.l.b16 %v1280
    %v4343 = vunpack.c.h.b16 %v1280
    %v4344 = vunpack.c.l.b16 %v1281
    %v4345 = vunpack.c.h.b16 %v1281
    %v4346 = vunpack.c.l.b16 %v1282
    %v4347 = vunpack.c.h.b16 %v1282
    %v4348 = vunpack.c.l.b16 %v1283
    %v4349 = vunpack.c.h.b16 %v1283
    %v4350 = vunpack.c.l.b16 %v1284
    %v4351 = vunpack.c.h.b16 %v1284
    %v4352 = vunpack.c.l.b16 %v1285
    %v4353 = vunpack.c.h.b16 %v1285
    %v4354 = vunpack.c.l.b16 %v1286
    %v4355 = vunpack.c.h.b16 %v1286
    %v4356 = vunpack.c.l.b16 %v1287
    %v4357 = vunpack.c.h.b16 %v1287
    %v4358 = vunpack.c.l.b16 %v1288
    %v4359 = vunpack.c.h.b16 %v1288
    %v4360 = vunpack.c.l.b16 %v1289
    %v4361 = vunpack.c.h.b16 %v1289
    %v4362 = vunpack.c.l.b16 %v1290
    %v4363 = vunpack.c.h.b16 %v1290
    %v4364 = vunpack.c.l.b16 %v1291
    %v4365 = vunpack.c.h.b16 %v1291
    %v4366 = vunpack.c.l.b16 %v1292
    %v4367 = vunpack.c.h.b16 %v1292
    %v4368 = vunpack.c.l.b16 %v1293
    %v4369 = vunpack.c.h.b16 %v1293
    %v4370 = vunpack.c.l.b16 %v1294
    %v4371 = vunpack.c.h.b16 %v1294
    %v4372 = vunpack.c.l.b16 %v1295
    %v4373 = vunpack.c.h.b16 %v1295
    %v4374 = vunpack.c.l.b16 %v1296
    %v4375 = vunpack.c.h.b16 %v1296
    %v4376 = vunpack.c.l.b16 %v1297
    %v4377 = vunpack.c.h.b16 %v1297
    %v4378 = vunpack.c.l.b16 %v1298
    %v4379 = vunpack.c.h.b16 %v1298
    %v4380 = vunpack.c.l.b16 %v1299
    %v4381 = vunpack.c.h.b16 %v1299
    %v4382 = vunpack.c.l.b16 %v1300
    %v4383 = vunpack.c.h.b16 %v1300
    %v4384 = vunpack.c.l.b16 %v1301
    %v4385 = vunpack.c.h.b16 %v1301
    %v4386 = vunpack.c.l.b16 %v1302
    %v4387 = vunpack.c.h.b16 %v1302
    %v4388 = vunpack.c.l.b16 %v1303
    %v4389 = vunpack.c.h.b16 %v1303
    %v4390 = vunpack.c.l.b16 %v1304
    %v4391 = vunpack.c.h.b16 %v1304
    %v4392 = vunpack.c.l.b16 %v1305
    %v4393 = vunpack.c.h.b16 %v1305
    %v4394 = vunpack.c.l.b16 %v1306
    %v4395 = vunpack.c.h.b16 %v1306
    %v4396 = vunpack.c.l.b16 %v1307
    %v4397 = vunpack.c.h.b16 %v1307
    %v4398 = vunpack.c.l.b16 %v1308
    %v4399 = vunpack.c.h.b16 %v1308
    %v4400 = vunpack.c.l.b16 %v1309
    %v4401 = vunpack.c.h.b16 %v1309
    %v4402 = vunpack.c.l.b16 %v1310
    %v4403 = vunpack.c.h.b16 %v1310
    %v4404 = vunpack.c.l.b16 %v1311
    %v4405 = vunpack.c.h.b16 %v1311
    %v4406 = vunpack.c.l.b16 %v1312
    %v4407 = vunpack.c.h.b16 %v1312
    %v4408 = vunpack.c.l.b16 %v1313
    %v4409 = vunpack.c.h.b16 %v1313
    %v4410 = vunpack.c.l.b16 %v1314
    %v4411 = vunpack.c.h.b16 %v1314
    %v4412 = vunpack.c.l.b16 %v1315
    %v4413 = vunpack.c.h.b16 %v1315
    %v4414 = vunpack.c.l.b16 %v1316
    %v4415 = vunpack.c.h.b16 %v1316
    %v4416 = vunpack.c.l.b16 %v1317
    %v4417 = vunpack.c.h.b16 %v1317
    %v4418 = vunpack.c.l.b16 %v1318
    %v4419 = vunpack.c.h.b16 %v1318
    %v4420 = vunpack.c.l.b16 %v1319
    %v4421 = vunpack.c.h.b16 %v1319
    %v4422 = vunpack.c.l.b16 %v1320
    %v4423 = vunpack.c.h.b16 %v1320
    %v4424 = vunpack.c.l.b16 %v1321
    %v4425 = vunpack.c.h.b16 %v1321
    %v4426 = vunpack.c.l.b16 %v1322
    %v4427 = vunpack.c.h.b16 %v1322
    %v4428 = vunpack.c.l.b16 %v1323
    %v4429 = vunpack.c.h.b16 %v1323
    %v4430 = vunpack.c.l.b16 %v1324
    %v4431 = vunpack.c.h.b16 %v1324
    %v4432 = vunpack.c.l.b16 %v1325
    %v4433 = vunpack.c.h.b16 %v1325
    %v4434 = vunpack.c.l.b16 %v1326
    %v4435 = vunpack.c.h.b16 %v1326
    %v4436 = vunpack.c.l.b16 %v1327
    %v4437 = vunpack.c.h.b16 %v1327
    %v4438 = vunpack.c.l.b16 %v1328
    %v4439 = vunpack.c.h.b16 %v1328
    %v4440 = vunpack.c.l.b16 %v1329
    %v4441 = vunpack.c.h.b16 %v1329
    %v4442 = vunpack.c.l.b16 %v1330
    %v4443 = vunpack.c.h.b16 %v1330
    %v4444 = vunpack.c.l.b16 %v1331
    %v4445 = vunpack.c.h.b16 %v1331
    %v4446 = vunpack.c.l.b16 %v1332
    %v4447 = vunpack.c.h.b16 %v1332
    %v4448 = vunpack.c.l.b16 %v1333
    %v4449 = vunpack.c.h.b16 %v1333
    %v4450 = vunpack.c.l.b16 %v1334
    %v4451 = vunpack.c.h.b16 %v1334
    %v4452 = vunpack.c.l.b16 %v1335
    %v4453 = vunpack.c.h.b16 %v1335
    %v4454 = vunpack.c.l.b16 %v1336
    %v4455 = vunpack.c.h.b16 %v1336
    %v4456 = vunpack.c.l.b16 %v1337
    %v4457 = vunpack.c.h.b16 %v1337
    %v4458 = vunpack.c.l.b16 %v1338
    %v4459 = vunpack.c.h.b16 %v1338
    %v4460 = vunpack.c.l.b16 %v1339
    %v4461 = vunpack.c.h.b16 %v1339
    %v4462 = vunpack.c.l.b16 %v1340
    %v4463 = vunpack.c.h.b16 %v1340
    %v4464 = vunpack.c.l.b16 %v1341
    %v4465 = vunpack.c.h.b16 %v1341
    %v4466 = vunpack.c.l.b16 %v1342
    %v4467 = vunpack.c.h.b16 %v1342
    %v4468 = vunpack.c.l.b16 %v1343
    %v4469 = vunpack.c.h.b16 %v1343
    %v4470 = vunpack.c.l.b16 %v1344
    %v4471 = vunpack.c.h.b16 %v1344
    %v4472 = vunpack.c.l.b16 %v1345
    %v4473 = vunpack.c.h.b16 %v1345
    %v4474 = vunpack.c.l.b16 %v1346
    %v4475 = vunpack.c.h.b16 %v1346
    %v4476 = vunpack.c.l.b16 %v1347
    %v4477 = vunpack.c.h.b16 %v1347
    %v4478 = vunpack.c.l.b16 %v1348
    %v4479 = vunpack.c.h.b16 %v1348
    %v4480 = vunpack.c.l.b16 %v1349
    %v4481 = vunpack.c.h.b16 %v1349
    %v4482 = vunpack.c.l.b16 %v1350
    %v4483 = vunpack.c.h.b16 %v1350
    %v4484 = vunpack.c.l.b16 %v1351
    %v4485 = vunpack.c.h.b16 %v1351
    %v4486 = vunpack.c.l.b16 %v1352
    %v4487 = vunpack.c.h.b16 %v1352
    %v4488 = vunpack.c.l.b16 %v1353
    %v4489 = vunpack.c.h.b16 %v1353
    %v4490 = vunpack.c.l.b16 %v1354
    %v4491 = vunpack.c.h.b16 %v1354
    %v4492 = vunpack.c.l.b16 %v1355
    %v4493 = vunpack.c.h.b16 %v1355
    %v4494 = vunpack.c.l.b16 %v1356
    %v4495 = vunpack.c.h.b16 %v1356
    %v4496 = vunpack.c.l.b16 %v1357
    %v4497 = vunpack.c.h.b16 %v1357
    %v4498 = vunpack.c.l.b16 %v1358
    %v4499 = vunpack.c.h.b16 %v1358
    %v4500 = vunpack.c.l.b16 %v1359
    %v4501 = vunpack.c.h.b16 %v1359
    %v4502 = vunpack.c.l.b16 %v1360
    %v4503 = vunpack.c.h.b16 %v1360
    %v4504 = vunpack.c.l.b16 %v1361
    %v4505 = vunpack.c.h.b16 %v1361
    %v4506 = vunpack.c.l.b16 %v1362
    %v4507 = vunpack.c.h.b16 %v1362
    %v4508 = vunpack.c.l.b16 %v1363
    %v4509 = vunpack.c.h.b16 %v1363
    %v4510 = vunpack.c.l.b16 %v1364
    %v4511 = vunpack.c.h.b16 %v1364
    %v4512 = vunpack.c.l.b16 %v1365
    %v4513 = vunpack.c.h.b16 %v1365
    %v4514 = vunpack.c.l.b16 %v1366
    %v4515 = vunpack.c.h.b16 %v1366
    %v4516 = vunpack.c.l.b16 %v1367
    %v4517 = vunpack.c.h.b16 %v1367
    %v4518 = vunpack.c.l.b16 %v1368
    %v4519 = vunpack.c.h.b16 %v1368
    %v4520 = vunpack.c.l.b16 %v1369
    %v4521 = vunpack.c.h.b16 %v1369
    %v4522 = vunpack.c.l.b16 %v1370
    %v4523 = vunpack.c.h.b16 %v1370
    %v4524 = vunpack.c.l.b16 %v1371
    %v4525 = vunpack.c.h.b16 %v1371
    %v4526 = vunpack.c.l.b16 %v1372
    %v4527 = vunpack.c.h.b16 %v1372
    %v4528 = vunpack.c.l.b16 %v1373
    %v4529 = vunpack.c.h.b16 %v1373
    %v4530 = vpack.c.b16 %v2498, %v2482
    %v4531 = vpack.c.b16 %v2499, %v2483
    %v4532 = vpack.c.b16 %v2500, %v2484
    %v4533 = vpack.c.b16 %v2501, %v2485
    %v4534 = vpack.c.b16 %v2502, %v2486
    %v4535 = vpack.c.b16 %v2503, %v2487
    %v4536 = vpack.c.b16 %v2504, %v2488
    %v4537 = vpack.c.b16 %v2505, %v2489
    %v4538 = vpack.c.b16 %v2506, %v2490
    %v4539 = vpack.c.b16 %v2507, %v2491
    %v4540 = vpack.c.b16 %v2508, %v2492
    %v4541 = vpack.c.b16 %v2509, %v2493
    %v4542 = vpack.c.b16 %v2510, %v2494
    %v4543 = vpack.c.b16 %v2511, %v2495
    %v4544 = vpack.c.b16 %v2512, %v2496
    %v4545 = vpack.c.b16 %v2513, %v2497
    %v4546 = vpack.c.b16 %v2530, %v2514
    %v4547 = vpack.c.b16 %v2531, %v2515
    %v4548 = vpack.c.b16 %v2532, %v2516
    %v4549 = vpack.c.b16 %v2533, %v2517
    %v4550 = vpack.c.b16 %v2534, %v2518
    %v4551 = vpack.c.b16 %v2535, %v2519
    %v4552 = vpack.c.b16 %v2536, %v2520
    %v4553 = vpack.c.b16 %v2537, %v2521
    %v4554 = vpack.c.b16 %v2538, %v2522
    %v4555 = vpack.c.b16 %v2539, %v2523
    %v4556 = vpack.c.b16 %v2540, %v2524
    %v4557 = vpack.c.b16 %v2541, %v2525
    %v4558 = vpack.c.b16 %v2542, %v2526
    %v4559 = vpack.c.b16 %v2543, %v2527
    %v4560 = vpack.c.b16 %v2544, %v2528
    %v4561 = vpack.c.b16 %v2545, %v2529
    %v4562 = vpack.c.b16 %v2562, %v2546
    %v4563 = vpack.c.b16 %v2563, %v2547
    %v4564 = vpack.c.b16 %v2564, %v2548
    %v4565 = vpack.c.b16 %v2565, %v2549
    %v4566 = vpack.c.b16 %v2566, %v2550
    %v4567 = vpack.c.b16 %v2567, %v2551
    %v4568 = vpack.c.b16 %v2568, %v2552
    %v4569 = vpack.c.b16 %v2569, %v2553
    %v4570 = vpack.c.b16 %v2570, %v2554
    %v4571 = vpack.c.b16 %v2571, %v2555
    %v4572 = vpack.c.b16 %v2572, %v2556
    %v4573 = vpack.c.b16 %v2573, %v2557
    %v4574 = vpack.c.b16 %v2574, %v2558
    %v4575 = vpack.c.b16 %v2575, %v2559
    %v4576 = vpack.c.b16 %v2576, %v2560
    %v4577 = vpack.c.b16 %v2577, %v2561
    %v4578 = vpack.c.b16 %v2594, %v2578
    %v4579 = vpack.c.b16 %v2595, %v2579
    %v4580 = vpack.c.b16 %v2596, %v2580
    %v4581 = vpack.c.b16 %v2597, %v2581
    %v4582 = vpack.c.b16 %v2598, %v2582
    %v4583 = vpack.c.b16 %v2599, %v2583
    %v4584 = vpack.c.b16 %v2600, %v2584
    %v4585 = vpack.c.b16 %v2601, %v2585
    %v4586 = vpack.c.b16 %v2602, %v2586
    %v4587 = vpack.c.b16 %v2603, %v2587
    %v4588 = vpack.c.b16 %v2604, %v2588
    %v4589 = vpack.c.b16 %v2605, %v2589
    %v4590 = vpack.c.b16 %v2606, %v2590
    %v4591 = vpack.c.b16 %v2607, %v2591
    %v4592 = vpack.c.b16 %v2608, %v2592
    %v4593 = vpack.c.b16 %v2609, %v2593
    %v4594 = vpack.c.b16 %v2626, %v2610
    %v4595 = vpack.c.b16 %v2627, %v2611
    %v4596 = vpack.c.b16 %v2628, %v2612
    %v4597 = vpack.c.b16 %v2629, %v2613
    %v4598 = vpack.c.b16 %v2630, %v2614
    %v4599 = vpack.c.b16 %v2631, %v2615
    %v4600 = vpack.c.b16 %v2632, %v2616
    %v4601 = vpack.c.b16 %v2633, %v2617
    %v4602 = vpack.c.b16 %v2634, %v2618
    %v4603 = vpack.c.b16 %v2635, %v2619
    %v4604 = vpack.c.b16 %v2636, %v2620
    %v4605 = vpack.c.b16 %v2637, %v2621
    %v4606 = vpack.c.b16 %v2638, %v2622
    %v4607 = vpack.c.b16 %v2639, %v2623
    %v4608 = vpack.c.b16 %v2640, %v2624
    %v4609 = vpack.c.b16 %v2641, %v2625
    %v4610 = vpack.c.b16 %v2658, %v2642
    %v4611 = vpack.c.b16 %v2659, %v2643
    %v4612 = vpack.c.b16 %v2660, %v2644
    %v4613 = vpack.c.b16 %v2661, %v2645
    %v4614 = vpack.c.b16 %v2662, %v2646
    %v4615 = vpack.c.b16 %v2663, %v2647
    %v4616 = vpack.c.b16 %v2664, %v2648
    %v4617 = vpack.c.b16 %v2665, %v2649
    %v4618 = vpack.c.b16 %v2666, %v2650
    %v4619 = vpack.c.b16 %v2667, %v2651
    %v4620 = vpack.c.b16 %v2668, %v2652
    %v4621 = vpack.c.b16 %v2669, %v2653
    %v4622 = vpack.c.b16 %v2670, %v2654
    %v4623 = vpack.c.b16 %v2671, %v2655
    %v4624 = vpack.c.b16 %v2672, %v2656
    %v4625 = vpack.c.b16 %v2673, %v2657
    %v4626 = vpack.c.b16 %v2690, %v2674
    %v4627 = vpack.c.b16 %v2691, %v2675
    %v4628 = vpack.c.b16 %v2692, %v2676
    %v4629 = vpack.c.b16 %v2693, %v2677
    %v4630 = vpack.c.b16 %v2694, %v2678
    %v4631 = vpack.c.b16 %v2695, %v2679
    %v4632 = vpack.c.b16 %v2696, %v2680
    %v4633 = vpack.c.b16 %v2697, %v2681
    %v4634 = vpack.c.b16 %v2698, %v2682
    %v4635 = vpack.c.b16 %v2699, %v2683
    %v4636 = vpack.c.b16 %v2700, %v2684
    %v4637 = vpack.c.b16 %v2701, %v2685
    %v4638 = vpack.c.b16 %v2702, %v2686
    %v4639 = vpack.c.b16 %v2703, %v2687
    %v4640 = vpack.c.b16 %v2704, %v2688
    %v4641 = vpack.c.b16 %v2705, %v2689
    %v4642 = vpack.c.b16 %v2722, %v2706
    %v4643 = vpack.c.b16 %v2723, %v2707
    %v4644 = vpack.c.b16 %v2724, %v2708
    %v4645 = vpack.c.b16 %v2725, %v2709
    %v4646 = vpack.c.b16 %v2726, %v2710
    %v4647 = vpack.c.b16 %v2727, %v2711
    %v4648 = vpack.c.b16 %v2728, %v2712
    %v4649 = vpack.c.b16 %v2729, %v2713
    %v4650 = vpack.c.b16 %v2730, %v2714
    %v4651 = vpack.c.b16 %v2731, %v2715
    %v4652 = vpack.c.b16 %v2732, %v2716
    %v4653 = vpack.c.b16 %v2733, %v2717
    %v4654 = vpack.c.b16 %v2734, %v2718
    %v4655 = vpack.c.b16 %v2735, %v2719
    %v4656 = vpack.c.b16 %v2736, %v2720
    %v4657 = vpack.c.b16 %v2737, %v2721
    %v4658 = vpack.c.b16 %v2754, %v2738
    %v4659 = vpack.c.b16 %v2755, %v2739
    %v4660 = vpack.c.b16 %v2756, %v2740
    %v4661 = vpack.c.b16 %v2757, %v2741
    %v4662 = vpack.c.b16 %v2758, %v2742
    %v4663 = vpack.c.b16 %v2759, %v2743
    %v4664 = vpack.c.b16 %v2760, %v2744
    %v4665 = vpack.c.b16 %v2761, %v2745
    %v4666 = vpack.c.b16 %v2762, %v2746
    %v4667 = vpack.c.b16 %v2763, %v2747
    %v4668 = vpack.c.b16 %v2764, %v2748
    %v4669 = vpack.c.b16 %v2765, %v2749
    %v4670 = vpack.c.b16 %v2766, %v2750
    %v4671 = vpack.c.b16 %v2767, %v2751
    %v4672 = vpack.c.b16 %v2768, %v2752
    %v4673 = vpack.c.b16 %v2769, %v2753
    %v4674 = vpack.c.b16 %v2786, %v2770
    %v4675 = vpack.c.b16 %v2787, %v2771
    %v4676 = vpack.c.b16 %v2788, %v2772
    %v4677 = vpack.c.b16 %v2789, %v2773
    %v4678 = vpack.c.b16 %v2790, %v2774
    %v4679 = vpack.c.b16 %v2791, %v2775
    %v4680 = vpack.c.b16 %v2792, %v2776
    %v4681 = vpack.c.b16 %v2793, %v2777
    %v4682 = vpack.c.b16 %v2794, %v2778
    %v4683 = vpack.c.b16 %v2795, %v2779
    %v4684 = vpack.c.b16 %v2796, %v2780
    %v4685 = vpack.c.b16 %v2797, %v2781
    %v4686 = vpack.c.b16 %v2798, %v2782
    %v4687 = vpack.c.b16 %v2799, %v2783
    %v4688 = vpack.c.b16 %v2800, %v2784
    %v4689 = vpack.c.b16 %v2801, %v2785
    %v4690 = vpack.c.b16 %v2818, %v2802
    %v4691 = vpack.c.b16 %v2819, %v2803
    %v4692 = vpack.c.b16 %v2820, %v2804
    %v4693 = vpack.c.b16 %v2821, %v2805
    %v4694 = vpack.c.b16 %v2822, %v2806
    %v4695 = vpack.c.b16 %v2823, %v2807
    %v4696 = vpack.c.b16 %v2824, %v2808
    %v4697 = vpack.c.b16 %v2825, %v2809
    %v4698 = vpack.c.b16 %v2826, %v2810
    %v4699 = vpack.c.b16 %v2827, %v2811
    %v4700 = vpack.c.b16 %v2828, %v2812
    %v4701 = vpack.c.b16 %v2829, %v2813
    %v4702 = vpack.c.b16 %v2830, %v2814
    %v4703 = vpack.c.b16 %v2831, %v2815
    %v4704 = vpack.c.b16 %v2832, %v2816
    %v4705 = vpack.c.b16 %v2833, %v2817
    %v4706 = vpack.c.b16 %v2850, %v2834
    %v4707 = vpack.c.b16 %v2851, %v2835
    %v4708 = vpack.c.b16 %v2852, %v2836
    %v4709 = vpack.c.b16 %v2853, %v2837
    %v4710 = vpack.c.b16 %v2854, %v2838
    %v4711 = vpack.c.b16 %v2855, %v2839
    %v4712 = vpack.c.b16 %v2856, %v2840
    %v4713 = vpack.c.b16 %v2857, %v2841
    %v4714 = vpack.c.b16 %v2858, %v2842
    %v4715 = vpack.c.b16 %v2859, %v2843
    %v4716 = vpack.c.b16 %v2860, %v2844
    %v4717 = vpack.c.b16 %v2861, %v2845
    %v4718 = vpack.c.b16 %v2862, %v2846
    %v4719 = vpack.c.b16 %v2863, %v2847
    %v4720 = vpack.c.b16 %v2864, %v2848
    %v4721 = vpack.c.b16 %v2865, %v2849
    %v4722 = vpack.c.b16 %v2882, %v2866
    %v4723 = vpack.c.b16 %v2883, %v2867
    %v4724 = vpack.c.b16 %v2884, %v2868
    %v4725 = vpack.c.b16 %v2885, %v2869
    %v4726 = vpack.c.b16 %v2886, %v2870
    %v4727 = vpack.c.b16 %v2887, %v2871
    %v4728 = vpack.c.b16 %v2888, %v2872
    %v4729 = vpack.c.b16 %v2889, %v2873
    %v4730 = vpack.c.b16 %v2890, %v2874
    %v4731 = vpack.c.b16 %v2891, %v2875
    %v4732 = vpack.c.b16 %v2892, %v2876
    %v4733 = vpack.c.b16 %v2893, %v2877
    %v4734 = vpack.c.b16 %v2894, %v2878
    %v4735 = vpack.c.b16 %v2895, %v2879
    %v4736 = vpack.c.b16 %v2896, %v2880
    %v4737 = vpack.c.b16 %v2897, %v2881
    %v4738 = vpack.c.b16 %v2914, %v2898
    %v4739 = vpack.c.b16 %v2915, %v2899
    %v4740 = vpack.c.b16 %v2916, %v2900
    %v4741 = vpack.c.b16 %v2917, %v2901
    %v4742 = vpack.c.b16 %v2918, %v2902
    %v4743 = vpack.c.b16 %v2919, %v2903
    %v4744 = vpack.c.b16 %v2920, %v2904
    %v4745 = vpack.c.b16 %v2921, %v2905
    %v4746 = vpack.c.b16 %v2922, %v2906
    %v4747 = vpack.c.b16 %v2923, %v2907
    %v4748 = vpack.c.b16 %v2924, %v2908
    %v4749 = vpack.c.b16 %v2925, %v2909
    %v4750 = vpack.c.b16 %v2926, %v2910
    %v4751 = vpack.c.b16 %v2927, %v2911
    %v4752 = vpack.c.b16 %v2928, %v2912
    %v4753 = vpack.c.b16 %v2929, %v2913
    %v4754 = vpack.c.b16 %v2946, %v2930
    %v4755 = vpack.c.b16 %v2947, %v2931
    %v4756 = vpack.c.b16 %v2948, %v2932
    %v4757 = vpack.c.b16 %v2949, %v2933
    %v4758 = vpack.c.b16 %v2950, %v2934
    %v4759 = vpack.c.b16 %v2951, %v2935
    %v4760 = vpack.c.b16 %v2952, %v2936
    %v4761 = vpack.c.b16 %v2953, %v2937
    %v4762 = vpack.c.b16 %v2954, %v2938
    %v4763 = vpack.c.b16 %v2955, %v2939
    %v4764 = vpack.c.b16 %v2956, %v2940
    %v4765 = vpack.c.b16 %v2957, %v2941
    %v4766 = vpack.c.b16 %v2958, %v2942
    %v4767 = vpack.c.b16 %v2959, %v2943
    %v4768 = vpack.c.b16 %v2960, %v2944
    %v4769 = vpack.c.b16 %v2961, %v2945
    %v4770 = vpack.c.b16 %v2978, %v2962
    %v4771 = vpack.c.b16 %v2979, %v2963
    %v4772 = vpack.c.b16 %v2980, %v2964
    %v4773 = vpack.c.b16 %v2981, %v2965
    %v4774 = vpack.c.b16 %v2982, %v2966
    %v4775 = vpack.c.b16 %v2983, %v2967
    %v4776 = vpack.c.b16 %v2984, %v2968
    %v4777 = vpack.c.b16 %v2985, %v2969
    %v4778 = vpack.c.b16 %v2986, %v2970
    %v4779 = vpack.c.b16 %v2987, %v2971
    %v4780 = vpack.c.b16 %v2988, %v2972
    %v4781 = vpack.c.b16 %v2989, %v2973
    %v4782 = vpack.c.b16 %v2990, %v2974
    %v4783 = vpack.c.b16 %v2991, %v2975
    %v4784 = vpack.c.b16 %v2992, %v2976
    %v4785 = vpack.c.b16 %v2993, %v2977
    %v4786 = vpack.c.b16 %v3010, %v2994
    %v4787 = vpack.c.b16 %v3011, %v2995
    %v4788 = vpack.c.b16 %v3012, %v2996
    %v4789 = vpack.c.b16 %v3013, %v2997
    %v4790 = vpack.c.b16 %v3014, %v2998
    %v4791 = vpack.c.b16 %v3015, %v2999
    %v4792 = vpack.c.b16 %v3016, %v3000
    %v4793 = vpack.c.b16 %v3017, %v3001
    %v4794 = vpack.c.b16 %v3018, %v3002
    %v4795 = vpack.c.b16 %v3019, %v3003
    %v4796 = vpack.c.b16 %v3020, %v3004
    %v4797 = vpack.c.b16 %v3021, %v3005
    %v4798 = vpack.c.b16 %v3022, %v3006
    %v4799 = vpack.c.b16 %v3023, %v3007
    %v4800 = vpack.c.b16 %v3024, %v3008
    %v4801 = vpack.c.b16 %v3025, %v3009
    %v4802 = vpack.c.b16 %v3042, %v3026
    %v4803 = vpack.c.b16 %v3043, %v3027
    %v4804 = vpack.c.b16 %v3044, %v3028
    %v4805 = vpack.c.b16 %v3045, %v3029
    %v4806 = vpack.c.b16 %v3046, %v3030
    %v4807 = vpack.c.b16 %v3047, %v3031
    %v4808 = vpack.c.b16 %v3048, %v3032
    %v4809 = vpack.c.b16 %v3049, %v3033
    %v4810 = vpack.c.b16 %v3050, %v3034
    %v4811 = vpack.c.b16 %v3051, %v3035
    %v4812 = vpack.c.b16 %v3052, %v3036
    %v4813 = vpack.c.b16 %v3053, %v3037
    %v4814 = vpack.c.b16 %v3054, %v3038
    %v4815 = vpack.c.b16 %v3055, %v3039
    %v4816 = vpack.c.b16 %v3056, %v3040
    %v4817 = vpack.c.b16 %v3057, %v3041
    %v4818 = vpack.c.b16 %v3074, %v3058
    %v4819 = vpack.c.b16 %v3075, %v3059
    %v4820 = vpack.c.b16 %v3076, %v3060
    %v4821 = vpack.c.b16 %v3077, %v3061
    %v4822 = vpack.c.b16 %v3078, %v3062
    %v4823 = vpack.c.b16 %v3079, %v3063
    %v4824 = vpack.c.b16 %v3080, %v3064
    %v4825 = vpack.c.b16 %v3081, %v3065
    %v4826 = vpack.c.b16 %v3082, %v3066
    %v4827 = vpack.c.b16 %v3083, %v3067
    %v4828 = vpack.c.b16 %v3084, %v3068
    %v4829 = vpack.c.b16 %v3085, %v3069
    %v4830 = vpack.c.b16 %v3086, %v3070
    %v4831 = vpack.c.b16 %v3087, %v3071
    %v4832 = vpack.c.b16 %v3088, %v3072
    %v4833 = vpack.c.b16 %v3089, %v3073
    %v4834 = vpack.c.b16 %v3106, %v3090
    %v4835 = vpack.c.b16 %v3107, %v3091
    %v4836 = vpack.c.b16 %v3108, %v3092
    %v4837 = vpack.c.b16 %v3109, %v3093
    %v4838 = vpack.c.b16 %v3110, %v3094
    %v4839 = vpack.c.b16 %v3111, %v3095
    %v4840 = vpack.c.b16 %v3112, %v3096
    %v4841 = vpack.c.b16 %v3113, %v3097
    %v4842 = vpack.c.b16 %v3114, %v3098
    %v4843 = vpack.c.b16 %v3115, %v3099
    %v4844 = vpack.c.b16 %v3116, %v3100
    %v4845 = vpack.c.b16 %v3117, %v3101
    %v4846 = vpack.c.b16 %v3118, %v3102
    %v4847 = vpack.c.b16 %v3119, %v3103
    %v4848 = vpack.c.b16 %v3120, %v3104
    %v4849 = vpack.c.b16 %v3121, %v3105
    %v4850 = vpack.c.b16 %v3138, %v3122
    %v4851 = vpack.c.b16 %v3139, %v3123
    %v4852 = vpack.c.b16 %v3140, %v3124
    %v4853 = vpack.c.b16 %v3141, %v3125
    %v4854 = vpack.c.b16 %v3142, %v3126
    %v4855 = vpack.c.b16 %v3143, %v3127
    %v4856 = vpack.c.b16 %v3144, %v3128
    %v4857 = vpack.c.b16 %v3145, %v3129
    %v4858 = vpack.c.b16 %v3146, %v3130
    %v4859 = vpack.c.b16 %v3147, %v3131
    %v4860 = vpack.c.b16 %v3148, %v3132
    %v4861 = vpack.c.b16 %v3149, %v3133
    %v4862 = vpack.c.b16 %v3150, %v3134
    %v4863 = vpack.c.b16 %v3151, %v3135
    %v4864 = vpack.c.b16 %v3152, %v3136
    %v4865 = vpack.c.b16 %v3153, %v3137
    %v4866 = vpack.c.b16 %v3170, %v3154
    %v4867 = vpack.c.b16 %v3171, %v3155
    %v4868 = vpack.c.b16 %v3172, %v3156
    %v4869 = vpack.c.b16 %v3173, %v3157
    %v4870 = vpack.c.b16 %v3174, %v3158
    %v4871 = vpack.c.b16 %v3175, %v3159
    %v4872 = vpack.c.b16 %v3176, %v3160
    %v4873 = vpack.c.b16 %v3177, %v3161
    %v4874 = vpack.c.b16 %v3178, %v3162
    %v4875 = vpack.c.b16 %v3179, %v3163
    %v4876 = vpack.c.b16 %v3180, %v3164
    %v4877 = vpack.c.b16 %v3181, %v3165
    %v4878 = vpack.c.b16 %v3182, %v3166
    %v4879 = vpack.c.b16 %v3183, %v3167
    %v4880 = vpack.c.b16 %v3184, %v3168
    %v4881 = vpack.c.b16 %v3185, %v3169
    %v4882 = vpack.c.b16 %v3202, %v3186
    %v4883 = vpack.c.b16 %v3203, %v3187
    %v4884 = vpack.c.b16 %v3204, %v3188
    %v4885 = vpack.c.b16 %v3205, %v3189
    %v4886 = vpack.c.b16 %v3206, %v3190
    %v4887 = vpack.c.b16 %v3207, %v3191
    %v4888 = vpack.c.b16 %v3208, %v3192
    %v4889 = vpack.c.b16 %v3209, %v3193
    %v4890 = vpack.c.b16 %v3210, %v3194
    %v4891 = vpack.c.b16 %v3211, %v3195
    %v4892 = vpack.c.b16 %v3212, %v3196
    %v4893 = vpack.c.b16 %v3213, %v3197
    %v4894 = vpack.c.b16 %v3214, %v3198
    %v4895 = vpack.c.b16 %v3215, %v3199
    %v4896 = vpack.c.b16 %v3216, %v3200
    %v4897 = vpack.c.b16 %v3217, %v3201
    %v4898 = vpack.c.b16 %v3234, %v3218
    %v4899 = vpack.c.b16 %v3235, %v3219
    %v4900 = vpack.c.b16 %v3236, %v3220
    %v4901 = vpack.c.b16 %v3237, %v3221
    %v4902 = vpack.c.b16 %v3238, %v3222
    %v4903 = vpack.c.b16 %v3239, %v3223
    %v4904 = vpack.c.b16 %v3240, %v3224
    %v4905 = vpack.c.b16 %v3241, %v3225
    %v4906 = vpack.c.b16 %v3242, %v3226
    %v4907 = vpack.c.b16 %v3243, %v3227
    %v4908 = vpack.c.b16 %v3244, %v3228
    %v4909 = vpack.c.b16 %v3245, %v3229
    %v4910 = vpack.c.b16 %v3246, %v3230
    %v4911 = vpack.c.b16 %v3247, %v3231
    %v4912 = vpack.c.b16 %v3248, %v3232
    %v4913 = vpack.c.b16 %v3249, %v3233
    %v4914 = vpack.c.b16 %v3266, %v3250
    %v4915 = vpack.c.b16 %v3267, %v3251
    %v4916 = vpack.c.b16 %v3268, %v3252
    %v4917 = vpack.c.b16 %v3269, %v3253
    %v4918 = vpack.c.b16 %v3270, %v3254
    %v4919 = vpack.c.b16 %v3271, %v3255
    %v4920 = vpack.c.b16 %v3272, %v3256
    %v4921 = vpack.c.b16 %v3273, %v3257
    %v4922 = vpack.c.b16 %v3274, %v3258
    %v4923 = vpack.c.b16 %v3275, %v3259
    %v4924 = vpack.c.b16 %v3276, %v3260
    %v4925 = vpack.c.b16 %v3277, %v3261
    %v4926 = vpack.c.b16 %v3278, %v3262
    %v4927 = vpack.c.b16 %v3279, %v3263
    %v4928 = vpack.c.b16 %v3280, %v3264
    %v4929 = vpack.c.b16 %v3281, %v3265
    %v4930 = vpack.c.b16 %v3298, %v3282
    %v4931 = vpack.c.b16 %v3299, %v3283
    %v4932 = vpack.c.b16 %v3300, %v3284
    %v4933 = vpack.c.b16 %v3301, %v3285
    %v4934 = vpack.c.b16 %v3302, %v3286
    %v4935 = vpack.c.b16 %v3303, %v3287
    %v4936 = vpack.c.b16 %v3304, %v3288
    %v4937 = vpack.c.b16 %v3305, %v3289
    %v4938 = vpack.c.b16 %v3306, %v3290
    %v4939 = vpack.c.b16 %v3307, %v3291
    %v4940 = vpack.c.b16 %v3308, %v3292
    %v4941 = vpack.c.b16 %v3309, %v3293
    %v4942 = vpack.c.b16 %v3310, %v3294
    %v4943 = vpack.c.b16 %v3311, %v3295
    %v4944 = vpack.c.b16 %v3312, %v3296
    %v4945 = vpack.c.b16 %v3313, %v3297
    %v4946 = vpack.c.b16 %v3330, %v3314
    %v4947 = vpack.c.b16 %v3331, %v3315
    %v4948 = vpack.c.b16 %v3332, %v3316
    %v4949 = vpack.c.b16 %v3333, %v3317
    %v4950 = vpack.c.b16 %v3334, %v3318
    %v4951 = vpack.c.b16 %v3335, %v3319
    %v4952 = vpack.c.b16 %v3336, %v3320
    %v4953 = vpack.c.b16 %v3337, %v3321
    %v4954 = vpack.c.b16 %v3338, %v3322
    %v4955 = vpack.c.b16 %v3339, %v3323
    %v4956 = vpack.c.b16 %v3340, %v3324
    %v4957 = vpack.c.b16 %v3341, %v3325
    %v4958 = vpack.c.b16 %v3342, %v3326
    %v4959 = vpack.c.b16 %v3343, %v3327
    %v4960 = vpack.c.b16 %v3344, %v3328
    %v4961 = vpack.c.b16 %v3345, %v3329
    %v4962 = vpack.c.b16 %v3362, %v3346
    %v4963 = vpack.c.b16 %v3363, %v3347
    %v4964 = vpack.c.b16 %v3364, %v3348
    %v4965 = vpack.c.b16 %v3365, %v3349
    %v4966 = vpack.c.b16 %v3366, %v3350
    %v4967 = vpack.c.b16 %v3367, %v3351
    %v4968 = vpack.c.b16 %v3368, %v3352
    %v4969 = vpack.c.b16 %v3369, %v3353
    %v4970 = vpack.c.b16 %v3370, %v3354
    %v4971 = vpack.c.b16 %v3371, %v3355
    %v4972 = vpack.c.b16 %v3372, %v3356
    %v4973 = vpack.c.b16 %v3373, %v3357
    %v4974 = vpack.c.b16 %v3374, %v3358
    %v4975 = vpack.c.b16 %v3375, %v3359
    %v4976 = vpack.c.b16 %v3376, %v3360
    %v4977 = vpack.c.b16 %v3377, %v3361
    %v4978 = vpack.c.b16 %v3394, %v3378
    %v4979 = vpack.c.b16 %v3395, %v3379
    %v4980 = vpack.c.b16 %v3396, %v3380
    %v4981 = vpack.c.b16 %v3397, %v3381
    %v4982 = vpack.c.b16 %v3398, %v3382
    %v4983 = vpack.c.b16 %v3399, %v3383
    %v4984 = vpack.c.b16 %v3400, %v3384
    %v4985 = vpack.c.b16 %v3401, %v3385
    %v4986 = vpack.c.b16 %v3402, %v3386
    %v4987 = vpack.c.b16 %v3403, %v3387
    %v4988 = vpack.c.b16 %v3404, %v3388
    %v4989 = vpack.c.b16 %v3405, %v3389
    %v4990 = vpack.c.b16 %v3406, %v3390
    %v4991 = vpack.c.b16 %v3407, %v3391
    %v4992 = vpack.c.b16 %v3408, %v3392
    %v4993 = vpack.c.b16 %v3409, %v3393
    %v4994 = vpack.c.b16 %v3426, %v3410
    %v4995 = vpack.c.b16 %v3427, %v3411
    %v4996 = vpack.c.b16 %v3428, %v3412
    %v4997 = vpack.c.b16 %v3429, %v3413
    %v4998 = vpack.c.b16 %v3430, %v3414
    %v4999 = vpack.c.b16 %v3431, %v3415
    %v5000 = vpack.c.b16 %v3432, %v3416
    %v5001 = vpack.c.b16 %v3433, %v3417
    %v5002 = vpack.c.b16 %v3434, %v3418
    %v5003 = vpack.c.b16 %v3435, %v3419
    %v5004 = vpack.c.b16 %v3436, %v3420
    %v5005 = vpack.c.b16 %v3437, %v3421
    %v5006 = vpack.c.b16 %v3438, %v3422
    %v5007 = vpack.c.b16 %v3439, %v3423
    %v5008 = vpack.c.b16 %v3440, %v3424
    %v5009 = vpack.c.b16 %v3441, %v3425
    %v5010 = vpack.c.b16 %v3458, %v3442
    %v5011 = vpack.c.b16 %v3459, %v3443
    %v5012 = vpack.c.b16 %v3460, %v3444
    %v5013 = vpack.c.b16 %v3461, %v3445
    %v5014 = vpack.c.b16 %v3462, %v3446
    %v5015 = vpack.c.b16 %v3463, %v3447
    %v5016 = vpack.c.b16 %v3464, %v3448
    %v5017 = vpack.c.b16 %v3465, %v3449
    %v5018 = vpack.c.b16 %v3466, %v3450
    %v5019 = vpack.c.b16 %v3467, %v3451
    %v5020 = vpack.c.b16 %v3468, %v3452
    %v5021 = vpack.c.b16 %v3469, %v3453
    %v5022 = vpack.c.b16 %v3470, %v3454
    %v5023 = vpack.c.b16 %v3471, %v3455
    %v5024 = vpack.c.b16 %v3472, %v3456
    %v5025 = vpack.c.b16 %v3473, %v3457
    %v5026 = vpack.c.b16 %v3490, %v3474
    %v5027 = vpack.c.b16 %v3491, %v3475
    %v5028 = vpack.c.b16 %v3492, %v3476
    %v5029 = vpack.c.b16 %v3493, %v3477
    %v5030 = vpack.c.b16 %v3494, %v3478
    %v5031 = vpack.c.b16 %v3495, %v3479
    %v5032 = vpack.c.b16 %v3496, %v3480
    %v5033 = vpack.c.b16 %v3497, %v3481
    %v5034 = vpack.c.b16 %v3498, %v3482
    %v5035 = vpack.c.b16 %v3499, %v3483
    %v5036 = vpack.c.b16 %v3500, %v3484
    %v5037 = vpack.c.b16 %v3501, %v3485
    %v5038 = vpack.c.b16 %v3502, %v3486
    %v5039 = vpack.c.b16 %v3503, %v3487
    %v5040 = vpack.c.b16 %v3504, %v3488
    %v5041 = vpack.c.b16 %v3505, %v3489
    %v5042 = vpack.c.b16 %v3522, %v3506
    %v5043 = vpack.c.b16 %v3523, %v3507
    %v5044 = vpack.c.b16 %v3524, %v3508
    %v5045 = vpack.c.b16 %v3525, %v3509
    %v5046 = vpack.c.b16 %v3526, %v3510
    %v5047 = vpack.c.b16 %v3527, %v3511
    %v5048 = vpack.c.b16 %v3528, %v3512
    %v5049 = vpack.c.b16 %v3529, %v3513
    %v5050 = vpack.c.b16 %v3530, %v3514
    %v5051 = vpack.c.b16 %v3531, %v3515
    %v5052 = vpack.c.b16 %v3532, %v3516
    %v5053 = vpack.c.b16 %v3533, %v3517
    %v5054 = vpack.c.b16 %v3534, %v3518
    %v5055 = vpack.c.b16 %v3535, %v3519
    %v5056 = vpack.c.b16 %v3536, %v3520
    %v5057 = vpack.c.b16 %v3537, %v3521
    %v5058 = vpack.c.b16 %v3554, %v3538
    %v5059 = vpack.c.b16 %v3555, %v3539
    %v5060 = vpack.c.b16 %v3556, %v3540
    %v5061 = vpack.c.b16 %v3557, %v3541
    %v5062 = vpack.c.b16 %v3558, %v3542
    %v5063 = vpack.c.b16 %v3559, %v3543
    %v5064 = vpack.c.b16 %v3560, %v3544
    %v5065 = vpack.c.b16 %v3561, %v3545
    %v5066 = vpack.c.b16 %v3562, %v3546
    %v5067 = vpack.c.b16 %v3563, %v3547
    %v5068 = vpack.c.b16 %v3564, %v3548
    %v5069 = vpack.c.b16 %v3565, %v3549
    %v5070 = vpack.c.b16 %v3566, %v3550
    %v5071 = vpack.c.b16 %v3567, %v3551
    %v5072 = vpack.c.b16 %v3568, %v3552
    %v5073 = vpack.c.b16 %v3569, %v3553
    %v5074 = vpack.c.b16 %v3586, %v3570
    %v5075 = vpack.c.b16 %v3587, %v3571
    %v5076 = vpack.c.b16 %v3588, %v3572
    %v5077 = vpack.c.b16 %v3589, %v3573
    %v5078 = vpack.c.b16 %v3590, %v3574
    %v5079 = vpack.c.b16 %v3591, %v3575
    %v5080 = vpack.c.b16 %v3592, %v3576
    %v5081 = vpack.c.b16 %v3593, %v3577
    %v5082 = vpack.c.b16 %v3594, %v3578
    %v5083 = vpack.c.b16 %v3595, %v3579
    %v5084 = vpack.c.b16 %v3596, %v3580
    %v5085 = vpack.c.b16 %v3597, %v3581
    %v5086 = vpack.c.b16 %v3598, %v3582
    %v5087 = vpack.c.b16 %v3599, %v3583
    %v5088 = vpack.c.b16 %v3600, %v3584
    %v5089 = vpack.c.b16 %v3601, %v3585
    %v5090 = vpack.c.b16 %v3618, %v3602
    %v5091 = vpack.c.b16 %v3619, %v3603
    %v5092 = vpack.c.b16 %v3620, %v3604
    %v5093 = vpack.c.b16 %v3621, %v3605
    %v5094 = vpack.c.b16 %v3622, %v3606
    %v5095 = vpack.c.b16 %v3623, %v3607
    %v5096 = vpack.c.b16 %v3624, %v3608
    %v5097 = vpack.c.b16 %v3625, %v3609
    %v5098 = vpack.c.b16 %v3626, %v3610
    %v5099 = vpack.c.b16 %v3627, %v3611
    %v5100 = vpack.c.b16 %v3628, %v3612
    %v5101 = vpack.c.b16 %v3629, %v3613
    %v5102 = vpack.c.b16 %v3630, %v3614
    %v5103 = vpack.c.b16 %v3631, %v3615
    %v5104 = vpack.c.b16 %v3632, %v3616
    %v5105 = vpack.c.b16 %v3633, %v3617
    %v5106 = vpack.c.b16 %v3650, %v3634
    %v5107 = vpack.c.b16 %v3651, %v3635
    %v5108 = vpack.c.b16 %v3652, %v3636
    %v5109 = vpack.c.b16 %v3653, %v3637
    %v5110 = vpack.c.b16 %v3654, %v3638
    %v5111 = vpack.c.b16 %v3655, %v3639
    %v5112 = vpack.c.b16 %v3656, %v3640
    %v5113 = vpack.c.b16 %v3657, %v3641
    %v5114 = vpack.c.b16 %v3658, %v3642
    %v5115 = vpack.c.b16 %v3659, %v3643
    %v5116 = vpack.c.b16 %v3660, %v3644
    %v5117 = vpack.c.b16 %v3661, %v3645
    %v5118 = vpack.c.b16 %v3662, %v3646
    %v5119 = vpack.c.b16 %v3663, %v3647
    %v5120 = vpack.c.b16 %v3664, %v3648
    %v5121 = vpack.c.b16 %v3665, %v3649
    %v5122 = vpack.c.b16 %v3682, %v3666
    %v5123 = vpack.c.b16 %v3683, %v3667
    %v5124 = vpack.c.b16 %v3684, %v3668
    %v5125 = vpack.c.b16 %v3685, %v3669
    %v5126 = vpack.c.b16 %v3686, %v3670
    %v5127 = vpack.c.b16 %v3687, %v3671
    %v5128 = vpack.c.b16 %v3688, %v3672
    %v5129 = vpack.c.b16 %v3689, %v3673
    %v5130 = vpack.c.b16 %v3690, %v3674
    %v5131 = vpack.c.b16 %v3691, %v3675
    %v5132 = vpack.c.b16 %v3692, %v3676
    %v5133 = vpack.c.b16 %v3693, %v3677
    %v5134 = vpack.c.b16 %v3694, %v3678
    %v5135 = vpack.c.b16 %v3695, %v3679
    %v5136 = vpack.c.b16 %v3696, %v3680
    %v5137 = vpack.c.b16 %v3697, %v3681
    %v5138 = vpack.c.b16 %v3714, %v3698
    %v5139 = vpack.c.b16 %v3715, %v3699
    %v5140 = vpack.c.b16 %v3716, %v3700
    %v5141 = vpack.c.b16 %v3717, %v3701
    %v5142 = vpack.c.b16 %v3718, %v3702
    %v5143 = vpack.c.b16 %v3719, %v3703
    %v5144 = vpack.c.b16 %v3720, %v3704
    %v5145 = vpack.c.b16 %v3721, %v3705
    %v5146 = vpack.c.b16 %v3722, %v3706
    %v5147 = vpack.c.b16 %v3723, %v3707
    %v5148 = vpack.c.b16 %v3724, %v3708
    %v5149 = vpack.c.b16 %v3725, %v3709
    %v5150 = vpack.c.b16 %v3726, %v3710
    %v5151 = vpack.c.b16 %v3727, %v3711
    %v5152 = vpack.c.b16 %v3728, %v3712
    %v5153 = vpack.c.b16 %v3729, %v3713
    %v5154 = vpack.c.b16 %v3746, %v3730
    %v5155 = vpack.c.b16 %v3747, %v3731
    %v5156 = vpack.c.b16 %v3748, %v3732
    %v5157 = vpack.c.b16 %v3749, %v3733
    %v5158 = vpack.c.b16 %v3750, %v3734
    %v5159 = vpack.c.b16 %v3751, %v3735
    %v5160 = vpack.c.b16 %v3752, %v3736
    %v5161 = vpack.c.b16 %v3753, %v3737
    %v5162 = vpack.c.b16 %v3754, %v3738
    %v5163 = vpack.c.b16 %v3755, %v3739
    %v5164 = vpack.c.b16 %v3756, %v3740
    %v5165 = vpack.c.b16 %v3757, %v3741
    %v5166 = vpack.c.b16 %v3758, %v3742
    %v5167 = vpack.c.b16 %v3759, %v3743
    %v5168 = vpack.c.b16 %v3760, %v3744
    %v5169 = vpack.c.b16 %v3761, %v3745
    %v5170 = vpack.c.b16 %v3778, %v3762
    %v5171 = vpack.c.b16 %v3779, %v3763
    %v5172 = vpack.c.b16 %v3780, %v3764
    %v5173 = vpack.c.b16 %v3781, %v3765
    %v5174 = vpack.c.b16 %v3782, %v3766
    %v5175 = vpack.c.b16 %v3783, %v3767
    %v5176 = vpack.c.b16 %v3784, %v3768
    %v5177 = vpack.c.b16 %v3785, %v3769
    %v5178 = vpack.c.b16 %v3786, %v3770
    %v5179 = vpack.c.b16 %v3787, %v3771
    %v5180 = vpack.c.b16 %v3788, %v3772
    %v5181 = vpack.c.b16 %v3789, %v3773
    %v5182 = vpack.c.b16 %v3790, %v3774
    %v5183 = vpack.c.b16 %v3791, %v3775
    %v5184 = vpack.c.b16 %v3792, %v3776
    %v5185 = vpack.c.b16 %v3793, %v3777
    %v5186 = vpack.c.b16 %v3810, %v3794
    %v5187 = vpack.c.b16 %v3811, %v3795
    %v5188 = vpack.c.b16 %v3812, %v3796
    %v5189 = vpack.c.b16 %v3813, %v3797
    %v5190 = vpack.c.b16 %v3814, %v3798
    %v5191 = vpack.c.b16 %v3815, %v3799
    %v5192 = vpack.c.b16 %v3816, %v3800
    %v5193 = vpack.c.b16 %v3817, %v3801
    %v5194 = vpack.c.b16 %v3818, %v3802
    %v5195 = vpack.c.b16 %v3819, %v3803
    %v5196 = vpack.c.b16 %v3820, %v3804
    %v5197 = vpack.c.b16 %v3821, %v3805
    %v5198 = vpack.c.b16 %v3822, %v3806
    %v5199 = vpack.c.b16 %v3823, %v3807
    %v5200 = vpack.c.b16 %v3824, %v3808
    %v5201 = vpack.c.b16 %v3825, %v3809
    %v5202 = vpack.c.b16 %v3842, %v3826
    %v5203 = vpack.c.b16 %v3843, %v3827
    %v5204 = vpack.c.b16 %v3844, %v3828
    %v5205 = vpack.c.b16 %v3845, %v3829
    %v5206 = vpack.c.b16 %v3846, %v3830
    %v5207 = vpack.c.b16 %v3847, %v3831
    %v5208 = vpack.c.b16 %v3848, %v3832
    %v5209 = vpack.c.b16 %v3849, %v3833
    %v5210 = vpack.c.b16 %v3850, %v3834
    %v5211 = vpack.c.b16 %v3851, %v3835
    %v5212 = vpack.c.b16 %v3852, %v3836
    %v5213 = vpack.c.b16 %v3853, %v3837
    %v5214 = vpack.c.b16 %v3854, %v3838
    %v5215 = vpack.c.b16 %v3855, %v3839
    %v5216 = vpack.c.b16 %v3856, %v3840
    %v5217 = vpack.c.b16 %v3857, %v3841
    %v5218 = vpack.c.b16 %v3874, %v3858
    %v5219 = vpack.c.b16 %v3875, %v3859
    %v5220 = vpack.c.b16 %v3876, %v3860
    %v5221 = vpack.c.b16 %v3877, %v3861
    %v5222 = vpack.c.b16 %v3878, %v3862
    %v5223 = vpack.c.b16 %v3879, %v3863
    %v5224 = vpack.c.b16 %v3880, %v3864
    %v5225 = vpack.c.b16 %v3881, %v3865
    %v5226 = vpack.c.b16 %v3882, %v3866
    %v5227 = vpack.c.b16 %v3883, %v3867
    %v5228 = vpack.c.b16 %v3884, %v3868
    %v5229 = vpack.c.b16 %v3885, %v3869
    %v5230 = vpack.c.b16 %v3886, %v3870
    %v5231 = vpack.c.b16 %v3887, %v3871
    %v5232 = vpack.c.b16 %v3888, %v3872
    %v5233 = vpack.c.b16 %v3889, %v3873
    %v5234 = vpack.c.b16 %v3906, %v3890
    %v5235 = vpack.c.b16 %v3907, %v3891
    %v5236 = vpack.c.b16 %v3908, %v3892
    %v5237 = vpack.c.b16 %v3909, %v3893
    %v5238 = vpack.c.b16 %v3910, %v3894
    %v5239 = vpack.c.b16 %v3911, %v3895
    %v5240 = vpack.c.b16 %v3912, %v3896
    %v5241 = vpack.c.b16 %v3913, %v3897
    %v5242 = vpack.c.b16 %v3914, %v3898
    %v5243 = vpack.c.b16 %v3915, %v3899
    %v5244 = vpack.c.b16 %v3916, %v3900
    %v5245 = vpack.c.b16 %v3917, %v3901
    %v5246 = vpack.c.b16 %v3918, %v3902
    %v5247 = vpack.c.b16 %v3919, %v3903
    %v5248 = vpack.c.b16 %v3920, %v3904
    %v5249 = vpack.c.b16 %v3921, %v3905
    %v5250 = vpack.c.b16 %v3938, %v3922
    %v5251 = vpack.c.b16 %v3939, %v3923
    %v5252 = vpack.c.b16 %v3940, %v3924
    %v5253 = vpack.c.b16 %v3941, %v3925
    %v5254 = vpack.c.b16 %v3942, %v3926
    %v5255 = vpack.c.b16 %v3943, %v3927
    %v5256 = vpack.c.b16 %v3944, %v3928
    %v5257 = vpack.c.b16 %v3945, %v3929
    %v5258 = vpack.c.b16 %v3946, %v3930
    %v5259 = vpack.c.b16 %v3947, %v3931
    %v5260 = vpack.c.b16 %v3948, %v3932
    %v5261 = vpack.c.b16 %v3949, %v3933
    %v5262 = vpack.c.b16 %v3950, %v3934
    %v5263 = vpack.c.b16 %v3951, %v3935
    %v5264 = vpack.c.b16 %v3952, %v3936
    %v5265 = vpack.c.b16 %v3953, %v3937
    %v5266 = vpack.c.b16 %v3970, %v3954
    %v5267 = vpack.c.b16 %v3971, %v3955
    %v5268 = vpack.c.b16 %v3972, %v3956
    %v5269 = vpack.c.b16 %v3973, %v3957
    %v5270 = vpack.c.b16 %v3974, %v3958
    %v5271 = vpack.c.b16 %v3975, %v3959
    %v5272 = vpack.c.b16 %v3976, %v3960
    %v5273 = vpack.c.b16 %v3977, %v3961
    %v5274 = vpack.c.b16 %v3978, %v3962
    %v5275 = vpack.c.b16 %v3979, %v3963
    %v5276 = vpack.c.b16 %v3980, %v3964
    %v5277 = vpack.c.b16 %v3981, %v3965
    %v5278 = vpack.c.b16 %v3982, %v3966
    %v5279 = vpack.c.b16 %v3983, %v3967
    %v5280 = vpack.c.b16 %v3984, %v3968
    %v5281 = vpack.c.b16 %v3985, %v3969
    %v5282 = vpack.c.b16 %v4002, %v3986
    %v5283 = vpack.c.b16 %v4003, %v3987
    %v5284 = vpack.c.b16 %v4004, %v3988
    %v5285 = vpack.c.b16 %v4005, %v3989
    %v5286 = vpack.c.b16 %v4006, %v3990
    %v5287 = vpack.c.b16 %v4007, %v3991
    %v5288 = vpack.c.b16 %v4008, %v3992
    %v5289 = vpack.c.b16 %v4009, %v3993
    %v5290 = vpack.c.b16 %v4010, %v3994
    %v5291 = vpack.c.b16 %v4011, %v3995
    %v5292 = vpack.c.b16 %v4012, %v3996
    %v5293 = vpack.c.b16 %v4013, %v3997
    %v5294 = vpack.c.b16 %v4014, %v3998
    %v5295 = vpack.c.b16 %v4015, %v3999
    %v5296 = vpack.c.b16 %v4016, %v4000
    %v5297 = vpack.c.b16 %v4017, %v4001
    %v5298 = vpack.c.b16 %v4034, %v4018
    %v5299 = vpack.c.b16 %v4035, %v4019
    %v5300 = vpack.c.b16 %v4036, %v4020
    %v5301 = vpack.c.b16 %v4037, %v4021
    %v5302 = vpack.c.b16 %v4038, %v4022
    %v5303 = vpack.c.b16 %v4039, %v4023
    %v5304 = vpack.c.b16 %v4040, %v4024
    %v5305 = vpack.c.b16 %v4041, %v4025
    %v5306 = vpack.c.b16 %v4042, %v4026
    %v5307 = vpack.c.b16 %v4043, %v4027
    %v5308 = vpack.c.b16 %v4044, %v4028
    %v5309 = vpack.c.b16 %v4045, %v4029
    %v5310 = vpack.c.b16 %v4046, %v4030
    %v5311 = vpack.c.b16 %v4047, %v4031
    %v5312 = vpack.c.b16 %v4048, %v4032
    %v5313 = vpack.c.b16 %v4049, %v4033
    %v5314 = vpack.c.b16 %v4066, %v4050
    %v5315 = vpack.c.b16 %v4067, %v4051
    %v5316 = vpack.c.b16 %v4068, %v4052
    %v5317 = vpack.c.b16 %v4069, %v4053
    %v5318 = vpack.c.b16 %v4070, %v4054
    %v5319 = vpack.c.b16 %v4071, %v4055
    %v5320 = vpack.c.b16 %v4072, %v4056
    %v5321 = vpack.c.b16 %v4073, %v4057
    %v5322 = vpack.c.b16 %v4074, %v4058
    %v5323 = vpack.c.b16 %v4075, %v4059
    %v5324 = vpack.c.b16 %v4076, %v4060
    %v5325 = vpack.c.b16 %v4077, %v4061
    %v5326 = vpack.c.b16 %v4078, %v4062
    %v5327 = vpack.c.b16 %v4079, %v4063
    %v5328 = vpack.c.b16 %v4080, %v4064
    %v5329 = vpack.c.b16 %v4081, %v4065
    %v5330 = vpack.c.b16 %v4098, %v4082
    %v5331 = vpack.c.b16 %v4099, %v4083
    %v5332 = vpack.c.b16 %v4100, %v4084
    %v5333 = vpack.c.b16 %v4101, %v4085
    %v5334 = vpack.c.b16 %v4102, %v4086
    %v5335 = vpack.c.b16 %v4103, %v4087
    %v5336 = vpack.c.b16 %v4104, %v4088
    %v5337 = vpack.c.b16 %v4105, %v4089
    %v5338 = vpack.c.b16 %v4106, %v4090
    %v5339 = vpack.c.b16 %v4107, %v4091
    %v5340 = vpack.c.b16 %v4108, %v4092
    %v5341 = vpack.c.b16 %v4109, %v4093
    %v5342 = vpack.c.b16 %v4110, %v4094
    %v5343 = vpack.c.b16 %v4111, %v4095
    %v5344 = vpack.c.b16 %v4112, %v4096
    %v5345 = vpack.c.b16 %v4113, %v4097
    %v5346 = vpack.c.b16 %v4130, %v4114
    %v5347 = vpack.c.b16 %v4131, %v4115
    %v5348 = vpack.c.b16 %v4132, %v4116
    %v5349 = vpack.c.b16 %v4133, %v4117
    %v5350 = vpack.c.b16 %v4134, %v4118
    %v5351 = vpack.c.b16 %v4135, %v4119
    %v5352 = vpack.c.b16 %v4136, %v4120
    %v5353 = vpack.c.b16 %v4137, %v4121
    %v5354 = vpack.c.b16 %v4138, %v4122
    %v5355 = vpack.c.b16 %v4139, %v4123
    %v5356 = vpack.c.b16 %v4140, %v4124
    %v5357 = vpack.c.b16 %v4141, %v4125
    %v5358 = vpack.c.b16 %v4142, %v4126
    %v5359 = vpack.c.b16 %v4143, %v4127
    %v5360 = vpack.c.b16 %v4144, %v4128
    %v5361 = vpack.c.b16 %v4145, %v4129
    %v5362 = vpack.c.b16 %v4162, %v4146
    %v5363 = vpack.c.b16 %v4163, %v4147
    %v5364 = vpack.c.b16 %v4164, %v4148
    %v5365 = vpack.c.b16 %v4165, %v4149
    %v5366 = vpack.c.b16 %v4166, %v4150
    %v5367 = vpack.c.b16 %v4167, %v4151
    %v5368 = vpack.c.b16 %v4168, %v4152
    %v5369 = vpack.c.b16 %v4169, %v4153
    %v5370 = vpack.c.b16 %v4170, %v4154
    %v5371 = vpack.c.b16 %v4171, %v4155
    %v5372 = vpack.c.b16 %v4172, %v4156
    %v5373 = vpack.c.b16 %v4173, %v4157
    %v5374 = vpack.c.b16 %v4174, %v4158
    %v5375 = vpack.c.b16 %v4175, %v4159
    %v5376 = vpack.c.b16 %v4176, %v4160
    %v5377 = vpack.c.b16 %v4177, %v4161
    %v5378 = vpack.c.b16 %v4194, %v4178
    %v5379 = vpack.c.b16 %v4195, %v4179
    %v5380 = vpack.c.b16 %v4196, %v4180
    %v5381 = vpack.c.b16 %v4197, %v4181
    %v5382 = vpack.c.b16 %v4198, %v4182
    %v5383 = vpack.c.b16 %v4199, %v4183
    %v5384 = vpack.c.b16 %v4200, %v4184
    %v5385 = vpack.c.b16 %v4201, %v4185
    %v5386 = vpack.c.b16 %v4202, %v4186
    %v5387 = vpack.c.b16 %v4203, %v4187
    %v5388 = vpack.c.b16 %v4204, %v4188
    %v5389 = vpack.c.b16 %v4205, %v4189
    %v5390 = vpack.c.b16 %v4206, %v4190
    %v5391 = vpack.c.b16 %v4207, %v4191
    %v5392 = vpack.c.b16 %v4208, %v4192
    %v5393 = vpack.c.b16 %v4209, %v4193
    %v5394 = vpack.c.b16 %v4226, %v4210
    %v5395 = vpack.c.b16 %v4227, %v4211
    %v5396 = vpack.c.b16 %v4228, %v4212
    %v5397 = vpack.c.b16 %v4229, %v4213
    %v5398 = vpack.c.b16 %v4230, %v4214
    %v5399 = vpack.c.b16 %v4231, %v4215
    %v5400 = vpack.c.b16 %v4232, %v4216
    %v5401 = vpack.c.b16 %v4233, %v4217
    %v5402 = vpack.c.b16 %v4234, %v4218
    %v5403 = vpack.c.b16 %v4235, %v4219
    %v5404 = vpack.c.b16 %v4236, %v4220
    %v5405 = vpack.c.b16 %v4237, %v4221
    %v5406 = vpack.c.b16 %v4238, %v4222
    %v5407 = vpack.c.b16 %v4239, %v4223
    %v5408 = vpack.c.b16 %v4240, %v4224
    %v5409 = vpack.c.b16 %v4241, %v4225
    %v5410 = vpack.c.b16 %v4258, %v4242
    %v5411 = vpack.c.b16 %v4259, %v4243
    %v5412 = vpack.c.b16 %v4260, %v4244
    %v5413 = vpack.c.b16 %v4261, %v4245
    %v5414 = vpack.c.b16 %v4262, %v4246
    %v5415 = vpack.c.b16 %v4263, %v4247
    %v5416 = vpack.c.b16 %v4264, %v4248
    %v5417 = vpack.c.b16 %v4265, %v4249
    %v5418 = vpack.c.b16 %v4266, %v4250
    %v5419 = vpack.c.b16 %v4267, %v4251
    %v5420 = vpack.c.b16 %v4268, %v4252
    %v5421 = vpack.c.b16 %v4269, %v4253
    %v5422 = vpack.c.b16 %v4270, %v4254
    %v5423 = vpack.c.b16 %v4271, %v4255
    %v5424 = vpack.c.b16 %v4272, %v4256
    %v5425 = vpack.c.b16 %v4273, %v4257
    %v5426 = vpack.c.b16 %v4290, %v4274
    %v5427 = vpack.c.b16 %v4291, %v4275
    %v5428 = vpack.c.b16 %v4292, %v4276
    %v5429 = vpack.c.b16 %v4293, %v4277
    %v5430 = vpack.c.b16 %v4294, %v4278
    %v5431 = vpack.c.b16 %v4295, %v4279
    %v5432 = vpack.c.b16 %v4296, %v4280
    %v5433 = vpack.c.b16 %v4297, %v4281
    %v5434 = vpack.c.b16 %v4298, %v4282
    %v5435 = vpack.c.b16 %v4299, %v4283
    %v5436 = vpack.c.b16 %v4300, %v4284
    %v5437 = vpack.c.b16 %v4301, %v4285
    %v5438 = vpack.c.b16 %v4302, %v4286
    %v5439 = vpack.c.b16 %v4303, %v4287
    %v5440 = vpack.c.b16 %v4304, %v4288
    %v5441 = vpack.c.b16 %v4305, %v4289
    %v5442 = vpack.c.b16 %v4322, %v4306
    %v5443 = vpack.c.b16 %v4323, %v4307
    %v5444 = vpack.c.b16 %v4324, %v4308
    %v5445 = vpack.c.b16 %v4325, %v4309
    %v5446 = vpack.c.b16 %v4326, %v4310
    %v5447 = vpack.c.b16 %v4327, %v4311
    %v5448 = vpack.c.b16 %v4328, %v4312
    %v5449 = vpack.c.b16 %v4329, %v4313
    %v5450 = vpack.c.b16 %v4330, %v4314
    %v5451 = vpack.c.b16 %v4331, %v4315
    %v5452 = vpack.c.b16 %v4332, %v4316
    %v5453 = vpack.c.b16 %v4333, %v4317
    %v5454 = vpack.c.b16 %v4334, %v4318
    %v5455 = vpack.c.b16 %v4335, %v4319
    %v5456 = vpack.c.b16 %v4336, %v4320
    %v5457 = vpack.c.b16 %v4337, %v4321
    %v5458 = vpack.c.b16 %v4354, %v4338
    %v5459 = vpack.c.b16 %v4355, %v4339
    %v5460 = vpack.c.b16 %v4356, %v4340
    %v5461 = vpack.c.b16 %v4357, %v4341
    %v5462 = vpack.c.b16 %v4358, %v4342
    %v5463 = vpack.c.b16 %v4359, %v4343
    %v5464 = vpack.c.b16 %v4360, %v4344
    %v5465 = vpack.c.b16 %v4361, %v4345
    %v5466 = vpack.c.b16 %v4362, %v4346
    %v5467 = vpack.c.b16 %v4363, %v4347
    %v5468 = vpack.c.b16 %v4364, %v4348
    %v5469 = vpack.c.b16 %v4365, %v4349
    %v5470 = vpack.c.b16 %v4366, %v4350
    %v5471 = vpack.c.b16 %v4367, %v4351
    %v5472 = vpack.c.b16 %v4368, %v4352
    %v5473 = vpack.c.b16 %v4369, %v4353
    %v5474 = vpack.c.b16 %v4386, %v4370
    %v5475 = vpack.c.b16 %v4387, %v4371
    %v5476 = vpack.c.b16 %v4388, %v4372
    %v5477 = vpack.c.b16 %v4389, %v4373
    %v5478 = vpack.c.b16 %v4390, %v4374
    %v5479 = vpack.c.b16 %v4391, %v4375
    %v5480 = vpack.c.b16 %v4392, %v4376
    %v5481 = vpack.c.b16 %v4393, %v4377
    %v5482 = vpack.c.b16 %v4394, %v4378
    %v5483 = vpack.c.b16 %v4395, %v4379
    %v5484 = vpack.c.b16 %v4396, %v4380
    %v5485 = vpack.c.b16 %v4397, %v4381
    %v5486 = vpack.c.b16 %v4398, %v4382
    %v5487 = vpack.c.b16 %v4399, %v4383
    %v5488 = vpack.c.b16 %v4400, %v4384
    %v5489 = vpack.c.b16 %v4401, %v4385
    %v5490 = vpack.c.b16 %v4418, %v4402
    %v5491 = vpack.c.b16 %v4419, %v4403
    %v5492 = vpack.c.b16 %v4420, %v4404
    %v5493 = vpack.c.b16 %v4421, %v4405
    %v5494 = vpack.c.b16 %v4422, %v4406
    %v5495 = vpack.c.b16 %v4423, %v4407
    %v5496 = vpack.c.b16 %v4424, %v4408
    %v5497 = vpack.c.b16 %v4425, %v4409
    %v5498 = vpack.c.b16 %v4426, %v4410
    %v5499 = vpack.c.b16 %v4427, %v4411
    %v5500 = vpack.c.b16 %v4428, %v4412
    %v5501 = vpack.c.b16 %v4429, %v4413
    %v5502 = vpack.c.b16 %v4430, %v4414
    %v5503 = vpack.c.b16 %v4431, %v4415
    %v5504 = vpack.c.b16 %v4432, %v4416
    %v5505 = vpack.c.b16 %v4433, %v4417
    %v5506 = vpack.c.b16 %v4450, %v4434
    %v5507 = vpack.c.b16 %v4451, %v4435
    %v5508 = vpack.c.b16 %v4452, %v4436
    %v5509 = vpack.c.b16 %v4453, %v4437
    %v5510 = vpack.c.b16 %v4454, %v4438
    %v5511 = vpack.c.b16 %v4455, %v4439
    %v5512 = vpack.c.b16 %v4456, %v4440
    %v5513 = vpack.c.b16 %v4457, %v4441
    %v5514 = vpack.c.b16 %v4458, %v4442
    %v5515 = vpack.c.b16 %v4459, %v4443
    %v5516 = vpack.c.b16 %v4460, %v4444
    %v5517 = vpack.c.b16 %v4461, %v4445
    %v5518 = vpack.c.b16 %v4462, %v4446
    %v5519 = vpack.c.b16 %v4463, %v4447
    %v5520 = vpack.c.b16 %v4464, %v4448
    %v5521 = vpack.c.b16 %v4465, %v4449
    %v5522 = vpack.c.b16 %v4482, %v4466
    %v5523 = vpack.c.b16 %v4483, %v4467
    %v5524 = vpack.c.b16 %v4484, %v4468
    %v5525 = vpack.c.b16 %v4485, %v4469
    %v5526 = vpack.c.b16 %v4486, %v4470
    %v5527 = vpack.c.b16 %v4487, %v4471
    %v5528 = vpack.c.b16 %v4488, %v4472
    %v5529 = vpack.c.b16 %v4489, %v4473
    %v5530 = vpack.c.b16 %v4490, %v4474
    %v5531 = vpack.c.b16 %v4491, %v4475
    %v5532 = vpack.c.b16 %v4492, %v4476
    %v5533 = vpack.c.b16 %v4493, %v4477
    %v5534 = vpack.c.b16 %v4494, %v4478
    %v5535 = vpack.c.b16 %v4495, %v4479
    %v5536 = vpack.c.b16 %v4496, %v4480
    %v5537 = vpack.c.b16 %v4497, %v4481
    %v5538 = vpack.c.b16 %v4514, %v4498
    %v5539 = vpack.c.b16 %v4515, %v4499
    %v5540 = vpack.c.b16 %v4516, %v4500
    %v5541 = vpack.c.b16 %v4517, %v4501
    %v5542 = vpack.c.b16 %v4518, %v4502
    %v5543 = vpack.c.b16 %v4519, %v4503
    %v5544 = vpack.c.b16 %v4520, %v4504
    %v5545 = vpack.c.b16 %v4521, %v4505
    %v5546 = vpack.c.b16 %v4522, %v4506
    %v5547 = vpack.c.b16 %v4523, %v4507
    %v5548 = vpack.c.b16 %v4524, %v4508
    %v5549 = vpack.c.b16 %v4525, %v4509
    %v5550 = vpack.c.b16 %v4526, %v4510
    %v5551 = vpack.c.b16 %v4527, %v4511
    %v5552 = vpack.c.b16 %v4528, %v4512
    %v5553 = vpack.c.b16 %v4529, %v4513
    %6578 = vmatprep.subr.bf16.mxu0 %v4643
    %6579 = vmatpush1.bf16.msra.mxu0 %v4642
    %6580 = vmatprep.subr.bf16.mxu0 %v4627
    %6581 = vmatpush1.bf16.msra.mxu0 %v4626
    %6582 = vmatprep.subr.bf16.mxu0 %v4611
    %6583 = vmatpush1.bf16.msra.mxu0 %v4610
    %6584 = vmatprep.subr.bf16.mxu0 %v4595
    %6585 = vmatpush1.bf16.msra.mxu0 %v4594
    %6586 = vmatprep.subr.bf16.mxu0 %v4579
    %6587 = vmatpush1.bf16.msra.mxu0 %v4578
    %6588 = vmatprep.subr.bf16.mxu0 %v4563
    %6589 = vmatpush1.bf16.msra.mxu0 %v4562
    %6590 = vmatprep.subr.bf16.mxu0 %v4547
    %6591 = vmatpush1.bf16.msra.mxu0 %v4546
    %6592 = vmatprep.subr.bf16.mxu0 %v4531
    %6593 = vmatpush1.bf16.msra.mxu0 %v4530
    %6594 = vmatprep.subr.bf16.mxu0 %v4771
    %6595 = vmatpush2.bf16.msra.mxu0 %v4770
    %6596 = vmatprep.subr.bf16.mxu0 %v4755
    %6597 = vmatpush2.bf16.msra.mxu0 %v4754
    %6598 = vmatprep.subr.bf16.mxu0 %v4739
    %6599 = vmatpush2.bf16.msra.mxu0 %v4738
    %6600 = vmatprep.subr.bf16.mxu0 %v4723
    %6601 = vmatpush2.bf16.msra.mxu0 %v4722
    %6602 = vmatprep.subr.bf16.mxu0 %v4707
    %6603 = vmatpush2.bf16.msra.mxu0 %v4706
    %6604 = vmatprep.subr.bf16.mxu0 %v4691
    %6605 = vmatpush2.bf16.msra.mxu0 %v4690
    %6606 = vmatprep.subr.bf16.mxu0 %v4675
    %6607 = vmatpush2.bf16.msra.mxu0 %v4674
    %6608 = vmatprep.subr.bf16.mxu0 %v4659
    %6609 = vmatpush2.bf16.msra.mxu0 %v4658
    %6610 = vmatprep.mubr.bf16.mxu0 %v343
    %6611 = vmatmul.mubr.bf16.gmra.mxu0 %v342
    %v6612 = vpop.f32.mrf.mxu0
    %v6613 = vadd.f32 %v1381, %v6612
    %v6614 = vpop.f32.mrf.mxu0
    %v6615 = vadd.f32 %v1385, %v6614
    %v6616 = vpop.f32.mrf.mxu0
    %v6617 = vpop.f32.mrf.mxu0
    %6618 = vdwg.mxu0
    %6619 = vmatprep.subr.bf16.mxu0 %v4899
    %6620 = vmatpush1.bf16.msra.mxu0 %v4898
    %6621 = vmatprep.subr.bf16.mxu0 %v4883
    %6622 = vmatpush1.bf16.msra.mxu0 %v4882
    %6623 = vmatprep.subr.bf16.mxu0 %v4867
    %6624 = vmatpush1.bf16.msra.mxu0 %v4866
    %6625 = vmatprep.subr.bf16.mxu0 %v4851
    %6626 = vmatpush1.bf16.msra.mxu0 %v4850
    %6627 = vmatprep.subr.bf16.mxu0 %v4835
    %6628 = vmatpush1.bf16.msra.mxu0 %v4834
    %6629 = vmatprep.subr.bf16.mxu0 %v4819
    %6630 = vmatpush1.bf16.msra.mxu0 %v4818
    %6631 = vmatprep.subr.bf16.mxu0 %v4803
    %6632 = vmatpush1.bf16.msra.mxu0 %v4802
    %6633 = vmatprep.subr.bf16.mxu0 %v4787
    %6634 = vmatpush1.bf16.msra.mxu0 %v4786
    %6635 = vmatprep.subr.bf16.mxu0 %v5027
    %6636 = vmatpush2.bf16.msra.mxu0 %v5026
    %6637 = vmatprep.subr.bf16.mxu0 %v5011
    %6638 = vmatpush2.bf16.msra.mxu0 %v5010
    %6639 = vmatprep.subr.bf16.mxu0 %v4995
    %6640 = vmatpush2.bf16.msra.mxu0 %v4994
    %6641 = vmatprep.subr.bf16.mxu0 %v4979
    %6642 = vmatpush2.bf16.msra.mxu0 %v4978
    %6643 = vmatprep.subr.bf16.mxu0 %v4963
    %6644 = vmatpush2.bf16.msra.mxu0 %v4962
    %6645 = vmatprep.subr.bf16.mxu0 %v4947
    %6646 = vmatpush2.bf16.msra.mxu0 %v4946
    %6647 = vmatprep.subr.bf16.mxu0 %v4931
    %6648 = vmatpush2.bf16.msra.mxu0 %v4930
    %6649 = vmatprep.subr.bf16.mxu0 %v4915
    %6650 = vmatpush2.bf16.msra.mxu0 %v4914
    %6651 = vmatprep.mubr.bf16.mxu0 %v345
    %6652 = vmatmul.mubr.bf16.gmra.mxu0 %v344
    %v6653 = vpop.f32.mrf.mxu0
    %v6654 = vadd.f32 %v6613, %v6653
    %v6655 = vpop.f32.mrf.mxu0
    %v6656 = vadd.f32 %v6615, %v6655
    %v6657 = vpop.f32.mrf.mxu0
    %v6658 = vpop.f32.mrf.mxu0
    %6659 = vdwg.mxu0
    %6660 = vmatprep.subr.bf16.mxu0 %v5155
    %6661 = vmatpush1.bf16.msra.mxu0 %v5154
    %6662 = vmatprep.subr.bf16.mxu0 %v5139
    %6663 = vmatpush1.bf16.msra.mxu0 %v5138
    %6664 = vmatprep.subr.bf16.mxu0 %v5123
    %6665 = vmatpush1.bf16.msra.mxu0 %v5122
    %6666 = vmatprep.subr.bf16.mxu0 %v5107
    %6667 = vmatpush1.bf16.msra.mxu0 %v5106
    %6668 = vmatprep.subr.bf16.mxu0 %v5091
    %6669 = vmatpush1.bf16.msra.mxu0 %v5090
    %6670 = vmatprep.subr.bf16.mxu0 %v5075
    %6671 = vmatpush1.bf16.msra.mxu0 %v5074
    %6672 = vmatprep.subr.bf16.mxu0 %v5059
    %6673 = vmatpush1.bf16.msra.mxu0 %v5058
    %6674 = vmatprep.subr.bf16.mxu0 %v5043
    %6675 = vmatpush1.bf16.msra.mxu0 %v5042
    %6676 = vmatprep.subr.bf16.mxu0 %v5283
    %6677 = vmatpush2.bf16.msra.mxu0 %v5282
    %6678 = vmatprep.subr.bf16.mxu0 %v5267
    %6679 = vmatpush2.bf16.msra.mxu0 %v5266
    %6680 = vmatprep.subr.bf16.mxu0 %v5251
    %6681 = vmatpush2.bf16.msra.mxu0 %v5250
    %6682 = vmatprep.subr.bf16.mxu0 %v5235
    %6683 = vmatpush2.bf16.msra.mxu0 %v5234
    %6684 = vmatprep.subr.bf16.mxu0 %v5219
    %6685 = vmatpush2.bf16.msra.mxu0 %v5218
    %6686 = vmatprep.subr.bf16.mxu0 %v5203
    %6687 = vmatpush2.bf16.msra.mxu0 %v5202
    %6688 = vmatprep.subr.bf16.mxu0 %v5187
    %6689 = vmatpush2.bf16.msra.mxu0 %v5186
    %6690 = vmatprep.subr.bf16.mxu0 %v5171
    %6691 = vmatpush2.bf16.msra.mxu0 %v5170
    %6692 = vmatprep.mubr.bf16.mxu0 %v347
    %6693 = vmatmul.mubr.bf16.gmra.mxu0 %v346
    %v6694 = vpop.f32.mrf.mxu0
    %v6695 = vadd.f32 %v6654, %v6694
    %v6696 = vpop.f32.mrf.mxu0
    %v6697 = vadd.f32 %v6656, %v6696
    %v6698 = vpop.f32.mrf.mxu0
    %v6699 = vpop.f32.mrf.mxu0
    %6700 = vdwg.mxu0
    %6701 = vmatprep.subr.bf16.mxu0 %v5411
    %6702 = vmatpush1.bf16.msra.mxu0 %v5410
    %6703 = vmatprep.subr.bf16.mxu0 %v5395
    %6704 = vmatpush1.bf16.msra.mxu0 %v5394
    %6705 = vmatprep.subr.bf16.mxu0 %v5379
    %6706 = vmatpush1.bf16.msra.mxu0 %v5378
    %6707 = vmatprep.subr.bf16.mxu0 %v5363
    %6708 = vmatpush1.bf16.msra.mxu0 %v5362
    %6709 = vmatprep.subr.bf16.mxu0 %v5347
    %6710 = vmatpush1.bf16.msra.mxu0 %v5346
    %6711 = vmatprep.subr.bf16.mxu0 %v5331
    %6712 = vmatpush1.bf16.msra.mxu0 %v5330
    %6713 = vmatprep.subr.bf16.mxu0 %v5315
    %6714 = vmatpush1.bf16.msra.mxu0 %v5314
    %6715 = vmatprep.subr.bf16.mxu0 %v5299
    %6716 = vmatpush1.bf16.msra.mxu0 %v5298
    %6717 = vmatprep.subr.bf16.mxu0 %v5539
    %6718 = vmatpush2.bf16.msra.mxu0 %v5538
    %6719 = vmatprep.subr.bf16.mxu0 %v5523
    %6720 = vmatpush2.bf16.msra.mxu0 %v5522
    %6721 = vmatprep.subr.bf16.mxu0 %v5507
    %6722 = vmatpush2.bf16.msra.mxu0 %v5506
    %6723 = vmatprep.subr.bf16.mxu0 %v5491
    %6724 = vmatpush2.bf16.msra.mxu0 %v5490
    %6725 = vmatprep.subr.bf16.mxu0 %v5475
    %6726 = vmatpush2.bf16.msra.mxu0 %v5474
    %6727 = vmatprep.subr.bf16.mxu0 %v5459
    %6728 = vmatpush2.bf16.msra.mxu0 %v5458
    %6729 = vmatprep.subr.bf16.mxu0 %v5443
    %6730 = vmatpush2.bf16.msra.mxu0 %v5442
    %6731 = vmatprep.subr.bf16.mxu0 %v5427
    %6732 = vmatpush2.bf16.msra.mxu0 %v5426
    %6733 = vmatprep.mubr.bf16.mxu0 %v349
    %6734 = vmatmul.mubr.bf16.gmra.mxu0 %v348
    %v6735 = vpop.f32.mrf.mxu0
    %v6736 = vadd.f32 %v6695, %v6735
    %v6737 = vpop.f32.mrf.mxu0
    %v6738 = vadd.f32 %v6697, %v6737
    %v6739 = vpop.f32.mrf.mxu0
    %v6740 = vpop.f32.mrf.mxu0
    %6741 = vdwg.mxu0
    %6742 = vmatprep.subr.bf16.mxu0 %v4645
    %6743 = vmatpush1.bf16.msra.mxu0 %v4644
    %6744 = vmatprep.subr.bf16.mxu0 %v4629
    %6745 = vmatpush1.bf16.msra.mxu0 %v4628
    %6746 = vmatprep.subr.bf16.mxu0 %v4613
    %6747 = vmatpush1.bf16.msra.mxu0 %v4612
    %6748 = vmatprep.subr.bf16.mxu0 %v4597
    %6749 = vmatpush1.bf16.msra.mxu0 %v4596
    %6750 = vmatprep.subr.bf16.mxu0 %v4581
    %6751 = vmatpush1.bf16.msra.mxu0 %v4580
    %6752 = vmatprep.subr.bf16.mxu0 %v4565
    %6753 = vmatpush1.bf16.msra.mxu0 %v4564
    %6754 = vmatprep.subr.bf16.mxu0 %v4549
    %6755 = vmatpush1.bf16.msra.mxu0 %v4548
    %6756 = vmatprep.subr.bf16.mxu0 %v4533
    %6757 = vmatpush1.bf16.msra.mxu0 %v4532
    %6758 = vmatprep.subr.bf16.mxu0 %v4773
    %6759 = vmatpush2.bf16.msra.mxu0 %v4772
    %6760 = vmatprep.subr.bf16.mxu0 %v4757
    %6761 = vmatpush2.bf16.msra.mxu0 %v4756
    %6762 = vmatprep.subr.bf16.mxu0 %v4741
    %6763 = vmatpush2.bf16.msra.mxu0 %v4740
    %6764 = vmatprep.subr.bf16.mxu0 %v4725
    %6765 = vmatpush2.bf16.msra.mxu0 %v4724
    %6766 = vmatprep.subr.bf16.mxu0 %v4709
    %6767 = vmatpush2.bf16.msra.mxu0 %v4708
    %6768 = vmatprep.subr.bf16.mxu0 %v4693
    %6769 = vmatpush2.bf16.msra.mxu0 %v4692
    %6770 = vmatprep.subr.bf16.mxu0 %v4677
    %6771 = vmatpush2.bf16.msra.mxu0 %v4676
    %6772 = vmatprep.subr.bf16.mxu0 %v4661
    %6773 = vmatpush2.bf16.msra.mxu0 %v4660
    %6774 = vmatprep.mubr.bf16.mxu0 %v343
    %6775 = vmatmul.mubr.bf16.gmra.mxu0 %v342
    %v6776 = vpop.f32.mrf.mxu0
    %v6777 = vadd.f32 %v1389, %v6776
    %v6778 = vpop.f32.mrf.mxu0
    %v6779 = vadd.f32 %v1393, %v6778
    %v6780 = vpop.f32.mrf.mxu0
    %v6781 = vpop.f32.mrf.mxu0
    %6782 = vdwg.mxu0
    %6783 = vmatprep.subr.bf16.mxu0 %v4901
    %6784 = vmatpush1.bf16.msra.mxu0 %v4900
    %6785 = vmatprep.subr.bf16.mxu0 %v4885
    %6786 = vmatpush1.bf16.msra.mxu0 %v4884
    %6787 = vmatprep.subr.bf16.mxu0 %v4869
    %6788 = vmatpush1.bf16.msra.mxu0 %v4868
    %6789 = vmatprep.subr.bf16.mxu0 %v4853
    %6790 = vmatpush1.bf16.msra.mxu0 %v4852
    %6791 = vmatprep.subr.bf16.mxu0 %v4837
    %6792 = vmatpush1.bf16.msra.mxu0 %v4836
    %6793 = vmatprep.subr.bf16.mxu0 %v4821
    %6794 = vmatpush1.bf16.msra.mxu0 %v4820
    %6795 = vmatprep.subr.bf16.mxu0 %v4805
    %6796 = vmatpush1.bf16.msra.mxu0 %v4804
    %6797 = vmatprep.subr.bf16.mxu0 %v4789
    %6798 = vmatpush1.bf16.msra.mxu0 %v4788
    %6799 = vmatprep.subr.bf16.mxu0 %v5029
    %6800 = vmatpush2.bf16.msra.mxu0 %v5028
    %6801 = vmatprep.subr.bf16.mxu0 %v5013
    %6802 = vmatpush2.bf16.msra.mxu0 %v5012
    %6803 = vmatprep.subr.bf16.mxu0 %v4997
    %6804 = vmatpush2.bf16.msra.mxu0 %v4996
    %6805 = vmatprep.subr.bf16.mxu0 %v4981
    %6806 = vmatpush2.bf16.msra.mxu0 %v4980
    %6807 = vmatprep.subr.bf16.mxu0 %v4965
    %6808 = vmatpush2.bf16.msra.mxu0 %v4964
    %6809 = vmatprep.subr.bf16.mxu0 %v4949
    %6810 = vmatpush2.bf16.msra.mxu0 %v4948
    %6811 = vmatprep.subr.bf16.mxu0 %v4933
    %6812 = vmatpush2.bf16.msra.mxu0 %v4932
    %6813 = vmatprep.subr.bf16.mxu0 %v4917
    %6814 = vmatpush2.bf16.msra.mxu0 %v4916
    %6815 = vmatprep.mubr.bf16.mxu0 %v345
    %6816 = vmatmul.mubr.bf16.gmra.mxu0 %v344
    %v6817 = vpop.f32.mrf.mxu0
    %v6818 = vadd.f32 %v6777, %v6817
    %v6819 = vpop.f32.mrf.mxu0
    %v6820 = vadd.f32 %v6779, %v6819
    %v6821 = vpop.f32.mrf.mxu0
    %v6822 = vpop.f32.mrf.mxu0
    %6823 = vdwg.mxu0
    %6824 = vmatprep.subr.bf16.mxu0 %v5157
    %6825 = vmatpush1.bf16.msra.mxu0 %v5156
    %6826 = vmatprep.subr.bf16.mxu0 %v5141
    %6827 = vmatpush1.bf16.msra.mxu0 %v5140
    %6828 = vmatprep.subr.bf16.mxu0 %v5125
    %6829 = vmatpush1.bf16.msra.mxu0 %v5124
    %6830 = vmatprep.subr.bf16.mxu0 %v5109
    %6831 = vmatpush1.bf16.msra.mxu0 %v5108
    %6832 = vmatprep.subr.bf16.mxu0 %v5093
    %6833 = vmatpush1.bf16.msra.mxu0 %v5092
    %6834 = vmatprep.subr.bf16.mxu0 %v5077
    %6835 = vmatpush1.bf16.msra.mxu0 %v5076
    %6836 = vmatprep.subr.bf16.mxu0 %v5061
    %6837 = vmatpush1.bf16.msra.mxu0 %v5060
    %6838 = vmatprep.subr.bf16.mxu0 %v5045
    %6839 = vmatpush1.bf16.msra.mxu0 %v5044
    %6840 = vmatprep.subr.bf16.mxu0 %v5285
    %6841 = vmatpush2.bf16.msra.mxu0 %v5284
    %6842 = vmatprep.subr.bf16.mxu0 %v5269
    %6843 = vmatpush2.bf16.msra.mxu0 %v5268
    %6844 = vmatprep.subr.bf16.mxu0 %v5253
    %6845 = vmatpush2.bf16.msra.mxu0 %v5252
    %6846 = vmatprep.subr.bf16.mxu0 %v5237
    %6847 = vmatpush2.bf16.msra.mxu0 %v5236
    %6848 = vmatprep.subr.bf16.mxu0 %v5221
    %6849 = vmatpush2.bf16.msra.mxu0 %v5220
    %6850 = vmatprep.subr.bf16.mxu0 %v5205
    %6851 = vmatpush2.bf16.msra.mxu0 %v5204
    %6852 = vmatprep.subr.bf16.mxu0 %v5189
    %6853 = vmatpush2.bf16.msra.mxu0 %v5188
    %6854 = vmatprep.subr.bf16.mxu0 %v5173
    %6855 = vmatpush2.bf16.msra.mxu0 %v5172
    %6856 = vmatprep.mubr.bf16.mxu0 %v347
    %6857 = vmatmul.mubr.bf16.gmra.mxu0 %v346
    %v6858 = vpop.f32.mrf.mxu0
    %v6859 = vadd.f32 %v6818, %v6858
    %v6860 = vpop.f32.mrf.mxu0
    %v6861 = vadd.f32 %v6820, %v6860
    %v6862 = vpop.f32.mrf.mxu0
    %v6863 = vpop.f32.mrf.mxu0
    %6864 = vdwg.mxu0
    %6865 = vmatprep.subr.bf16.mxu0 %v5413
    %6866 = vmatpush1.bf16.msra.mxu0 %v5412
    %6867 = vmatprep.subr.bf16.mxu0 %v5397
    %6868 = vmatpush1.bf16.msra.mxu0 %v5396
    %6869 = vmatprep.subr.bf16.mxu0 %v5381
    %6870 = vmatpush1.bf16.msra.mxu0 %v5380
    %6871 = vmatprep.subr.bf16.mxu0 %v5365
    %6872 = vmatpush1.bf16.msra.mxu0 %v5364
    %6873 = vmatprep.subr.bf16.mxu0 %v5349
    %6874 = vmatpush1.bf16.msra.mxu0 %v5348
    %6875 = vmatprep.subr.bf16.mxu0 %v5333
    %6876 = vmatpush1.bf16.msra.mxu0 %v5332
    %6877 = vmatprep.subr.bf16.mxu0 %v5317
    %6878 = vmatpush1.bf16.msra.mxu0 %v5316
    %6879 = vmatprep.subr.bf16.mxu0 %v5301
    %6880 = vmatpush1.bf16.msra.mxu0 %v5300
    %6881 = vmatprep.subr.bf16.mxu0 %v5541
    %6882 = vmatpush2.bf16.msra.mxu0 %v5540
    %6883 = vmatprep.subr.bf16.mxu0 %v5525
    %6884 = vmatpush2.bf16.msra.mxu0 %v5524
    %6885 = vmatprep.subr.bf16.mxu0 %v5509
    %6886 = vmatpush2.bf16.msra.mxu0 %v5508
    %6887 = vmatprep.subr.bf16.mxu0 %v5493
    %6888 = vmatpush2.bf16.msra.mxu0 %v5492
    %6889 = vmatprep.subr.bf16.mxu0 %v5477
    %6890 = vmatpush2.bf16.msra.mxu0 %v5476
    %6891 = vmatprep.subr.bf16.mxu0 %v5461
    %6892 = vmatpush2.bf16.msra.mxu0 %v5460
    %6893 = vmatprep.subr.bf16.mxu0 %v5445
    %6894 = vmatpush2.bf16.msra.mxu0 %v5444
    %6895 = vmatprep.subr.bf16.mxu0 %v5429
    %6896 = vmatpush2.bf16.msra.mxu0 %v5428
    %6897 = vmatprep.mubr.bf16.mxu0 %v349
    %6898 = vmatmul.mubr.bf16.gmra.mxu0 %v348
    %v6899 = vpop.f32.mrf.mxu0
    %v6900 = vadd.f32 %v6859, %v6899
    %v6901 = vpop.f32.mrf.mxu0
    %v6902 = vadd.f32 %v6861, %v6901
    %v6903 = vpop.f32.mrf.mxu0
    %v6904 = vpop.f32.mrf.mxu0
    %6905 = vdwg.mxu0
    %6906 = vmatprep.subr.bf16.mxu0 %v4647
    %6907 = vmatpush1.bf16.msra.mxu0 %v4646
    %6908 = vmatprep.subr.bf16.mxu0 %v4631
    %6909 = vmatpush1.bf16.msra.mxu0 %v4630
    %6910 = vmatprep.subr.bf16.mxu0 %v4615
    %6911 = vmatpush1.bf16.msra.mxu0 %v4614
    %6912 = vmatprep.subr.bf16.mxu0 %v4599
    %6913 = vmatpush1.bf16.msra.mxu0 %v4598
    %6914 = vmatprep.subr.bf16.mxu0 %v4583
    %6915 = vmatpush1.bf16.msra.mxu0 %v4582
    %6916 = vmatprep.subr.bf16.mxu0 %v4567
    %6917 = vmatpush1.bf16.msra.mxu0 %v4566
    %6918 = vmatprep.subr.bf16.mxu0 %v4551
    %6919 = vmatpush1.bf16.msra.mxu0 %v4550
    %6920 = vmatprep.subr.bf16.mxu0 %v4535
    %6921 = vmatpush1.bf16.msra.mxu0 %v4534
    %6922 = vmatprep.subr.bf16.mxu0 %v4775
    %6923 = vmatpush2.bf16.msra.mxu0 %v4774
    %6924 = vmatprep.subr.bf16.mxu0 %v4759
    %6925 = vmatpush2.bf16.msra.mxu0 %v4758
    %6926 = vmatprep.subr.bf16.mxu0 %v4743
    %6927 = vmatpush2.bf16.msra.mxu0 %v4742
    %6928 = vmatprep.subr.bf16.mxu0 %v4727
    %6929 = vmatpush2.bf16.msra.mxu0 %v4726
    %6930 = vmatprep.subr.bf16.mxu0 %v4711
    %6931 = vmatpush2.bf16.msra.mxu0 %v4710
    %6932 = vmatprep.subr.bf16.mxu0 %v4695
    %6933 = vmatpush2.bf16.msra.mxu0 %v4694
    %6934 = vmatprep.subr.bf16.mxu0 %v4679
    %6935 = vmatpush2.bf16.msra.mxu0 %v4678
    %6936 = vmatprep.subr.bf16.mxu0 %v4663
    %6937 = vmatpush2.bf16.msra.mxu0 %v4662
    %6938 = vmatprep.mubr.bf16.mxu0 %v343
    %6939 = vmatmul.mubr.bf16.gmra.mxu0 %v342
    %v6940 = vpop.f32.mrf.mxu0
    %v6941 = vadd.f32 %v1397, %v6940
    %v6942 = vpop.f32.mrf.mxu0
    %v6943 = vadd.f32 %v1401, %v6942
    %v6944 = vpop.f32.mrf.mxu0
    %v6945 = vpop.f32.mrf.mxu0
    %6946 = vdwg.mxu0
    %6947 = vmatprep.subr.bf16.mxu0 %v4903
    %6948 = vmatpush1.bf16.msra.mxu0 %v4902
    %6949 = vmatprep.subr.bf16.mxu0 %v4887
    %6950 = vmatpush1.bf16.msra.mxu0 %v4886
    %6951 = vmatprep.subr.bf16.mxu0 %v4871
    %6952 = vmatpush1.bf16.msra.mxu0 %v4870
    %6953 = vmatprep.subr.bf16.mxu0 %v4855
    %6954 = vmatpush1.bf16.msra.mxu0 %v4854
    %6955 = vmatprep.subr.bf16.mxu0 %v4839
    %6956 = vmatpush1.bf16.msra.mxu0 %v4838
    %6957 = vmatprep.subr.bf16.mxu0 %v4823
    %6958 = vmatpush1.bf16.msra.mxu0 %v4822
    %6959 = vmatprep.subr.bf16.mxu0 %v4807
    %6960 = vmatpush1.bf16.msra.mxu0 %v4806
    %6961 = vmatprep.subr.bf16.mxu0 %v4791
    %6962 = vmatpush1.bf16.msra.mxu0 %v4790
    %6963 = vmatprep.subr.bf16.mxu0 %v5031
    %6964 = vmatpush2.bf16.msra.mxu0 %v5030
    %6965 = vmatprep.subr.bf16.mxu0 %v5015
    %6966 = vmatpush2.bf16.msra.mxu0 %v5014
    %6967 = vmatprep.subr.bf16.mxu0 %v4999
    %6968 = vmatpush2.bf16.msra.mxu0 %v4998
    %6969 = vmatprep.subr.bf16.mxu0 %v4983
    %6970 = vmatpush2.bf16.msra.mxu0 %v4982
    %6971 = vmatprep.subr.bf16.mxu0 %v4967
    %6972 = vmatpush2.bf16.msra.mxu0 %v4966
    %6973 = vmatprep.subr.bf16.mxu0 %v4951
    %6974 = vmatpush2.bf16.msra.mxu0 %v4950
    %6975 = vmatprep.subr.bf16.mxu0 %v4935
    %6976 = vmatpush2.bf16.msra.mxu0 %v4934
    %6977 = vmatprep.subr.bf16.mxu0 %v4919
    %6978 = vmatpush2.bf16.msra.mxu0 %v4918
    %6979 = vmatprep.mubr.bf16.mxu0 %v345
    %6980 = vmatmul.mubr.bf16.gmra.mxu0 %v344
    %v6981 = vpop.f32.mrf.mxu0
    %v6982 = vadd.f32 %v6941, %v6981
    %v6983 = vpop.f32.mrf.mxu0
    %v6984 = vadd.f32 %v6943, %v6983
    %v6985 = vpop.f32.mrf.mxu0
    %v6986 = vpop.f32.mrf.mxu0
    %6987 = vdwg.mxu0
    %6988 = vmatprep.subr.bf16.mxu0 %v5159
    %6989 = vmatpush1.bf16.msra.mxu0 %v5158
    %6990 = vmatprep.subr.bf16.mxu0 %v5143
    %6991 = vmatpush1.bf16.msra.mxu0 %v5142
    %6992 = vmatprep.subr.bf16.mxu0 %v5127
    %6993 = vmatpush1.bf16.msra.mxu0 %v5126
    %6994 = vmatprep.subr.bf16.mxu0 %v5111
    %6995 = vmatpush1.bf16.msra.mxu0 %v5110
    %6996 = vmatprep.subr.bf16.mxu0 %v5095
    %6997 = vmatpush1.bf16.msra.mxu0 %v5094
    %6998 = vmatprep.subr.bf16.mxu0 %v5079
    %6999 = vmatpush1.bf16.msra.mxu0 %v5078
    %7000 = vmatprep.subr.bf16.mxu0 %v5063
    %7001 = vmatpush1.bf16.msra.mxu0 %v5062
    %7002 = vmatprep.subr.bf16.mxu0 %v5047
    %7003 = vmatpush1.bf16.msra.mxu0 %v5046
    %7004 = vmatprep.subr.bf16.mxu0 %v5287
    %7005 = vmatpush2.bf16.msra.mxu0 %v5286
    %7006 = vmatprep.subr.bf16.mxu0 %v5271
    %7007 = vmatpush2.bf16.msra.mxu0 %v5270
    %7008 = vmatprep.subr.bf16.mxu0 %v5255
    %7009 = vmatpush2.bf16.msra.mxu0 %v5254
    %7010 = vmatprep.subr.bf16.mxu0 %v5239
    %7011 = vmatpush2.bf16.msra.mxu0 %v5238
    %7012 = vmatprep.subr.bf16.mxu0 %v5223
    %7013 = vmatpush2.bf16.msra.mxu0 %v5222
    %7014 = vmatprep.subr.bf16.mxu0 %v5207
    %7015 = vmatpush2.bf16.msra.mxu0 %v5206
    %7016 = vmatprep.subr.bf16.mxu0 %v5191
    %7017 = vmatpush2.bf16.msra.mxu0 %v5190
    %7018 = vmatprep.subr.bf16.mxu0 %v5175
    %7019 = vmatpush2.bf16.msra.mxu0 %v5174
    %7020 = vmatprep.mubr.bf16.mxu0 %v347
    %7021 = vmatmul.mubr.bf16.gmra.mxu0 %v346
    %v7022 = vpop.f32.mrf.mxu0
    %v7023 = vadd.f32 %v6982, %v7022
    %v7024 = vpop.f32.mrf.mxu0
    %v7025 = vadd.f32 %v6984, %v7024
    %v7026 = vpop.f32.mrf.mxu0
    %v7027 = vpop.f32.mrf.mxu0
    %7028 = vdwg.mxu0
    %7029 = vmatprep.subr.bf16.mxu0 %v5415
    %7030 = vmatpush1.bf16.msra.mxu0 %v5414
    %7031 = vmatprep.subr.bf16.mxu0 %v5399
    %7032 = vmatpush1.bf16.msra.mxu0 %v5398
    %7033 = vmatprep.subr.bf16.mxu0 %v5383
    %7034 = vmatpush1.bf16.msra.mxu0 %v5382
    %7035 = vmatprep.subr.bf16.mxu0 %v5367
    %7036 = vmatpush1.bf16.msra.mxu0 %v5366
    %7037 = vmatprep.subr.bf16.mxu0 %v5351
    %7038 = vmatpush1.bf16.msra.mxu0 %v5350
    %7039 = vmatprep.subr.bf16.mxu0 %v5335
    %7040 = vmatpush1.bf16.msra.mxu0 %v5334
    %7041 = vmatprep.subr.bf16.mxu0 %v5319
    %7042 = vmatpush1.bf16.msra.mxu0 %v5318
    %7043 = vmatprep.subr.bf16.mxu0 %v5303
    %7044 = vmatpush1.bf16.msra.mxu0 %v5302
    %7045 = vmatprep.subr.bf16.mxu0 %v5543
    %7046 = vmatpush2.bf16.msra.mxu0 %v5542
    %7047 = vmatprep.subr.bf16.mxu0 %v5527
    %7048 = vmatpush2.bf16.msra.mxu0 %v5526
    %7049 = vmatprep.subr.bf16.mxu0 %v5511
    %7050 = vmatpush2.bf16.msra.mxu0 %v5510
    %7051 = vmatprep.subr.bf16.mxu0 %v5495
    %7052 = vmatpush2.bf16.msra.mxu0 %v5494
    %7053 = vmatprep.subr.bf16.mxu0 %v5479
    %7054 = vmatpush2.bf16.msra.mxu0 %v5478
    %7055 = vmatprep.subr.bf16.mxu0 %v5463
    %7056 = vmatpush2.bf16.msra.mxu0 %v5462
    %7057 = vmatprep.subr.bf16.mxu0 %v5447
    %7058 = vmatpush2.bf16.msra.mxu0 %v5446
    %7059 = vmatprep.subr.bf16.mxu0 %v5431
    %7060 = vmatpush2.bf16.msra.mxu0 %v5430
    %7061 = vmatprep.mubr.bf16.mxu0 %v349
    %7062 = vmatmul.mubr.bf16.gmra.mxu0 %v348
    %v7063 = vpop.f32.mrf.mxu0
    %v7064 = vadd.f32 %v7023, %v7063
    %v7065 = vpop.f32.mrf.mxu0
    %v7066 = vadd.f32 %v7025, %v7065
    %v7067 = vpop.f32.mrf.mxu0
    %v7068 = vpop.f32.mrf.mxu0
    %7069 = vdwg.mxu0
    %7070 = vmatprep.subr.bf16.mxu0 %v4649
    %7071 = vmatpush1.bf16.msra.mxu0 %v4648
    %7072 = vmatprep.subr.bf16.mxu0 %v4633
    %7073 = vmatpush1.bf16.msra.mxu0 %v4632
    %7074 = vmatprep.subr.bf16.mxu0 %v4617
    %7075 = vmatpush1.bf16.msra.mxu0 %v4616
    %7076 = vmatprep.subr.bf16.mxu0 %v4601
    %7077 = vmatpush1.bf16.msra.mxu0 %v4600
    %7078 = vmatprep.subr.bf16.mxu0 %v4585
    %7079 = vmatpush1.bf16.msra.mxu0 %v4584
    %7080 = vmatprep.subr.bf16.mxu0 %v4569
    %7081 = vmatpush1.bf16.msra.mxu0 %v4568
    %7082 = vmatprep.subr.bf16.mxu0 %v4553
    %7083 = vmatpush1.bf16.msra.mxu0 %v4552
    %7084 = vmatprep.subr.bf16.mxu0 %v4537
    %7085 = vmatpush1.bf16.msra.mxu0 %v4536
    %7086 = vmatprep.subr.bf16.mxu0 %v4777
    %7087 = vmatpush2.bf16.msra.mxu0 %v4776
    %7088 = vmatprep.subr.bf16.mxu0 %v4761
    %7089 = vmatpush2.bf16.msra.mxu0 %v4760
    %7090 = vmatprep.subr.bf16.mxu0 %v4745
    %7091 = vmatpush2.bf16.msra.mxu0 %v4744
    %7092 = vmatprep.subr.bf16.mxu0 %v4729
    %7093 = vmatpush2.bf16.msra.mxu0 %v4728
    %7094 = vmatprep.subr.bf16.mxu0 %v4713
    %7095 = vmatpush2.bf16.msra.mxu0 %v4712
    %7096 = vmatprep.subr.bf16.mxu0 %v4697
    %7097 = vmatpush2.bf16.msra.mxu0 %v4696
    %7098 = vmatprep.subr.bf16.mxu0 %v4681
    %7099 = vmatpush2.bf16.msra.mxu0 %v4680
    %7100 = vmatprep.subr.bf16.mxu0 %v4665
    %7101 = vmatpush2.bf16.msra.mxu0 %v4664
    %7102 = vmatprep.mubr.bf16.mxu0 %v343
    %7103 = vmatmul.mubr.bf16.gmra.mxu0 %v342
    %v7104 = vpop.f32.mrf.mxu0
    %v7105 = vadd.f32 %v1405, %v7104
    %v7106 = vpop.f32.mrf.mxu0
    %v7107 = vadd.f32 %v1409, %v7106
    %v7108 = vpop.f32.mrf.mxu0
    %v7109 = vpop.f32.mrf.mxu0
    %7110 = vdwg.mxu0
    %7111 = vmatprep.subr.bf16.mxu0 %v4905
    %7112 = vmatpush1.bf16.msra.mxu0 %v4904
    %7113 = vmatprep.subr.bf16.mxu0 %v4889
    %7114 = vmatpush1.bf16.msra.mxu0 %v4888
    %7115 = vmatprep.subr.bf16.mxu0 %v4873
    %7116 = vmatpush1.bf16.msra.mxu0 %v4872
    %7117 = vmatprep.subr.bf16.mxu0 %v4857
    %7118 = vmatpush1.bf16.msra.mxu0 %v4856
    %7119 = vmatprep.subr.bf16.mxu0 %v4841
    %7120 = vmatpush1.bf16.msra.mxu0 %v4840
    %7121 = vmatprep.subr.bf16.mxu0 %v4825
    %7122 = vmatpush1.bf16.msra.mxu0 %v4824
    %7123 = vmatprep.subr.bf16.mxu0 %v4809
    %7124 = vmatpush1.bf16.msra.mxu0 %v4808
    %7125 = vmatprep.subr.bf16.mxu0 %v4793
    %7126 = vmatpush1.bf16.msra.mxu0 %v4792
    %7127 = vmatprep.subr.bf16.mxu0 %v5033
    %7128 = vmatpush2.bf16.msra.mxu0 %v5032
    %7129 = vmatprep.subr.bf16.mxu0 %v5017
    %7130 = vmatpush2.bf16.msra.mxu0 %v5016
    %7131 = vmatprep.subr.bf16.mxu0 %v5001
    %7132 = vmatpush2.bf16.msra.mxu0 %v5000
    %7133 = vmatprep.subr.bf16.mxu0 %v4985
    %7134 = vmatpush2.bf16.msra.mxu0 %v4984
    %7135 = vmatprep.subr.bf16.mxu0 %v4969
    %7136 = vmatpush2.bf16.msra.mxu0 %v4968
    %7137 = vmatprep.subr.bf16.mxu0 %v4953
    %7138 = vmatpush2.bf16.msra.mxu0 %v4952
    %7139 = vmatprep.subr.bf16.mxu0 %v4937
    %7140 = vmatpush2.bf16.msra.mxu0 %v4936
    %7141 = vmatprep.subr.bf16.mxu0 %v4921
    %7142 = vmatpush2.bf16.msra.mxu0 %v4920
    %7143 = vmatprep.mubr.bf16.mxu0 %v345
    %7144 = vmatmul.mubr.bf16.gmra.mxu0 %v344
    %v7145 = vpop.f32.mrf.mxu0
    %v7146 = vadd.f32 %v7105, %v7145
    %v7147 = vpop.f32.mrf.mxu0
    %v7148 = vadd.f32 %v7107, %v7147
    %v7149 = vpop.f32.mrf.mxu0
    %v7150 = vpop.f32.mrf.mxu0
    %7151 = vdwg.mxu0
    %7152 = vmatprep.subr.bf16.mxu0 %v5161
    %7153 = vmatpush1.bf16.msra.mxu0 %v5160
    %7154 = vmatprep.subr.bf16.mxu0 %v5145
    %7155 = vmatpush1.bf16.msra.mxu0 %v5144
    %7156 = vmatprep.subr.bf16.mxu0 %v5129
    %7157 = vmatpush1.bf16.msra.mxu0 %v5128
    %7158 = vmatprep.subr.bf16.mxu0 %v5113
    %7159 = vmatpush1.bf16.msra.mxu0 %v5112
    %7160 = vmatprep.subr.bf16.mxu0 %v5097
    %7161 = vmatpush1.bf16.msra.mxu0 %v5096
    %7162 = vmatprep.subr.bf16.mxu0 %v5081
    %7163 = vmatpush1.bf16.msra.mxu0 %v5080
    %7164 = vmatprep.subr.bf16.mxu0 %v5065
    %7165 = vmatpush1.bf16.msra.mxu0 %v5064
    %7166 = vmatprep.subr.bf16.mxu0 %v5049
    %7167 = vmatpush1.bf16.msra.mxu0 %v5048
    %7168 = vmatprep.subr.bf16.mxu0 %v5289
    %7169 = vmatpush2.bf16.msra.mxu0 %v5288
    %7170 = vmatprep.subr.bf16.mxu0 %v5273
    %7171 = vmatpush2.bf16.msra.mxu0 %v5272
    %7172 = vmatprep.subr.bf16.mxu0 %v5257
    %7173 = vmatpush2.bf16.msra.mxu0 %v5256
    %7174 = vmatprep.subr.bf16.mxu0 %v5241
    %7175 = vmatpush2.bf16.msra.mxu0 %v5240
    %7176 = vmatprep.subr.bf16.mxu0 %v5225
    %7177 = vmatpush2.bf16.msra.mxu0 %v5224
    %7178 = vmatprep.subr.bf16.mxu0 %v5209
    %7179 = vmatpush2.bf16.msra.mxu0 %v5208
    %7180 = vmatprep.subr.bf16.mxu0 %v5193
    %7181 = vmatpush2.bf16.msra.mxu0 %v5192
    %7182 = vmatprep.subr.bf16.mxu0 %v5177
    %7183 = vmatpush2.bf16.msra.mxu0 %v5176
    %7184 = vmatprep.mubr.bf16.mxu0 %v347
    %7185 = vmatmul.mubr.bf16.gmra.mxu0 %v346
    %v7186 = vpop.f32.mrf.mxu0
    %v7187 = vadd.f32 %v7146, %v7186
    %v7188 = vpop.f32.mrf.mxu0
    %v7189 = vadd.f32 %v7148, %v7188
    %v7190 = vpop.f32.mrf.mxu0
    %v7191 = vpop.f32.mrf.mxu0
    %7192 = vdwg.mxu0
    %7193 = vmatprep.subr.bf16.mxu0 %v5417
    %7194 = vmatpush1.bf16.msra.mxu0 %v5416
    %7195 = vmatprep.subr.bf16.mxu0 %v5401
    %7196 = vmatpush1.bf16.msra.mxu0 %v5400
    %7197 = vmatprep.subr.bf16.mxu0 %v5385
    %7198 = vmatpush1.bf16.msra.mxu0 %v5384
    %7199 = vmatprep.subr.bf16.mxu0 %v5369
    %7200 = vmatpush1.bf16.msra.mxu0 %v5368
    %7201 = vmatprep.subr.bf16.mxu0 %v5353
    %7202 = vmatpush1.bf16.msra.mxu0 %v5352
    %7203 = vmatprep.subr.bf16.mxu0 %v5337
    %7204 = vmatpush1.bf16.msra.mxu0 %v5336
    %7205 = vmatprep.subr.bf16.mxu0 %v5321
    %7206 = vmatpush1.bf16.msra.mxu0 %v5320
    %7207 = vmatprep.subr.bf16.mxu0 %v5305
    %7208 = vmatpush1.bf16.msra.mxu0 %v5304
    %7209 = vmatprep.subr.bf16.mxu0 %v5545
    %7210 = vmatpush2.bf16.msra.mxu0 %v5544
    %7211 = vmatprep.subr.bf16.mxu0 %v5529
    %7212 = vmatpush2.bf16.msra.mxu0 %v5528
    %7213 = vmatprep.subr.bf16.mxu0 %v5513
    %7214 = vmatpush2.bf16.msra.mxu0 %v5512
    %7215 = vmatprep.subr.bf16.mxu0 %v5497
    %7216 = vmatpush2.bf16.msra.mxu0 %v5496
    %7217 = vmatprep.subr.bf16.mxu0 %v5481
    %7218 = vmatpush2.bf16.msra.mxu0 %v5480
    %7219 = vmatprep.subr.bf16.mxu0 %v5465
    %7220 = vmatpush2.bf16.msra.mxu0 %v5464
    %7221 = vmatprep.subr.bf16.mxu0 %v5449
    %7222 = vmatpush2.bf16.msra.mxu0 %v5448
    %7223 = vmatprep.subr.bf16.mxu0 %v5433
    %7224 = vmatpush2.bf16.msra.mxu0 %v5432
    %7225 = vmatprep.mubr.bf16.mxu0 %v349
    %7226 = vmatmul.mubr.bf16.gmra.mxu0 %v348
    %v7227 = vpop.f32.mrf.mxu0
    %v7228 = vadd.f32 %v7187, %v7227
    %v7229 = vpop.f32.mrf.mxu0
    %v7230 = vadd.f32 %v7189, %v7229
    %v7231 = vpop.f32.mrf.mxu0
    %v7232 = vpop.f32.mrf.mxu0
    %7233 = vdwg.mxu0
    %7234 = vmatprep.subr.bf16.mxu0 %v4651
    %7235 = vmatpush1.bf16.msra.mxu0 %v4650
    %7236 = vmatprep.subr.bf16.mxu0 %v4635
    %7237 = vmatpush1.bf16.msra.mxu0 %v4634
    %7238 = vmatprep.subr.bf16.mxu0 %v4619
    %7239 = vmatpush1.bf16.msra.mxu0 %v4618
    %7240 = vmatprep.subr.bf16.mxu0 %v4603
    %7241 = vmatpush1.bf16.msra.mxu0 %v4602
    %7242 = vmatprep.subr.bf16.mxu0 %v4587
    %7243 = vmatpush1.bf16.msra.mxu0 %v4586
    %7244 = vmatprep.subr.bf16.mxu0 %v4571
    %7245 = vmatpush1.bf16.msra.mxu0 %v4570
    %7246 = vmatprep.subr.bf16.mxu0 %v4555
    %7247 = vmatpush1.bf16.msra.mxu0 %v4554
    %7248 = vmatprep.subr.bf16.mxu0 %v4539
    %7249 = vmatpush1.bf16.msra.mxu0 %v4538
    %7250 = vmatprep.subr.bf16.mxu0 %v4779
    %7251 = vmatpush2.bf16.msra.mxu0 %v4778
    %7252 = vmatprep.subr.bf16.mxu0 %v4763
    %7253 = vmatpush2.bf16.msra.mxu0 %v4762
    %7254 = vmatprep.subr.bf16.mxu0 %v4747
    %7255 = vmatpush2.bf16.msra.mxu0 %v4746
    %7256 = vmatprep.subr.bf16.mxu0 %v4731
    %7257 = vmatpush2.bf16.msra.mxu0 %v4730
    %7258 = vmatprep.subr.bf16.mxu0 %v4715
    %7259 = vmatpush2.bf16.msra.mxu0 %v4714
    %7260 = vmatprep.subr.bf16.mxu0 %v4699
    %7261 = vmatpush2.bf16.msra.mxu0 %v4698
    %7262 = vmatprep.subr.bf16.mxu0 %v4683
    %7263 = vmatpush2.bf16.msra.mxu0 %v4682
    %7264 = vmatprep.subr.bf16.mxu0 %v4667
    %7265 = vmatpush2.bf16.msra.mxu0 %v4666
    %7266 = vmatprep.mubr.bf16.mxu0 %v343
    %7267 = vmatmul.mubr.bf16.gmra.mxu0 %v342
    %v7268 = vpop.f32.mrf.mxu0
    %v7269 = vadd.f32 %v1413, %v7268
    %v7270 = vpop.f32.mrf.mxu0
    %v7271 = vadd.f32 %v1417, %v7270
    %v7272 = vpop.f32.mrf.mxu0
    %v7273 = vpop.f32.mrf.mxu0
    %7274 = vdwg.mxu0
    %7275 = vmatprep.subr.bf16.mxu0 %v4907
    %7276 = vmatpush1.bf16.msra.mxu0 %v4906
    %7277 = vmatprep.subr.bf16.mxu0 %v4891
    %7278 = vmatpush1.bf16.msra.mxu0 %v4890
    %7279 = vmatprep.subr.bf16.mxu0 %v4875
    %7280 = vmatpush1.bf16.msra.mxu0 %v4874
    %7281 = vmatprep.subr.bf16.mxu0 %v4859
    %7282 = vmatpush1.bf16.msra.mxu0 %v4858
    %7283 = vmatprep.subr.bf16.mxu0 %v4843
    %7284 = vmatpush1.bf16.msra.mxu0 %v4842
    %7285 = vmatprep.subr.bf16.mxu0 %v4827
    %7286 = vmatpush1.bf16.msra.mxu0 %v4826
    %7287 = vmatprep.subr.bf16.mxu0 %v4811
    %7288 = vmatpush1.bf16.msra.mxu0 %v4810
    %7289 = vmatprep.subr.bf16.mxu0 %v4795
    %7290 = vmatpush1.bf16.msra.mxu0 %v4794
    %7291 = vmatprep.subr.bf16.mxu0 %v5035
    %7292 = vmatpush2.bf16.msra.mxu0 %v5034
    %7293 = vmatprep.subr.bf16.mxu0 %v5019
    %7294 = vmatpush2.bf16.msra.mxu0 %v5018
    %7295 = vmatprep.subr.bf16.mxu0 %v5003
    %7296 = vmatpush2.bf16.msra.mxu0 %v5002
    %7297 = vmatprep.subr.bf16.mxu0 %v4987
    %7298 = vmatpush2.bf16.msra.mxu0 %v4986
    %7299 = vmatprep.subr.bf16.mxu0 %v4971
    %7300 = vmatpush2.bf16.msra.mxu0 %v4970
    %7301 = vmatprep.subr.bf16.mxu0 %v4955
    %7302 = vmatpush2.bf16.msra.mxu0 %v4954
    %7303 = vmatprep.subr.bf16.mxu0 %v4939
    %7304 = vmatpush2.bf16.msra.mxu0 %v4938
    %7305 = vmatprep.subr.bf16.mxu0 %v4923
    %7306 = vmatpush2.bf16.msra.mxu0 %v4922
    %7307 = vmatprep.mubr.bf16.mxu0 %v345
    %7308 = vmatmul.mubr.bf16.gmra.mxu0 %v344
    %v7309 = vpop.f32.mrf.mxu0
    %v7310 = vadd.f32 %v7269, %v7309
    %v7311 = vpop.f32.mrf.mxu0
    %v7312 = vadd.f32 %v7271, %v7311
    %v7313 = vpop.f32.mrf.mxu0
    %v7314 = vpop.f32.mrf.mxu0
    %7315 = vdwg.mxu0
    %7316 = vmatprep.subr.bf16.mxu0 %v5163
    %7317 = vmatpush1.bf16.msra.mxu0 %v5162
    %7318 = vmatprep.subr.bf16.mxu0 %v5147
    %7319 = vmatpush1.bf16.msra.mxu0 %v5146
    %7320 = vmatprep.subr.bf16.mxu0 %v5131
    %7321 = vmatpush1.bf16.msra.mxu0 %v5130
    %7322 = vmatprep.subr.bf16.mxu0 %v5115
    %7323 = vmatpush1.bf16.msra.mxu0 %v5114
    %7324 = vmatprep.subr.bf16.mxu0 %v5099
    %7325 = vmatpush1.bf16.msra.mxu0 %v5098
    %7326 = vmatprep.subr.bf16.mxu0 %v5083
    %7327 = vmatpush1.bf16.msra.mxu0 %v5082
    %7328 = vmatprep.subr.bf16.mxu0 %v5067
    %7329 = vmatpush1.bf16.msra.mxu0 %v5066
    %7330 = vmatprep.subr.bf16.mxu0 %v5051
    %7331 = vmatpush1.bf16.msra.mxu0 %v5050
    %7332 = vmatprep.subr.bf16.mxu0 %v5291
    %7333 = vmatpush2.bf16.msra.mxu0 %v5290
    %7334 = vmatprep.subr.bf16.mxu0 %v5275
    %7335 = vmatpush2.bf16.msra.mxu0 %v5274
    %7336 = vmatprep.subr.bf16.mxu0 %v5259
    %7337 = vmatpush2.bf16.msra.mxu0 %v5258
    %7338 = vmatprep.subr.bf16.mxu0 %v5243
    %7339 = vmatpush2.bf16.msra.mxu0 %v5242
    %7340 = vmatprep.subr.bf16.mxu0 %v5227
    %7341 = vmatpush2.bf16.msra.mxu0 %v5226
    %7342 = vmatprep.subr.bf16.mxu0 %v5211
    %7343 = vmatpush2.bf16.msra.mxu0 %v5210
    %7344 = vmatprep.subr.bf16.mxu0 %v5195
    %7345 = vmatpush2.bf16.msra.mxu0 %v5194
    %7346 = vmatprep.subr.bf16.mxu0 %v5179
    %7347 = vmatpush2.bf16.msra.mxu0 %v5178
    %7348 = vmatprep.mubr.bf16.mxu0 %v347
    %7349 = vmatmul.mubr.bf16.gmra.mxu0 %v346
    %v7350 = vpop.f32.mrf.mxu0
    %v7351 = vadd.f32 %v7310, %v7350
    %v7352 = vpop.f32.mrf.mxu0
    %v7353 = vadd.f32 %v7312, %v7352
    %v7354 = vpop.f32.mrf.mxu0
    %v7355 = vpop.f32.mrf.mxu0
    %7356 = vdwg.mxu0
    %7357 = vmatprep.subr.bf16.mxu0 %v5419
    %7358 = vmatpush1.bf16.msra.mxu0 %v5418
    %7359 = vmatprep.subr.bf16.mxu0 %v5403
    %7360 = vmatpush1.bf16.msra.mxu0 %v5402
    %7361 = vmatprep.subr.bf16.mxu0 %v5387
    %7362 = vmatpush1.bf16.msra.mxu0 %v5386
    %7363 = vmatprep.subr.bf16.mxu0 %v5371
    %7364 = vmatpush1.bf16.msra.mxu0 %v5370
    %7365 = vmatprep.subr.bf16.mxu0 %v5355
    %7366 = vmatpush1.bf16.msra.mxu0 %v5354
    %7367 = vmatprep.subr.bf16.mxu0 %v5339
    %7368 = vmatpush1.bf16.msra.mxu0 %v5338
    %7369 = vmatprep.subr.bf16.mxu0 %v5323
    %7370 = vmatpush1.bf16.msra.mxu0 %v5322
    %7371 = vmatprep.subr.bf16.mxu0 %v5307
    %7372 = vmatpush1.bf16.msra.mxu0 %v5306
    %7373 = vmatprep.subr.bf16.mxu0 %v5547
    %7374 = vmatpush2.bf16.msra.mxu0 %v5546
    %7375 = vmatprep.subr.bf16.mxu0 %v5531
    %7376 = vmatpush2.bf16.msra.mxu0 %v5530
    %7377 = vmatprep.subr.bf16.mxu0 %v5515
    %7378 = vmatpush2.bf16.msra.mxu0 %v5514
    %7379 = vmatprep.subr.bf16.mxu0 %v5499
    %7380 = vmatpush2.bf16.msra.mxu0 %v5498
    %7381 = vmatprep.subr.bf16.mxu0 %v5483
    %7382 = vmatpush2.bf16.msra.mxu0 %v5482
    %7383 = vmatprep.subr.bf16.mxu0 %v5467
    %7384 = vmatpush2.bf16.msra.mxu0 %v5466
    %7385 = vmatprep.subr.bf16.mxu0 %v5451
    %7386 = vmatpush2.bf16.msra.mxu0 %v5450
    %7387 = vmatprep.subr.bf16.mxu0 %v5435
    %7388 = vmatpush2.bf16.msra.mxu0 %v5434
    %7389 = vmatprep.mubr.bf16.mxu0 %v349
    %7390 = vmatmul.mubr.bf16.gmra.mxu0 %v348
    %v7391 = vpop.f32.mrf.mxu0
    %v7392 = vadd.f32 %v7351, %v7391
    %v7393 = vpop.f32.mrf.mxu0
    %v7394 = vadd.f32 %v7353, %v7393
    %v7395 = vpop.f32.mrf.mxu0
    %v7396 = vpop.f32.mrf.mxu0
    %7397 = vdwg.mxu0
    %7398 = vmatprep.subr.bf16.mxu0 %v4653
    %7399 = vmatpush1.bf16.msra.mxu0 %v4652
    %7400 = vmatprep.subr.bf16.mxu0 %v4637
    %7401 = vmatpush1.bf16.msra.mxu0 %v4636
    %7402 = vmatprep.subr.bf16.mxu0 %v4621
    %7403 = vmatpush1.bf16.msra.mxu0 %v4620
    %7404 = vmatprep.subr.bf16.mxu0 %v4605
    %7405 = vmatpush1.bf16.msra.mxu0 %v4604
    %7406 = vmatprep.subr.bf16.mxu0 %v4589
    %7407 = vmatpush1.bf16.msra.mxu0 %v4588
    %7408 = vmatprep.subr.bf16.mxu0 %v4573
    %7409 = vmatpush1.bf16.msra.mxu0 %v4572
    %7410 = vmatprep.subr.bf16.mxu0 %v4557
    %7411 = vmatpush1.bf16.msra.mxu0 %v4556
    %7412 = vmatprep.subr.bf16.mxu0 %v4541
    %7413 = vmatpush1.bf16.msra.mxu0 %v4540
    %7414 = vmatprep.subr.bf16.mxu0 %v4781
    %7415 = vmatpush2.bf16.msra.mxu0 %v4780
    %7416 = vmatprep.subr.bf16.mxu0 %v4765
    %7417 = vmatpush2.bf16.msra.mxu0 %v4764
    %7418 = vmatprep.subr.bf16.mxu0 %v4749
    %7419 = vmatpush2.bf16.msra.mxu0 %v4748
    %7420 = vmatprep.subr.bf16.mxu0 %v4733
    %7421 = vmatpush2.bf16.msra.mxu0 %v4732
    %7422 = vmatprep.subr.bf16.mxu0 %v4717
    %7423 = vmatpush2.bf16.msra.mxu0 %v4716
    %7424 = vmatprep.subr.bf16.mxu0 %v4701
    %7425 = vmatpush2.bf16.msra.mxu0 %v4700
    %7426 = vmatprep.subr.bf16.mxu0 %v4685
    %7427 = vmatpush2.bf16.msra.mxu0 %v4684
    %7428 = vmatprep.subr.bf16.mxu0 %v4669
    %7429 = vmatpush2.bf16.msra.mxu0 %v4668
    %7430 = vmatprep.mubr.bf16.mxu0 %v343
    %7431 = vmatmul.mubr.bf16.gmra.mxu0 %v342
    %v7432 = vpop.f32.mrf.mxu0
    %v7433 = vadd.f32 %v1421, %v7432
    %v7434 = vpop.f32.mrf.mxu0
    %v7435 = vadd.f32 %v1425, %v7434
    %v7436 = vpop.f32.mrf.mxu0
    %v7437 = vpop.f32.mrf.mxu0
    %7438 = vdwg.mxu0
    %7439 = vmatprep.subr.bf16.mxu0 %v4909
    %7440 = vmatpush1.bf16.msra.mxu0 %v4908
    %7441 = vmatprep.subr.bf16.mxu0 %v4893
    %7442 = vmatpush1.bf16.msra.mxu0 %v4892
    %7443 = vmatprep.subr.bf16.mxu0 %v4877
    %7444 = vmatpush1.bf16.msra.mxu0 %v4876
    %7445 = vmatprep.subr.bf16.mxu0 %v4861
    %7446 = vmatpush1.bf16.msra.mxu0 %v4860
    %7447 = vmatprep.subr.bf16.mxu0 %v4845
    %7448 = vmatpush1.bf16.msra.mxu0 %v4844
    %7449 = vmatprep.subr.bf16.mxu0 %v4829
    %7450 = vmatpush1.bf16.msra.mxu0 %v4828
    %7451 = vmatprep.subr.bf16.mxu0 %v4813
    %7452 = vmatpush1.bf16.msra.mxu0 %v4812
    %7453 = vmatprep.subr.bf16.mxu0 %v4797
    %7454 = vmatpush1.bf16.msra.mxu0 %v4796
    %7455 = vmatprep.subr.bf16.mxu0 %v5037
    %7456 = vmatpush2.bf16.msra.mxu0 %v5036
    %7457 = vmatprep.subr.bf16.mxu0 %v5021
    %7458 = vmatpush2.bf16.msra.mxu0 %v5020
    %7459 = vmatprep.subr.bf16.mxu0 %v5005
    %7460 = vmatpush2.bf16.msra.mxu0 %v5004
    %7461 = vmatprep.subr.bf16.mxu0 %v4989
    %7462 = vmatpush2.bf16.msra.mxu0 %v4988
    %7463 = vmatprep.subr.bf16.mxu0 %v4973
    %7464 = vmatpush2.bf16.msra.mxu0 %v4972
    %7465 = vmatprep.subr.bf16.mxu0 %v4957
    %7466 = vmatpush2.bf16.msra.mxu0 %v4956
    %7467 = vmatprep.subr.bf16.mxu0 %v4941
    %7468 = vmatpush2.bf16.msra.mxu0 %v4940
    %7469 = vmatprep.subr.bf16.mxu0 %v4925
    %7470 = vmatpush2.bf16.msra.mxu0 %v4924
    %7471 = vmatprep.mubr.bf16.mxu0 %v345
    %7472 = vmatmul.mubr.bf16.gmra.mxu0 %v344
    %v7473 = vpop.f32.mrf.mxu0
    %v7474 = vadd.f32 %v7433, %v7473
    %v7475 = vpop.f32.mrf.mxu0
    %v7476 = vadd.f32 %v7435, %v7475
    %v7477 = vpop.f32.mrf.mxu0
    %v7478 = vpop.f32.mrf.mxu0
    %7479 = vdwg.mxu0
    %7480 = vmatprep.subr.bf16.mxu0 %v5165
    %7481 = vmatpush1.bf16.msra.mxu0 %v5164
    %7482 = vmatprep.subr.bf16.mxu0 %v5149
    %7483 = vmatpush1.bf16.msra.mxu0 %v5148
    %7484 = vmatprep.subr.bf16.mxu0 %v5133
    %7485 = vmatpush1.bf16.msra.mxu0 %v5132
    %7486 = vmatprep.subr.bf16.mxu0 %v5117
    %7487 = vmatpush1.bf16.msra.mxu0 %v5116
    %7488 = vmatprep.subr.bf16.mxu0 %v5101
    %7489 = vmatpush1.bf16.msra.mxu0 %v5100
    %7490 = vmatprep.subr.bf16.mxu0 %v5085
    %7491 = vmatpush1.bf16.msra.mxu0 %v5084
    %7492 = vmatprep.subr.bf16.mxu0 %v5069
    %7493 = vmatpush1.bf16.msra.mxu0 %v5068
    %7494 = vmatprep.subr.bf16.mxu0 %v5053
    %7495 = vmatpush1.bf16.msra.mxu0 %v5052
    %7496 = vmatprep.subr.bf16.mxu0 %v5293
    %7497 = vmatpush2.bf16.msra.mxu0 %v5292
    %7498 = vmatprep.subr.bf16.mxu0 %v5277
    %7499 = vmatpush2.bf16.msra.mxu0 %v5276
    %7500 = vmatprep.subr.bf16.mxu0 %v5261
    %7501 = vmatpush2.bf16.msra.mxu0 %v5260
    %7502 = vmatprep.subr.bf16.mxu0 %v5245
    %7503 = vmatpush2.bf16.msra.mxu0 %v5244
    %7504 = vmatprep.subr.bf16.mxu0 %v5229
    %7505 = vmatpush2.bf16.msra.mxu0 %v5228
    %7506 = vmatprep.subr.bf16.mxu0 %v5213
    %7507 = vmatpush2.bf16.msra.mxu0 %v5212
    %7508 = vmatprep.subr.bf16.mxu0 %v5197
    %7509 = vmatpush2.bf16.msra.mxu0 %v5196
    %7510 = vmatprep.subr.bf16.mxu0 %v5181
    %7511 = vmatpush2.bf16.msra.mxu0 %v5180
    %7512 = vmatprep.mubr.bf16.mxu0 %v347
    %7513 = vmatmul.mubr.bf16.gmra.mxu0 %v346
    %v7514 = vpop.f32.mrf.mxu0
    %v7515 = vadd.f32 %v7474, %v7514
    %v7516 = vpop.f32.mrf.mxu0
    %v7517 = vadd.f32 %v7476, %v7516
    %v7518 = vpop.f32.mrf.mxu0
    %v7519 = vpop.f32.mrf.mxu0
    %7520 = vdwg.mxu0
    %7521 = vmatprep.subr.bf16.mxu0 %v5421
    %7522 = vmatpush1.bf16.msra.mxu0 %v5420
    %7523 = vmatprep.subr.bf16.mxu0 %v5405
    %7524 = vmatpush1.bf16.msra.mxu0 %v5404
    %7525 = vmatprep.subr.bf16.mxu0 %v5389
    %7526 = vmatpush1.bf16.msra.mxu0 %v5388
    %7527 = vmatprep.subr.bf16.mxu0 %v5373
    %7528 = vmatpush1.bf16.msra.mxu0 %v5372
    %7529 = vmatprep.subr.bf16.mxu0 %v5357
    %7530 = vmatpush1.bf16.msra.mxu0 %v5356
    %7531 = vmatprep.subr.bf16.mxu0 %v5341
    %7532 = vmatpush1.bf16.msra.mxu0 %v5340
    %7533 = vmatprep.subr.bf16.mxu0 %v5325
    %7534 = vmatpush1.bf16.msra.mxu0 %v5324
    %7535 = vmatprep.subr.bf16.mxu0 %v5309
    %7536 = vmatpush1.bf16.msra.mxu0 %v5308
    %7537 = vmatprep.subr.bf16.mxu0 %v5549
    %7538 = vmatpush2.bf16.msra.mxu0 %v5548
    %7539 = vmatprep.subr.bf16.mxu0 %v5533
    %7540 = vmatpush2.bf16.msra.mxu0 %v5532
    %7541 = vmatprep.subr.bf16.mxu0 %v5517
    %7542 = vmatpush2.bf16.msra.mxu0 %v5516
    %7543 = vmatprep.subr.bf16.mxu0 %v5501
    %7544 = vmatpush2.bf16.msra.mxu0 %v5500
    %7545 = vmatprep.subr.bf16.mxu0 %v5485
    %7546 = vmatpush2.bf16.msra.mxu0 %v5484
    %7547 = vmatprep.subr.bf16.mxu0 %v5469
    %7548 = vmatpush2.bf16.msra.mxu0 %v5468
    %7549 = vmatprep.subr.bf16.mxu0 %v5453
    %7550 = vmatpush2.bf16.msra.mxu0 %v5452
    %7551 = vmatprep.subr.bf16.mxu0 %v5437
    %7552 = vmatpush2.bf16.msra.mxu0 %v5436
    %7553 = vmatprep.mubr.bf16.mxu0 %v349
    %7554 = vmatmul.mubr.bf16.gmra.mxu0 %v348
    %v7555 = vpop.f32.mrf.mxu0
    %v7556 = vadd.f32 %v7515, %v7555
    %v7557 = vpop.f32.mrf.mxu0
    %v7558 = vadd.f32 %v7517, %v7557
    %v7559 = vpop.f32.mrf.mxu0
    %v7560 = vpop.f32.mrf.mxu0
    %7561 = vdwg.mxu0
    %7562 = vmatprep.subr.bf16.mxu0 %v4655
    %7563 = vmatpush1.bf16.msra.mxu0 %v4654
    %7564 = vmatprep.subr.bf16.mxu0 %v4639
    %7565 = vmatpush1.bf16.msra.mxu0 %v4638
    %7566 = vmatprep.subr.bf16.mxu0 %v4623
    %7567 = vmatpush1.bf16.msra.mxu0 %v4622
    %7568 = vmatprep.subr.bf16.mxu0 %v4607
    %7569 = vmatpush1.bf16.msra.mxu0 %v4606
    %7570 = vmatprep.subr.bf16.mxu0 %v4591
    %7571 = vmatpush1.bf16.msra.mxu0 %v4590
    %7572 = vmatprep.subr.bf16.mxu0 %v4575
    %7573 = vmatpush1.bf16.msra.mxu0 %v4574
    %7574 = vmatprep.subr.bf16.mxu0 %v4559
    %7575 = vmatpush1.bf16.msra.mxu0 %v4558
    %7576 = vmatprep.subr.bf16.mxu0 %v4543
    %7577 = vmatpush1.bf16.msra.mxu0 %v4542
    %7578 = vmatprep.subr.bf16.mxu0 %v4783
    %7579 = vmatpush2.bf16.msra.mxu0 %v4782
    %7580 = vmatprep.subr.bf16.mxu0 %v4767
    %7581 = vmatpush2.bf16.msra.mxu0 %v4766
    %7582 = vmatprep.subr.bf16.mxu0 %v4751
    %7583 = vmatpush2.bf16.msra.mxu0 %v4750
    %7584 = vmatprep.subr.bf16.mxu0 %v4735
    %7585 = vmatpush2.bf16.msra.mxu0 %v4734
    %7586 = vmatprep.subr.bf16.mxu0 %v4719
    %7587 = vmatpush2.bf16.msra.mxu0 %v4718
    %7588 = vmatprep.subr.bf16.mxu0 %v4703
    %7589 = vmatpush2.bf16.msra.mxu0 %v4702
    %7590 = vmatprep.subr.bf16.mxu0 %v4687
    %7591 = vmatpush2.bf16.msra.mxu0 %v4686
    %7592 = vmatprep.subr.bf16.mxu0 %v4671
    %7593 = vmatpush2.bf16.msra.mxu0 %v4670
    %7594 = vmatprep.mubr.bf16.mxu0 %v343
    %7595 = vmatmul.mubr.bf16.gmra.mxu0 %v342
    %v7596 = vpop.f32.mrf.mxu0
    %v7597 = vadd.f32 %v1429, %v7596
    %v7598 = vpop.f32.mrf.mxu0
    %v7599 = vadd.f32 %v1433, %v7598
    %v7600 = vpop.f32.mrf.mxu0
    %v7601 = vpop.f32.mrf.mxu0
    %7602 = vdwg.mxu0
    %7603 = vmatprep.subr.bf16.mxu0 %v4911
    %7604 = vmatpush1.bf16.msra.mxu0 %v4910
    %7605 = vmatprep.subr.bf16.mxu0 %v4895
    %7606 = vmatpush1.bf16.msra.mxu0 %v4894
    %7607 = vmatprep.subr.bf16.mxu0 %v4879
    %7608 = vmatpush1.bf16.msra.mxu0 %v4878
    %7609 = vmatprep.subr.bf16.mxu0 %v4863
    %7610 = vmatpush1.bf16.msra.mxu0 %v4862
    %7611 = vmatprep.subr.bf16.mxu0 %v4847
    %7612 = vmatpush1.bf16.msra.mxu0 %v4846
    %7613 = vmatprep.subr.bf16.mxu0 %v4831
    %7614 = vmatpush1.bf16.msra.mxu0 %v4830
    %7615 = vmatprep.subr.bf16.mxu0 %v4815
    %7616 = vmatpush1.bf16.msra.mxu0 %v4814
    %7617 = vmatprep.subr.bf16.mxu0 %v4799
    %7618 = vmatpush1.bf16.msra.mxu0 %v4798
    %7619 = vmatprep.subr.bf16.mxu0 %v5039
    %7620 = vmatpush2.bf16.msra.mxu0 %v5038
    %7621 = vmatprep.subr.bf16.mxu0 %v5023
    %7622 = vmatpush2.bf16.msra.mxu0 %v5022
    %7623 = vmatprep.subr.bf16.mxu0 %v5007
    %7624 = vmatpush2.bf16.msra.mxu0 %v5006
    %7625 = vmatprep.subr.bf16.mxu0 %v4991
    %7626 = vmatpush2.bf16.msra.mxu0 %v4990
    %7627 = vmatprep.subr.bf16.mxu0 %v4975
    %7628 = vmatpush2.bf16.msra.mxu0 %v4974
    %7629 = vmatprep.subr.bf16.mxu0 %v4959
    %7630 = vmatpush2.bf16.msra.mxu0 %v4958
    %7631 = vmatprep.subr.bf16.mxu0 %v4943
    %7632 = vmatpush2.bf16.msra.mxu0 %v4942
    %7633 = vmatprep.subr.bf16.mxu0 %v4927
    %7634 = vmatpush2.bf16.msra.mxu0 %v4926
    %7635 = vmatprep.mubr.bf16.mxu0 %v345
    %7636 = vmatmul.mubr.bf16.gmra.mxu0 %v344
    %v7637 = vpop.f32.mrf.mxu0
    %v7638 = vadd.f32 %v7597, %v7637
    %v7639 = vpop.f32.mrf.mxu0
    %v7640 = vadd.f32 %v7599, %v7639
    %v7641 = vpop.f32.mrf.mxu0
    %v7642 = vpop.f32.mrf.mxu0
    %7643 = vdwg.mxu0
    %7644 = vmatprep.subr.bf16.mxu0 %v5167
    %7645 = vmatpush1.bf16.msra.mxu0 %v5166
    %7646 = vmatprep.subr.bf16.mxu0 %v5151
    %7647 = vmatpush1.bf16.msra.mxu0 %v5150
    %7648 = vmatprep.subr.bf16.mxu0 %v5135
    %7649 = vmatpush1.bf16.msra.mxu0 %v5134
    %7650 = vmatprep.subr.bf16.mxu0 %v5119
    %7651 = vmatpush1.bf16.msra.mxu0 %v5118
    %7652 = vmatprep.subr.bf16.mxu0 %v5103
    %7653 = vmatpush1.bf16.msra.mxu0 %v5102
    %7654 = vmatprep.subr.bf16.mxu0 %v5087
    %7655 = vmatpush1.bf16.msra.mxu0 %v5086
    %7656 = vmatprep.subr.bf16.mxu0 %v5071
    %7657 = vmatpush1.bf16.msra.mxu0 %v5070
    %7658 = vmatprep.subr.bf16.mxu0 %v5055
    %7659 = vmatpush1.bf16.msra.mxu0 %v5054
    %7660 = vmatprep.subr.bf16.mxu0 %v5295
    %7661 = vmatpush2.bf16.msra.mxu0 %v5294
    %7662 = vmatprep.subr.bf16.mxu0 %v5279
    %7663 = vmatpush2.bf16.msra.mxu0 %v5278
    %7664 = vmatprep.subr.bf16.mxu0 %v5263
    %7665 = vmatpush2.bf16.msra.mxu0 %v5262
    %7666 = vmatprep.subr.bf16.mxu0 %v5247
    %7667 = vmatpush2.bf16.msra.mxu0 %v5246
    %7668 = vmatprep.subr.bf16.mxu0 %v5231
    %7669 = vmatpush2.bf16.msra.mxu0 %v5230
    %7670 = vmatprep.subr.bf16.mxu0 %v5215
    %7671 = vmatpush2.bf16.msra.mxu0 %v5214
    %7672 = vmatprep.subr.bf16.mxu0 %v5199
    %7673 = vmatpush2.bf16.msra.mxu0 %v5198
    %7674 = vmatprep.subr.bf16.mxu0 %v5183
    %7675 = vmatpush2.bf16.msra.mxu0 %v5182
    %7676 = vmatprep.mubr.bf16.mxu0 %v347
    %7677 = vmatmul.mubr.bf16.gmra.mxu0 %v346
    %v7678 = vpop.f32.mrf.mxu0
    %v7679 = vadd.f32 %v7638, %v7678
    %v7680 = vpop.f32.mrf.mxu0
    %v7681 = vadd.f32 %v7640, %v7680
    %v7682 = vpop.f32.mrf.mxu0
    %v7683 = vpop.f32.mrf.mxu0
    %7684 = vdwg.mxu0
    %7685 = vmatprep.subr.bf16.mxu0 %v5423
    %7686 = vmatpush1.bf16.msra.mxu0 %v5422
    %7687 = vmatprep.subr.bf16.mxu0 %v5407
    %7688 = vmatpush1.bf16.msra.mxu0 %v5406
    %7689 = vmatprep.subr.bf16.mxu0 %v5391
    %7690 = vmatpush1.bf16.msra.mxu0 %v5390
    %7691 = vmatprep.subr.bf16.mxu0 %v5375
    %7692 = vmatpush1.bf16.msra.mxu0 %v5374
    %7693 = vmatprep.subr.bf16.mxu0 %v5359
    %7694 = vmatpush1.bf16.msra.mxu0 %v5358
    %7695 = vmatprep.subr.bf16.mxu0 %v5343
    %7696 = vmatpush1.bf16.msra.mxu0 %v5342
    %7697 = vmatprep.subr.bf16.mxu0 %v5327
    %7698 = vmatpush1.bf16.msra.mxu0 %v5326
    %7699 = vmatprep.subr.bf16.mxu0 %v5311
    %7700 = vmatpush1.bf16.msra.mxu0 %v5310
    %7701 = vmatprep.subr.bf16.mxu0 %v5551
    %7702 = vmatpush2.bf16.msra.mxu0 %v5550
    %7703 = vmatprep.subr.bf16.mxu0 %v5535
    %7704 = vmatpush2.bf16.msra.mxu0 %v5534
    %7705 = vmatprep.subr.bf16.mxu0 %v5519
    %7706 = vmatpush2.bf16.msra.mxu0 %v5518
    %7707 = vmatprep.subr.bf16.mxu0 %v5503
    %7708 = vmatpush2.bf16.msra.mxu0 %v5502
    %7709 = vmatprep.subr.bf16.mxu0 %v5487
    %7710 = vmatpush2.bf16.msra.mxu0 %v5486
    %7711 = vmatprep.subr.bf16.mxu0 %v5471
    %7712 = vmatpush2.bf16.msra.mxu0 %v5470
    %7713 = vmatprep.subr.bf16.mxu0 %v5455
    %7714 = vmatpush2.bf16.msra.mxu0 %v5454
    %7715 = vmatprep.subr.bf16.mxu0 %v5439
    %7716 = vmatpush2.bf16.msra.mxu0 %v5438
    %7717 = vmatprep.mubr.bf16.mxu0 %v349
    %7718 = vmatmul.mubr.bf16.gmra.mxu0 %v348
    %v7719 = vpop.f32.mrf.mxu0
    %v7720 = vadd.f32 %v7679, %v7719
    %v7721 = vpop.f32.mrf.mxu0
    %v7722 = vadd.f32 %v7681, %v7721
    %v7723 = vpop.f32.mrf.mxu0
    %v7724 = vpop.f32.mrf.mxu0
    %7725 = vdwg.mxu0
    %7726 = vmatprep.subr.bf16.mxu0 %v4657
    %7727 = vmatpush1.bf16.msra.mxu0 %v4656
    %7728 = vmatprep.subr.bf16.mxu0 %v4641
    %7729 = vmatpush1.bf16.msra.mxu0 %v4640
    %7730 = vmatprep.subr.bf16.mxu0 %v4625
    %7731 = vmatpush1.bf16.msra.mxu0 %v4624
    %7732 = vmatprep.subr.bf16.mxu0 %v4609
    %7733 = vmatpush1.bf16.msra.mxu0 %v4608
    %7734 = vmatprep.subr.bf16.mxu0 %v4593
    %7735 = vmatpush1.bf16.msra.mxu0 %v4592
    %7736 = vmatprep.subr.bf16.mxu0 %v4577
    %7737 = vmatpush1.bf16.msra.mxu0 %v4576
    %7738 = vmatprep.subr.bf16.mxu0 %v4561
    %7739 = vmatpush1.bf16.msra.mxu0 %v4560
    %7740 = vmatprep.subr.bf16.mxu0 %v4545
    %7741 = vmatpush1.bf16.msra.mxu0 %v4544
    %7742 = vmatprep.subr.bf16.mxu0 %v4785
    %7743 = vmatpush2.bf16.msra.mxu0 %v4784
    %7744 = vmatprep.subr.bf16.mxu0 %v4769
    %7745 = vmatpush2.bf16.msra.mxu0 %v4768
    %7746 = vmatprep.subr.bf16.mxu0 %v4753
    %7747 = vmatpush2.bf16.msra.mxu0 %v4752
    %7748 = vmatprep.subr.bf16.mxu0 %v4737
    %7749 = vmatpush2.bf16.msra.mxu0 %v4736
    %7750 = vmatprep.subr.bf16.mxu0 %v4721
    %7751 = vmatpush2.bf16.msra.mxu0 %v4720
    %7752 = vmatprep.subr.bf16.mxu0 %v4705
    %7753 = vmatpush2.bf16.msra.mxu0 %v4704
    %7754 = vmatprep.subr.bf16.mxu0 %v4689
    %7755 = vmatpush2.bf16.msra.mxu0 %v4688
    %7756 = vmatprep.subr.bf16.mxu0 %v4673
    %7757 = vmatpush2.bf16.msra.mxu0 %v4672
    %7758 = vmatprep.mubr.bf16.mxu0 %v343
    %7759 = vmatmul.mubr.bf16.gmra.mxu0 %v342
    %v7760 = vpop.f32.mrf.mxu0
    %v7761 = vadd.f32 %v1437, %v7760
    %v7762 = vpop.f32.mrf.mxu0
    %v7763 = vadd.f32 %v1441, %v7762
    %v7764 = vpop.f32.mrf.mxu0
    %v7765 = vpop.f32.mrf.mxu0
    %7766 = vdwg.mxu0
    %7767 = vmatprep.subr.bf16.mxu0 %v4913
    %7768 = vmatpush1.bf16.msra.mxu0 %v4912
    %7769 = vmatprep.subr.bf16.mxu0 %v4897
    %7770 = vmatpush1.bf16.msra.mxu0 %v4896
    %7771 = vmatprep.subr.bf16.mxu0 %v4881
    %7772 = vmatpush1.bf16.msra.mxu0 %v4880
    %7773 = vmatprep.subr.bf16.mxu0 %v4865
    %7774 = vmatpush1.bf16.msra.mxu0 %v4864
    %7775 = vmatprep.subr.bf16.mxu0 %v4849
    %7776 = vmatpush1.bf16.msra.mxu0 %v4848
    %7777 = vmatprep.subr.bf16.mxu0 %v4833
    %7778 = vmatpush1.bf16.msra.mxu0 %v4832
    %7779 = vmatprep.subr.bf16.mxu0 %v4817
    %7780 = vmatpush1.bf16.msra.mxu0 %v4816
    %7781 = vmatprep.subr.bf16.mxu0 %v4801
    %7782 = vmatpush1.bf16.msra.mxu0 %v4800
    %7783 = vmatprep.subr.bf16.mxu0 %v5041
    %7784 = vmatpush2.bf16.msra.mxu0 %v5040
    %7785 = vmatprep.subr.bf16.mxu0 %v5025
    %7786 = vmatpush2.bf16.msra.mxu0 %v5024
    %7787 = vmatprep.subr.bf16.mxu0 %v5009
    %7788 = vmatpush2.bf16.msra.mxu0 %v5008
    %7789 = vmatprep.subr.bf16.mxu0 %v4993
    %7790 = vmatpush2.bf16.msra.mxu0 %v4992
    %7791 = vmatprep.subr.bf16.mxu0 %v4977
    %7792 = vmatpush2.bf16.msra.mxu0 %v4976
    %7793 = vmatprep.subr.bf16.mxu0 %v4961
    %7794 = vmatpush2.bf16.msra.mxu0 %v4960
    %7795 = vmatprep.subr.bf16.mxu0 %v4945
    %7796 = vmatpush2.bf16.msra.mxu0 %v4944
    %7797 = vmatprep.subr.bf16.mxu0 %v4929
    %7798 = vmatpush2.bf16.msra.mxu0 %v4928
    %7799 = vmatprep.mubr.bf16.mxu0 %v345
    %7800 = vmatmul.mubr.bf16.gmra.mxu0 %v344
    %v7801 = vpop.f32.mrf.mxu0
    %v7802 = vadd.f32 %v7761, %v7801
    %v7803 = vpop.f32.mrf.mxu0
    %v7804 = vadd.f32 %v7763, %v7803
    %v7805 = vpop.f32.mrf.mxu0
    %v7806 = vpop.f32.mrf.mxu0
    %7807 = vdwg.mxu0
    %7808 = vmatprep.subr.bf16.mxu0 %v5169
    %7809 = vmatpush1.bf16.msra.mxu0 %v5168
    %7810 = vmatprep.subr.bf16.mxu0 %v5153
    %7811 = vmatpush1.bf16.msra.mxu0 %v5152
    %7812 = vmatprep.subr.bf16.mxu0 %v5137
    %7813 = vmatpush1.bf16.msra.mxu0 %v5136
    %7814 = vmatprep.subr.bf16.mxu0 %v5121
    %7815 = vmatpush1.bf16.msra.mxu0 %v5120
    %7816 = vmatprep.subr.bf16.mxu0 %v5105
    %7817 = vmatpush1.bf16.msra.mxu0 %v5104
    %7818 = vmatprep.subr.bf16.mxu0 %v5089
    %7819 = vmatpush1.bf16.msra.mxu0 %v5088
    %7820 = vmatprep.subr.bf16.mxu0 %v5073
    %7821 = vmatpush1.bf16.msra.mxu0 %v5072
    %7822 = vmatprep.subr.bf16.mxu0 %v5057
    %7823 = vmatpush1.bf16.msra.mxu0 %v5056
    %7824 = vmatprep.subr.bf16.mxu0 %v5297
    %7825 = vmatpush2.bf16.msra.mxu0 %v5296
    %7826 = vmatprep.subr.bf16.mxu0 %v5281
    %7827 = vmatpush2.bf16.msra.mxu0 %v5280
    %7828 = vmatprep.subr.bf16.mxu0 %v5265
    %7829 = vmatpush2.bf16.msra.mxu0 %v5264
    %7830 = vmatprep.subr.bf16.mxu0 %v5249
    %7831 = vmatpush2.bf16.msra.mxu0 %v5248
    %7832 = vmatprep.subr.bf16.mxu0 %v5233
    %7833 = vmatpush2.bf16.msra.mxu0 %v5232
    %7834 = vmatprep.subr.bf16.mxu0 %v5217
    %7835 = vmatpush2.bf16.msra.mxu0 %v5216
    %7836 = vmatprep.subr.bf16.mxu0 %v5201
    %7837 = vmatpush2.bf16.msra.mxu0 %v5200
    %7838 = vmatprep.subr.bf16.mxu0 %v5185
    %7839 = vmatpush2.bf16.msra.mxu0 %v5184
    %7840 = vmatprep.mubr.bf16.mxu0 %v347
    %7841 = vmatmul.mubr.bf16.gmra.mxu0 %v346
    %v7842 = vpop.f32.mrf.mxu0
    %v7843 = vadd.f32 %v7802, %v7842
    %v7844 = vpop.f32.mrf.mxu0
    %v7845 = vadd.f32 %v7804, %v7844
    %v7846 = vpop.f32.mrf.mxu0
    %v7847 = vpop.f32.mrf.mxu0
    %7848 = vdwg.mxu0
    %7849 = vmatprep.subr.bf16.mxu0 %v5425
    %7850 = vmatpush1.bf16.msra.mxu0 %v5424
    %7851 = vmatprep.subr.bf16.mxu0 %v5409
    %7852 = vmatpush1.bf16.msra.mxu0 %v5408
    %7853 = vmatprep.subr.bf16.mxu0 %v5393
    %7854 = vmatpush1.bf16.msra.mxu0 %v5392
    %7855 = vmatprep.subr.bf16.mxu0 %v5377
    %7856 = vmatpush1.bf16.msra.mxu0 %v5376
    %7857 = vmatprep.subr.bf16.mxu0 %v5361
    %7858 = vmatpush1.bf16.msra.mxu0 %v5360
    %7859 = vmatprep.subr.bf16.mxu0 %v5345
    %7860 = vmatpush1.bf16.msra.mxu0 %v5344
    %7861 = vmatprep.subr.bf16.mxu0 %v5329
    %7862 = vmatpush1.bf16.msra.mxu0 %v5328
    %7863 = vmatprep.subr.bf16.mxu0 %v5313
    %7864 = vmatpush1.bf16.msra.mxu0 %v5312
    %7865 = vmatprep.subr.bf16.mxu0 %v5553
    %7866 = vmatpush2.bf16.msra.mxu0 %v5552
    %7867 = vmatprep.subr.bf16.mxu0 %v5537
    %7868 = vmatpush2.bf16.msra.mxu0 %v5536
    %7869 = vmatprep.subr.bf16.mxu0 %v5521
    %7870 = vmatpush2.bf16.msra.mxu0 %v5520
    %7871 = vmatprep.subr.bf16.mxu0 %v5505
    %7872 = vmatpush2.bf16.msra.mxu0 %v5504
    %7873 = vmatprep.subr.bf16.mxu0 %v5489
    %7874 = vmatpush2.bf16.msra.mxu0 %v5488
    %7875 = vmatprep.subr.bf16.mxu0 %v5473
    %7876 = vmatpush2.bf16.msra.mxu0 %v5472
    %7877 = vmatprep.subr.bf16.mxu0 %v5457
    %7878 = vmatpush2.bf16.msra.mxu0 %v5456
    %7879 = vmatprep.subr.bf16.mxu0 %v5441
    %7880 = vmatpush2.bf16.msra.mxu0 %v5440
    %7881 = vmatprep.mubr.bf16.mxu0 %v349
    %7882 = vmatmul.mubr.bf16.gmra.mxu0 %v348
    %v7883 = vpop.f32.mrf.mxu0
    %v7884 = vadd.f32 %v7843, %v7883
    %v7885 = vpop.f32.mrf.mxu0
    %v7886 = vadd.f32 %v7845, %v7885
    %v7887 = vpop.f32.mrf.mxu0
    %v7888 = vpop.f32.mrf.mxu0
    %7889 = vdwg.mxu0
    %v7890 = vmax.f32 %v6736, 0.0
    %v7891 = vmax.f32 %v6738, 0.0
    %v7892 = vmax.f32 %v6900, 0.0
    %v7893 = vmax.f32 %v6902, 0.0
    %v7894 = vmax.f32 %v7064, 0.0
    %v7895 = vmax.f32 %v7066, 0.0
    %v7896 = vmax.f32 %v7228, 0.0
    %v7897 = vmax.f32 %v7230, 0.0
    %v7898 = vmax.f32 %v7392, 0.0
    %v7899 = vmax.f32 %v7394, 0.0
    %v7900 = vmax.f32 %v7556, 0.0
    %v7901 = vmax.f32 %v7558, 0.0
    %v7902 = vmax.f32 %v7720, 0.0
    %v7903 = vmax.f32 %v7722, 0.0
    %v7904 = vmax.f32 %v7884, 0.0
    %v7905 = vmax.f32 %v7886, 0.0
    %v7906 = vpack.c.bf16 %v7890, %v7890
    %v7907 = vpack.c.bf16 %v7891, %v7891
    %v7908 = vpack.c.bf16 %v7892, %v7892
    %v7909 = vpack.c.bf16 %v7893, %v7893
    %v7910 = vpack.c.bf16 %v7894, %v7894
    %v7911 = vpack.c.bf16 %v7895, %v7895
    %v7912 = vpack.c.bf16 %v7896, %v7896
    %v7913 = vpack.c.bf16 %v7897, %v7897
    %v7914 = vpack.c.bf16 %v7898, %v7898
    %v7915 = vpack.c.bf16 %v7899, %v7899
    %v7916 = vpack.c.bf16 %v7900, %v7900
    %v7917 = vpack.c.bf16 %v7901, %v7901
    %v7918 = vpack.c.bf16 %v7902, %v7902
    %v7919 = vpack.c.bf16 %v7903, %v7903
    %v7920 = vpack.c.bf16 %v7904, %v7904
    %v7921 = vpack.c.bf16 %v7905, %v7905
    %v7922 = vld [vmem:[#allocation10] sm:$0xf]
    %v7923 = vld [vmem:[#allocation10 + $0x4] sm:$0xf]
    %v7924 = vld [vmem:[#allocation10 + $0x8] sm:$0xf]
    %v7925 = vld [vmem:[#allocation10 + $0xc] sm:$0xf]
    %v7926 = vld [vmem:[#allocation10 + $0x10] sm:$0xf]
    %v7927 = vld [vmem:[#allocation10 + $0x14] sm:$0xf]
    %v7928 = vld [vmem:[#allocation10 + $0x18] sm:$0xf]
    %v7929 = vld [vmem:[#allocation10 + $0x1c] sm:$0xf]
    %v7930 = vld [vmem:[#allocation10 + $0x20] sm:$0xf]
    %v7931 = vld [vmem:[#allocation10 + $0x24] sm:$0xf]
    %v7932 = vld [vmem:[#allocation10 + $0x28] sm:$0xf]
    %v7933 = vld [vmem:[#allocation10 + $0x2c] sm:$0xf]
    %v7934 = vld [vmem:[#allocation10 + $0x30] sm:$0xf]
    %v7935 = vld [vmem:[#allocation10 + $0x34] sm:$0xf]
    %v7936 = vld [vmem:[#allocation10 + $0x38] sm:$0xf]
    %v7937 = vld [vmem:[#allocation10 + $0x3c] sm:$0xf]
    %v7938 = vld [vmem:[#allocation10 + $0x40] sm:$0xf]
    %v7939 = vld [vmem:[#allocation10 + $0x44] sm:$0xf]
    %v7940 = vld [vmem:[#allocation10 + $0x48] sm:$0xf]
    %v7941 = vld [vmem:[#allocation10 + $0x4c] sm:$0xf]
    %v7942 = vld [vmem:[#allocation10 + $0x50] sm:$0xf]
    %v7943 = vld [vmem:[#allocation10 + $0x54] sm:$0xf]
    %v7944 = vld [vmem:[#allocation10 + $0x58] sm:$0xf]
    %v7945 = vld [vmem:[#allocation10 + $0x5c] sm:$0xf]
    %v7946 = vld [vmem:[#allocation10 + $0x60] sm:$0xf]
    %v7947 = vld [vmem:[#allocation10 + $0x64] sm:$0xf]
    %v7948 = vld [vmem:[#allocation10 + $0x68] sm:$0xf]
    %v7949 = vld [vmem:[#allocation10 + $0x6c] sm:$0xf]
    %v7950 = vld [vmem:[#allocation10 + $0x70] sm:$0xf]
    %v7951 = vld [vmem:[#allocation10 + $0x74] sm:$0xf]
    %v7952 = vld [vmem:[#allocation10 + $0x78] sm:$0xf]
    %v7953 = vld [vmem:[#allocation10 + $0x7c] sm:$0xf]
    %v7954 = vld [vmem:[#allocation10 + $0x80] sm:$0xf]
    %v7955 = vld [vmem:[#allocation10 + $0x84] sm:$0xf]
    %v7956 = vld [vmem:[#allocation10 + $0x88] sm:$0xf]
    %v7957 = vld [vmem:[#allocation10 + $0x8c] sm:$0xf]
    %v7958 = vld [vmem:[#allocation10 + $0x90] sm:$0xf]
    %v7959 = vld [vmem:[#allocation10 + $0x94] sm:$0xf]
    %v7960 = vld [vmem:[#allocation10 + $0x98] sm:$0xf]
    %v7961 = vld [vmem:[#allocation10 + $0x9c] sm:$0xf]
    %v7962 = vld [vmem:[#allocation10 + $0xa0] sm:$0xf]
    %v7963 = vld [vmem:[#allocation10 + $0xa4] sm:$0xf]
    %v7964 = vld [vmem:[#allocation10 + $0xa8] sm:$0xf]
    %v7965 = vld [vmem:[#allocation10 + $0xac] sm:$0xf]
    %v7966 = vld [vmem:[#allocation10 + $0xb0] sm:$0xf]
    %v7967 = vld [vmem:[#allocation10 + $0xb4] sm:$0xf]
    %v7968 = vld [vmem:[#allocation10 + $0xb8] sm:$0xf]
    %v7969 = vld [vmem:[#allocation10 + $0xbc] sm:$0xf]
    %v7970 = vld [vmem:[#allocation10 + $0xc0] sm:$0xf]
    %v7971 = vld [vmem:[#allocation10 + $0xc4] sm:$0xf]
    %v7972 = vld [vmem:[#allocation10 + $0xc8] sm:$0xf]
    %v7973 = vld [vmem:[#allocation10 + $0xcc] sm:$0xf]
    %v7974 = vld [vmem:[#allocation10 + $0xd0] sm:$0xf]
    %v7975 = vld [vmem:[#allocation10 + $0xd4] sm:$0xf]
    %v7976 = vld [vmem:[#allocation10 + $0xd8] sm:$0xf]
    %v7977 = vld [vmem:[#allocation10 + $0xdc] sm:$0xf]
    %v7978 = vld [vmem:[#allocation10 + $0xe0] sm:$0xf]
    %v7979 = vld [vmem:[#allocation10 + $0xe4] sm:$0xf]
    %v7980 = vld [vmem:[#allocation10 + $0xe8] sm:$0xf]
    %v7981 = vld [vmem:[#allocation10 + $0xec] sm:$0xf]
    %v7982 = vld [vmem:[#allocation10 + $0xf0] sm:$0xf]
    %v7983 = vld [vmem:[#allocation10 + $0xf4] sm:$0xf]
    %v7984 = vld [vmem:[#allocation10 + $0xf8] sm:$0xf]
    %v7985 = vld [vmem:[#allocation10 + $0xfc] sm:$0xf]
    %v7986 = vld [vmem:[#allocation10 + $0x100] sm:$0xf]
    %v7987 = vld [vmem:[#allocation10 + $0x104] sm:$0xf]
    %v7988 = vld [vmem:[#allocation10 + $0x108] sm:$0xf]
    %v7989 = vld [vmem:[#allocation10 + $0x10c] sm:$0xf]
    %v7990 = vld [vmem:[#allocation10 + $0x110] sm:$0xf]
    %v7991 = vld [vmem:[#allocation10 + $0x114] sm:$0xf]
    %v7992 = vld [vmem:[#allocation10 + $0x118] sm:$0xf]
    %v7993 = vld [vmem:[#allocation10 + $0x11c] sm:$0xf]
    %v7994 = vld [vmem:[#allocation10 + $0x120] sm:$0xf]
    %v7995 = vld [vmem:[#allocation10 + $0x124] sm:$0xf]
    %v7996 = vld [vmem:[#allocation10 + $0x128] sm:$0xf]
    %v7997 = vld [vmem:[#allocation10 + $0x12c] sm:$0xf]
    %v7998 = vld [vmem:[#allocation10 + $0x130] sm:$0xf]
    %v7999 = vld [vmem:[#allocation10 + $0x134] sm:$0xf]
    %v8000 = vld [vmem:[#allocation10 + $0x138] sm:$0xf]
    %v8001 = vld [vmem:[#allocation10 + $0x13c] sm:$0xf]
    %v8002 = vld [vmem:[#allocation10 + $0x140] sm:$0xf]
    %v8003 = vld [vmem:[#allocation10 + $0x144] sm:$0xf]
    %v8004 = vld [vmem:[#allocation10 + $0x148] sm:$0xf]
    %v8005 = vld [vmem:[#allocation10 + $0x14c] sm:$0xf]
    %v8006 = vld [vmem:[#allocation10 + $0x150] sm:$0xf]
    %v8007 = vld [vmem:[#allocation10 + $0x154] sm:$0xf]
    %v8008 = vld [vmem:[#allocation10 + $0x158] sm:$0xf]
    %v8009 = vld [vmem:[#allocation10 + $0x15c] sm:$0xf]
    %v8010 = vld [vmem:[#allocation10 + $0x160] sm:$0xf]
    %v8011 = vld [vmem:[#allocation10 + $0x164] sm:$0xf]
    %v8012 = vld [vmem:[#allocation10 + $0x168] sm:$0xf]
    %v8013 = vld [vmem:[#allocation10 + $0x16c] sm:$0xf]
    %v8014 = vld [vmem:[#allocation10 + $0x170] sm:$0xf]
    %v8015 = vld [vmem:[#allocation10 + $0x174] sm:$0xf]
    %v8016 = vld [vmem:[#allocation10 + $0x178] sm:$0xf]
    %v8017 = vld [vmem:[#allocation10 + $0x17c] sm:$0xf]
    %v8018 = vld [vmem:[#allocation10 + $0x180] sm:$0xf]
    %v8019 = vld [vmem:[#allocation10 + $0x184] sm:$0xf]
    %v8020 = vld [vmem:[#allocation10 + $0x188] sm:$0xf]
    %v8021 = vld [vmem:[#allocation10 + $0x18c] sm:$0xf]
    %v8022 = vld [vmem:[#allocation10 + $0x190] sm:$0xf]
    %v8023 = vld [vmem:[#allocation10 + $0x194] sm:$0xf]
    %v8024 = vld [vmem:[#allocation10 + $0x198] sm:$0xf]
    %v8025 = vld [vmem:[#allocation10 + $0x19c] sm:$0xf]
    %v8026 = vld [vmem:[#allocation10 + $0x1a0] sm:$0xf]
    %v8027 = vld [vmem:[#allocation10 + $0x1a4] sm:$0xf]
    %v8028 = vld [vmem:[#allocation10 + $0x1a8] sm:$0xf]
    %v8029 = vld [vmem:[#allocation10 + $0x1ac] sm:$0xf]
    %v8030 = vld [vmem:[#allocation10 + $0x1b0] sm:$0xf]
    %v8031 = vld [vmem:[#allocation10 + $0x1b4] sm:$0xf]
    %v8032 = vld [vmem:[#allocation10 + $0x1b8] sm:$0xf]
    %v8033 = vld [vmem:[#allocation10 + $0x1bc] sm:$0xf]
    %v8034 = vld [vmem:[#allocation10 + $0x1c0] sm:$0xf]
    %v8035 = vld [vmem:[#allocation10 + $0x1c4] sm:$0xf]
    %v8036 = vld [vmem:[#allocation10 + $0x1c8] sm:$0xf]
    %v8037 = vld [vmem:[#allocation10 + $0x1cc] sm:$0xf]
    %v8038 = vld [vmem:[#allocation10 + $0x1d0] sm:$0xf]
    %v8039 = vld [vmem:[#allocation10 + $0x1d4] sm:$0xf]
    %v8040 = vld [vmem:[#allocation10 + $0x1d8] sm:$0xf]
    %v8041 = vld [vmem:[#allocation10 + $0x1dc] sm:$0xf]
    %v8042 = vld [vmem:[#allocation10 + $0x1e0] sm:$0xf]
    %v8043 = vld [vmem:[#allocation10 + $0x1e4] sm:$0xf]
    %v8044 = vld [vmem:[#allocation10 + $0x1e8] sm:$0xf]
    %v8045 = vld [vmem:[#allocation10 + $0x1ec] sm:$0xf]
    %v8046 = vld [vmem:[#allocation10 + $0x1f0] sm:$0xf]
    %v8047 = vld [vmem:[#allocation10 + $0x1f4] sm:$0xf]
    %v8048 = vld [vmem:[#allocation10 + $0x1f8] sm:$0xf]
    %v8049 = vld [vmem:[#allocation10 + $0x1fc] sm:$0xf]
    %v8050 = vld [vmem:[#allocation10 + $0x200] sm:$0xf]
    %v8051 = vld [vmem:[#allocation10 + $0x204] sm:$0xf]
    %v8052 = vld [vmem:[#allocation10 + $0x208] sm:$0xf]
    %v8053 = vld [vmem:[#allocation10 + $0x20c] sm:$0xf]
    %v8054 = vld [vmem:[#allocation10 + $0x210] sm:$0xf]
    %v8055 = vld [vmem:[#allocation10 + $0x214] sm:$0xf]
    %v8056 = vld [vmem:[#allocation10 + $0x218] sm:$0xf]
    %v8057 = vld [vmem:[#allocation10 + $0x21c] sm:$0xf]
    %v8058 = vld [vmem:[#allocation10 + $0x220] sm:$0xf]
    %v8059 = vld [vmem:[#allocation10 + $0x224] sm:$0xf]
    %v8060 = vld [vmem:[#allocation10 + $0x228] sm:$0xf]
    %v8061 = vld [vmem:[#allocation10 + $0x22c] sm:$0xf]
    %v8062 = vld [vmem:[#allocation10 + $0x230] sm:$0xf]
    %v8063 = vld [vmem:[#allocation10 + $0x234] sm:$0xf]
    %v8064 = vld [vmem:[#allocation10 + $0x238] sm:$0xf]
    %v8065 = vld [vmem:[#allocation10 + $0x23c] sm:$0xf]
    %v8066 = vld [vmem:[#allocation10 + $0x240] sm:$0xf]
    %v8067 = vld [vmem:[#allocation10 + $0x244] sm:$0xf]
    %v8068 = vld [vmem:[#allocation10 + $0x248] sm:$0xf]
    %v8069 = vld [vmem:[#allocation10 + $0x24c] sm:$0xf]
    %v8070 = vld [vmem:[#allocation10 + $0x250] sm:$0xf]
    %v8071 = vld [vmem:[#allocation10 + $0x254] sm:$0xf]
    %v8072 = vld [vmem:[#allocation10 + $0x258] sm:$0xf]
    %v8073 = vld [vmem:[#allocation10 + $0x25c] sm:$0xf]
    %v8074 = vld [vmem:[#allocation10 + $0x260] sm:$0xf]
    %v8075 = vld [vmem:[#allocation10 + $0x264] sm:$0xf]
    %v8076 = vld [vmem:[#allocation10 + $0x268] sm:$0xf]
    %v8077 = vld [vmem:[#allocation10 + $0x26c] sm:$0xf]
    %v8078 = vld [vmem:[#allocation10 + $0x270] sm:$0xf]
    %v8079 = vld [vmem:[#allocation10 + $0x274] sm:$0xf]
    %v8080 = vld [vmem:[#allocation10 + $0x278] sm:$0xf]
    %v8081 = vld [vmem:[#allocation10 + $0x27c] sm:$0xf]
    %v8082 = vld [vmem:[#allocation10 + $0x280] sm:$0xf]
    %v8083 = vld [vmem:[#allocation10 + $0x284] sm:$0xf]
    %v8084 = vld [vmem:[#allocation10 + $0x288] sm:$0xf]
    %v8085 = vld [vmem:[#allocation10 + $0x28c] sm:$0xf]
    %v8086 = vld [vmem:[#allocation10 + $0x290] sm:$0xf]
    %v8087 = vld [vmem:[#allocation10 + $0x294] sm:$0xf]
    %v8088 = vld [vmem:[#allocation10 + $0x298] sm:$0xf]
    %v8089 = vld [vmem:[#allocation10 + $0x29c] sm:$0xf]
    %v8090 = vld [vmem:[#allocation10 + $0x2a0] sm:$0xf]
    %v8091 = vld [vmem:[#allocation10 + $0x2a4] sm:$0xf]
    %v8092 = vld [vmem:[#allocation10 + $0x2a8] sm:$0xf]
    %v8093 = vld [vmem:[#allocation10 + $0x2ac] sm:$0xf]
    %v8094 = vld [vmem:[#allocation10 + $0x2b0] sm:$0xf]
    %v8095 = vld [vmem:[#allocation10 + $0x2b4] sm:$0xf]
    %v8096 = vld [vmem:[#allocation10 + $0x2b8] sm:$0xf]
    %v8097 = vld [vmem:[#allocation10 + $0x2bc] sm:$0xf]
    %v8098 = vld [vmem:[#allocation10 + $0x2c0] sm:$0xf]
    %v8099 = vld [vmem:[#allocation10 + $0x2c4] sm:$0xf]
    %v8100 = vld [vmem:[#allocation10 + $0x2c8] sm:$0xf]
    %v8101 = vld [vmem:[#allocation10 + $0x2cc] sm:$0xf]
    %v8102 = vld [vmem:[#allocation10 + $0x2d0] sm:$0xf]
    %v8103 = vld [vmem:[#allocation10 + $0x2d4] sm:$0xf]
    %v8104 = vld [vmem:[#allocation10 + $0x2d8] sm:$0xf]
    %v8105 = vld [vmem:[#allocation10 + $0x2dc] sm:$0xf]
    %v8106 = vld [vmem:[#allocation10 + $0x2e0] sm:$0xf]
    %v8107 = vld [vmem:[#allocation10 + $0x2e4] sm:$0xf]
    %v8108 = vld [vmem:[#allocation10 + $0x2e8] sm:$0xf]
    %v8109 = vld [vmem:[#allocation10 + $0x2ec] sm:$0xf]
    %v8110 = vld [vmem:[#allocation10 + $0x2f0] sm:$0xf]
    %v8111 = vld [vmem:[#allocation10 + $0x2f4] sm:$0xf]
    %v8112 = vld [vmem:[#allocation10 + $0x2f8] sm:$0xf]
    %v8113 = vld [vmem:[#allocation10 + $0x2fc] sm:$0xf]
    %v8114 = vld [vmem:[#allocation10 + $0x300] sm:$0xf]
    %v8115 = vld [vmem:[#allocation10 + $0x304] sm:$0xf]
    %v8116 = vld [vmem:[#allocation10 + $0x308] sm:$0xf]
    %v8117 = vld [vmem:[#allocation10 + $0x30c] sm:$0xf]
    %v8118 = vld [vmem:[#allocation10 + $0x310] sm:$0xf]
    %v8119 = vld [vmem:[#allocation10 + $0x314] sm:$0xf]
    %v8120 = vld [vmem:[#allocation10 + $0x318] sm:$0xf]
    %v8121 = vld [vmem:[#allocation10 + $0x31c] sm:$0xf]
    %v8122 = vld [vmem:[#allocation10 + $0x320] sm:$0xf]
    %v8123 = vld [vmem:[#allocation10 + $0x324] sm:$0xf]
    %v8124 = vld [vmem:[#allocation10 + $0x328] sm:$0xf]
    %v8125 = vld [vmem:[#allocation10 + $0x32c] sm:$0xf]
    %v8126 = vld [vmem:[#allocation10 + $0x330] sm:$0xf]
    %v8127 = vld [vmem:[#allocation10 + $0x334] sm:$0xf]
    %v8128 = vld [vmem:[#allocation10 + $0x338] sm:$0xf]
    %v8129 = vld [vmem:[#allocation10 + $0x33c] sm:$0xf]
    %v8130 = vld [vmem:[#allocation10 + $0x340] sm:$0xf]
    %v8131 = vld [vmem:[#allocation10 + $0x344] sm:$0xf]
    %v8132 = vld [vmem:[#allocation10 + $0x348] sm:$0xf]
    %v8133 = vld [vmem:[#allocation10 + $0x34c] sm:$0xf]
    %v8134 = vld [vmem:[#allocation10 + $0x350] sm:$0xf]
    %v8135 = vld [vmem:[#allocation10 + $0x354] sm:$0xf]
    %v8136 = vld [vmem:[#allocation10 + $0x358] sm:$0xf]
    %v8137 = vld [vmem:[#allocation10 + $0x35c] sm:$0xf]
    %v8138 = vld [vmem:[#allocation10 + $0x360] sm:$0xf]
    %v8139 = vld [vmem:[#allocation10 + $0x364] sm:$0xf]
    %v8140 = vld [vmem:[#allocation10 + $0x368] sm:$0xf]
    %v8141 = vld [vmem:[#allocation10 + $0x36c] sm:$0xf]
    %v8142 = vld [vmem:[#allocation10 + $0x370] sm:$0xf]
    %v8143 = vld [vmem:[#allocation10 + $0x374] sm:$0xf]
    %v8144 = vld [vmem:[#allocation10 + $0x378] sm:$0xf]
    %v8145 = vld [vmem:[#allocation10 + $0x37c] sm:$0xf]
    %v8146 = vld [vmem:[#allocation10 + $0x380] sm:$0xf]
    %v8147 = vld [vmem:[#allocation10 + $0x384] sm:$0xf]
    %v8148 = vld [vmem:[#allocation10 + $0x388] sm:$0xf]
    %v8149 = vld [vmem:[#allocation10 + $0x38c] sm:$0xf]
    %v8150 = vld [vmem:[#allocation10 + $0x390] sm:$0xf]
    %v8151 = vld [vmem:[#allocation10 + $0x394] sm:$0xf]
    %v8152 = vld [vmem:[#allocation10 + $0x398] sm:$0xf]
    %v8153 = vld [vmem:[#allocation10 + $0x39c] sm:$0xf]
    %v8154 = vld [vmem:[#allocation10 + $0x3a0] sm:$0xf]
    %v8155 = vld [vmem:[#allocation10 + $0x3a4] sm:$0xf]
    %v8156 = vld [vmem:[#allocation10 + $0x3a8] sm:$0xf]
    %v8157 = vld [vmem:[#allocation10 + $0x3ac] sm:$0xf]
    %v8158 = vld [vmem:[#allocation10 + $0x3b0] sm:$0xf]
    %v8159 = vld [vmem:[#allocation10 + $0x3b4] sm:$0xf]
    %v8160 = vld [vmem:[#allocation10 + $0x3b8] sm:$0xf]
    %v8161 = vld [vmem:[#allocation10 + $0x3bc] sm:$0xf]
    %v8162 = vld [vmem:[#allocation10 + $0x3c0] sm:$0xf]
    %v8163 = vld [vmem:[#allocation10 + $0x3c4] sm:$0xf]
    %v8164 = vld [vmem:[#allocation10 + $0x3c8] sm:$0xf]
    %v8165 = vld [vmem:[#allocation10 + $0x3cc] sm:$0xf]
    %v8166 = vld [vmem:[#allocation10 + $0x3d0] sm:$0xf]
    %v8167 = vld [vmem:[#allocation10 + $0x3d4] sm:$0xf]
    %v8168 = vld [vmem:[#allocation10 + $0x3d8] sm:$0xf]
    %v8169 = vld [vmem:[#allocation10 + $0x3dc] sm:$0xf]
    %v8170 = vld [vmem:[#allocation10 + $0x3e0] sm:$0xf]
    %v8171 = vld [vmem:[#allocation10 + $0x3e4] sm:$0xf]
    %v8172 = vld [vmem:[#allocation10 + $0x3e8] sm:$0xf]
    %v8173 = vld [vmem:[#allocation10 + $0x3ec] sm:$0xf]
    %v8174 = vld [vmem:[#allocation10 + $0x3f0] sm:$0xf]
    %v8175 = vld [vmem:[#allocation10 + $0x3f4] sm:$0xf]
    %v8176 = vld [vmem:[#allocation10 + $0x3f8] sm:$0xf]
    %v8177 = vld [vmem:[#allocation10 + $0x3fc] sm:$0xf]
    %v8178 = vld [vmem:[#allocation11] sm:$0x1]
    %v8180 = vlaneseq
    %v8181 = vshrl.u32 %v8180, 7
    %v8182 = vsub.s32 0, %v8181
    %v8183 = vrot.slane %v8178, %v8182
    %v8441 = vunpack.c.l.b16 %v7922
    %v8442 = vunpack.c.l.b16 %v7923
    %v8443 = vunpack.c.l.b16 %v7924
    %v8444 = vunpack.c.l.b16 %v7925
    %v8445 = vunpack.c.l.b16 %v7926
    %v8446 = vunpack.c.l.b16 %v7927
    %v8447 = vunpack.c.l.b16 %v7928
    %v8448 = vunpack.c.l.b16 %v7929
    %v8449 = vunpack.c.l.b16 %v7930
    %v8450 = vunpack.c.l.b16 %v7931
    %v8451 = vunpack.c.l.b16 %v7932
    %v8452 = vunpack.c.l.b16 %v7933
    %v8453 = vunpack.c.l.b16 %v7934
    %v8454 = vunpack.c.l.b16 %v7935
    %v8455 = vunpack.c.l.b16 %v7936
    %v8456 = vunpack.c.l.b16 %v7937
    %v8457 = vunpack.c.l.b16 %v7938
    %v8458 = vunpack.c.l.b16 %v7939
    %v8459 = vunpack.c.l.b16 %v7940
    %v8460 = vunpack.c.l.b16 %v7941
    %v8461 = vunpack.c.l.b16 %v7942
    %v8462 = vunpack.c.l.b16 %v7943
    %v8463 = vunpack.c.l.b16 %v7944
    %v8464 = vunpack.c.l.b16 %v7945
    %v8465 = vunpack.c.l.b16 %v7946
    %v8466 = vunpack.c.l.b16 %v7947
    %v8467 = vunpack.c.l.b16 %v7948
    %v8468 = vunpack.c.l.b16 %v7949
    %v8469 = vunpack.c.l.b16 %v7950
    %v8470 = vunpack.c.l.b16 %v7951
    %v8471 = vunpack.c.l.b16 %v7952
    %v8472 = vunpack.c.l.b16 %v7953
    %v8473 = vunpack.c.l.b16 %v7954
    %v8474 = vunpack.c.l.b16 %v7955
    %v8475 = vunpack.c.l.b16 %v7956
    %v8476 = vunpack.c.l.b16 %v7957
    %v8477 = vunpack.c.l.b16 %v7958
    %v8478 = vunpack.c.l.b16 %v7959
    %v8479 = vunpack.c.l.b16 %v7960
    %v8480 = vunpack.c.l.b16 %v7961
    %v8481 = vunpack.c.l.b16 %v7962
    %v8482 = vunpack.c.l.b16 %v7963
    %v8483 = vunpack.c.l.b16 %v7964
    %v8484 = vunpack.c.l.b16 %v7965
    %v8485 = vunpack.c.l.b16 %v7966
    %v8486 = vunpack.c.l.b16 %v7967
    %v8487 = vunpack.c.l.b16 %v7968
    %v8488 = vunpack.c.l.b16 %v7969
    %v8489 = vunpack.c.l.b16 %v7970
    %v8490 = vunpack.c.l.b16 %v7971
    %v8491 = vunpack.c.l.b16 %v7972
    %v8492 = vunpack.c.l.b16 %v7973
    %v8493 = vunpack.c.l.b16 %v7974
    %v8494 = vunpack.c.l.b16 %v7975
    %v8495 = vunpack.c.l.b16 %v7976
    %v8496 = vunpack.c.l.b16 %v7977
    %v8497 = vunpack.c.l.b16 %v7978
    %v8498 = vunpack.c.l.b16 %v7979
    %v8499 = vunpack.c.l.b16 %v7980
    %v8500 = vunpack.c.l.b16 %v7981
    %v8501 = vunpack.c.l.b16 %v7982
    %v8502 = vunpack.c.l.b16 %v7983
    %v8503 = vunpack.c.l.b16 %v7984
    %v8504 = vunpack.c.l.b16 %v7985
    %v8505 = vunpack.c.l.b16 %v7986
    %v8506 = vunpack.c.l.b16 %v7987
    %v8507 = vunpack.c.l.b16 %v7988
    %v8508 = vunpack.c.l.b16 %v7989
    %v8509 = vunpack.c.l.b16 %v7990
    %v8510 = vunpack.c.l.b16 %v7991
    %v8511 = vunpack.c.l.b16 %v7992
    %v8512 = vunpack.c.l.b16 %v7993
    %v8513 = vunpack.c.l.b16 %v7994
    %v8514 = vunpack.c.l.b16 %v7995
    %v8515 = vunpack.c.l.b16 %v7996
    %v8516 = vunpack.c.l.b16 %v7997
    %v8517 = vunpack.c.l.b16 %v7998
    %v8518 = vunpack.c.l.b16 %v7999
    %v8519 = vunpack.c.l.b16 %v8000
    %v8520 = vunpack.c.l.b16 %v8001
    %v8521 = vunpack.c.l.b16 %v8002
    %v8522 = vunpack.c.l.b16 %v8003
    %v8523 = vunpack.c.l.b16 %v8004
    %v8524 = vunpack.c.l.b16 %v8005
    %v8525 = vunpack.c.l.b16 %v8006
    %v8526 = vunpack.c.l.b16 %v8007
    %v8527 = vunpack.c.l.b16 %v8008
    %v8528 = vunpack.c.l.b16 %v8009
    %v8529 = vunpack.c.l.b16 %v8010
    %v8530 = vunpack.c.l.b16 %v8011
    %v8531 = vunpack.c.l.b16 %v8012
    %v8532 = vunpack.c.l.b16 %v8013
    %v8533 = vunpack.c.l.b16 %v8014
    %v8534 = vunpack.c.l.b16 %v8015
    %v8535 = vunpack.c.l.b16 %v8016
    %v8536 = vunpack.c.l.b16 %v8017
    %v8537 = vunpack.c.l.b16 %v8018
    %v8538 = vunpack.c.l.b16 %v8019
    %v8539 = vunpack.c.l.b16 %v8020
    %v8540 = vunpack.c.l.b16 %v8021
    %v8541 = vunpack.c.l.b16 %v8022
    %v8542 = vunpack.c.l.b16 %v8023
    %v8543 = vunpack.c.l.b16 %v8024
    %v8544 = vunpack.c.l.b16 %v8025
    %v8545 = vunpack.c.l.b16 %v8026
    %v8546 = vunpack.c.l.b16 %v8027
    %v8547 = vunpack.c.l.b16 %v8028
    %v8548 = vunpack.c.l.b16 %v8029
    %v8549 = vunpack.c.l.b16 %v8030
    %v8550 = vunpack.c.l.b16 %v8031
    %v8551 = vunpack.c.l.b16 %v8032
    %v8552 = vunpack.c.l.b16 %v8033
    %v8553 = vunpack.c.l.b16 %v8034
    %v8554 = vunpack.c.l.b16 %v8035
    %v8555 = vunpack.c.l.b16 %v8036
    %v8556 = vunpack.c.l.b16 %v8037
    %v8557 = vunpack.c.l.b16 %v8038
    %v8558 = vunpack.c.l.b16 %v8039
    %v8559 = vunpack.c.l.b16 %v8040
    %v8560 = vunpack.c.l.b16 %v8041
    %v8561 = vunpack.c.l.b16 %v8042
    %v8562 = vunpack.c.l.b16 %v8043
    %v8563 = vunpack.c.l.b16 %v8044
    %v8564 = vunpack.c.l.b16 %v8045
    %v8565 = vunpack.c.l.b16 %v8046
    %v8566 = vunpack.c.l.b16 %v8047
    %v8567 = vunpack.c.l.b16 %v8048
    %v8568 = vunpack.c.l.b16 %v8049
    %v8569 = vunpack.c.l.b16 %v8050
    %v8570 = vunpack.c.l.b16 %v8051
    %v8571 = vunpack.c.l.b16 %v8052
    %v8572 = vunpack.c.l.b16 %v8053
    %v8573 = vunpack.c.l.b16 %v8054
    %v8574 = vunpack.c.l.b16 %v8055
    %v8575 = vunpack.c.l.b16 %v8056
    %v8576 = vunpack.c.l.b16 %v8057
    %v8577 = vunpack.c.l.b16 %v8058
    %v8578 = vunpack.c.l.b16 %v8059
    %v8579 = vunpack.c.l.b16 %v8060
    %v8580 = vunpack.c.l.b16 %v8061
    %v8581 = vunpack.c.l.b16 %v8062
    %v8582 = vunpack.c.l.b16 %v8063
    %v8583 = vunpack.c.l.b16 %v8064
    %v8584 = vunpack.c.l.b16 %v8065
    %v8585 = vunpack.c.l.b16 %v8066
    %v8586 = vunpack.c.l.b16 %v8067
    %v8587 = vunpack.c.l.b16 %v8068
    %v8588 = vunpack.c.l.b16 %v8069
    %v8589 = vunpack.c.l.b16 %v8070
    %v8590 = vunpack.c.l.b16 %v8071
    %v8591 = vunpack.c.l.b16 %v8072
    %v8592 = vunpack.c.l.b16 %v8073
    %v8593 = vunpack.c.l.b16 %v8074
    %v8594 = vunpack.c.l.b16 %v8075
    %v8595 = vunpack.c.l.b16 %v8076
    %v8596 = vunpack.c.l.b16 %v8077
    %v8597 = vunpack.c.l.b16 %v8078
    %v8598 = vunpack.c.l.b16 %v8079
    %v8599 = vunpack.c.l.b16 %v8080
    %v8600 = vunpack.c.l.b16 %v8081
    %v8601 = vunpack.c.l.b16 %v8082
    %v8602 = vunpack.c.l.b16 %v8083
    %v8603 = vunpack.c.l.b16 %v8084
    %v8604 = vunpack.c.l.b16 %v8085
    %v8605 = vunpack.c.l.b16 %v8086
    %v8606 = vunpack.c.l.b16 %v8087
    %v8607 = vunpack.c.l.b16 %v8088
    %v8608 = vunpack.c.l.b16 %v8089
    %v8609 = vunpack.c.l.b16 %v8090
    %v8610 = vunpack.c.l.b16 %v8091
    %v8611 = vunpack.c.l.b16 %v8092
    %v8612 = vunpack.c.l.b16 %v8093
    %v8613 = vunpack.c.l.b16 %v8094
    %v8614 = vunpack.c.l.b16 %v8095
    %v8615 = vunpack.c.l.b16 %v8096
    %v8616 = vunpack.c.l.b16 %v8097
    %v8617 = vunpack.c.l.b16 %v8098
    %v8618 = vunpack.c.l.b16 %v8099
    %v8619 = vunpack.c.l.b16 %v8100
    %v8620 = vunpack.c.l.b16 %v8101
    %v8621 = vunpack.c.l.b16 %v8102
    %v8622 = vunpack.c.l.b16 %v8103
    %v8623 = vunpack.c.l.b16 %v8104
    %v8624 = vunpack.c.l.b16 %v8105
    %v8625 = vunpack.c.l.b16 %v8106
    %v8626 = vunpack.c.l.b16 %v8107
    %v8627 = vunpack.c.l.b16 %v8108
    %v8628 = vunpack.c.l.b16 %v8109
    %v8629 = vunpack.c.l.b16 %v8110
    %v8630 = vunpack.c.l.b16 %v8111
    %v8631 = vunpack.c.l.b16 %v8112
    %v8632 = vunpack.c.l.b16 %v8113
    %v8633 = vunpack.c.l.b16 %v8114
    %v8634 = vunpack.c.l.b16 %v8115
    %v8635 = vunpack.c.l.b16 %v8116
    %v8636 = vunpack.c.l.b16 %v8117
    %v8637 = vunpack.c.l.b16 %v8118
    %v8638 = vunpack.c.l.b16 %v8119
    %v8639 = vunpack.c.l.b16 %v8120
    %v8640 = vunpack.c.l.b16 %v8121
    %v8641 = vunpack.c.l.b16 %v8122
    %v8642 = vunpack.c.l.b16 %v8123
    %v8643 = vunpack.c.l.b16 %v8124
    %v8644 = vunpack.c.l.b16 %v8125
    %v8645 = vunpack.c.l.b16 %v8126
    %v8646 = vunpack.c.l.b16 %v8127
    %v8647 = vunpack.c.l.b16 %v8128
    %v8648 = vunpack.c.l.b16 %v8129
    %v8649 = vunpack.c.l.b16 %v8130
    %v8650 = vunpack.c.l.b16 %v8131
    %v8651 = vunpack.c.l.b16 %v8132
    %v8652 = vunpack.c.l.b16 %v8133
    %v8653 = vunpack.c.l.b16 %v8134
    %v8654 = vunpack.c.l.b16 %v8135
    %v8655 = vunpack.c.l.b16 %v8136
    %v8656 = vunpack.c.l.b16 %v8137
    %v8657 = vunpack.c.l.b16 %v8138
    %v8658 = vunpack.c.l.b16 %v8139
    %v8659 = vunpack.c.l.b16 %v8140
    %v8660 = vunpack.c.l.b16 %v8141
    %v8661 = vunpack.c.l.b16 %v8142
    %v8662 = vunpack.c.l.b16 %v8143
    %v8663 = vunpack.c.l.b16 %v8144
    %v8664 = vunpack.c.l.b16 %v8145
    %v8665 = vunpack.c.l.b16 %v8146
    %v8666 = vunpack.c.l.b16 %v8147
    %v8667 = vunpack.c.l.b16 %v8148
    %v8668 = vunpack.c.l.b16 %v8149
    %v8669 = vunpack.c.l.b16 %v8150
    %v8670 = vunpack.c.l.b16 %v8151
    %v8671 = vunpack.c.l.b16 %v8152
    %v8672 = vunpack.c.l.b16 %v8153
    %v8673 = vunpack.c.l.b16 %v8154
    %v8674 = vunpack.c.l.b16 %v8155
    %v8675 = vunpack.c.l.b16 %v8156
    %v8676 = vunpack.c.l.b16 %v8157
    %v8677 = vunpack.c.l.b16 %v8158
    %v8678 = vunpack.c.l.b16 %v8159
    %v8679 = vunpack.c.l.b16 %v8160
    %v8680 = vunpack.c.l.b16 %v8161
    %v8681 = vunpack.c.l.b16 %v8162
    %v8682 = vunpack.c.l.b16 %v8163
    %v8683 = vunpack.c.l.b16 %v8164
    %v8684 = vunpack.c.l.b16 %v8165
    %v8685 = vunpack.c.l.b16 %v8166
    %v8686 = vunpack.c.l.b16 %v8167
    %v8687 = vunpack.c.l.b16 %v8168
    %v8688 = vunpack.c.l.b16 %v8169
    %v8689 = vunpack.c.l.b16 %v8170
    %v8690 = vunpack.c.l.b16 %v8171
    %v8691 = vunpack.c.l.b16 %v8172
    %v8692 = vunpack.c.l.b16 %v8173
    %v8693 = vunpack.c.l.b16 %v8174
    %v8694 = vunpack.c.l.b16 %v8175
    %v8695 = vunpack.c.l.b16 %v8176
    %v8696 = vunpack.c.l.b16 %v8177
    %v8697 = vpack.c.b16 %v8442, %v8441
    %v8698 = vpack.c.b16 %v8444, %v8443
    %v8699 = vpack.c.b16 %v8446, %v8445
    %v8700 = vpack.c.b16 %v8448, %v8447
    %v8701 = vpack.c.b16 %v8450, %v8449
    %v8702 = vpack.c.b16 %v8452, %v8451
    %v8703 = vpack.c.b16 %v8454, %v8453
    %v8704 = vpack.c.b16 %v8456, %v8455
    %v8705 = vpack.c.b16 %v8458, %v8457
    %v8706 = vpack.c.b16 %v8460, %v8459
    %v8707 = vpack.c.b16 %v8462, %v8461
    %v8708 = vpack.c.b16 %v8464, %v8463
    %v8709 = vpack.c.b16 %v8466, %v8465
    %v8710 = vpack.c.b16 %v8468, %v8467
    %v8711 = vpack.c.b16 %v8470, %v8469
    %v8712 = vpack.c.b16 %v8472, %v8471
    %v8713 = vpack.c.b16 %v8474, %v8473
    %v8714 = vpack.c.b16 %v8476, %v8475
    %v8715 = vpack.c.b16 %v8478, %v8477
    %v8716 = vpack.c.b16 %v8480, %v8479
    %v8717 = vpack.c.b16 %v8482, %v8481
    %v8718 = vpack.c.b16 %v8484, %v8483
    %v8719 = vpack.c.b16 %v8486, %v8485
    %v8720 = vpack.c.b16 %v8488, %v8487
    %v8721 = vpack.c.b16 %v8490, %v8489
    %v8722 = vpack.c.b16 %v8492, %v8491
    %v8723 = vpack.c.b16 %v8494, %v8493
    %v8724 = vpack.c.b16 %v8496, %v8495
    %v8725 = vpack.c.b16 %v8498, %v8497
    %v8726 = vpack.c.b16 %v8500, %v8499
    %v8727 = vpack.c.b16 %v8502, %v8501
    %v8728 = vpack.c.b16 %v8504, %v8503
    %v8729 = vpack.c.b16 %v8506, %v8505
    %v8730 = vpack.c.b16 %v8508, %v8507
    %v8731 = vpack.c.b16 %v8510, %v8509
    %v8732 = vpack.c.b16 %v8512, %v8511
    %v8733 = vpack.c.b16 %v8514, %v8513
    %v8734 = vpack.c.b16 %v8516, %v8515
    %v8735 = vpack.c.b16 %v8518, %v8517
    %v8736 = vpack.c.b16 %v8520, %v8519
    %v8737 = vpack.c.b16 %v8522, %v8521
    %v8738 = vpack.c.b16 %v8524, %v8523
    %v8739 = vpack.c.b16 %v8526, %v8525
    %v8740 = vpack.c.b16 %v8528, %v8527
    %v8741 = vpack.c.b16 %v8530, %v8529
    %v8742 = vpack.c.b16 %v8532, %v8531
    %v8743 = vpack.c.b16 %v8534, %v8533
    %v8744 = vpack.c.b16 %v8536, %v8535
    %v8745 = vpack.c.b16 %v8538, %v8537
    %v8746 = vpack.c.b16 %v8540, %v8539
    %v8747 = vpack.c.b16 %v8542, %v8541
    %v8748 = vpack.c.b16 %v8544, %v8543
    %v8749 = vpack.c.b16 %v8546, %v8545
    %v8750 = vpack.c.b16 %v8548, %v8547
    %v8751 = vpack.c.b16 %v8550, %v8549
    %v8752 = vpack.c.b16 %v8552, %v8551
    %v8753 = vpack.c.b16 %v8554, %v8553
    %v8754 = vpack.c.b16 %v8556, %v8555
    %v8755 = vpack.c.b16 %v8558, %v8557
    %v8756 = vpack.c.b16 %v8560, %v8559
    %v8757 = vpack.c.b16 %v8562, %v8561
    %v8758 = vpack.c.b16 %v8564, %v8563
    %v8759 = vpack.c.b16 %v8566, %v8565
    %v8760 = vpack.c.b16 %v8568, %v8567
    %v8761 = vpack.c.b16 %v8570, %v8569
    %v8762 = vpack.c.b16 %v8572, %v8571
    %v8763 = vpack.c.b16 %v8574, %v8573
    %v8764 = vpack.c.b16 %v8576, %v8575
    %v8765 = vpack.c.b16 %v8578, %v8577
    %v8766 = vpack.c.b16 %v8580, %v8579
    %v8767 = vpack.c.b16 %v8582, %v8581
    %v8768 = vpack.c.b16 %v8584, %v8583
    %v8769 = vpack.c.b16 %v8586, %v8585
    %v8770 = vpack.c.b16 %v8588, %v8587
    %v8771 = vpack.c.b16 %v8590, %v8589
    %v8772 = vpack.c.b16 %v8592, %v8591
    %v8773 = vpack.c.b16 %v8594, %v8593
    %v8774 = vpack.c.b16 %v8596, %v8595
    %v8775 = vpack.c.b16 %v8598, %v8597
    %v8776 = vpack.c.b16 %v8600, %v8599
    %v8777 = vpack.c.b16 %v8602, %v8601
    %v8778 = vpack.c.b16 %v8604, %v8603
    %v8779 = vpack.c.b16 %v8606, %v8605
    %v8780 = vpack.c.b16 %v8608, %v8607
    %v8781 = vpack.c.b16 %v8610, %v8609
    %v8782 = vpack.c.b16 %v8612, %v8611
    %v8783 = vpack.c.b16 %v8614, %v8613
    %v8784 = vpack.c.b16 %v8616, %v8615
    %v8785 = vpack.c.b16 %v8618, %v8617
    %v8786 = vpack.c.b16 %v8620, %v8619
    %v8787 = vpack.c.b16 %v8622, %v8621
    %v8788 = vpack.c.b16 %v8624, %v8623
    %v8789 = vpack.c.b16 %v8626, %v8625
    %v8790 = vpack.c.b16 %v8628, %v8627
    %v8791 = vpack.c.b16 %v8630, %v8629
    %v8792 = vpack.c.b16 %v8632, %v8631
    %v8793 = vpack.c.b16 %v8634, %v8633
    %v8794 = vpack.c.b16 %v8636, %v8635
    %v8795 = vpack.c.b16 %v8638, %v8637
    %v8796 = vpack.c.b16 %v8640, %v8639
    %v8797 = vpack.c.b16 %v8642, %v8641
    %v8798 = vpack.c.b16 %v8644, %v8643
    %v8799 = vpack.c.b16 %v8646, %v8645
    %v8800 = vpack.c.b16 %v8648, %v8647
    %v8801 = vpack.c.b16 %v8650, %v8649
    %v8802 = vpack.c.b16 %v8652, %v8651
    %v8803 = vpack.c.b16 %v8654, %v8653
    %v8804 = vpack.c.b16 %v8656, %v8655
    %v8805 = vpack.c.b16 %v8658, %v8657
    %v8806 = vpack.c.b16 %v8660, %v8659
    %v8807 = vpack.c.b16 %v8662, %v8661
    %v8808 = vpack.c.b16 %v8664, %v8663
    %v8809 = vpack.c.b16 %v8666, %v8665
    %v8810 = vpack.c.b16 %v8668, %v8667
    %v8811 = vpack.c.b16 %v8670, %v8669
    %v8812 = vpack.c.b16 %v8672, %v8671
    %v8813 = vpack.c.b16 %v8674, %v8673
    %v8814 = vpack.c.b16 %v8676, %v8675
    %v8815 = vpack.c.b16 %v8678, %v8677
    %v8816 = vpack.c.b16 %v8680, %v8679
    %v8817 = vpack.c.b16 %v8682, %v8681
    %v8818 = vpack.c.b16 %v8684, %v8683
    %v8819 = vpack.c.b16 %v8686, %v8685
    %v8820 = vpack.c.b16 %v8688, %v8687
    %v8821 = vpack.c.b16 %v8690, %v8689
    %v8822 = vpack.c.b16 %v8692, %v8691
    %v8823 = vpack.c.b16 %v8694, %v8693
    %v8824 = vpack.c.b16 %v8696, %v8695
    %8953 = vmatprep.subr.bf16.mxu0 0
    %8954 = vmatpush1.bf16.msra.mxu0 %v8704
    %8955 = vmatprep.subr.bf16.mxu0 0
    %8956 = vmatpush1.bf16.msra.mxu0 %v8703
    %8957 = vmatprep.subr.bf16.mxu0 0
    %8958 = vmatpush1.bf16.msra.mxu0 %v8702
    %8959 = vmatprep.subr.bf16.mxu0 0
    %8960 = vmatpush1.bf16.msra.mxu0 %v8701
    %8961 = vmatprep.subr.bf16.mxu0 0
    %8962 = vmatpush1.bf16.msra.mxu0 %v8700
    %8963 = vmatprep.subr.bf16.mxu0 0
    %8964 = vmatpush1.bf16.msra.mxu0 %v8699
    %8965 = vmatprep.subr.bf16.mxu0 0
    %8966 = vmatpush1.bf16.msra.mxu0 %v8698
    %8967 = vmatprep.subr.bf16.mxu0 0
    %8968 = vmatpush1.bf16.msra.mxu0 %v8697
    %8969 = vmatprep.subr.bf16.mxu0 0
    %8970 = vmatpush2.bf16.msra.mxu0 %v8712
    %8971 = vmatprep.subr.bf16.mxu0 0
    %8972 = vmatpush2.bf16.msra.mxu0 %v8711
    %8973 = vmatprep.subr.bf16.mxu0 0
    %8974 = vmatpush2.bf16.msra.mxu0 %v8710
    %8975 = vmatprep.subr.bf16.mxu0 0
    %8976 = vmatpush2.bf16.msra.mxu0 %v8709
    %8977 = vmatprep.subr.bf16.mxu0 0
    %8978 = vmatpush2.bf16.msra.mxu0 %v8708
    %8979 = vmatprep.subr.bf16.mxu0 0
    %8980 = vmatpush2.bf16.msra.mxu0 %v8707
    %8981 = vmatprep.subr.bf16.mxu0 0
    %8982 = vmatpush2.bf16.msra.mxu0 %v8706
    %8983 = vmatprep.subr.bf16.mxu0 0
    %8984 = vmatpush2.bf16.msra.mxu0 %v8705
    %8985 = vmatprep.mubr.bf16.mxu0 %v7907
    %8986 = vmatmul.mubr.bf16.gmra.mxu0 %v7906
    %v8987 = vpop.f32.mrf.mxu0
    %v8988 = vadd.f32 %v8183, %v8987
    %v8989 = vpop.f32.mrf.mxu0
    %v8990 = vpop.f32.mrf.mxu0
    %v8991 = vpop.f32.mrf.mxu0
    %8992 = vdwg.mxu0
    %8993 = vmatprep.subr.bf16.mxu0 0
    %8994 = vmatpush1.bf16.msra.mxu0 %v8720
    %8995 = vmatprep.subr.bf16.mxu0 0
    %8996 = vmatpush1.bf16.msra.mxu0 %v8719
    %8997 = vmatprep.subr.bf16.mxu0 0
    %8998 = vmatpush1.bf16.msra.mxu0 %v8718
    %8999 = vmatprep.subr.bf16.mxu0 0
    %9000 = vmatpush1.bf16.msra.mxu0 %v8717
    %9001 = vmatprep.subr.bf16.mxu0 0
    %9002 = vmatpush1.bf16.msra.mxu0 %v8716
    %9003 = vmatprep.subr.bf16.mxu0 0
    %9004 = vmatpush1.bf16.msra.mxu0 %v8715
    %9005 = vmatprep.subr.bf16.mxu0 0
    %9006 = vmatpush1.bf16.msra.mxu0 %v8714
    %9007 = vmatprep.subr.bf16.mxu0 0
    %9008 = vmatpush1.bf16.msra.mxu0 %v8713
    %9009 = vmatprep.subr.bf16.mxu0 0
    %9010 = vmatpush2.bf16.msra.mxu0 %v8728
    %9011 = vmatprep.subr.bf16.mxu0 0
    %9012 = vmatpush2.bf16.msra.mxu0 %v8727
    %9013 = vmatprep.subr.bf16.mxu0 0
    %9014 = vmatpush2.bf16.msra.mxu0 %v8726
    %9015 = vmatprep.subr.bf16.mxu0 0
    %9016 = vmatpush2.bf16.msra.mxu0 %v8725
    %9017 = vmatprep.subr.bf16.mxu0 0
    %9018 = vmatpush2.bf16.msra.mxu0 %v8724
    %9019 = vmatprep.subr.bf16.mxu0 0
    %9020 = vmatpush2.bf16.msra.mxu0 %v8723
    %9021 = vmatprep.subr.bf16.mxu0 0
    %9022 = vmatpush2.bf16.msra.mxu0 %v8722
    %9023 = vmatprep.subr.bf16.mxu0 0
    %9024 = vmatpush2.bf16.msra.mxu0 %v8721
    %9025 = vmatprep.mubr.bf16.mxu0 %v7909
    %9026 = vmatmul.mubr.bf16.gmra.mxu0 %v7908
    %v9027 = vpop.f32.mrf.mxu0
    %v9028 = vadd.f32 %v8988, %v9027
    %v9029 = vpop.f32.mrf.mxu0
    %v9030 = vpop.f32.mrf.mxu0
    %v9031 = vpop.f32.mrf.mxu0
    %9032 = vdwg.mxu0
    %9033 = vmatprep.subr.bf16.mxu0 0
    %9034 = vmatpush1.bf16.msra.mxu0 %v8736
    %9035 = vmatprep.subr.bf16.mxu0 0
    %9036 = vmatpush1.bf16.msra.mxu0 %v8735
    %9037 = vmatprep.subr.bf16.mxu0 0
    %9038 = vmatpush1.bf16.msra.mxu0 %v8734
    %9039 = vmatprep.subr.bf16.mxu0 0
    %9040 = vmatpush1.bf16.msra.mxu0 %v8733
    %9041 = vmatprep.subr.bf16.mxu0 0
    %9042 = vmatpush1.bf16.msra.mxu0 %v8732
    %9043 = vmatprep.subr.bf16.mxu0 0
    %9044 = vmatpush1.bf16.msra.mxu0 %v8731
    %9045 = vmatprep.subr.bf16.mxu0 0
    %9046 = vmatpush1.bf16.msra.mxu0 %v8730
    %9047 = vmatprep.subr.bf16.mxu0 0
    %9048 = vmatpush1.bf16.msra.mxu0 %v8729
    %9049 = vmatprep.subr.bf16.mxu0 0
    %9050 = vmatpush2.bf16.msra.mxu0 %v8744
    %9051 = vmatprep.subr.bf16.mxu0 0
    %9052 = vmatpush2.bf16.msra.mxu0 %v8743
    %9053 = vmatprep.subr.bf16.mxu0 0
    %9054 = vmatpush2.bf16.msra.mxu0 %v8742
    %9055 = vmatprep.subr.bf16.mxu0 0
    %9056 = vmatpush2.bf16.msra.mxu0 %v8741
    %9057 = vmatprep.subr.bf16.mxu0 0
    %9058 = vmatpush2.bf16.msra.mxu0 %v8740
    %9059 = vmatprep.subr.bf16.mxu0 0
    %9060 = vmatpush2.bf16.msra.mxu0 %v8739
    %9061 = vmatprep.subr.bf16.mxu0 0
    %9062 = vmatpush2.bf16.msra.mxu0 %v8738
    %9063 = vmatprep.subr.bf16.mxu0 0
    %9064 = vmatpush2.bf16.msra.mxu0 %v8737
    %9065 = vmatprep.mubr.bf16.mxu0 %v7911
    %9066 = vmatmul.mubr.bf16.gmra.mxu0 %v7910
    %v9067 = vpop.f32.mrf.mxu0
    %v9068 = vadd.f32 %v9028, %v9067
    %v9069 = vpop.f32.mrf.mxu0
    %v9070 = vpop.f32.mrf.mxu0
    %v9071 = vpop.f32.mrf.mxu0
    %9072 = vdwg.mxu0
    %9073 = vmatprep.subr.bf16.mxu0 0
    %9074 = vmatpush1.bf16.msra.mxu0 %v8752
    %9075 = vmatprep.subr.bf16.mxu0 0
    %9076 = vmatpush1.bf16.msra.mxu0 %v8751
    %9077 = vmatprep.subr.bf16.mxu0 0
    %9078 = vmatpush1.bf16.msra.mxu0 %v8750
    %9079 = vmatprep.subr.bf16.mxu0 0
    %9080 = vmatpush1.bf16.msra.mxu0 %v8749
    %9081 = vmatprep.subr.bf16.mxu0 0
    %9082 = vmatpush1.bf16.msra.mxu0 %v8748
    %9083 = vmatprep.subr.bf16.mxu0 0
    %9084 = vmatpush1.bf16.msra.mxu0 %v8747
    %9085 = vmatprep.subr.bf16.mxu0 0
    %9086 = vmatpush1.bf16.msra.mxu0 %v8746
    %9087 = vmatprep.subr.bf16.mxu0 0
    %9088 = vmatpush1.bf16.msra.mxu0 %v8745
    %9089 = vmatprep.subr.bf16.mxu0 0
    %9090 = vmatpush2.bf16.msra.mxu0 %v8760
    %9091 = vmatprep.subr.bf16.mxu0 0
    %9092 = vmatpush2.bf16.msra.mxu0 %v8759
    %9093 = vmatprep.subr.bf16.mxu0 0
    %9094 = vmatpush2.bf16.msra.mxu0 %v8758
    %9095 = vmatprep.subr.bf16.mxu0 0
    %9096 = vmatpush2.bf16.msra.mxu0 %v8757
    %9097 = vmatprep.subr.bf16.mxu0 0
    %9098 = vmatpush2.bf16.msra.mxu0 %v8756
    %9099 = vmatprep.subr.bf16.mxu0 0
    %9100 = vmatpush2.bf16.msra.mxu0 %v8755
    %9101 = vmatprep.subr.bf16.mxu0 0
    %9102 = vmatpush2.bf16.msra.mxu0 %v8754
    %9103 = vmatprep.subr.bf16.mxu0 0
    %9104 = vmatpush2.bf16.msra.mxu0 %v8753
    %9105 = vmatprep.mubr.bf16.mxu0 %v7913
    %9106 = vmatmul.mubr.bf16.gmra.mxu0 %v7912
    %v9107 = vpop.f32.mrf.mxu0
    %v9108 = vadd.f32 %v9068, %v9107
    %v9109 = vpop.f32.mrf.mxu0
    %v9110 = vpop.f32.mrf.mxu0
    %v9111 = vpop.f32.mrf.mxu0
    %9112 = vdwg.mxu0
    %9113 = vmatprep.subr.bf16.mxu0 0
    %9114 = vmatpush1.bf16.msra.mxu0 %v8768
    %9115 = vmatprep.subr.bf16.mxu0 0
    %9116 = vmatpush1.bf16.msra.mxu0 %v8767
    %9117 = vmatprep.subr.bf16.mxu0 0
    %9118 = vmatpush1.bf16.msra.mxu0 %v8766
    %9119 = vmatprep.subr.bf16.mxu0 0
    %9120 = vmatpush1.bf16.msra.mxu0 %v8765
    %9121 = vmatprep.subr.bf16.mxu0 0
    %9122 = vmatpush1.bf16.msra.mxu0 %v8764
    %9123 = vmatprep.subr.bf16.mxu0 0
    %9124 = vmatpush1.bf16.msra.mxu0 %v8763
    %9125 = vmatprep.subr.bf16.mxu0 0
    %9126 = vmatpush1.bf16.msra.mxu0 %v8762
    %9127 = vmatprep.subr.bf16.mxu0 0
    %9128 = vmatpush1.bf16.msra.mxu0 %v8761
    %9129 = vmatprep.subr.bf16.mxu0 0
    %9130 = vmatpush2.bf16.msra.mxu0 %v8776
    %9131 = vmatprep.subr.bf16.mxu0 0
    %9132 = vmatpush2.bf16.msra.mxu0 %v8775
    %9133 = vmatprep.subr.bf16.mxu0 0
    %9134 = vmatpush2.bf16.msra.mxu0 %v8774
    %9135 = vmatprep.subr.bf16.mxu0 0
    %9136 = vmatpush2.bf16.msra.mxu0 %v8773
    %9137 = vmatprep.subr.bf16.mxu0 0
    %9138 = vmatpush2.bf16.msra.mxu0 %v8772
    %9139 = vmatprep.subr.bf16.mxu0 0
    %9140 = vmatpush2.bf16.msra.mxu0 %v8771
    %9141 = vmatprep.subr.bf16.mxu0 0
    %9142 = vmatpush2.bf16.msra.mxu0 %v8770
    %9143 = vmatprep.subr.bf16.mxu0 0
    %9144 = vmatpush2.bf16.msra.mxu0 %v8769
    %9145 = vmatprep.mubr.bf16.mxu0 %v7915
    %9146 = vmatmul.mubr.bf16.gmra.mxu0 %v7914
    %v9147 = vpop.f32.mrf.mxu0
    %v9148 = vadd.f32 %v9108, %v9147
    %v9149 = vpop.f32.mrf.mxu0
    %v9150 = vpop.f32.mrf.mxu0
    %v9151 = vpop.f32.mrf.mxu0
    %9152 = vdwg.mxu0
    %9153 = vmatprep.subr.bf16.mxu0 0
    %9154 = vmatpush1.bf16.msra.mxu0 %v8784
    %9155 = vmatprep.subr.bf16.mxu0 0
    %9156 = vmatpush1.bf16.msra.mxu0 %v8783
    %9157 = vmatprep.subr.bf16.mxu0 0
    %9158 = vmatpush1.bf16.msra.mxu0 %v8782
    %9159 = vmatprep.subr.bf16.mxu0 0
    %9160 = vmatpush1.bf16.msra.mxu0 %v8781
    %9161 = vmatprep.subr.bf16.mxu0 0
    %9162 = vmatpush1.bf16.msra.mxu0 %v8780
    %9163 = vmatprep.subr.bf16.mxu0 0
    %9164 = vmatpush1.bf16.msra.mxu0 %v8779
    %9165 = vmatprep.subr.bf16.mxu0 0
    %9166 = vmatpush1.bf16.msra.mxu0 %v8778
    %9167 = vmatprep.subr.bf16.mxu0 0
    %9168 = vmatpush1.bf16.msra.mxu0 %v8777
    %9169 = vmatprep.subr.bf16.mxu0 0
    %9170 = vmatpush2.bf16.msra.mxu0 %v8792
    %9171 = vmatprep.subr.bf16.mxu0 0
    %9172 = vmatpush2.bf16.msra.mxu0 %v8791
    %9173 = vmatprep.subr.bf16.mxu0 0
    %9174 = vmatpush2.bf16.msra.mxu0 %v8790
    %9175 = vmatprep.subr.bf16.mxu0 0
    %9176 = vmatpush2.bf16.msra.mxu0 %v8789
    %9177 = vmatprep.subr.bf16.mxu0 0
    %9178 = vmatpush2.bf16.msra.mxu0 %v8788
    %9179 = vmatprep.subr.bf16.mxu0 0
    %9180 = vmatpush2.bf16.msra.mxu0 %v8787
    %9181 = vmatprep.subr.bf16.mxu0 0
    %9182 = vmatpush2.bf16.msra.mxu0 %v8786
    %9183 = vmatprep.subr.bf16.mxu0 0
    %9184 = vmatpush2.bf16.msra.mxu0 %v8785
    %9185 = vmatprep.mubr.bf16.mxu0 %v7917
    %9186 = vmatmul.mubr.bf16.gmra.mxu0 %v7916
    %v9187 = vpop.f32.mrf.mxu0
    %v9188 = vadd.f32 %v9148, %v9187
    %v9189 = vpop.f32.mrf.mxu0
    %v9190 = vpop.f32.mrf.mxu0
    %v9191 = vpop.f32.mrf.mxu0
    %9192 = vdwg.mxu0
    %9193 = vmatprep.subr.bf16.mxu0 0
    %9194 = vmatpush1.bf16.msra.mxu0 %v8800
    %9195 = vmatprep.subr.bf16.mxu0 0
    %9196 = vmatpush1.bf16.msra.mxu0 %v8799
    %9197 = vmatprep.subr.bf16.mxu0 0
    %9198 = vmatpush1.bf16.msra.mxu0 %v8798
    %9199 = vmatprep.subr.bf16.mxu0 0
    %9200 = vmatpush1.bf16.msra.mxu0 %v8797
    %9201 = vmatprep.subr.bf16.mxu0 0
    %9202 = vmatpush1.bf16.msra.mxu0 %v8796
    %9203 = vmatprep.subr.bf16.mxu0 0
    %9204 = vmatpush1.bf16.msra.mxu0 %v8795
    %9205 = vmatprep.subr.bf16.mxu0 0
    %9206 = vmatpush1.bf16.msra.mxu0 %v8794
    %9207 = vmatprep.subr.bf16.mxu0 0
    %9208 = vmatpush1.bf16.msra.mxu0 %v8793
    %9209 = vmatprep.subr.bf16.mxu0 0
    %9210 = vmatpush2.bf16.msra.mxu0 %v8808
    %9211 = vmatprep.subr.bf16.mxu0 0
    %9212 = vmatpush2.bf16.msra.mxu0 %v8807
    %9213 = vmatprep.subr.bf16.mxu0 0
    %9214 = vmatpush2.bf16.msra.mxu0 %v8806
    %9215 = vmatprep.subr.bf16.mxu0 0
    %9216 = vmatpush2.bf16.msra.mxu0 %v8805
    %9217 = vmatprep.subr.bf16.mxu0 0
    %9218 = vmatpush2.bf16.msra.mxu0 %v8804
    %9219 = vmatprep.subr.bf16.mxu0 0
    %9220 = vmatpush2.bf16.msra.mxu0 %v8803
    %9221 = vmatprep.subr.bf16.mxu0 0
    %9222 = vmatpush2.bf16.msra.mxu0 %v8802
    %9223 = vmatprep.subr.bf16.mxu0 0
    %9224 = vmatpush2.bf16.msra.mxu0 %v8801
    %9225 = vmatprep.mubr.bf16.mxu0 %v7919
    %9226 = vmatmul.mubr.bf16.gmra.mxu0 %v7918
    %v9227 = vpop.f32.mrf.mxu0
    %v9228 = vadd.f32 %v9188, %v9227
    %v9229 = vpop.f32.mrf.mxu0
    %v9230 = vpop.f32.mrf.mxu0
    %v9231 = vpop.f32.mrf.mxu0
    %9232 = vdwg.mxu0
    %9233 = vmatprep.subr.bf16.mxu0 0
    %9234 = vmatpush1.bf16.msra.mxu0 %v8816
    %9235 = vmatprep.subr.bf16.mxu0 0
    %9236 = vmatpush1.bf16.msra.mxu0 %v8815
    %9237 = vmatprep.subr.bf16.mxu0 0
    %9238 = vmatpush1.bf16.msra.mxu0 %v8814
    %9239 = vmatprep.subr.bf16.mxu0 0
    %9240 = vmatpush1.bf16.msra.mxu0 %v8813
    %9241 = vmatprep.subr.bf16.mxu0 0
    %9242 = vmatpush1.bf16.msra.mxu0 %v8812
    %9243 = vmatprep.subr.bf16.mxu0 0
    %9244 = vmatpush1.bf16.msra.mxu0 %v8811
    %9245 = vmatprep.subr.bf16.mxu0 0
    %9246 = vmatpush1.bf16.msra.mxu0 %v8810
    %9247 = vmatprep.subr.bf16.mxu0 0
    %9248 = vmatpush1.bf16.msra.mxu0 %v8809
    %9249 = vmatprep.subr.bf16.mxu0 0
    %9250 = vmatpush2.bf16.msra.mxu0 %v8824
    %9251 = vmatprep.subr.bf16.mxu0 0
    %9252 = vmatpush2.bf16.msra.mxu0 %v8823
    %9253 = vmatprep.subr.bf16.mxu0 0
    %9254 = vmatpush2.bf16.msra.mxu0 %v8822
    %9255 = vmatprep.subr.bf16.mxu0 0
    %9256 = vmatpush2.bf16.msra.mxu0 %v8821
    %9257 = vmatprep.subr.bf16.mxu0 0
    %9258 = vmatpush2.bf16.msra.mxu0 %v8820
    %9259 = vmatprep.subr.bf16.mxu0 0
    %9260 = vmatpush2.bf16.msra.mxu0 %v8819
    %9261 = vmatprep.subr.bf16.mxu0 0
    %9262 = vmatpush2.bf16.msra.mxu0 %v8818
    %9263 = vmatprep.subr.bf16.mxu0 0
    %9264 = vmatpush2.bf16.msra.mxu0 %v8817
    %9265 = vmatprep.mubr.bf16.mxu0 %v7921
    %9266 = vmatmul.mubr.bf16.gmra.mxu0 %v7920
    %v9267 = vpop.f32.mrf.mxu0
    %v9268 = vadd.f32 %v9228, %v9267
    %v9269 = vpop.f32.mrf.mxu0
    %v9270 = vpop.f32.mrf.mxu0
    %v9271 = vpop.f32.mrf.mxu0
    %9272 = vdwg.mxu0
    %9273 = vst [vmem:[#allocation13] sm:$0xff] %v9268
    // Predicated region
    $region54: #{decoder_forward.1} parent=1 // pred_check
      _
    $region55: #{decoder_forward.1} parent=1 // pred_check_branch
      %9275 = sbr.rel (0) target = $region57
    $region56: #{decoder_forward.1} parent=1 // pred_region
      %s9277 = ssub.s32 128, 128
      %9278 = vsyncadd [#allocation4], %s9277
      %s9280 = sshll.u32 [#allocation13], 4
      %s9281 = int_to_ptr.vmem [resolvable:$true] %s9280
      %9283 = dma.vmem_to_hbm [thread:$0]  %s9281, 128, %s7, [#allocation4]
    $region57: #{decoder_forward.1} parent=1 // pred_fallthru
      _
    // Predicated region
    $region58: #{decoder_forward.1} parent=1 // pred_check
      _
    $region59: #{decoder_forward.1} parent=1 // pred_check_branch
      %9285 = sbr.rel (0) target = $region61
    $region60: #{decoder_forward.1} parent=1 // pred_region
      %9286 = dma.done [#allocation4], 128
    $region61: #{decoder_forward.1} parent=1 // pred_fallthru
      _
    %9287 = vsyncpa [#allocation3], 1
    %9288 = vsyncpa [#allocation6], 1
    %9289 = vsyncpa [#allocation9], 1
    %9290 = vsyncpa [#allocation12], 1
    %9291 = vsyncpa [#allocation4], 1

</llo_original>
